<compile_context>
chip_gen: v6e
topology: v6e:2x2x1
jax: 0.10.0
libtpu: 0.0.40
codegen_flags: <defaults>
</compile_context>

<pallas_src>
import jax
import jax.numpy as jnp
from jax.experimental import pallas as pl
from jax.experimental.pallas import tpu as pltpu


# --------------------------------------------------------------------------- #
# Kernel
# --------------------------------------------------------------------------- #
def _mlp_kernel(x_ref,
                w1_ref, b1_ref,
                w2_ref, b2_ref,
                w3_ref, b3_ref,
                w4_ref, b4_ref,
                o_ref):
    # In-kernel bf16 cast of the activation tile (no wrapper-side HBM round trip).
    h = x_ref[...].astype(jnp.bfloat16)
    # Layer 1: Linear (bf16 operands, f32 MXU accumulation) + bias + ReLU in f32.
    h = jnp.dot(h, w1_ref[...], preferred_element_type=jnp.float32)
    h = jnp.maximum(h + b1_ref[...], 0.0).astype(jnp.bfloat16)
    # Layer 2
    h = jnp.dot(h, w2_ref[...], preferred_element_type=jnp.float32)
    h = jnp.maximum(h + b2_ref[...], 0.0).astype(jnp.bfloat16)
    # Layer 3
    h = jnp.dot(h, w3_ref[...], preferred_element_type=jnp.float32)
    h = jnp.maximum(h + b3_ref[...], 0.0).astype(jnp.bfloat16)
    # Layer 4: logits, padded to a lane-dense 128-wide output block (unmasked vst).
    o_ref[...] = jnp.dot(h, w4_ref[...], preferred_element_type=jnp.float32) + b4_ref[...]


# --------------------------------------------------------------------------- #
# Parameter prep (one-time, hoisted out of the per-call path)
# --------------------------------------------------------------------------- #
def prepare_params(params):
    """Cast weights to bf16, biases to f32 (1, out) rows, and zero-pad the final
    projection to a multiple of 128 classes.  Do this ONCE per model."""
    num_classes = params["w4"].shape[1]
    c_pad = pl.cdiv(num_classes, 128) * 128

    def bias_row(b):
        return jnp.asarray(b, jnp.float32).reshape(1, -1)

    w4p = jnp.pad(params["w4"], ((0, 0), (0, c_pad - num_classes)))
    b4p = jnp.pad(bias_row(params["b4"]), ((0, 0), (0, c_pad - num_classes)))

    prep = {
        "w1": params["w1"].astype(jnp.bfloat16), "b1": bias_row(params["b1"]),
        "w2": params["w2"].astype(jnp.bfloat16), "b2": bias_row(params["b2"]),
        "w3": params["w3"].astype(jnp.bfloat16), "b3": bias_row(params["b3"]),
        "w4": w4p.astype(jnp.bfloat16),          "b4": b4p,
        "num_classes": num_classes,              # python int, not traced
    }
    return jax.tree_util.tree_map(
        lambda a: jax.block_until_ready(a) if isinstance(a, jax.Array) else a, prep)


# --------------------------------------------------------------------------- #
# Tiling / pallas_call construction
# --------------------------------------------------------------------------- #
def _round_up(x, m):
    return ((x + m - 1) // m) * m


def _pick_batch_tile(B):
    # B <= 128: one minimal 8-aligned tile (minimal padding, single grid step).
    # 128 < B < 512: 128-row tiles -> >=2 grid steps so both v7x TensorCores
    #                get work; also the natural v5e MXU row width.
    # B >= 512: 256-row tiles to fill the v6e/v7x 256-wide MXU (still >=2 steps).
    if B <= 128:
        return max(8, _round_up(B, 8))
    if B < 512:
        return 128
    return 256


def _build_mlp_call(b_pad, d_in, c_pad, tile, n_tiles, wb_shapes,
                    single_buffer_weights):
    def const_spec(shape):
        imap = lambda i, _s=shape: (0,) * len(_s)
        if single_buffer_weights:
            # Weights/biases are resident (constant index_map); single-buffering
            # them frees ~half the weight VMEM footprint.
            return pl.BlockSpec(shape, imap, pipeline_mode=pl.Buffered(1))
        return pl.BlockSpec(shape, imap)

    in_specs = [pl.BlockSpec((tile, d_in), lambda i: (i, 0))]   # x tile (f32)
    for s in wb_shapes:
        in_specs.append(const_spec(s))

    return pl.pallas_call(
        _mlp_kernel,
        out_shape=jax.ShapeDtypeStruct((b_pad, c_pad), jnp.float32),
        grid_spec=pltpu.PrefetchScalarGridSpec(
            num_scalar_prefetch=0,
            grid=(n_tiles,),
            in_specs=in_specs,
            out_specs=pl.BlockSpec((tile, c_pad), lambda i: (i, 0)),
        ),
        compiler_params=pltpu.CompilerParams(
            dimension_semantics=("parallel",),   # batch axis shards across TCs on v7x
            vmem_limit_bytes=32 << 20,           # actual use ~10 MiB; v7x headroom
        ),
    )


def custom_classifier_forward(x, prep, *, batch_tile=None):
    """x: (B, input_dim) float32.  prep: output of prepare_params()."""
    B, d_in = x.shape
    num_classes = prep["num_classes"]
    c_pad = prep["w4"].shape[1]

    tile = _pick_batch_tile(B) if batch_tile is None else batch_tile
    n_tiles = pl.cdiv(B, tile)
    b_pad = n_tiles * tile
    xin = x if b_pad == B else jnp.pad(x, ((0, b_pad - B), (0, 0)))

    args = (xin,
            prep["w1"], prep["b1"],
            prep["w2"], prep["b2"],
            prep["w3"], prep["b3"],
            prep["w4"], prep["b4"])
    wb_shapes = [a.shape for a in args[1:]]

    try:
        out = _build_mlp_call(b_pad, d_in, c_pad, tile, n_tiles, wb_shapes,
                              single_buffer_weights=True)(*args)
    except Exception:
        # pipeline_mode=pl.Buffered(1) not supported by this JAX build; the hint is
        # purely a VMEM optimization, so fall back to default double buffering.
        out = _build_mlp_call(b_pad, d_in, c_pad, tile, n_tiles, wb_shapes,
                              single_buffer_weights=False)(*args)

    return out[:B, :num_classes]


# --------------------------------------------------------------------------- #
# Synthetic params + numerics-matched reference
# --------------------------------------------------------------------------- #
def init_params(key, input_dim=768, hidden_dim=1024, num_classes=10):
    """Deterministic synthetic parameters matching nn.Linear shapes (stored transposed)."""
    dims = [input_dim, hidden_dim, hidden_dim // 2, hidden_dim // 4, num_classes]
    params = {}
    for li in range(4):
        key, kw, kb = jax.random.split(key, 3)
        fan_in, fan_out = dims[li], dims[li + 1]
        scale = 1.0 / jnp.sqrt(fan_in)
        # torch nn.Linear weight is (out, in); we store (in, out) so y = x @ W + b.
        params[f"w{li + 1}"] = jax.random.uniform(
            kw, (fan_in, fan_out), jnp.float32, -scale, scale)
        params[f"b{li + 1}"] = jax.random.uniform(
            kb, (1, fan_out), jnp.float32, -scale, scale)
    return params


def reference_forward(x, prep):
    """Pure-JAX reference with identical casts: bf16 operands, f32 accumulation,
    f32 bias/ReLU, eval-mode dropout (identity)."""
    h = x.astype(jnp.bfloat16)
    for li in (1, 2, 3):
        h = jnp.dot(h, prep[f"w{li}"], preferred_element_type=jnp.float32) + prep[f"b{li}"]
        h = jnp.maximum(h, 0.0).astype(jnp.bfloat16)
    out = jnp.dot(h, prep["w4"], preferred_element_type=jnp.float32) + prep["b4"]
    return out[:, :prep["num_classes"]]


# --------------------------------------------------------------------------- #
if __name__ == "__main__":
    key = jax.random.PRNGKey(0)
    kp, kx = jax.random.split(key)

    input_dim, hidden_dim, num_classes = 768, 1024, 10
    batch = 20   # not a multiple of 8: exercises the batch-padding path

    raw_params = init_params(kp, input_dim, hidden_dim, num_classes)
    prep = prepare_params(raw_params)          # one-time, outside the per-call path
    x = jax.random.normal(kx, (batch, input_dim), jnp.float32)

    out = jax.block_until_ready(custom_classifier_forward(x, prep))

    ref = reference_forward(x, prep)
    assert out.shape == (batch, num_classes), out.shape
    max_err = float(jnp.max(jnp.abs(out - ref)))
    assert jnp.allclose(out, ref, atol=2e-3, rtol=2e-3), max_err

    print("KERNEL_OK")
</pallas_src>

<mosaic_0001>
module attributes {stable_mosaic.version = 11 : i64} {
  func.func @_mlp_kernel(%arg0: i32, %arg1: memref<24x768xf32, #tpu.memory_space<vmem>>, %arg2: memref<768x1024xbf16, #tpu.memory_space<vmem>>, %arg3: memref<1x1024xf32, #tpu.memory_space<vmem>>, %arg4: memref<1024x512xbf16, #tpu.memory_space<vmem>>, %arg5: memref<1x512xf32, #tpu.memory_space<vmem>>, %arg6: memref<512x256xbf16, #tpu.memory_space<vmem>>, %arg7: memref<1x256xf32, #tpu.memory_space<vmem>>, %arg8: memref<256x128xbf16, #tpu.memory_space<vmem>>, %arg9: memref<1x128xf32, #tpu.memory_space<vmem>>, %arg10: memref<24x128xf32, #tpu.memory_space<vmem>>) attributes {dimension_semantics = [#tpu.dimension_semantics<parallel>], iteration_bounds = array<i64: 1>, scalar_prefetch = 0 : i64, scratch_operands = 0 : i64, tpu.core_type = #tpu.core_type<tc>, window_params = [{transform_indices = @transform_0, window_bounds = array<i64: 24, 768>}, {pipeline_mode = #tpu.pipeline_mode<synchronous>, transform_indices = @transform_1, window_bounds = array<i64: 768, 1024>}, {pipeline_mode = #tpu.pipeline_mode<synchronous>, transform_indices = @transform_2, window_bounds = array<i64: 1, 1024>}, {pipeline_mode = #tpu.pipeline_mode<synchronous>, transform_indices = @transform_3, window_bounds = array<i64: 1024, 512>}, {pipeline_mode = #tpu.pipeline_mode<synchronous>, transform_indices = @transform_4, window_bounds = array<i64: 1, 512>}, {pipeline_mode = #tpu.pipeline_mode<synchronous>, transform_indices = @transform_5, window_bounds = array<i64: 512, 256>}, {pipeline_mode = #tpu.pipeline_mode<synchronous>, transform_indices = @transform_6, window_bounds = array<i64: 1, 256>}, {pipeline_mode = #tpu.pipeline_mode<synchronous>, transform_indices = @transform_7, window_bounds = array<i64: 256, 128>}, {pipeline_mode = #tpu.pipeline_mode<synchronous>, transform_indices = @transform_8, window_bounds = array<i64: 1, 128>}, {transform_indices = @transform_9, window_bounds = array<i64: 24, 128>}]} {
    %c0 = arith.constant 0 : index
    %c0_0 = arith.constant 0 : index
    %0 = vector.load %arg1[%c0, %c0_0] : memref<24x768xf32, #tpu.memory_space<vmem>>, vector<24x768xf32>
    %1 = arith.truncf %0 : vector<24x768xf32> to vector<24x768xbf16>
    %c0_1 = arith.constant 0 : index
    %c0_2 = arith.constant 0 : index
    %2 = vector.load %arg2[%c0_1, %c0_2] : memref<768x1024xbf16, #tpu.memory_space<vmem>>, vector<768x1024xbf16>
    %cst = arith.constant dense<0.000000e+00> : vector<24x1024xf32>
    %3 = tpu.matmul %1, %2, %cst {dimension_numbers = #tpu.dot_dimension_numbers<[1], [0], [0], [1], [0, 0, 1, 1], [], []>} : vector<24x768xbf16>, vector<768x1024xbf16>, vector<24x1024xf32> -> vector<24x1024xf32>
    %c0_3 = arith.constant 0 : index
    %c0_4 = arith.constant 0 : index
    %4 = vector.load %arg3[%c0_3, %c0_4] : memref<1x1024xf32, #tpu.memory_space<vmem>>, vector<1x1024xf32>
    %5 = vector.broadcast %4 : vector<1x1024xf32> to vector<24x1024xf32>
    %6 = arith.addf %3, %5 : vector<24x1024xf32>
    %cst_5 = arith.constant 0.000000e+00 : f32
    %7 = vector.broadcast %cst_5 : f32 to vector<24x1024xf32>
    %8 = arith.maximumf %6, %7 : vector<24x1024xf32>
    %9 = arith.truncf %8 : vector<24x1024xf32> to vector<24x1024xbf16>
    %c0_6 = arith.constant 0 : index
    %c0_7 = arith.constant 0 : index
    %10 = vector.load %arg4[%c0_6, %c0_7] : memref<1024x512xbf16, #tpu.memory_space<vmem>>, vector<1024x512xbf16>
    %cst_8 = arith.constant dense<0.000000e+00> : vector<24x512xf32>
    %11 = tpu.matmul %9, %10, %cst_8 {dimension_numbers = #tpu.dot_dimension_numbers<[1], [0], [0], [1], [0, 0, 1, 1], [], []>} : vector<24x1024xbf16>, vector<1024x512xbf16>, vector<24x512xf32> -> vector<24x512xf32>
    %c0_9 = arith.constant 0 : index
    %c0_10 = arith.constant 0 : index
    %12 = vector.load %arg5[%c0_9, %c0_10] : memref<1x512xf32, #tpu.memory_space<vmem>>, vector<1x512xf32>
    %13 = vector.broadcast %12 : vector<1x512xf32> to vector<24x512xf32>
    %14 = arith.addf %11, %13 : vector<24x512xf32>
    %cst_11 = arith.constant 0.000000e+00 : f32
    %15 = vector.broadcast %cst_11 : f32 to vector<24x512xf32>
    %16 = arith.maximumf %14, %15 : vector<24x512xf32>
    %17 = arith.truncf %16 : vector<24x512xf32> to vector<24x512xbf16>
    %c0_12 = arith.constant 0 : index
    %c0_13 = arith.constant 0 : index
    %18 = vector.load %arg6[%c0_12, %c0_13] : memref<512x256xbf16, #tpu.memory_space<vmem>>, vector<512x256xbf16>
    %cst_14 = arith.constant dense<0.000000e+00> : vector<24x256xf32>
    %19 = tpu.matmul %17, %18, %cst_14 {dimension_numbers = #tpu.dot_dimension_numbers<[1], [0], [0], [1], [0, 0, 1, 1], [], []>} : vector<24x512xbf16>, vector<512x256xbf16>, vector<24x256xf32> -> vector<24x256xf32>
    %c0_15 = arith.constant 0 : index
    %c0_16 = arith.constant 0 : index
    %20 = vector.load %arg7[%c0_15, %c0_16] : memref<1x256xf32, #tpu.memory_space<vmem>>, vector<1x256xf32>
    %21 = vector.broadcast %20 : vector<1x256xf32> to vector<24x256xf32>
    %22 = arith.addf %19, %21 : vector<24x256xf32>
    %cst_17 = arith.constant 0.000000e+00 : f32
    %23 = vector.broadcast %cst_17 : f32 to vector<24x256xf32>
    %24 = arith.maximumf %22, %23 : vector<24x256xf32>
    %25 = arith.truncf %24 : vector<24x256xf32> to vector<24x256xbf16>
    %c0_18 = arith.constant 0 : index
    %c0_19 = arith.constant 0 : index
    %26 = vector.load %arg8[%c0_18, %c0_19] : memref<256x128xbf16, #tpu.memory_space<vmem>>, vector<256x128xbf16>
    %cst_20 = arith.constant dense<0.000000e+00> : vector<24x128xf32>
    %27 = tpu.matmul %25, %26, %cst_20 {dimension_numbers = #tpu.dot_dimension_numbers<[1], [0], [0], [1], [0, 0, 1, 1], [], []>} : vector<24x256xbf16>, vector<256x128xbf16>, vector<24x128xf32> -> vector<24x128xf32>
    %c0_21 = arith.constant 0 : index
    %c0_22 = arith.constant 0 : index
    %28 = vector.load %arg9[%c0_21, %c0_22] : memref<1x128xf32, #tpu.memory_space<vmem>>, vector<1x128xf32>
    %29 = vector.broadcast %28 : vector<1x128xf32> to vector<24x128xf32>
    %30 = arith.addf %27, %29 : vector<24x128xf32>
    %c0_23 = arith.constant 0 : index
    %c0_24 = arith.constant 0 : index
    %31 = vector.load %arg10[%c0_23, %c0_24] : memref<24x128xf32, #tpu.memory_space<vmem>>, vector<24x128xf32>
    tpu.vector_store %arg10[%c0_23, %c0_24], %30 {strides = array<i32>} : memref<24x128xf32, #tpu.memory_space<vmem>>, vector<24x128xf32>,
    return
  }
  func.func @transform_0(%arg0: i32) -> (i32, i32) {
    %c0_i32 = arith.constant 0 : i32
    %c0_i32_0 = arith.constant 0 : i32
    return %arg0, %c0_i32 : i32, i32
  }
  func.func @transform_1(%arg0: i32) -> (i32, i32) {
    %c0_i32 = arith.constant 0 : i32
    %c0_i32_0 = arith.constant 0 : i32
    %c0_i32_1 = arith.constant 0 : i32
    return %c0_i32, %c0_i32_0 : i32, i32
  }
  func.func @transform_2(%arg0: i32) -> (i32, i32) {
    %c0_i32 = arith.constant 0 : i32
    %c0_i32_0 = arith.constant 0 : i32
    %c0_i32_1 = arith.constant 0 : i32
    return %c0_i32, %c0_i32_0 : i32, i32
  }
  func.func @transform_3(%arg0: i32) -> (i32, i32) {
    %c0_i32 = arith.constant 0 : i32
    %c0_i32_0 = arith.constant 0 : i32
    %c0_i32_1 = arith.constant 0 : i32
    return %c0_i32, %c0_i32_0 : i32, i32
  }
  func.func @transform_4(%arg0: i32) -> (i32, i32) {
    %c0_i32 = arith.constant 0 : i32
    %c0_i32_0 = arith.constant 0 : i32
    %c0_i32_1 = arith.constant 0 : i32
    return %c0_i32, %c0_i32_0 : i32, i32
  }
  func.func @transform_5(%arg0: i32) -> (i32, i32) {
    %c0_i32 = arith.constant 0 : i32
    %c0_i32_0 = arith.constant 0 : i32
    %c0_i32_1 = arith.constant 0 : i32
    return %c0_i32, %c0_i32_0 : i32, i32
  }
  func.func @transform_6(%arg0: i32) -> (i32, i32) {
    %c0_i32 = arith.constant 0 : i32
    %c0_i32_0 = arith.constant 0 : i32
    %c0_i32_1 = arith.constant 0 : i32
    return %c0_i32, %c0_i32_0 : i32, i32
  }
  func.func @transform_7(%arg0: i32) -> (i32, i32) {
    %c0_i32 = arith.constant 0 : i32
    %c0_i32_0 = arith.constant 0 : i32
    %c0_i32_1 = arith.constant 0 : i32
    return %c0_i32, %c0_i32_0 : i32, i32
  }
  func.func @transform_8(%arg0: i32) -> (i32, i32) {
    %c0_i32 = arith.constant 0 : i32
    %c0_i32_0 = arith.constant 0 : i32
    %c0_i32_1 = arith.constant 0 : i32
    return %c0_i32, %c0_i32_0 : i32, i32
  }
  func.func @transform_9(%arg0: i32) -> (i32, i32) {
    %c0_i32 = arith.constant 0 : i32
    %c0_i32_0 = arith.constant 0 : i32
    return %arg0, %c0_i32 : i32, i32
  }
}

module attributes {stable_mosaic.version = 11 : i64} {
  func.func @_mlp_kernel(%arg0: i32, %arg1: memref<24x768xf32, #tpu.memory_space<vmem>>, %arg2: memref<768x1024xbf16, #tpu.memory_space<vmem>>, %arg3: memref<1x1024xf32, #tpu.memory_space<vmem>>, %arg4: memref<1024x512xbf16, #tpu.memory_space<vmem>>, %arg5: memref<1x512xf32, #tpu.memory_space<vmem>>, %arg6: memref<512x256xbf16, #tpu.memory_space<vmem>>, %arg7: memref<1x256xf32, #tpu.memory_space<vmem>>, %arg8: memref<256x128xbf16, #tpu.memory_space<vmem>>, %arg9: memref<1x128xf32, #tpu.memory_space<vmem>>, %arg10: memref<24x128xf32, #tpu.memory_space<vmem>>) attributes {dimension_semantics = [#tpu.dimension_semantics<parallel>], iteration_bounds = array<i64: 1>, scalar_prefetch = 0 : i64, scratch_operands = 0 : i64, tpu.core_type = #tpu.core_type<tc>, window_params = [{transform_indices = @transform_0, window_bounds = array<i64: 24, 768>}, {pipeline_mode = #tpu.pipeline_mode<synchronous>, transform_indices = @transform_1, window_bounds = array<i64: 768, 1024>}, {pipeline_mode = #tpu.pipeline_mode<synchronous>, transform_indices = @transform_2, window_bounds = array<i64: 1, 1024>}, {pipeline_mode = #tpu.pipeline_mode<synchronous>, transform_indices = @transform_3, window_bounds = array<i64: 1024, 512>}, {pipeline_mode = #tpu.pipeline_mode<synchronous>, transform_indices = @transform_4, window_bounds = array<i64: 1, 512>}, {pipeline_mode = #tpu.pipeline_mode<synchronous>, transform_indices = @transform_5, window_bounds = array<i64: 512, 256>}, {pipeline_mode = #tpu.pipeline_mode<synchronous>, transform_indices = @transform_6, window_bounds = array<i64: 1, 256>}, {pipeline_mode = #tpu.pipeline_mode<synchronous>, transform_indices = @transform_7, window_bounds = array<i64: 256, 128>}, {pipeline_mode = #tpu.pipeline_mode<synchronous>, transform_indices = @transform_8, window_bounds = array<i64: 1, 128>}, {transform_indices = @transform_9, window_bounds = array<i64: 24, 128>}]} {
    %c0 = arith.constant 0 : index
    %c0_0 = arith.constant 0 : index
    %0 = vector.load %arg1[%c0, %c0_0] : memref<24x768xf32, #tpu.memory_space<vmem>>, vector<24x768xf32>
    %1 = arith.truncf %0 : vector<24x768xf32> to vector<24x768xbf16>
    %c0_1 = arith.constant 0 : index
    %c0_2 = arith.constant 0 : index
    %2 = vector.load %arg2[%c0_1, %c0_2] : memref<768x1024xbf16, #tpu.memory_space<vmem>>, vector<768x1024xbf16>
    %cst = arith.constant dense<0.000000e+00> : vector<24x1024xf32>
    %3 = tpu.matmul %1, %2, %cst {dimension_numbers = #tpu.dot_dimension_numbers<[1], [0], [0], [1], [0, 0, 1, 1], [], []>} : vector<24x768xbf16>, vector<768x1024xbf16>, vector<24x1024xf32> -> vector<24x1024xf32>
    %c0_3 = arith.constant 0 : index
    %c0_4 = arith.constant 0 : index
    %4 = vector.load %arg3[%c0_3, %c0_4] : memref<1x1024xf32, #tpu.memory_space<vmem>>, vector<1x1024xf32>
    %5 = vector.broadcast %4 : vector<1x1024xf32> to vector<24x1024xf32>
    %6 = arith.addf %3, %5 : vector<24x1024xf32>
    %cst_5 = arith.constant 0.000000e+00 : f32
    %7 = vector.broadcast %cst_5 : f32 to vector<24x1024xf32>
    %8 = arith.maximumf %6, %7 : vector<24x1024xf32>
    %9 = arith.truncf %8 : vector<24x1024xf32> to vector<24x1024xbf16>
    %c0_6 = arith.constant 0 : index
    %c0_7 = arith.constant 0 : index
    %10 = vector.load %arg4[%c0_6, %c0_7] : memref<1024x512xbf16, #tpu.memory_space<vmem>>, vector<1024x512xbf16>
    %cst_8 = arith.constant dense<0.000000e+00> : vector<24x512xf32>
    %11 = tpu.matmul %9, %10, %cst_8 {dimension_numbers = #tpu.dot_dimension_numbers<[1], [0], [0], [1], [0, 0, 1, 1], [], []>} : vector<24x1024xbf16>, vector<1024x512xbf16>, vector<24x512xf32> -> vector<24x512xf32>
    %c0_9 = arith.constant 0 : index
    %c0_10 = arith.constant 0 : index
    %12 = vector.load %arg5[%c0_9, %c0_10] : memref<1x512xf32, #tpu.memory_space<vmem>>, vector<1x512xf32>
    %13 = vector.broadcast %12 : vector<1x512xf32> to vector<24x512xf32>
    %14 = arith.addf %11, %13 : vector<24x512xf32>
    %cst_11 = arith.constant 0.000000e+00 : f32
    %15 = vector.broadcast %cst_11 : f32 to vector<24x512xf32>
    %16 = arith.maximumf %14, %15 : vector<24x512xf32>
    %17 = arith.truncf %16 : vector<24x512xf32> to vector<24x512xbf16>
    %c0_12 = arith.constant 0 : index
    %c0_13 = arith.constant 0 : index
    %18 = vector.load %arg6[%c0_12, %c0_13] : memref<512x256xbf16, #tpu.memory_space<vmem>>, vector<512x256xbf16>
    %cst_14 = arith.constant dense<0.000000e+00> : vector<24x256xf32>
    %19 = tpu.matmul %17, %18, %cst_14 {dimension_numbers = #tpu.dot_dimension_numbers<[1], [0], [0], [1], [0, 0, 1, 1], [], []>} : vector<24x512xbf16>, vector<512x256xbf16>, vector<24x256xf32> -> vector<24x256xf32>
    %c0_15 = arith.constant 0 : index
    %c0_16 = arith.constant 0 : index
    %20 = vector.load %arg7[%c0_15, %c0_16] : memref<1x256xf32, #tpu.memory_space<vmem>>, vector<1x256xf32>
    %21 = vector.broadcast %20 : vector<1x256xf32> to vector<24x256xf32>
    %22 = arith.addf %19, %21 : vector<24x256xf32>
    %cst_17 = arith.constant 0.000000e+00 : f32
    %23 = vector.broadcast %cst_17 : f32 to vector<24x256xf32>
    %24 = arith.maximumf %22, %23 : vector<24x256xf32>
    %25 = arith.truncf %24 : vector<24x256xf32> to vector<24x256xbf16>
    %c0_18 = arith.constant 0 : index
    %c0_19 = arith.constant 0 : index
    %26 = vector.load %arg8[%c0_18, %c0_19] : memref<256x128xbf16, #tpu.memory_space<vmem>>, vector<256x128xbf16>
    %cst_20 = arith.constant dense<0.000000e+00> : vector<24x128xf32>
    %27 = tpu.matmul %25, %26, %cst_20 {dimension_numbers = #tpu.dot_dimension_numbers<[1], [0], [0], [1], [0, 0, 1, 1], [], []>} : vector<24x256xbf16>, vector<256x128xbf16>, vector<24x128xf32> -> vector<24x128xf32>
    %c0_21 = arith.constant 0 : index
    %c0_22 = arith.constant 0 : index
    %28 = vector.load %arg9[%c0_21, %c0_22] : memref<1x128xf32, #tpu.memory_space<vmem>>, vector<1x128xf32>
    %29 = vector.broadcast %28 : vector<1x128xf32> to vector<24x128xf32>
    %30 = arith.addf %27, %29 : vector<24x128xf32>
    %c0_23 = arith.constant 0 : index
    %c0_24 = arith.constant 0 : index
    %31 = vector.load %arg10[%c0_23, %c0_24] : memref<24x128xf32, #tpu.memory_space<vmem>>, vector<24x128xf32>
    tpu.vector_store %arg10[%c0_23, %c0_24], %30 {strides = array<i32>} : memref<24x128xf32, #tpu.memory_space<vmem>>, vector<24x128xf32>,
    return
  }
  func.func @transform_0(%arg0: i32) -> (i32, i32) {
    %c0_i32 = arith.constant 0 : i32
    %c0_i32_0 = arith.constant 0 : i32
    return %arg0, %c0_i32 : i32, i32
  }
  func.func @transform_1(%arg0: i32) -> (i32, i32) {
    %c0_i32 = arith.constant 0 : i32
    %c0_i32_0 = arith.constant 0 : i32
    %c0_i32_1 = arith.constant 0 : i32
    return %c0_i32, %c0_i32_0 : i32, i32
  }
  func.func @transform_2(%arg0: i32) -> (i32, i32) {
    %c0_i32 = arith.constant 0 : i32
    %c0_i32_0 = arith.constant 0 : i32
    %c0_i32_1 = arith.constant 0 : i32
    return %c0_i32, %c0_i32_0 : i32, i32
  }
  func.func @transform_3(%arg0: i32) -> (i32, i32) {
    %c0_i32 = arith.constant 0 : i32
    %c0_i32_0 = arith.constant 0 : i32
    %c0_i32_1 = arith.constant 0 : i32
    return %c0_i32, %c0_i32_0 : i32, i32
  }
  func.func @transform_4(%arg0: i32) -> (i32, i32) {
    %c0_i32 = arith.constant 0 : i32
    %c0_i32_0 = arith.constant 0 : i32
    %c0_i32_1 = arith.constant 0 : i32
    return %c0_i32, %c0_i32_0 : i32, i32
  }
  func.func @transform_5(%arg0: i32) -> (i32, i32) {
    %c0_i32 = arith.constant 0 : i32
    %c0_i32_0 = arith.constant 0 : i32
    %c0_i32_1 = arith.constant 0 : i32
    return %c0_i32, %c0_i32_0 : i32, i32
  }
  func.func @transform_6(%arg0: i32) -> (i32, i32) {
    %c0_i32 = arith.constant 0 : i32
    %c0_i32_0 = arith.constant 0 : i32
    %c0_i32_1 = arith.constant 0 : i32
    return %c0_i32, %c0_i32_0 : i32, i32
  }
  func.func @transform_7(%arg0: i32) -> (i32, i32) {
    %c0_i32 = arith.constant 0 : i32
    %c0_i32_0 = arith.constant 0 : i32
    %c0_i32_1 = arith.constant 0 : i32
    return %c0_i32, %c0_i32_0 : i32, i32
  }
  func.func @transform_8(%arg0: i32) -> (i32, i32) {
    %c0_i32 = arith.constant 0 : i32
    %c0_i32_0 = arith.constant 0 : i32
    %c0_i32_1 = arith.constant 0 : i32
    return %c0_i32, %c0_i32_0 : i32, i32
  }
  func.func @transform_9(%arg0: i32) -> (i32, i32) {
    %c0_i32 = arith.constant 0 : i32
    %c0_i32_0 = arith.constant 0 : i32
    return %arg0, %c0_i32 : i32, i32
  }
}

</mosaic_0001>

<llo_original>
// kernel: tpu_custom_call.1
$region0: #{tpu_custom_call.1}
  #allocation0 [shape = 'u32[]', space=smem, size = 0x4, offset = 0x4, fixed_abs, tag = 'smem constant byte address 0x4 - core index']
  #allocation1 [shape = 'u32[144,128]{1,0:T(1,128)}', space=vmem, size = 0x12000, scoped, tag = 'internal scratch']
  %s0 = inlined_call_operand.hbm [shape: f32[24,768], index: 0, kind: input, shape index: {}]
  %s1 = inlined_call_operand.hbm [shape: bf16[768,1024], index: 1, kind: input, shape index: {}]
  %s2 = inlined_call_operand.hbm [shape: f32[1,1024], index: 2, kind: input, shape index: {}]
  %s3 = inlined_call_operand.hbm [shape: bf16[1024,512], index: 3, kind: input, shape index: {}]
  %s4 = inlined_call_operand.hbm [shape: f32[1,512], index: 4, kind: input, shape index: {}]
  %s5 = inlined_call_operand.hbm [shape: bf16[512,256], index: 5, kind: input, shape index: {}]
  %s6 = inlined_call_operand.hbm [shape: f32[1,256], index: 6, kind: input, shape index: {}]
  %s7 = inlined_call_operand.hbm [shape: bf16[256,128], index: 7, kind: input, shape index: {}]
  %s8 = inlined_call_operand.hbm [shape: f32[1,128], index: 8, kind: input, shape index: {}]
  %s9 = inlined_call_operand.hbm [shape: f32[24,128], index: 9, kind: output, shape index: {}]
  %s10 = sld [smem:[#allocation0]]
  $region82: #{tpu_custom_call.1} parent=0
    _
  %s12 = ssub.s32 1, %s10
  %s13 = scalar_select 0, %s12, %s10
  $region1: #{tpu_custom_call.1} parent=0
    #allocation2 [shape = 'u8[73728]{0}', space=vmem, size = 0x12000, scoped, tag = 'input window, operand 0, single buffered']
    #allocation3 [shape = 's32[1]{0}', space=sflag, size = 0x4, scoped, tag = 'scoped memory for tpu_custom_call.1']
    #allocation4 [shape = 's32[1]{0}', space=sflag, size = 0x4, scoped, tag = 'scoped memory for tpu_custom_call.1']
    #allocation5 [shape = 'u8[1572864]{0}', space=vmem, size = 0x180000, scoped, tag = 'input window, operand 1, single buffered']
    #allocation6 [shape = 's32[1]{0}', space=sflag, size = 0x4, scoped, tag = 'scoped memory for tpu_custom_call.1']
    #allocation7 [shape = 'u8[4096]{0}', space=vmem, size = 0x1000, scoped, tag = 'input window, operand 2, single buffered']
    #allocation8 [shape = 'u8[1048576]{0}', space=vmem, size = 0x100000, scoped, tag = 'input window, operand 3, single buffered']
    #allocation9 [shape = 's32[1]{0}', space=sflag, size = 0x4, scoped, tag = 'scoped memory for tpu_custom_call.1']
    #allocation10 [shape = 'u8[2048]{0}', space=vmem, size = 0x800, scoped, tag = 'input window, operand 4, single buffered']
    #allocation11 [shape = 'u8[262144]{0}', space=vmem, size = 0x40000, scoped, tag = 'input window, operand 5, single buffered']
    #allocation12 [shape = 's32[1]{0}', space=sflag, size = 0x4, scoped, tag = 'scoped memory for tpu_custom_call.1']
    #allocation13 [shape = 'u8[1024]{0}', space=vmem, size = 0x400, scoped, tag = 'input window, operand 6, single buffered']
    #allocation14 [shape = 'u8[65536]{0}', space=vmem, size = 0x10000, scoped, tag = 'input window, operand 7, single buffered']
    #allocation15 [shape = 's32[1]{0}', space=sflag, size = 0x4, scoped, tag = 'scoped memory for tpu_custom_call.1']
    #allocation16 [shape = 'u8[512]{0}', space=vmem, size = 0x400, scoped, tag = 'input window, operand 8, single buffered']
    #allocation17 [shape = 'u8[12288]{0}', space=vmem, size = 0x3000, scoped, tag = 'output window, operand 0, single buffered']
    %14 = vsyncpa [#allocation3], 0
    %15 = vsyncpa [#allocation6], 0
    %16 = vsyncpa [#allocation9], 0
    %17 = vsyncpa [#allocation12], 0
    %18 = vsyncpa [#allocation15], 0
    %19 = vsyncpa [#allocation4], 0
    // Predicated region
    $region2: #{tpu_custom_call.1} parent=1 // pred_check
      _
    $region3: #{tpu_custom_call.1} parent=1 // pred_check_branch
      %21 = sbr.rel (0) target = $region5
    $region4: #{tpu_custom_call.1} parent=1 // pred_region
      %s23 = ssub.s32 2304, 2304
      %24 = vsyncadd [#allocation3], %s23
      %s25 = sshll.u32 [#allocation2], 4
      %s26 = int_to_ptr.vmem [resolvable:$true] %s25
      %31 = dma.hbm_to_vmem [thread:$0]  %s0, 2304, %s26, [#allocation3], 768, 768, 48
    $region5: #{tpu_custom_call.1} parent=1 // pred_fallthru
      _
    // Predicated region
    $region6: #{tpu_custom_call.1} parent=1 // pred_check
      _
    $region7: #{tpu_custom_call.1} parent=1 // pred_check_branch
      %33 = sbr.rel (0) target = $region9
    $region8: #{tpu_custom_call.1} parent=1 // pred_region
      %s35 = ssub.s32 49152, 49152
      %36 = vsyncadd [#allocation6], %s35
      %s37 = sshll.u32 [#allocation5], 4
      %s38 = int_to_ptr.vmem [resolvable:$true] %s37
      %43 = dma.hbm_to_vmem [thread:$0]  %s1, 49152, %s38, [#allocation6], 512, 512, 32
    $region9: #{tpu_custom_call.1} parent=1 // pred_fallthru
      _
    // Predicated region
    $region10: #{tpu_custom_call.1} parent=1 // pred_check
      _
    $region11: #{tpu_custom_call.1} parent=1 // pred_check_branch
      %45 = sbr.rel (0) target = $region13
    $region12: #{tpu_custom_call.1} parent=1 // pred_region
      %s47 = ssub.s32 128, 128
      %48 = vsyncadd [#allocation6], %s47
      %s50 = sshll.u32 [#allocation7], 4
      %s51 = int_to_ptr.vmem [resolvable:$true] %s50
      %53 = dma.hbm_to_vmem [thread:$0]  %s2, 128, %s51, [#allocation6]
    $region13: #{tpu_custom_call.1} parent=1 // pred_fallthru
      _
    // Predicated region
    $region14: #{tpu_custom_call.1} parent=1 // pred_check
      _
    $region15: #{tpu_custom_call.1} parent=1 // pred_check_branch
      %55 = sbr.rel (0) target = $region17
    $region16: #{tpu_custom_call.1} parent=1 // pred_region
      %s57 = ssub.s32 32768, 32768
      %58 = vsyncadd [#allocation9], %s57
      %s59 = sshll.u32 [#allocation8], 4
      %s60 = int_to_ptr.vmem [resolvable:$true] %s59
      %65 = dma.hbm_to_vmem [thread:$0]  %s3, 32768, %s60, [#allocation9], 256, 256, 16
    $region17: #{tpu_custom_call.1} parent=1 // pred_fallthru
      _
    // Predicated region
    $region18: #{tpu_custom_call.1} parent=1 // pred_check
      _
    $region19: #{tpu_custom_call.1} parent=1 // pred_check_branch
      %67 = sbr.rel (0) target = $region21
    $region20: #{tpu_custom_call.1} parent=1 // pred_region
      %s69 = ssub.s32 64, 64
      %70 = vsyncadd [#allocation9], %s69
      %s72 = sshll.u32 [#allocation10], 4
      %s73 = int_to_ptr.vmem [resolvable:$true] %s72
      %75 = dma.hbm_to_vmem [thread:$0]  %s4, 64, %s73, [#allocation9]
    $region21: #{tpu_custom_call.1} parent=1 // pred_fallthru
      _
    // Predicated region
    $region22: #{tpu_custom_call.1} parent=1 // pred_check
      _
    $region23: #{tpu_custom_call.1} parent=1 // pred_check_branch
      %77 = sbr.rel (0) target = $region25
    $region24: #{tpu_custom_call.1} parent=1 // pred_region
      %s79 = ssub.s32 8192, 8192
      %80 = vsyncadd [#allocation12], %s79
      %s81 = sshll.u32 [#allocation11], 4
      %s82 = int_to_ptr.vmem [resolvable:$true] %s81
      %87 = dma.hbm_to_vmem [thread:$0]  %s5, 8192, %s82, [#allocation12], 128, 128, 8
    $region25: #{tpu_custom_call.1} parent=1 // pred_fallthru
      _
    // Predicated region
    $region26: #{tpu_custom_call.1} parent=1 // pred_check
      _
    $region27: #{tpu_custom_call.1} parent=1 // pred_check_branch
      %89 = sbr.rel (0) target = $region29
    $region28: #{tpu_custom_call.1} parent=1 // pred_region
      %s91 = ssub.s32 32, 32
      %92 = vsyncadd [#allocation12], %s91
      %s94 = sshll.u32 [#allocation13], 4
      %s95 = int_to_ptr.vmem [resolvable:$true] %s94
      %97 = dma.hbm_to_vmem [thread:$0]  %s6, 32, %s95, [#allocation12]
    $region29: #{tpu_custom_call.1} parent=1 // pred_fallthru
      _
    // Predicated region
    $region30: #{tpu_custom_call.1} parent=1 // pred_check
      _
    $region31: #{tpu_custom_call.1} parent=1 // pred_check_branch
      %99 = sbr.rel (0) target = $region33
    $region32: #{tpu_custom_call.1} parent=1 // pred_region
      %s101 = ssub.s32 2048, 2048
      %102 = vsyncadd [#allocation15], %s101
      %s103 = sshll.u32 [#allocation14], 4
      %s104 = int_to_ptr.vmem [resolvable:$true] %s103
      %109 = dma.hbm_to_vmem [thread:$0]  %s7, 2048, %s104, [#allocation15], 64, 64, 4
    $region33: #{tpu_custom_call.1} parent=1 // pred_fallthru
      _
    // Predicated region
    $region34: #{tpu_custom_call.1} parent=1 // pred_check
      _
    $region35: #{tpu_custom_call.1} parent=1 // pred_check_branch
      %111 = sbr.rel (0) target = $region37
    $region36: #{tpu_custom_call.1} parent=1 // pred_region
      %s113 = ssub.s32 16, 16
      %114 = vsyncadd [#allocation15], %s113
      %s116 = sshll.u32 [#allocation16], 4
      %s117 = int_to_ptr.vmem [resolvable:$true] %s116
      %119 = dma.hbm_to_vmem [thread:$0]  %s8, 16, %s117, [#allocation15]
    $region37: #{tpu_custom_call.1} parent=1 // pred_fallthru
      _
    // Predicated region
    $region38: #{tpu_custom_call.1} parent=1 // pred_check
      _
    $region39: #{tpu_custom_call.1} parent=1 // pred_check_branch
      %121 = sbr.rel (0) target = $region41
    $region40: #{tpu_custom_call.1} parent=1 // pred_region
      %122 = dma.done [#allocation3], 2304
    $region41: #{tpu_custom_call.1} parent=1 // pred_fallthru
      _
    // Predicated region
    $region42: #{tpu_custom_call.1} parent=1 // pred_check
      _
    $region43: #{tpu_custom_call.1} parent=1 // pred_check_branch
      %124 = sbr.rel (0) target = $region45
    $region44: #{tpu_custom_call.1} parent=1 // pred_region
      %125 = dma.done [#allocation6], 49152
    $region45: #{tpu_custom_call.1} parent=1 // pred_fallthru
      _
    // Predicated region
    $region46: #{tpu_custom_call.1} parent=1 // pred_check
      _
    $region47: #{tpu_custom_call.1} parent=1 // pred_check_branch
      %127 = sbr.rel (0) target = $region49
    $region48: #{tpu_custom_call.1} parent=1 // pred_region
      %128 = dma.done [#allocation6], 128
    $region49: #{tpu_custom_call.1} parent=1 // pred_fallthru
      _
    // Predicated region
    $region50: #{tpu_custom_call.1} parent=1 // pred_check
      _
    $region51: #{tpu_custom_call.1} parent=1 // pred_check_branch
      %130 = sbr.rel (0) target = $region53
    $region52: #{tpu_custom_call.1} parent=1 // pred_region
      %131 = dma.done [#allocation9], 32768
    $region53: #{tpu_custom_call.1} parent=1 // pred_fallthru
      _
    // Predicated region
    $region54: #{tpu_custom_call.1} parent=1 // pred_check
      _
    $region55: #{tpu_custom_call.1} parent=1 // pred_check_branch
      %133 = sbr.rel (0) target = $region57
    $region56: #{tpu_custom_call.1} parent=1 // pred_region
      %134 = dma.done [#allocation9], 64
    $region57: #{tpu_custom_call.1} parent=1 // pred_fallthru
      _
    // Predicated region
    $region58: #{tpu_custom_call.1} parent=1 // pred_check
      _
    $region59: #{tpu_custom_call.1} parent=1 // pred_check_branch
      %136 = sbr.rel (0) target = $region61
    $region60: #{tpu_custom_call.1} parent=1 // pred_region
      %137 = dma.done [#allocation12], 8192
    $region61: #{tpu_custom_call.1} parent=1 // pred_fallthru
      _
    // Predicated region
    $region62: #{tpu_custom_call.1} parent=1 // pred_check
      _
    $region63: #{tpu_custom_call.1} parent=1 // pred_check_branch
      %139 = sbr.rel (0) target = $region65
    $region64: #{tpu_custom_call.1} parent=1 // pred_region
      %140 = dma.done [#allocation12], 32
    $region65: #{tpu_custom_call.1} parent=1 // pred_fallthru
      _
    // Predicated region
    $region66: #{tpu_custom_call.1} parent=1 // pred_check
      _
    $region67: #{tpu_custom_call.1} parent=1 // pred_check_branch
      %142 = sbr.rel (0) target = $region69
    $region68: #{tpu_custom_call.1} parent=1 // pred_region
      %143 = dma.done [#allocation15], 2048
    $region69: #{tpu_custom_call.1} parent=1 // pred_fallthru
      _
    // Predicated region
    $region70: #{tpu_custom_call.1} parent=1 // pred_check
      _
    $region71: #{tpu_custom_call.1} parent=1 // pred_check_branch
      %145 = sbr.rel (0) target = $region73
    $region72: #{tpu_custom_call.1} parent=1 // pred_region
      %146 = dma.done [#allocation15], 16
    $region73: #{tpu_custom_call.1} parent=1 // pred_fallthru
      _
    %v148 = vld [vmem:[#allocation2] sm:$0xff]
    %v149 = vld [vmem:[#allocation2 + $0x8] sm:$0xff]
    %v150 = vld [vmem:[#allocation2 + $0x10] sm:$0xff]
    %v151 = vld [vmem:[#allocation2 + $0x18] sm:$0xff]
    %v152 = vld [vmem:[#allocation2 + $0x20] sm:$0xff]
    %v153 = vld [vmem:[#allocation2 + $0x28] sm:$0xff]
    %v154 = vld [vmem:[#allocation2 + $0x30] sm:$0xff]
    %v155 = vld [vmem:[#allocation2 + $0x38] sm:$0xff]
    %v156 = vld [vmem:[#allocation2 + $0x40] sm:$0xff]
    %v157 = vld [vmem:[#allocation2 + $0x48] sm:$0xff]
    %v158 = vld [vmem:[#allocation2 + $0x50] sm:$0xff]
    %v159 = vld [vmem:[#allocation2 + $0x58] sm:$0xff]
    %v160 = vld [vmem:[#allocation2 + $0x60] sm:$0xff]
    %v161 = vld [vmem:[#allocation2 + $0x68] sm:$0xff]
    %v162 = vld [vmem:[#allocation2 + $0x70] sm:$0xff]
    %v163 = vld [vmem:[#allocation2 + $0x78] sm:$0xff]
    %v164 = vld [vmem:[#allocation2 + $0x80] sm:$0xff]
    %v165 = vld [vmem:[#allocation2 + $0x88] sm:$0xff]
    %v166 = vpack.c.bf16 %v154, %v148
    %v167 = vpack.c.bf16 %v155, %v149
    %v168 = vpack.c.bf16 %v156, %v150
    %v169 = vpack.c.bf16 %v157, %v151
    %v170 = vpack.c.bf16 %v158, %v152
    %v171 = vpack.c.bf16 %v159, %v153
    %v172 = vpack.c.bf16 %v160, %v160
    %v173 = vpack.c.bf16 %v161, %v161
    %v174 = vpack.c.bf16 %v162, %v162
    %v175 = vpack.c.bf16 %v163, %v163
    %v176 = vpack.c.bf16 %v164, %v164
    %v177 = vpack.c.bf16 %v165, %v165
    %v178 = vld [vmem:[#allocation5] sm:$0xff]
    %v179 = vld [vmem:[#allocation5 + $0x8] sm:$0xff]
    %v180 = vld [vmem:[#allocation5 + $0x10] sm:$0xff]
    %v181 = vld [vmem:[#allocation5 + $0x18] sm:$0xff]
    %v182 = vld [vmem:[#allocation5 + $0x20] sm:$0xff]
    %v183 = vld [vmem:[#allocation5 + $0x28] sm:$0xff]
    %v184 = vld [vmem:[#allocation5 + $0x30] sm:$0xff]
    %v185 = vld [vmem:[#allocation5 + $0x38] sm:$0xff]
    %v186 = vld [vmem:[#allocation5 + $0x40] sm:$0xff]
    %v187 = vld [vmem:[#allocation5 + $0x48] sm:$0xff]
    %v188 = vld [vmem:[#allocation5 + $0x50] sm:$0xff]
    %v189 = vld [vmem:[#allocation5 + $0x58] sm:$0xff]
    %v190 = vld [vmem:[#allocation5 + $0x60] sm:$0xff]
    %v191 = vld [vmem:[#allocation5 + $0x68] sm:$0xff]
    %v192 = vld [vmem:[#allocation5 + $0x70] sm:$0xff]
    %v193 = vld [vmem:[#allocation5 + $0x78] sm:$0xff]
    %v194 = vld [vmem:[#allocation5 + $0x80] sm:$0xff]
    %v195 = vld [vmem:[#allocation5 + $0x88] sm:$0xff]
    %v196 = vld [vmem:[#allocation5 + $0x90] sm:$0xff]
    %v197 = vld [vmem:[#allocation5 + $0x98] sm:$0xff]
    %v198 = vld [vmem:[#allocation5 + $0xa0] sm:$0xff]
    %v199 = vld [vmem:[#allocation5 + $0xa8] sm:$0xff]
    %v200 = vld [vmem:[#allocation5 + $0xb0] sm:$0xff]
    %v201 = vld [vmem:[#allocation5 + $0xb8] sm:$0xff]
    %v202 = vld [vmem:[#allocation5 + $0xc0] sm:$0xff]
    %v203 = vld [vmem:[#allocation5 + $0xc8] sm:$0xff]
    %v204 = vld [vmem:[#allocation5 + $0xd0] sm:$0xff]
    %v205 = vld [vmem:[#allocation5 + $0xd8] sm:$0xff]
    %v206 = vld [vmem:[#allocation5 + $0xe0] sm:$0xff]
    %v207 = vld [vmem:[#allocation5 + $0xe8] sm:$0xff]
    %v208 = vld [vmem:[#allocation5 + $0xf0] sm:$0xff]
    %v209 = vld [vmem:[#allocation5 + $0xf8] sm:$0xff]
    %v210 = vld [vmem:[#allocation5 + $0x100] sm:$0xff]
    %v211 = vld [vmem:[#allocation5 + $0x108] sm:$0xff]
    %v212 = vld [vmem:[#allocation5 + $0x110] sm:$0xff]
    %v213 = vld [vmem:[#allocation5 + $0x118] sm:$0xff]
    %v214 = vld [vmem:[#allocation5 + $0x120] sm:$0xff]
    %v215 = vld [vmem:[#allocation5 + $0x128] sm:$0xff]
    %v216 = vld [vmem:[#allocation5 + $0x130] sm:$0xff]
    %v217 = vld [vmem:[#allocation5 + $0x138] sm:$0xff]
    %v218 = vld [vmem:[#allocation5 + $0x140] sm:$0xff]
    %v219 = vld [vmem:[#allocation5 + $0x148] sm:$0xff]
    %v220 = vld [vmem:[#allocation5 + $0x150] sm:$0xff]
    %v221 = vld [vmem:[#allocation5 + $0x158] sm:$0xff]
    %v222 = vld [vmem:[#allocation5 + $0x160] sm:$0xff]
    %v223 = vld [vmem:[#allocation5 + $0x168] sm:$0xff]
    %v224 = vld [vmem:[#allocation5 + $0x170] sm:$0xff]
    %v225 = vld [vmem:[#allocation5 + $0x178] sm:$0xff]
    %v226 = vld [vmem:[#allocation5 + $0x180] sm:$0xff]
    %v227 = vld [vmem:[#allocation5 + $0x188] sm:$0xff]
    %v228 = vld [vmem:[#allocation5 + $0x190] sm:$0xff]
    %v229 = vld [vmem:[#allocation5 + $0x198] sm:$0xff]
    %v230 = vld [vmem:[#allocation5 + $0x1a0] sm:$0xff]
    %v231 = vld [vmem:[#allocation5 + $0x1a8] sm:$0xff]
    %v232 = vld [vmem:[#allocation5 + $0x1b0] sm:$0xff]
    %v233 = vld [vmem:[#allocation5 + $0x1b8] sm:$0xff]
    %v234 = vld [vmem:[#allocation5 + $0x1c0] sm:$0xff]
    %v235 = vld [vmem:[#allocation5 + $0x1c8] sm:$0xff]
    %v236 = vld [vmem:[#allocation5 + $0x1d0] sm:$0xff]
    %v237 = vld [vmem:[#allocation5 + $0x1d8] sm:$0xff]
    %v238 = vld [vmem:[#allocation5 + $0x1e0] sm:$0xff]
    %v239 = vld [vmem:[#allocation5 + $0x1e8] sm:$0xff]
    %v240 = vld [vmem:[#allocation5 + $0x1f0] sm:$0xff]
    %v241 = vld [vmem:[#allocation5 + $0x1f8] sm:$0xff]
    %v242 = vld [vmem:[#allocation5 + $0x200] sm:$0xff]
    %v243 = vld [vmem:[#allocation5 + $0x208] sm:$0xff]
    %v244 = vld [vmem:[#allocation5 + $0x210] sm:$0xff]
    %v245 = vld [vmem:[#allocation5 + $0x218] sm:$0xff]
    %v246 = vld [vmem:[#allocation5 + $0x220] sm:$0xff]
    %v247 = vld [vmem:[#allocation5 + $0x228] sm:$0xff]
    %v248 = vld [vmem:[#allocation5 + $0x230] sm:$0xff]
    %v249 = vld [vmem:[#allocation5 + $0x238] sm:$0xff]
    %v250 = vld [vmem:[#allocation5 + $0x240] sm:$0xff]
    %v251 = vld [vmem:[#allocation5 + $0x248] sm:$0xff]
    %v252 = vld [vmem:[#allocation5 + $0x250] sm:$0xff]
    %v253 = vld [vmem:[#allocation5 + $0x258] sm:$0xff]
    %v254 = vld [vmem:[#allocation5 + $0x260] sm:$0xff]
    %v255 = vld [vmem:[#allocation5 + $0x268] sm:$0xff]
    %v256 = vld [vmem:[#allocation5 + $0x270] sm:$0xff]
    %v257 = vld [vmem:[#allocation5 + $0x278] sm:$0xff]
    %v258 = vld [vmem:[#allocation5 + $0x280] sm:$0xff]
    %v259 = vld [vmem:[#allocation5 + $0x288] sm:$0xff]
    %v260 = vld [vmem:[#allocation5 + $0x290] sm:$0xff]
    %v261 = vld [vmem:[#allocation5 + $0x298] sm:$0xff]
    %v262 = vld [vmem:[#allocation5 + $0x2a0] sm:$0xff]
    %v263 = vld [vmem:[#allocation5 + $0x2a8] sm:$0xff]
    %v264 = vld [vmem:[#allocation5 + $0x2b0] sm:$0xff]
    %v265 = vld [vmem:[#allocation5 + $0x2b8] sm:$0xff]
    %v266 = vld [vmem:[#allocation5 + $0x2c0] sm:$0xff]
    %v267 = vld [vmem:[#allocation5 + $0x2c8] sm:$0xff]
    %v268 = vld [vmem:[#allocation5 + $0x2d0] sm:$0xff]
    %v269 = vld [vmem:[#allocation5 + $0x2d8] sm:$0xff]
    %v270 = vld [vmem:[#allocation5 + $0x2e0] sm:$0xff]
    %v271 = vld [vmem:[#allocation5 + $0x2e8] sm:$0xff]
    %v272 = vld [vmem:[#allocation5 + $0x2f0] sm:$0xff]
    %v273 = vld [vmem:[#allocation5 + $0x2f8] sm:$0xff]
    %v274 = vld [vmem:[#allocation5 + $0x300] sm:$0xff]
    %v275 = vld [vmem:[#allocation5 + $0x308] sm:$0xff]
    %v276 = vld [vmem:[#allocation5 + $0x310] sm:$0xff]
    %v277 = vld [vmem:[#allocation5 + $0x318] sm:$0xff]
    %v278 = vld [vmem:[#allocation5 + $0x320] sm:$0xff]
    %v279 = vld [vmem:[#allocation5 + $0x328] sm:$0xff]
    %v280 = vld [vmem:[#allocation5 + $0x330] sm:$0xff]
    %v281 = vld [vmem:[#allocation5 + $0x338] sm:$0xff]
    %v282 = vld [vmem:[#allocation5 + $0x340] sm:$0xff]
    %v283 = vld [vmem:[#allocation5 + $0x348] sm:$0xff]
    %v284 = vld [vmem:[#allocation5 + $0x350] sm:$0xff]
    %v285 = vld [vmem:[#allocation5 + $0x358] sm:$0xff]
    %v286 = vld [vmem:[#allocation5 + $0x360] sm:$0xff]
    %v287 = vld [vmem:[#allocation5 + $0x368] sm:$0xff]
    %v288 = vld [vmem:[#allocation5 + $0x370] sm:$0xff]
    %v289 = vld [vmem:[#allocation5 + $0x378] sm:$0xff]
    %v290 = vld [vmem:[#allocation5 + $0x380] sm:$0xff]
    %v291 = vld [vmem:[#allocation5 + $0x388] sm:$0xff]
    %v292 = vld [vmem:[#allocation5 + $0x390] sm:$0xff]
    %v293 = vld [vmem:[#allocation5 + $0x398] sm:$0xff]
    %v294 = vld [vmem:[#allocation5 + $0x3a0] sm:$0xff]
    %v295 = vld [vmem:[#allocation5 + $0x3a8] sm:$0xff]
    %v296 = vld [vmem:[#allocation5 + $0x3b0] sm:$0xff]
    %v297 = vld [vmem:[#allocation5 + $0x3b8] sm:$0xff]
    %v298 = vld [vmem:[#allocation5 + $0x3c0] sm:$0xff]
    %v299 = vld [vmem:[#allocation5 + $0x3c8] sm:$0xff]
    %v300 = vld [vmem:[#allocation5 + $0x3d0] sm:$0xff]
    %v301 = vld [vmem:[#allocation5 + $0x3d8] sm:$0xff]
    %v302 = vld [vmem:[#allocation5 + $0x3e0] sm:$0xff]
    %v303 = vld [vmem:[#allocation5 + $0x3e8] sm:$0xff]
    %v304 = vld [vmem:[#allocation5 + $0x3f0] sm:$0xff]
    %v305 = vld [vmem:[#allocation5 + $0x3f8] sm:$0xff]
    %v306 = vld [vmem:[#allocation5 + $0x400] sm:$0xff]
    %v307 = vld [vmem:[#allocation5 + $0x408] sm:$0xff]
    %v308 = vld [vmem:[#allocation5 + $0x410] sm:$0xff]
    %v309 = vld [vmem:[#allocation5 + $0x418] sm:$0xff]
    %v310 = vld [vmem:[#allocation5 + $0x420] sm:$0xff]
    %v311 = vld [vmem:[#allocation5 + $0x428] sm:$0xff]
    %v312 = vld [vmem:[#allocation5 + $0x430] sm:$0xff]
    %v313 = vld [vmem:[#allocation5 + $0x438] sm:$0xff]
    %v314 = vld [vmem:[#allocation5 + $0x440] sm:$0xff]
    %v315 = vld [vmem:[#allocation5 + $0x448] sm:$0xff]
    %v316 = vld [vmem:[#allocation5 + $0x450] sm:$0xff]
    %v317 = vld [vmem:[#allocation5 + $0x458] sm:$0xff]
    %v318 = vld [vmem:[#allocation5 + $0x460] sm:$0xff]
    %v319 = vld [vmem:[#allocation5 + $0x468] sm:$0xff]
    %v320 = vld [vmem:[#allocation5 + $0x470] sm:$0xff]
    %v321 = vld [vmem:[#allocation5 + $0x478] sm:$0xff]
    %v322 = vld [vmem:[#allocation5 + $0x480] sm:$0xff]
    %v323 = vld [vmem:[#allocation5 + $0x488] sm:$0xff]
    %v324 = vld [vmem:[#allocation5 + $0x490] sm:$0xff]
    %v325 = vld [vmem:[#allocation5 + $0x498] sm:$0xff]
    %v326 = vld [vmem:[#allocation5 + $0x4a0] sm:$0xff]
    %v327 = vld [vmem:[#allocation5 + $0x4a8] sm:$0xff]
    %v328 = vld [vmem:[#allocation5 + $0x4b0] sm:$0xff]
    %v329 = vld [vmem:[#allocation5 + $0x4b8] sm:$0xff]
    %v330 = vld [vmem:[#allocation5 + $0x4c0] sm:$0xff]
    %v331 = vld [vmem:[#allocation5 + $0x4c8] sm:$0xff]
    %v332 = vld [vmem:[#allocation5 + $0x4d0] sm:$0xff]
    %v333 = vld [vmem:[#allocation5 + $0x4d8] sm:$0xff]
    %v334 = vld [vmem:[#allocation5 + $0x4e0] sm:$0xff]
    %v335 = vld [vmem:[#allocation5 + $0x4e8] sm:$0xff]
    %v336 = vld [vmem:[#allocation5 + $0x4f0] sm:$0xff]
    %v337 = vld [vmem:[#allocation5 + $0x4f8] sm:$0xff]
    %v338 = vld [vmem:[#allocation5 + $0x500] sm:$0xff]
    %v339 = vld [vmem:[#allocation5 + $0x508] sm:$0xff]
    %v340 = vld [vmem:[#allocation5 + $0x510] sm:$0xff]
    %v341 = vld [vmem:[#allocation5 + $0x518] sm:$0xff]
    %v342 = vld [vmem:[#allocation5 + $0x520] sm:$0xff]
    %v343 = vld [vmem:[#allocation5 + $0x528] sm:$0xff]
    %v344 = vld [vmem:[#allocation5 + $0x530] sm:$0xff]
    %v345 = vld [vmem:[#allocation5 + $0x538] sm:$0xff]
    %v346 = vld [vmem:[#allocation5 + $0x540] sm:$0xff]
    %v347 = vld [vmem:[#allocation5 + $0x548] sm:$0xff]
    %v348 = vld [vmem:[#allocation5 + $0x550] sm:$0xff]
    %v349 = vld [vmem:[#allocation5 + $0x558] sm:$0xff]
    %v350 = vld [vmem:[#allocation5 + $0x560] sm:$0xff]
    %v351 = vld [vmem:[#allocation5 + $0x568] sm:$0xff]
    %v352 = vld [vmem:[#allocation5 + $0x570] sm:$0xff]
    %v353 = vld [vmem:[#allocation5 + $0x578] sm:$0xff]
    %v354 = vld [vmem:[#allocation5 + $0x580] sm:$0xff]
    %v355 = vld [vmem:[#allocation5 + $0x588] sm:$0xff]
    %v356 = vld [vmem:[#allocation5 + $0x590] sm:$0xff]
    %v357 = vld [vmem:[#allocation5 + $0x598] sm:$0xff]
    %v358 = vld [vmem:[#allocation5 + $0x5a0] sm:$0xff]
    %v359 = vld [vmem:[#allocation5 + $0x5a8] sm:$0xff]
    %v360 = vld [vmem:[#allocation5 + $0x5b0] sm:$0xff]
    %v361 = vld [vmem:[#allocation5 + $0x5b8] sm:$0xff]
    %v362 = vld [vmem:[#allocation5 + $0x5c0] sm:$0xff]
    %v363 = vld [vmem:[#allocation5 + $0x5c8] sm:$0xff]
    %v364 = vld [vmem:[#allocation5 + $0x5d0] sm:$0xff]
    %v365 = vld [vmem:[#allocation5 + $0x5d8] sm:$0xff]
    %v366 = vld [vmem:[#allocation5 + $0x5e0] sm:$0xff]
    %v367 = vld [vmem:[#allocation5 + $0x5e8] sm:$0xff]
    %v368 = vld [vmem:[#allocation5 + $0x5f0] sm:$0xff]
    %v369 = vld [vmem:[#allocation5 + $0x5f8] sm:$0xff]
    %v370 = vld [vmem:[#allocation5 + $0x600] sm:$0xff]
    %v371 = vld [vmem:[#allocation5 + $0x608] sm:$0xff]
    %v372 = vld [vmem:[#allocation5 + $0x610] sm:$0xff]
    %v373 = vld [vmem:[#allocation5 + $0x618] sm:$0xff]
    %v374 = vld [vmem:[#allocation5 + $0x620] sm:$0xff]
    %v375 = vld [vmem:[#allocation5 + $0x628] sm:$0xff]
    %v376 = vld [vmem:[#allocation5 + $0x630] sm:$0xff]
    %v377 = vld [vmem:[#allocation5 + $0x638] sm:$0xff]
    %v378 = vld [vmem:[#allocation5 + $0x640] sm:$0xff]
    %v379 = vld [vmem:[#allocation5 + $0x648] sm:$0xff]
    %v380 = vld [vmem:[#allocation5 + $0x650] sm:$0xff]
    %v381 = vld [vmem:[#allocation5 + $0x658] sm:$0xff]
    %v382 = vld [vmem:[#allocation5 + $0x660] sm:$0xff]
    %v383 = vld [vmem:[#allocation5 + $0x668] sm:$0xff]
    %v384 = vld [vmem:[#allocation5 + $0x670] sm:$0xff]
    %v385 = vld [vmem:[#allocation5 + $0x678] sm:$0xff]
    %v386 = vld [vmem:[#allocation5 + $0x680] sm:$0xff]
    %v387 = vld [vmem:[#allocation5 + $0x688] sm:$0xff]
    %v388 = vld [vmem:[#allocation5 + $0x690] sm:$0xff]
    %v389 = vld [vmem:[#allocation5 + $0x698] sm:$0xff]
    %v390 = vld [vmem:[#allocation5 + $0x6a0] sm:$0xff]
    %v391 = vld [vmem:[#allocation5 + $0x6a8] sm:$0xff]
    %v392 = vld [vmem:[#allocation5 + $0x6b0] sm:$0xff]
    %v393 = vld [vmem:[#allocation5 + $0x6b8] sm:$0xff]
    %v394 = vld [vmem:[#allocation5 + $0x6c0] sm:$0xff]
    %v395 = vld [vmem:[#allocation5 + $0x6c8] sm:$0xff]
    %v396 = vld [vmem:[#allocation5 + $0x6d0] sm:$0xff]
    %v397 = vld [vmem:[#allocation5 + $0x6d8] sm:$0xff]
    %v398 = vld [vmem:[#allocation5 + $0x6e0] sm:$0xff]
    %v399 = vld [vmem:[#allocation5 + $0x6e8] sm:$0xff]
    %v400 = vld [vmem:[#allocation5 + $0x6f0] sm:$0xff]
    %v401 = vld [vmem:[#allocation5 + $0x6f8] sm:$0xff]
    %v402 = vld [vmem:[#allocation5 + $0x700] sm:$0xff]
    %v403 = vld [vmem:[#allocation5 + $0x708] sm:$0xff]
    %v404 = vld [vmem:[#allocation5 + $0x710] sm:$0xff]
    %v405 = vld [vmem:[#allocation5 + $0x718] sm:$0xff]
    %v406 = vld [vmem:[#allocation5 + $0x720] sm:$0xff]
    %v407 = vld [vmem:[#allocation5 + $0x728] sm:$0xff]
    %v408 = vld [vmem:[#allocation5 + $0x730] sm:$0xff]
    %v409 = vld [vmem:[#allocation5 + $0x738] sm:$0xff]
    %v410 = vld [vmem:[#allocation5 + $0x740] sm:$0xff]
    %v411 = vld [vmem:[#allocation5 + $0x748] sm:$0xff]
    %v412 = vld [vmem:[#allocation5 + $0x750] sm:$0xff]
    %v413 = vld [vmem:[#allocation5 + $0x758] sm:$0xff]
    %v414 = vld [vmem:[#allocation5 + $0x760] sm:$0xff]
    %v415 = vld [vmem:[#allocation5 + $0x768] sm:$0xff]
    %v416 = vld [vmem:[#allocation5 + $0x770] sm:$0xff]
    %v417 = vld [vmem:[#allocation5 + $0x778] sm:$0xff]
    %v418 = vld [vmem:[#allocation5 + $0x780] sm:$0xff]
    %v419 = vld [vmem:[#allocation5 + $0x788] sm:$0xff]
    %v420 = vld [vmem:[#allocation5 + $0x790] sm:$0xff]
    %v421 = vld [vmem:[#allocation5 + $0x798] sm:$0xff]
    %v422 = vld [vmem:[#allocation5 + $0x7a0] sm:$0xff]
    %v423 = vld [vmem:[#allocation5 + $0x7a8] sm:$0xff]
    %v424 = vld [vmem:[#allocation5 + $0x7b0] sm:$0xff]
    %v425 = vld [vmem:[#allocation5 + $0x7b8] sm:$0xff]
    %v426 = vld [vmem:[#allocation5 + $0x7c0] sm:$0xff]
    %v427 = vld [vmem:[#allocation5 + $0x7c8] sm:$0xff]
    %v428 = vld [vmem:[#allocation5 + $0x7d0] sm:$0xff]
    %v429 = vld [vmem:[#allocation5 + $0x7d8] sm:$0xff]
    %v430 = vld [vmem:[#allocation5 + $0x7e0] sm:$0xff]
    %v431 = vld [vmem:[#allocation5 + $0x7e8] sm:$0xff]
    %v432 = vld [vmem:[#allocation5 + $0x7f0] sm:$0xff]
    %v433 = vld [vmem:[#allocation5 + $0x7f8] sm:$0xff]
    %v434 = vld [vmem:[#allocation5 + $0x800] sm:$0xff]
    %v435 = vld [vmem:[#allocation5 + $0x808] sm:$0xff]
    %v436 = vld [vmem:[#allocation5 + $0x810] sm:$0xff]
    %v437 = vld [vmem:[#allocation5 + $0x818] sm:$0xff]
    %v438 = vld [vmem:[#allocation5 + $0x820] sm:$0xff]
    %v439 = vld [vmem:[#allocation5 + $0x828] sm:$0xff]
    %v440 = vld [vmem:[#allocation5 + $0x830] sm:$0xff]
    %v441 = vld [vmem:[#allocation5 + $0x838] sm:$0xff]
    %v442 = vld [vmem:[#allocation5 + $0x840] sm:$0xff]
    %v443 = vld [vmem:[#allocation5 + $0x848] sm:$0xff]
    %v444 = vld [vmem:[#allocation5 + $0x850] sm:$0xff]
    %v445 = vld [vmem:[#allocation5 + $0x858] sm:$0xff]
    %v446 = vld [vmem:[#allocation5 + $0x860] sm:$0xff]
    %v447 = vld [vmem:[#allocation5 + $0x868] sm:$0xff]
    %v448 = vld [vmem:[#allocation5 + $0x870] sm:$0xff]
    %v449 = vld [vmem:[#allocation5 + $0x878] sm:$0xff]
    %v450 = vld [vmem:[#allocation5 + $0x880] sm:$0xff]
    %v451 = vld [vmem:[#allocation5 + $0x888] sm:$0xff]
    %v452 = vld [vmem:[#allocation5 + $0x890] sm:$0xff]
    %v453 = vld [vmem:[#allocation5 + $0x898] sm:$0xff]
    %v454 = vld [vmem:[#allocation5 + $0x8a0] sm:$0xff]
    %v455 = vld [vmem:[#allocation5 + $0x8a8] sm:$0xff]
    %v456 = vld [vmem:[#allocation5 + $0x8b0] sm:$0xff]
    %v457 = vld [vmem:[#allocation5 + $0x8b8] sm:$0xff]
    %v458 = vld [vmem:[#allocation5 + $0x8c0] sm:$0xff]
    %v459 = vld [vmem:[#allocation5 + $0x8c8] sm:$0xff]
    %v460 = vld [vmem:[#allocation5 + $0x8d0] sm:$0xff]
    %v461 = vld [vmem:[#allocation5 + $0x8d8] sm:$0xff]
    %v462 = vld [vmem:[#allocation5 + $0x8e0] sm:$0xff]
    %v463 = vld [vmem:[#allocation5 + $0x8e8] sm:$0xff]
    %v464 = vld [vmem:[#allocation5 + $0x8f0] sm:$0xff]
    %v465 = vld [vmem:[#allocation5 + $0x8f8] sm:$0xff]
    %v466 = vld [vmem:[#allocation5 + $0x900] sm:$0xff]
    %v467 = vld [vmem:[#allocation5 + $0x908] sm:$0xff]
    %v468 = vld [vmem:[#allocation5 + $0x910] sm:$0xff]
    %v469 = vld [vmem:[#allocation5 + $0x918] sm:$0xff]
    %v470 = vld [vmem:[#allocation5 + $0x920] sm:$0xff]
    %v471 = vld [vmem:[#allocation5 + $0x928] sm:$0xff]
    %v472 = vld [vmem:[#allocation5 + $0x930] sm:$0xff]
    %v473 = vld [vmem:[#allocation5 + $0x938] sm:$0xff]
    %v474 = vld [vmem:[#allocation5 + $0x940] sm:$0xff]
    %v475 = vld [vmem:[#allocation5 + $0x948] sm:$0xff]
    %v476 = vld [vmem:[#allocation5 + $0x950] sm:$0xff]
    %v477 = vld [vmem:[#allocation5 + $0x958] sm:$0xff]
    %v478 = vld [vmem:[#allocation5 + $0x960] sm:$0xff]
    %v479 = vld [vmem:[#allocation5 + $0x968] sm:$0xff]
    %v480 = vld [vmem:[#allocation5 + $0x970] sm:$0xff]
    %v481 = vld [vmem:[#allocation5 + $0x978] sm:$0xff]
    %v482 = vld [vmem:[#allocation5 + $0x980] sm:$0xff]
    %v483 = vld [vmem:[#allocation5 + $0x988] sm:$0xff]
    %v484 = vld [vmem:[#allocation5 + $0x990] sm:$0xff]
    %v485 = vld [vmem:[#allocation5 + $0x998] sm:$0xff]
    %v486 = vld [vmem:[#allocation5 + $0x9a0] sm:$0xff]
    %v487 = vld [vmem:[#allocation5 + $0x9a8] sm:$0xff]
    %v488 = vld [vmem:[#allocation5 + $0x9b0] sm:$0xff]
    %v489 = vld [vmem:[#allocation5 + $0x9b8] sm:$0xff]
    %v490 = vld [vmem:[#allocation5 + $0x9c0] sm:$0xff]
    %v491 = vld [vmem:[#allocation5 + $0x9c8] sm:$0xff]
    %v492 = vld [vmem:[#allocation5 + $0x9d0] sm:$0xff]
    %v493 = vld [vmem:[#allocation5 + $0x9d8] sm:$0xff]
    %v494 = vld [vmem:[#allocation5 + $0x9e0] sm:$0xff]
    %v495 = vld [vmem:[#allocation5 + $0x9e8] sm:$0xff]
    %v496 = vld [vmem:[#allocation5 + $0x9f0] sm:$0xff]
    %v497 = vld [vmem:[#allocation5 + $0x9f8] sm:$0xff]
    %v498 = vld [vmem:[#allocation5 + $0xa00] sm:$0xff]
    %v499 = vld [vmem:[#allocation5 + $0xa08] sm:$0xff]
    %v500 = vld [vmem:[#allocation5 + $0xa10] sm:$0xff]
    %v501 = vld [vmem:[#allocation5 + $0xa18] sm:$0xff]
    %v502 = vld [vmem:[#allocation5 + $0xa20] sm:$0xff]
    %v503 = vld [vmem:[#allocation5 + $0xa28] sm:$0xff]
    %v504 = vld [vmem:[#allocation5 + $0xa30] sm:$0xff]
    %v505 = vld [vmem:[#allocation5 + $0xa38] sm:$0xff]
    %v506 = vld [vmem:[#allocation5 + $0xa40] sm:$0xff]
    %v507 = vld [vmem:[#allocation5 + $0xa48] sm:$0xff]
    %v508 = vld [vmem:[#allocation5 + $0xa50] sm:$0xff]
    %v509 = vld [vmem:[#allocation5 + $0xa58] sm:$0xff]
    %v510 = vld [vmem:[#allocation5 + $0xa60] sm:$0xff]
    %v511 = vld [vmem:[#allocation5 + $0xa68] sm:$0xff]
    %v512 = vld [vmem:[#allocation5 + $0xa70] sm:$0xff]
    %v513 = vld [vmem:[#allocation5 + $0xa78] sm:$0xff]
    %v514 = vld [vmem:[#allocation5 + $0xa80] sm:$0xff]
    %v515 = vld [vmem:[#allocation5 + $0xa88] sm:$0xff]
    %v516 = vld [vmem:[#allocation5 + $0xa90] sm:$0xff]
    %v517 = vld [vmem:[#allocation5 + $0xa98] sm:$0xff]
    %v518 = vld [vmem:[#allocation5 + $0xaa0] sm:$0xff]
    %v519 = vld [vmem:[#allocation5 + $0xaa8] sm:$0xff]
    %v520 = vld [vmem:[#allocation5 + $0xab0] sm:$0xff]
    %v521 = vld [vmem:[#allocation5 + $0xab8] sm:$0xff]
    %v522 = vld [vmem:[#allocation5 + $0xac0] sm:$0xff]
    %v523 = vld [vmem:[#allocation5 + $0xac8] sm:$0xff]
    %v524 = vld [vmem:[#allocation5 + $0xad0] sm:$0xff]
    %v525 = vld [vmem:[#allocation5 + $0xad8] sm:$0xff]
    %v526 = vld [vmem:[#allocation5 + $0xae0] sm:$0xff]
    %v527 = vld [vmem:[#allocation5 + $0xae8] sm:$0xff]
    %v528 = vld [vmem:[#allocation5 + $0xaf0] sm:$0xff]
    %v529 = vld [vmem:[#allocation5 + $0xaf8] sm:$0xff]
    %v530 = vld [vmem:[#allocation5 + $0xb00] sm:$0xff]
    %v531 = vld [vmem:[#allocation5 + $0xb08] sm:$0xff]
    %v532 = vld [vmem:[#allocation5 + $0xb10] sm:$0xff]
    %v533 = vld [vmem:[#allocation5 + $0xb18] sm:$0xff]
    %v534 = vld [vmem:[#allocation5 + $0xb20] sm:$0xff]
    %v535 = vld [vmem:[#allocation5 + $0xb28] sm:$0xff]
    %v536 = vld [vmem:[#allocation5 + $0xb30] sm:$0xff]
    %v537 = vld [vmem:[#allocation5 + $0xb38] sm:$0xff]
    %v538 = vld [vmem:[#allocation5 + $0xb40] sm:$0xff]
    %v539 = vld [vmem:[#allocation5 + $0xb48] sm:$0xff]
    %v540 = vld [vmem:[#allocation5 + $0xb50] sm:$0xff]
    %v541 = vld [vmem:[#allocation5 + $0xb58] sm:$0xff]
    %v542 = vld [vmem:[#allocation5 + $0xb60] sm:$0xff]
    %v543 = vld [vmem:[#allocation5 + $0xb68] sm:$0xff]
    %v544 = vld [vmem:[#allocation5 + $0xb70] sm:$0xff]
    %v545 = vld [vmem:[#allocation5 + $0xb78] sm:$0xff]
    %v546 = vld [vmem:[#allocation5 + $0xb80] sm:$0xff]
    %v547 = vld [vmem:[#allocation5 + $0xb88] sm:$0xff]
    %v548 = vld [vmem:[#allocation5 + $0xb90] sm:$0xff]
    %v549 = vld [vmem:[#allocation5 + $0xb98] sm:$0xff]
    %v550 = vld [vmem:[#allocation5 + $0xba0] sm:$0xff]
    %v551 = vld [vmem:[#allocation5 + $0xba8] sm:$0xff]
    %v552 = vld [vmem:[#allocation5 + $0xbb0] sm:$0xff]
    %v553 = vld [vmem:[#allocation5 + $0xbb8] sm:$0xff]
    %v554 = vld [vmem:[#allocation5 + $0xbc0] sm:$0xff]
    %v555 = vld [vmem:[#allocation5 + $0xbc8] sm:$0xff]
    %v556 = vld [vmem:[#allocation5 + $0xbd0] sm:$0xff]
    %v557 = vld [vmem:[#allocation5 + $0xbd8] sm:$0xff]
    %v558 = vld [vmem:[#allocation5 + $0xbe0] sm:$0xff]
    %v559 = vld [vmem:[#allocation5 + $0xbe8] sm:$0xff]
    %v560 = vld [vmem:[#allocation5 + $0xbf0] sm:$0xff]
    %v561 = vld [vmem:[#allocation5 + $0xbf8] sm:$0xff]
    %v562 = vld [vmem:[#allocation7] sm:$0xff]
    %v564 = vlaneseq
    %v565 = vshrl.u32 %v564, 7
    %v566 = vsub.s32 0, %v565
    %v567 = vrot.slane %v562, %v566
    %v568 = vlaneseq
    %v569 = vshrl.u32 %v568, 7
    %v570 = vsub.s32 1, %v569
    %v571 = vrot.slane %v562, %v570
    %v572 = vlaneseq
    %v573 = vshrl.u32 %v572, 7
    %v574 = vsub.s32 2, %v573
    %v575 = vrot.slane %v562, %v574
    %v576 = vlaneseq
    %v577 = vshrl.u32 %v576, 7
    %v578 = vsub.s32 3, %v577
    %v579 = vrot.slane %v562, %v578
    %v580 = vlaneseq
    %v581 = vshrl.u32 %v580, 7
    %v582 = vsub.s32 4, %v581
    %v583 = vrot.slane %v562, %v582
    %v584 = vlaneseq
    %v585 = vshrl.u32 %v584, 7
    %v586 = vsub.s32 5, %v585
    %v587 = vrot.slane %v562, %v586
    %v588 = vlaneseq
    %v589 = vshrl.u32 %v588, 7
    %v590 = vsub.s32 6, %v589
    %v591 = vrot.slane %v562, %v590
    %v592 = vlaneseq
    %v593 = vshrl.u32 %v592, 7
    %v594 = vsub.s32 7, %v593
    %v595 = vrot.slane %v562, %v594
    %v988 = vunpack.c.l.b16 %v178
    %v989 = vunpack.c.h.b16 %v178
    %v990 = vunpack.c.l.b16 %v179
    %v991 = vunpack.c.h.b16 %v179
    %v992 = vunpack.c.l.b16 %v180
    %v993 = vunpack.c.h.b16 %v180
    %v994 = vunpack.c.l.b16 %v181
    %v995 = vunpack.c.h.b16 %v181
    %v996 = vunpack.c.l.b16 %v182
    %v997 = vunpack.c.h.b16 %v182
    %v998 = vunpack.c.l.b16 %v183
    %v999 = vunpack.c.h.b16 %v183
    %v1000 = vunpack.c.l.b16 %v184
    %v1001 = vunpack.c.h.b16 %v184
    %v1002 = vunpack.c.l.b16 %v185
    %v1003 = vunpack.c.h.b16 %v185
    %v1004 = vunpack.c.l.b16 %v186
    %v1005 = vunpack.c.h.b16 %v186
    %v1006 = vunpack.c.l.b16 %v187
    %v1007 = vunpack.c.h.b16 %v187
    %v1008 = vunpack.c.l.b16 %v188
    %v1009 = vunpack.c.h.b16 %v188
    %v1010 = vunpack.c.l.b16 %v189
    %v1011 = vunpack.c.h.b16 %v189
    %v1012 = vunpack.c.l.b16 %v190
    %v1013 = vunpack.c.h.b16 %v190
    %v1014 = vunpack.c.l.b16 %v191
    %v1015 = vunpack.c.h.b16 %v191
    %v1016 = vunpack.c.l.b16 %v192
    %v1017 = vunpack.c.h.b16 %v192
    %v1018 = vunpack.c.l.b16 %v193
    %v1019 = vunpack.c.h.b16 %v193
    %v1020 = vunpack.c.l.b16 %v194
    %v1021 = vunpack.c.h.b16 %v194
    %v1022 = vunpack.c.l.b16 %v195
    %v1023 = vunpack.c.h.b16 %v195
    %v1024 = vunpack.c.l.b16 %v196
    %v1025 = vunpack.c.h.b16 %v196
    %v1026 = vunpack.c.l.b16 %v197
    %v1027 = vunpack.c.h.b16 %v197
    %v1028 = vunpack.c.l.b16 %v198
    %v1029 = vunpack.c.h.b16 %v198
    %v1030 = vunpack.c.l.b16 %v199
    %v1031 = vunpack.c.h.b16 %v199
    %v1032 = vunpack.c.l.b16 %v200
    %v1033 = vunpack.c.h.b16 %v200
    %v1034 = vunpack.c.l.b16 %v201
    %v1035 = vunpack.c.h.b16 %v201
    %v1036 = vunpack.c.l.b16 %v202
    %v1037 = vunpack.c.h.b16 %v202
    %v1038 = vunpack.c.l.b16 %v203
    %v1039 = vunpack.c.h.b16 %v203
    %v1040 = vunpack.c.l.b16 %v204
    %v1041 = vunpack.c.h.b16 %v204
    %v1042 = vunpack.c.l.b16 %v205
    %v1043 = vunpack.c.h.b16 %v205
    %v1044 = vunpack.c.l.b16 %v206
    %v1045 = vunpack.c.h.b16 %v206
    %v1046 = vunpack.c.l.b16 %v207
    %v1047 = vunpack.c.h.b16 %v207
    %v1048 = vunpack.c.l.b16 %v208
    %v1049 = vunpack.c.h.b16 %v208
    %v1050 = vunpack.c.l.b16 %v209
    %v1051 = vunpack.c.h.b16 %v209
    %v1052 = vunpack.c.l.b16 %v210
    %v1053 = vunpack.c.h.b16 %v210
    %v1054 = vunpack.c.l.b16 %v211
    %v1055 = vunpack.c.h.b16 %v211
    %v1056 = vunpack.c.l.b16 %v212
    %v1057 = vunpack.c.h.b16 %v212
    %v1058 = vunpack.c.l.b16 %v213
    %v1059 = vunpack.c.h.b16 %v213
    %v1060 = vunpack.c.l.b16 %v214
    %v1061 = vunpack.c.h.b16 %v214
    %v1062 = vunpack.c.l.b16 %v215
    %v1063 = vunpack.c.h.b16 %v215
    %v1064 = vunpack.c.l.b16 %v216
    %v1065 = vunpack.c.h.b16 %v216
    %v1066 = vunpack.c.l.b16 %v217
    %v1067 = vunpack.c.h.b16 %v217
    %v1068 = vunpack.c.l.b16 %v218
    %v1069 = vunpack.c.h.b16 %v218
    %v1070 = vunpack.c.l.b16 %v219
    %v1071 = vunpack.c.h.b16 %v219
    %v1072 = vunpack.c.l.b16 %v220
    %v1073 = vunpack.c.h.b16 %v220
    %v1074 = vunpack.c.l.b16 %v221
    %v1075 = vunpack.c.h.b16 %v221
    %v1076 = vunpack.c.l.b16 %v222
    %v1077 = vunpack.c.h.b16 %v222
    %v1078 = vunpack.c.l.b16 %v223
    %v1079 = vunpack.c.h.b16 %v223
    %v1080 = vunpack.c.l.b16 %v224
    %v1081 = vunpack.c.h.b16 %v224
    %v1082 = vunpack.c.l.b16 %v225
    %v1083 = vunpack.c.h.b16 %v225
    %v1084 = vunpack.c.l.b16 %v226
    %v1085 = vunpack.c.h.b16 %v226
    %v1086 = vunpack.c.l.b16 %v227
    %v1087 = vunpack.c.h.b16 %v227
    %v1088 = vunpack.c.l.b16 %v228
    %v1089 = vunpack.c.h.b16 %v228
    %v1090 = vunpack.c.l.b16 %v229
    %v1091 = vunpack.c.h.b16 %v229
    %v1092 = vunpack.c.l.b16 %v230
    %v1093 = vunpack.c.h.b16 %v230
    %v1094 = vunpack.c.l.b16 %v231
    %v1095 = vunpack.c.h.b16 %v231
    %v1096 = vunpack.c.l.b16 %v232
    %v1097 = vunpack.c.h.b16 %v232
    %v1098 = vunpack.c.l.b16 %v233
    %v1099 = vunpack.c.h.b16 %v233
    %v1100 = vunpack.c.l.b16 %v234
    %v1101 = vunpack.c.h.b16 %v234
    %v1102 = vunpack.c.l.b16 %v235
    %v1103 = vunpack.c.h.b16 %v235
    %v1104 = vunpack.c.l.b16 %v236
    %v1105 = vunpack.c.h.b16 %v236
    %v1106 = vunpack.c.l.b16 %v237
    %v1107 = vunpack.c.h.b16 %v237
    %v1108 = vunpack.c.l.b16 %v238
    %v1109 = vunpack.c.h.b16 %v238
    %v1110 = vunpack.c.l.b16 %v239
    %v1111 = vunpack.c.h.b16 %v239
    %v1112 = vunpack.c.l.b16 %v240
    %v1113 = vunpack.c.h.b16 %v240
    %v1114 = vunpack.c.l.b16 %v241
    %v1115 = vunpack.c.h.b16 %v241
    %v1116 = vunpack.c.l.b16 %v242
    %v1117 = vunpack.c.h.b16 %v242
    %v1118 = vunpack.c.l.b16 %v243
    %v1119 = vunpack.c.h.b16 %v243
    %v1120 = vunpack.c.l.b16 %v244
    %v1121 = vunpack.c.h.b16 %v244
    %v1122 = vunpack.c.l.b16 %v245
    %v1123 = vunpack.c.h.b16 %v245
    %v1124 = vunpack.c.l.b16 %v246
    %v1125 = vunpack.c.h.b16 %v246
    %v1126 = vunpack.c.l.b16 %v247
    %v1127 = vunpack.c.h.b16 %v247
    %v1128 = vunpack.c.l.b16 %v248
    %v1129 = vunpack.c.h.b16 %v248
    %v1130 = vunpack.c.l.b16 %v249
    %v1131 = vunpack.c.h.b16 %v249
    %v1132 = vunpack.c.l.b16 %v250
    %v1133 = vunpack.c.h.b16 %v250
    %v1134 = vunpack.c.l.b16 %v251
    %v1135 = vunpack.c.h.b16 %v251
    %v1136 = vunpack.c.l.b16 %v252
    %v1137 = vunpack.c.h.b16 %v252
    %v1138 = vunpack.c.l.b16 %v253
    %v1139 = vunpack.c.h.b16 %v253
    %v1140 = vunpack.c.l.b16 %v254
    %v1141 = vunpack.c.h.b16 %v254
    %v1142 = vunpack.c.l.b16 %v255
    %v1143 = vunpack.c.h.b16 %v255
    %v1144 = vunpack.c.l.b16 %v256
    %v1145 = vunpack.c.h.b16 %v256
    %v1146 = vunpack.c.l.b16 %v257
    %v1147 = vunpack.c.h.b16 %v257
    %v1148 = vunpack.c.l.b16 %v258
    %v1149 = vunpack.c.h.b16 %v258
    %v1150 = vunpack.c.l.b16 %v259
    %v1151 = vunpack.c.h.b16 %v259
    %v1152 = vunpack.c.l.b16 %v260
    %v1153 = vunpack.c.h.b16 %v260
    %v1154 = vunpack.c.l.b16 %v261
    %v1155 = vunpack.c.h.b16 %v261
    %v1156 = vunpack.c.l.b16 %v262
    %v1157 = vunpack.c.h.b16 %v262
    %v1158 = vunpack.c.l.b16 %v263
    %v1159 = vunpack.c.h.b16 %v263
    %v1160 = vunpack.c.l.b16 %v264
    %v1161 = vunpack.c.h.b16 %v264
    %v1162 = vunpack.c.l.b16 %v265
    %v1163 = vunpack.c.h.b16 %v265
    %v1164 = vunpack.c.l.b16 %v266
    %v1165 = vunpack.c.h.b16 %v266
    %v1166 = vunpack.c.l.b16 %v267
    %v1167 = vunpack.c.h.b16 %v267
    %v1168 = vunpack.c.l.b16 %v268
    %v1169 = vunpack.c.h.b16 %v268
    %v1170 = vunpack.c.l.b16 %v269
    %v1171 = vunpack.c.h.b16 %v269
    %v1172 = vunpack.c.l.b16 %v270
    %v1173 = vunpack.c.h.b16 %v270
    %v1174 = vunpack.c.l.b16 %v271
    %v1175 = vunpack.c.h.b16 %v271
    %v1176 = vunpack.c.l.b16 %v272
    %v1177 = vunpack.c.h.b16 %v272
    %v1178 = vunpack.c.l.b16 %v273
    %v1179 = vunpack.c.h.b16 %v273
    %v1180 = vunpack.c.l.b16 %v274
    %v1181 = vunpack.c.h.b16 %v274
    %v1182 = vunpack.c.l.b16 %v275
    %v1183 = vunpack.c.h.b16 %v275
    %v1184 = vunpack.c.l.b16 %v276
    %v1185 = vunpack.c.h.b16 %v276
    %v1186 = vunpack.c.l.b16 %v277
    %v1187 = vunpack.c.h.b16 %v277
    %v1188 = vunpack.c.l.b16 %v278
    %v1189 = vunpack.c.h.b16 %v278
    %v1190 = vunpack.c.l.b16 %v279
    %v1191 = vunpack.c.h.b16 %v279
    %v1192 = vunpack.c.l.b16 %v280
    %v1193 = vunpack.c.h.b16 %v280
    %v1194 = vunpack.c.l.b16 %v281
    %v1195 = vunpack.c.h.b16 %v281
    %v1196 = vunpack.c.l.b16 %v282
    %v1197 = vunpack.c.h.b16 %v282
    %v1198 = vunpack.c.l.b16 %v283
    %v1199 = vunpack.c.h.b16 %v283
    %v1200 = vunpack.c.l.b16 %v284
    %v1201 = vunpack.c.h.b16 %v284
    %v1202 = vunpack.c.l.b16 %v285
    %v1203 = vunpack.c.h.b16 %v285
    %v1204 = vunpack.c.l.b16 %v286
    %v1205 = vunpack.c.h.b16 %v286
    %v1206 = vunpack.c.l.b16 %v287
    %v1207 = vunpack.c.h.b16 %v287
    %v1208 = vunpack.c.l.b16 %v288
    %v1209 = vunpack.c.h.b16 %v288
    %v1210 = vunpack.c.l.b16 %v289
    %v1211 = vunpack.c.h.b16 %v289
    %v1212 = vunpack.c.l.b16 %v290
    %v1213 = vunpack.c.h.b16 %v290
    %v1214 = vunpack.c.l.b16 %v291
    %v1215 = vunpack.c.h.b16 %v291
    %v1216 = vunpack.c.l.b16 %v292
    %v1217 = vunpack.c.h.b16 %v292
    %v1218 = vunpack.c.l.b16 %v293
    %v1219 = vunpack.c.h.b16 %v293
    %v1220 = vunpack.c.l.b16 %v294
    %v1221 = vunpack.c.h.b16 %v294
    %v1222 = vunpack.c.l.b16 %v295
    %v1223 = vunpack.c.h.b16 %v295
    %v1224 = vunpack.c.l.b16 %v296
    %v1225 = vunpack.c.h.b16 %v296
    %v1226 = vunpack.c.l.b16 %v297
    %v1227 = vunpack.c.h.b16 %v297
    %v1228 = vunpack.c.l.b16 %v298
    %v1229 = vunpack.c.h.b16 %v298
    %v1230 = vunpack.c.l.b16 %v299
    %v1231 = vunpack.c.h.b16 %v299
    %v1232 = vunpack.c.l.b16 %v300
    %v1233 = vunpack.c.h.b16 %v300
    %v1234 = vunpack.c.l.b16 %v301
    %v1235 = vunpack.c.h.b16 %v301
    %v1236 = vunpack.c.l.b16 %v302
    %v1237 = vunpack.c.h.b16 %v302
    %v1238 = vunpack.c.l.b16 %v303
    %v1239 = vunpack.c.h.b16 %v303
    %v1240 = vunpack.c.l.b16 %v304
    %v1241 = vunpack.c.h.b16 %v304
    %v1242 = vunpack.c.l.b16 %v305
    %v1243 = vunpack.c.h.b16 %v305
    %v1244 = vunpack.c.l.b16 %v306
    %v1245 = vunpack.c.h.b16 %v306
    %v1246 = vunpack.c.l.b16 %v307
    %v1247 = vunpack.c.h.b16 %v307
    %v1248 = vunpack.c.l.b16 %v308
    %v1249 = vunpack.c.h.b16 %v308
    %v1250 = vunpack.c.l.b16 %v309
    %v1251 = vunpack.c.h.b16 %v309
    %v1252 = vunpack.c.l.b16 %v310
    %v1253 = vunpack.c.h.b16 %v310
    %v1254 = vunpack.c.l.b16 %v311
    %v1255 = vunpack.c.h.b16 %v311
    %v1256 = vunpack.c.l.b16 %v312
    %v1257 = vunpack.c.h.b16 %v312
    %v1258 = vunpack.c.l.b16 %v313
    %v1259 = vunpack.c.h.b16 %v313
    %v1260 = vunpack.c.l.b16 %v314
    %v1261 = vunpack.c.h.b16 %v314
    %v1262 = vunpack.c.l.b16 %v315
    %v1263 = vunpack.c.h.b16 %v315
    %v1264 = vunpack.c.l.b16 %v316
    %v1265 = vunpack.c.h.b16 %v316
    %v1266 = vunpack.c.l.b16 %v317
    %v1267 = vunpack.c.h.b16 %v317
    %v1268 = vunpack.c.l.b16 %v318
    %v1269 = vunpack.c.h.b16 %v318
    %v1270 = vunpack.c.l.b16 %v319
    %v1271 = vunpack.c.h.b16 %v319
    %v1272 = vunpack.c.l.b16 %v320
    %v1273 = vunpack.c.h.b16 %v320
    %v1274 = vunpack.c.l.b16 %v321
    %v1275 = vunpack.c.h.b16 %v321
    %v1276 = vunpack.c.l.b16 %v322
    %v1277 = vunpack.c.h.b16 %v322
    %v1278 = vunpack.c.l.b16 %v323
    %v1279 = vunpack.c.h.b16 %v323
    %v1280 = vunpack.c.l.b16 %v324
    %v1281 = vunpack.c.h.b16 %v324
    %v1282 = vunpack.c.l.b16 %v325
    %v1283 = vunpack.c.h.b16 %v325
    %v1284 = vunpack.c.l.b16 %v326
    %v1285 = vunpack.c.h.b16 %v326
    %v1286 = vunpack.c.l.b16 %v327
    %v1287 = vunpack.c.h.b16 %v327
    %v1288 = vunpack.c.l.b16 %v328
    %v1289 = vunpack.c.h.b16 %v328
    %v1290 = vunpack.c.l.b16 %v329
    %v1291 = vunpack.c.h.b16 %v329
    %v1292 = vunpack.c.l.b16 %v330
    %v1293 = vunpack.c.h.b16 %v330
    %v1294 = vunpack.c.l.b16 %v331
    %v1295 = vunpack.c.h.b16 %v331
    %v1296 = vunpack.c.l.b16 %v332
    %v1297 = vunpack.c.h.b16 %v332
    %v1298 = vunpack.c.l.b16 %v333
    %v1299 = vunpack.c.h.b16 %v333
    %v1300 = vunpack.c.l.b16 %v334
    %v1301 = vunpack.c.h.b16 %v334
    %v1302 = vunpack.c.l.b16 %v335
    %v1303 = vunpack.c.h.b16 %v335
    %v1304 = vunpack.c.l.b16 %v336
    %v1305 = vunpack.c.h.b16 %v336
    %v1306 = vunpack.c.l.b16 %v337
    %v1307 = vunpack.c.h.b16 %v337
    %v1308 = vunpack.c.l.b16 %v338
    %v1309 = vunpack.c.h.b16 %v338
    %v1310 = vunpack.c.l.b16 %v339
    %v1311 = vunpack.c.h.b16 %v339
    %v1312 = vunpack.c.l.b16 %v340
    %v1313 = vunpack.c.h.b16 %v340
    %v1314 = vunpack.c.l.b16 %v341
    %v1315 = vunpack.c.h.b16 %v341
    %v1316 = vunpack.c.l.b16 %v342
    %v1317 = vunpack.c.h.b16 %v342
    %v1318 = vunpack.c.l.b16 %v343
    %v1319 = vunpack.c.h.b16 %v343
    %v1320 = vunpack.c.l.b16 %v344
    %v1321 = vunpack.c.h.b16 %v344
    %v1322 = vunpack.c.l.b16 %v345
    %v1323 = vunpack.c.h.b16 %v345
    %v1324 = vunpack.c.l.b16 %v346
    %v1325 = vunpack.c.h.b16 %v346
    %v1326 = vunpack.c.l.b16 %v347
    %v1327 = vunpack.c.h.b16 %v347
    %v1328 = vunpack.c.l.b16 %v348
    %v1329 = vunpack.c.h.b16 %v348
    %v1330 = vunpack.c.l.b16 %v349
    %v1331 = vunpack.c.h.b16 %v349
    %v1332 = vunpack.c.l.b16 %v350
    %v1333 = vunpack.c.h.b16 %v350
    %v1334 = vunpack.c.l.b16 %v351
    %v1335 = vunpack.c.h.b16 %v351
    %v1336 = vunpack.c.l.b16 %v352
    %v1337 = vunpack.c.h.b16 %v352
    %v1338 = vunpack.c.l.b16 %v353
    %v1339 = vunpack.c.h.b16 %v353
    %v1340 = vunpack.c.l.b16 %v354
    %v1341 = vunpack.c.h.b16 %v354
    %v1342 = vunpack.c.l.b16 %v355
    %v1343 = vunpack.c.h.b16 %v355
    %v1344 = vunpack.c.l.b16 %v356
    %v1345 = vunpack.c.h.b16 %v356
    %v1346 = vunpack.c.l.b16 %v357
    %v1347 = vunpack.c.h.b16 %v357
    %v1348 = vunpack.c.l.b16 %v358
    %v1349 = vunpack.c.h.b16 %v358
    %v1350 = vunpack.c.l.b16 %v359
    %v1351 = vunpack.c.h.b16 %v359
    %v1352 = vunpack.c.l.b16 %v360
    %v1353 = vunpack.c.h.b16 %v360
    %v1354 = vunpack.c.l.b16 %v361
    %v1355 = vunpack.c.h.b16 %v361
    %v1356 = vunpack.c.l.b16 %v362
    %v1357 = vunpack.c.h.b16 %v362
    %v1358 = vunpack.c.l.b16 %v363
    %v1359 = vunpack.c.h.b16 %v363
    %v1360 = vunpack.c.l.b16 %v364
    %v1361 = vunpack.c.h.b16 %v364
    %v1362 = vunpack.c.l.b16 %v365
    %v1363 = vunpack.c.h.b16 %v365
    %v1364 = vunpack.c.l.b16 %v366
    %v1365 = vunpack.c.h.b16 %v366
    %v1366 = vunpack.c.l.b16 %v367
    %v1367 = vunpack.c.h.b16 %v367
    %v1368 = vunpack.c.l.b16 %v368
    %v1369 = vunpack.c.h.b16 %v368
    %v1370 = vunpack.c.l.b16 %v369
    %v1371 = vunpack.c.h.b16 %v369
    %v1372 = vunpack.c.l.b16 %v370
    %v1373 = vunpack.c.h.b16 %v370
    %v1374 = vunpack.c.l.b16 %v371
    %v1375 = vunpack.c.h.b16 %v371
    %v1376 = vunpack.c.l.b16 %v372
    %v1377 = vunpack.c.h.b16 %v372
    %v1378 = vunpack.c.l.b16 %v373
    %v1379 = vunpack.c.h.b16 %v373
    %v1380 = vunpack.c.l.b16 %v374
    %v1381 = vunpack.c.h.b16 %v374
    %v1382 = vunpack.c.l.b16 %v375
    %v1383 = vunpack.c.h.b16 %v375
    %v1384 = vunpack.c.l.b16 %v376
    %v1385 = vunpack.c.h.b16 %v376
    %v1386 = vunpack.c.l.b16 %v377
    %v1387 = vunpack.c.h.b16 %v377
    %v1388 = vunpack.c.l.b16 %v378
    %v1389 = vunpack.c.h.b16 %v378
    %v1390 = vunpack.c.l.b16 %v379
    %v1391 = vunpack.c.h.b16 %v379
    %v1392 = vunpack.c.l.b16 %v380
    %v1393 = vunpack.c.h.b16 %v380
    %v1394 = vunpack.c.l.b16 %v381
    %v1395 = vunpack.c.h.b16 %v381
    %v1396 = vunpack.c.l.b16 %v382
    %v1397 = vunpack.c.h.b16 %v382
    %v1398 = vunpack.c.l.b16 %v383
    %v1399 = vunpack.c.h.b16 %v383
    %v1400 = vunpack.c.l.b16 %v384
    %v1401 = vunpack.c.h.b16 %v384
    %v1402 = vunpack.c.l.b16 %v385
    %v1403 = vunpack.c.h.b16 %v385
    %v1404 = vunpack.c.l.b16 %v386
    %v1405 = vunpack.c.h.b16 %v386
    %v1406 = vunpack.c.l.b16 %v387
    %v1407 = vunpack.c.h.b16 %v387
    %v1408 = vunpack.c.l.b16 %v388
    %v1409 = vunpack.c.h.b16 %v388
    %v1410 = vunpack.c.l.b16 %v389
    %v1411 = vunpack.c.h.b16 %v389
    %v1412 = vunpack.c.l.b16 %v390
    %v1413 = vunpack.c.h.b16 %v390
    %v1414 = vunpack.c.l.b16 %v391
    %v1415 = vunpack.c.h.b16 %v391
    %v1416 = vunpack.c.l.b16 %v392
    %v1417 = vunpack.c.h.b16 %v392
    %v1418 = vunpack.c.l.b16 %v393
    %v1419 = vunpack.c.h.b16 %v393
    %v1420 = vunpack.c.l.b16 %v394
    %v1421 = vunpack.c.h.b16 %v394
    %v1422 = vunpack.c.l.b16 %v395
    %v1423 = vunpack.c.h.b16 %v395
    %v1424 = vunpack.c.l.b16 %v396
    %v1425 = vunpack.c.h.b16 %v396
    %v1426 = vunpack.c.l.b16 %v397
    %v1427 = vunpack.c.h.b16 %v397
    %v1428 = vunpack.c.l.b16 %v398
    %v1429 = vunpack.c.h.b16 %v398
    %v1430 = vunpack.c.l.b16 %v399
    %v1431 = vunpack.c.h.b16 %v399
    %v1432 = vunpack.c.l.b16 %v400
    %v1433 = vunpack.c.h.b16 %v400
    %v1434 = vunpack.c.l.b16 %v401
    %v1435 = vunpack.c.h.b16 %v401
    %v1436 = vunpack.c.l.b16 %v402
    %v1437 = vunpack.c.h.b16 %v402
    %v1438 = vunpack.c.l.b16 %v403
    %v1439 = vunpack.c.h.b16 %v403
    %v1440 = vunpack.c.l.b16 %v404
    %v1441 = vunpack.c.h.b16 %v404
    %v1442 = vunpack.c.l.b16 %v405
    %v1443 = vunpack.c.h.b16 %v405
    %v1444 = vunpack.c.l.b16 %v406
    %v1445 = vunpack.c.h.b16 %v406
    %v1446 = vunpack.c.l.b16 %v407
    %v1447 = vunpack.c.h.b16 %v407
    %v1448 = vunpack.c.l.b16 %v408
    %v1449 = vunpack.c.h.b16 %v408
    %v1450 = vunpack.c.l.b16 %v409
    %v1451 = vunpack.c.h.b16 %v409
    %v1452 = vunpack.c.l.b16 %v410
    %v1453 = vunpack.c.h.b16 %v410
    %v1454 = vunpack.c.l.b16 %v411
    %v1455 = vunpack.c.h.b16 %v411
    %v1456 = vunpack.c.l.b16 %v412
    %v1457 = vunpack.c.h.b16 %v412
    %v1458 = vunpack.c.l.b16 %v413
    %v1459 = vunpack.c.h.b16 %v413
    %v1460 = vunpack.c.l.b16 %v414
    %v1461 = vunpack.c.h.b16 %v414
    %v1462 = vunpack.c.l.b16 %v415
    %v1463 = vunpack.c.h.b16 %v415
    %v1464 = vunpack.c.l.b16 %v416
    %v1465 = vunpack.c.h.b16 %v416
    %v1466 = vunpack.c.l.b16 %v417
    %v1467 = vunpack.c.h.b16 %v417
    %v1468 = vunpack.c.l.b16 %v418
    %v1469 = vunpack.c.h.b16 %v418
    %v1470 = vunpack.c.l.b16 %v419
    %v1471 = vunpack.c.h.b16 %v419
    %v1472 = vunpack.c.l.b16 %v420
    %v1473 = vunpack.c.h.b16 %v420
    %v1474 = vunpack.c.l.b16 %v421
    %v1475 = vunpack.c.h.b16 %v421
    %v1476 = vunpack.c.l.b16 %v422
    %v1477 = vunpack.c.h.b16 %v422
    %v1478 = vunpack.c.l.b16 %v423
    %v1479 = vunpack.c.h.b16 %v423
    %v1480 = vunpack.c.l.b16 %v424
    %v1481 = vunpack.c.h.b16 %v424
    %v1482 = vunpack.c.l.b16 %v425
    %v1483 = vunpack.c.h.b16 %v425
    %v1484 = vunpack.c.l.b16 %v426
    %v1485 = vunpack.c.h.b16 %v426
    %v1486 = vunpack.c.l.b16 %v427
    %v1487 = vunpack.c.h.b16 %v427
    %v1488 = vunpack.c.l.b16 %v428
    %v1489 = vunpack.c.h.b16 %v428
    %v1490 = vunpack.c.l.b16 %v429
    %v1491 = vunpack.c.h.b16 %v429
    %v1492 = vunpack.c.l.b16 %v430
    %v1493 = vunpack.c.h.b16 %v430
    %v1494 = vunpack.c.l.b16 %v431
    %v1495 = vunpack.c.h.b16 %v431
    %v1496 = vunpack.c.l.b16 %v432
    %v1497 = vunpack.c.h.b16 %v432
    %v1498 = vunpack.c.l.b16 %v433
    %v1499 = vunpack.c.h.b16 %v433
    %v1500 = vunpack.c.l.b16 %v434
    %v1501 = vunpack.c.h.b16 %v434
    %v1502 = vunpack.c.l.b16 %v435
    %v1503 = vunpack.c.h.b16 %v435
    %v1504 = vunpack.c.l.b16 %v436
    %v1505 = vunpack.c.h.b16 %v436
    %v1506 = vunpack.c.l.b16 %v437
    %v1507 = vunpack.c.h.b16 %v437
    %v1508 = vunpack.c.l.b16 %v438
    %v1509 = vunpack.c.h.b16 %v438
    %v1510 = vunpack.c.l.b16 %v439
    %v1511 = vunpack.c.h.b16 %v439
    %v1512 = vunpack.c.l.b16 %v440
    %v1513 = vunpack.c.h.b16 %v440
    %v1514 = vunpack.c.l.b16 %v441
    %v1515 = vunpack.c.h.b16 %v441
    %v1516 = vunpack.c.l.b16 %v442
    %v1517 = vunpack.c.h.b16 %v442
    %v1518 = vunpack.c.l.b16 %v443
    %v1519 = vunpack.c.h.b16 %v443
    %v1520 = vunpack.c.l.b16 %v444
    %v1521 = vunpack.c.h.b16 %v444
    %v1522 = vunpack.c.l.b16 %v445
    %v1523 = vunpack.c.h.b16 %v445
    %v1524 = vunpack.c.l.b16 %v446
    %v1525 = vunpack.c.h.b16 %v446
    %v1526 = vunpack.c.l.b16 %v447
    %v1527 = vunpack.c.h.b16 %v447
    %v1528 = vunpack.c.l.b16 %v448
    %v1529 = vunpack.c.h.b16 %v448
    %v1530 = vunpack.c.l.b16 %v449
    %v1531 = vunpack.c.h.b16 %v449
    %v1532 = vunpack.c.l.b16 %v450
    %v1533 = vunpack.c.h.b16 %v450
    %v1534 = vunpack.c.l.b16 %v451
    %v1535 = vunpack.c.h.b16 %v451
    %v1536 = vunpack.c.l.b16 %v452
    %v1537 = vunpack.c.h.b16 %v452
    %v1538 = vunpack.c.l.b16 %v453
    %v1539 = vunpack.c.h.b16 %v453
    %v1540 = vunpack.c.l.b16 %v454
    %v1541 = vunpack.c.h.b16 %v454
    %v1542 = vunpack.c.l.b16 %v455
    %v1543 = vunpack.c.h.b16 %v455
    %v1544 = vunpack.c.l.b16 %v456
    %v1545 = vunpack.c.h.b16 %v456
    %v1546 = vunpack.c.l.b16 %v457
    %v1547 = vunpack.c.h.b16 %v457
    %v1548 = vunpack.c.l.b16 %v458
    %v1549 = vunpack.c.h.b16 %v458
    %v1550 = vunpack.c.l.b16 %v459
    %v1551 = vunpack.c.h.b16 %v459
    %v1552 = vunpack.c.l.b16 %v460
    %v1553 = vunpack.c.h.b16 %v460
    %v1554 = vunpack.c.l.b16 %v461
    %v1555 = vunpack.c.h.b16 %v461
    %v1556 = vunpack.c.l.b16 %v462
    %v1557 = vunpack.c.h.b16 %v462
    %v1558 = vunpack.c.l.b16 %v463
    %v1559 = vunpack.c.h.b16 %v463
    %v1560 = vunpack.c.l.b16 %v464
    %v1561 = vunpack.c.h.b16 %v464
    %v1562 = vunpack.c.l.b16 %v465
    %v1563 = vunpack.c.h.b16 %v465
    %v1564 = vunpack.c.l.b16 %v466
    %v1565 = vunpack.c.h.b16 %v466
    %v1566 = vunpack.c.l.b16 %v467
    %v1567 = vunpack.c.h.b16 %v467
    %v1568 = vunpack.c.l.b16 %v468
    %v1569 = vunpack.c.h.b16 %v468
    %v1570 = vunpack.c.l.b16 %v469
    %v1571 = vunpack.c.h.b16 %v469
    %v1572 = vunpack.c.l.b16 %v470
    %v1573 = vunpack.c.h.b16 %v470
    %v1574 = vunpack.c.l.b16 %v471
    %v1575 = vunpack.c.h.b16 %v471
    %v1576 = vunpack.c.l.b16 %v472
    %v1577 = vunpack.c.h.b16 %v472
    %v1578 = vunpack.c.l.b16 %v473
    %v1579 = vunpack.c.h.b16 %v473
    %v1580 = vunpack.c.l.b16 %v474
    %v1581 = vunpack.c.h.b16 %v474
    %v1582 = vunpack.c.l.b16 %v475
    %v1583 = vunpack.c.h.b16 %v475
    %v1584 = vunpack.c.l.b16 %v476
    %v1585 = vunpack.c.h.b16 %v476
    %v1586 = vunpack.c.l.b16 %v477
    %v1587 = vunpack.c.h.b16 %v477
    %v1588 = vunpack.c.l.b16 %v478
    %v1589 = vunpack.c.h.b16 %v478
    %v1590 = vunpack.c.l.b16 %v479
    %v1591 = vunpack.c.h.b16 %v479
    %v1592 = vunpack.c.l.b16 %v480
    %v1593 = vunpack.c.h.b16 %v480
    %v1594 = vunpack.c.l.b16 %v481
    %v1595 = vunpack.c.h.b16 %v481
    %v1596 = vunpack.c.l.b16 %v482
    %v1597 = vunpack.c.h.b16 %v482
    %v1598 = vunpack.c.l.b16 %v483
    %v1599 = vunpack.c.h.b16 %v483
    %v1600 = vunpack.c.l.b16 %v484
    %v1601 = vunpack.c.h.b16 %v484
    %v1602 = vunpack.c.l.b16 %v485
    %v1603 = vunpack.c.h.b16 %v485
    %v1604 = vunpack.c.l.b16 %v486
    %v1605 = vunpack.c.h.b16 %v486
    %v1606 = vunpack.c.l.b16 %v487
    %v1607 = vunpack.c.h.b16 %v487
    %v1608 = vunpack.c.l.b16 %v488
    %v1609 = vunpack.c.h.b16 %v488
    %v1610 = vunpack.c.l.b16 %v489
    %v1611 = vunpack.c.h.b16 %v489
    %v1612 = vunpack.c.l.b16 %v490
    %v1613 = vunpack.c.h.b16 %v490
    %v1614 = vunpack.c.l.b16 %v491
    %v1615 = vunpack.c.h.b16 %v491
    %v1616 = vunpack.c.l.b16 %v492
    %v1617 = vunpack.c.h.b16 %v492
    %v1618 = vunpack.c.l.b16 %v493
    %v1619 = vunpack.c.h.b16 %v493
    %v1620 = vunpack.c.l.b16 %v494
    %v1621 = vunpack.c.h.b16 %v494
    %v1622 = vunpack.c.l.b16 %v495
    %v1623 = vunpack.c.h.b16 %v495
    %v1624 = vunpack.c.l.b16 %v496
    %v1625 = vunpack.c.h.b16 %v496
    %v1626 = vunpack.c.l.b16 %v497
    %v1627 = vunpack.c.h.b16 %v497
    %v1628 = vunpack.c.l.b16 %v498
    %v1629 = vunpack.c.h.b16 %v498
    %v1630 = vunpack.c.l.b16 %v499
    %v1631 = vunpack.c.h.b16 %v499
    %v1632 = vunpack.c.l.b16 %v500
    %v1633 = vunpack.c.h.b16 %v500
    %v1634 = vunpack.c.l.b16 %v501
    %v1635 = vunpack.c.h.b16 %v501
    %v1636 = vunpack.c.l.b16 %v502
    %v1637 = vunpack.c.h.b16 %v502
    %v1638 = vunpack.c.l.b16 %v503
    %v1639 = vunpack.c.h.b16 %v503
    %v1640 = vunpack.c.l.b16 %v504
    %v1641 = vunpack.c.h.b16 %v504
    %v1642 = vunpack.c.l.b16 %v505
    %v1643 = vunpack.c.h.b16 %v505
    %v1644 = vunpack.c.l.b16 %v506
    %v1645 = vunpack.c.h.b16 %v506
    %v1646 = vunpack.c.l.b16 %v507
    %v1647 = vunpack.c.h.b16 %v507
    %v1648 = vunpack.c.l.b16 %v508
    %v1649 = vunpack.c.h.b16 %v508
    %v1650 = vunpack.c.l.b16 %v509
    %v1651 = vunpack.c.h.b16 %v509
    %v1652 = vunpack.c.l.b16 %v510
    %v1653 = vunpack.c.h.b16 %v510
    %v1654 = vunpack.c.l.b16 %v511
    %v1655 = vunpack.c.h.b16 %v511
    %v1656 = vunpack.c.l.b16 %v512
    %v1657 = vunpack.c.h.b16 %v512
    %v1658 = vunpack.c.l.b16 %v513
    %v1659 = vunpack.c.h.b16 %v513
    %v1660 = vunpack.c.l.b16 %v514
    %v1661 = vunpack.c.h.b16 %v514
    %v1662 = vunpack.c.l.b16 %v515
    %v1663 = vunpack.c.h.b16 %v515
    %v1664 = vunpack.c.l.b16 %v516
    %v1665 = vunpack.c.h.b16 %v516
    %v1666 = vunpack.c.l.b16 %v517
    %v1667 = vunpack.c.h.b16 %v517
    %v1668 = vunpack.c.l.b16 %v518
    %v1669 = vunpack.c.h.b16 %v518
    %v1670 = vunpack.c.l.b16 %v519
    %v1671 = vunpack.c.h.b16 %v519
    %v1672 = vunpack.c.l.b16 %v520
    %v1673 = vunpack.c.h.b16 %v520
    %v1674 = vunpack.c.l.b16 %v521
    %v1675 = vunpack.c.h.b16 %v521
    %v1676 = vunpack.c.l.b16 %v522
    %v1677 = vunpack.c.h.b16 %v522
    %v1678 = vunpack.c.l.b16 %v523
    %v1679 = vunpack.c.h.b16 %v523
    %v1680 = vunpack.c.l.b16 %v524
    %v1681 = vunpack.c.h.b16 %v524
    %v1682 = vunpack.c.l.b16 %v525
    %v1683 = vunpack.c.h.b16 %v525
    %v1684 = vunpack.c.l.b16 %v526
    %v1685 = vunpack.c.h.b16 %v526
    %v1686 = vunpack.c.l.b16 %v527
    %v1687 = vunpack.c.h.b16 %v527
    %v1688 = vunpack.c.l.b16 %v528
    %v1689 = vunpack.c.h.b16 %v528
    %v1690 = vunpack.c.l.b16 %v529
    %v1691 = vunpack.c.h.b16 %v529
    %v1692 = vunpack.c.l.b16 %v530
    %v1693 = vunpack.c.h.b16 %v530
    %v1694 = vunpack.c.l.b16 %v531
    %v1695 = vunpack.c.h.b16 %v531
    %v1696 = vunpack.c.l.b16 %v532
    %v1697 = vunpack.c.h.b16 %v532
    %v1698 = vunpack.c.l.b16 %v533
    %v1699 = vunpack.c.h.b16 %v533
    %v1700 = vunpack.c.l.b16 %v534
    %v1701 = vunpack.c.h.b16 %v534
    %v1702 = vunpack.c.l.b16 %v535
    %v1703 = vunpack.c.h.b16 %v535
    %v1704 = vunpack.c.l.b16 %v536
    %v1705 = vunpack.c.h.b16 %v536
    %v1706 = vunpack.c.l.b16 %v537
    %v1707 = vunpack.c.h.b16 %v537
    %v1708 = vunpack.c.l.b16 %v538
    %v1709 = vunpack.c.h.b16 %v538
    %v1710 = vunpack.c.l.b16 %v539
    %v1711 = vunpack.c.h.b16 %v539
    %v1712 = vunpack.c.l.b16 %v540
    %v1713 = vunpack.c.h.b16 %v540
    %v1714 = vunpack.c.l.b16 %v541
    %v1715 = vunpack.c.h.b16 %v541
    %v1716 = vunpack.c.l.b16 %v542
    %v1717 = vunpack.c.h.b16 %v542
    %v1718 = vunpack.c.l.b16 %v543
    %v1719 = vunpack.c.h.b16 %v543
    %v1720 = vunpack.c.l.b16 %v544
    %v1721 = vunpack.c.h.b16 %v544
    %v1722 = vunpack.c.l.b16 %v545
    %v1723 = vunpack.c.h.b16 %v545
    %v1724 = vunpack.c.l.b16 %v546
    %v1725 = vunpack.c.h.b16 %v546
    %v1726 = vunpack.c.l.b16 %v547
    %v1727 = vunpack.c.h.b16 %v547
    %v1728 = vunpack.c.l.b16 %v548
    %v1729 = vunpack.c.h.b16 %v548
    %v1730 = vunpack.c.l.b16 %v549
    %v1731 = vunpack.c.h.b16 %v549
    %v1732 = vunpack.c.l.b16 %v550
    %v1733 = vunpack.c.h.b16 %v550
    %v1734 = vunpack.c.l.b16 %v551
    %v1735 = vunpack.c.h.b16 %v551
    %v1736 = vunpack.c.l.b16 %v552
    %v1737 = vunpack.c.h.b16 %v552
    %v1738 = vunpack.c.l.b16 %v553
    %v1739 = vunpack.c.h.b16 %v553
    %v1740 = vunpack.c.l.b16 %v554
    %v1741 = vunpack.c.h.b16 %v554
    %v1742 = vunpack.c.l.b16 %v555
    %v1743 = vunpack.c.h.b16 %v555
    %v1744 = vunpack.c.l.b16 %v556
    %v1745 = vunpack.c.h.b16 %v556
    %v1746 = vunpack.c.l.b16 %v557
    %v1747 = vunpack.c.h.b16 %v557
    %v1748 = vunpack.c.l.b16 %v558
    %v1749 = vunpack.c.h.b16 %v558
    %v1750 = vunpack.c.l.b16 %v559
    %v1751 = vunpack.c.h.b16 %v559
    %v1752 = vunpack.c.l.b16 %v560
    %v1753 = vunpack.c.h.b16 %v560
    %v1754 = vunpack.c.l.b16 %v561
    %v1755 = vunpack.c.h.b16 %v561
    %v1756 = vpack.c.b16 %v996, %v988
    %v1757 = vpack.c.b16 %v997, %v989
    %v1758 = vpack.c.b16 %v998, %v990
    %v1759 = vpack.c.b16 %v999, %v991
    %v1760 = vpack.c.b16 %v1000, %v992
    %v1761 = vpack.c.b16 %v1001, %v993
    %v1762 = vpack.c.b16 %v1002, %v994
    %v1763 = vpack.c.b16 %v1003, %v995
    %v1764 = vpack.c.b16 %v1012, %v1004
    %v1765 = vpack.c.b16 %v1013, %v1005
    %v1766 = vpack.c.b16 %v1014, %v1006
    %v1767 = vpack.c.b16 %v1015, %v1007
    %v1768 = vpack.c.b16 %v1016, %v1008
    %v1769 = vpack.c.b16 %v1017, %v1009
    %v1770 = vpack.c.b16 %v1018, %v1010
    %v1771 = vpack.c.b16 %v1019, %v1011
    %v1772 = vpack.c.b16 %v1028, %v1020
    %v1773 = vpack.c.b16 %v1029, %v1021
    %v1774 = vpack.c.b16 %v1030, %v1022
    %v1775 = vpack.c.b16 %v1031, %v1023
    %v1776 = vpack.c.b16 %v1032, %v1024
    %v1777 = vpack.c.b16 %v1033, %v1025
    %v1778 = vpack.c.b16 %v1034, %v1026
    %v1779 = vpack.c.b16 %v1035, %v1027
    %v1780 = vpack.c.b16 %v1044, %v1036
    %v1781 = vpack.c.b16 %v1045, %v1037
    %v1782 = vpack.c.b16 %v1046, %v1038
    %v1783 = vpack.c.b16 %v1047, %v1039
    %v1784 = vpack.c.b16 %v1048, %v1040
    %v1785 = vpack.c.b16 %v1049, %v1041
    %v1786 = vpack.c.b16 %v1050, %v1042
    %v1787 = vpack.c.b16 %v1051, %v1043
    %v1788 = vpack.c.b16 %v1060, %v1052
    %v1789 = vpack.c.b16 %v1061, %v1053
    %v1790 = vpack.c.b16 %v1062, %v1054
    %v1791 = vpack.c.b16 %v1063, %v1055
    %v1792 = vpack.c.b16 %v1064, %v1056
    %v1793 = vpack.c.b16 %v1065, %v1057
    %v1794 = vpack.c.b16 %v1066, %v1058
    %v1795 = vpack.c.b16 %v1067, %v1059
    %v1796 = vpack.c.b16 %v1076, %v1068
    %v1797 = vpack.c.b16 %v1077, %v1069
    %v1798 = vpack.c.b16 %v1078, %v1070
    %v1799 = vpack.c.b16 %v1079, %v1071
    %v1800 = vpack.c.b16 %v1080, %v1072
    %v1801 = vpack.c.b16 %v1081, %v1073
    %v1802 = vpack.c.b16 %v1082, %v1074
    %v1803 = vpack.c.b16 %v1083, %v1075
    %v1804 = vpack.c.b16 %v1092, %v1084
    %v1805 = vpack.c.b16 %v1093, %v1085
    %v1806 = vpack.c.b16 %v1094, %v1086
    %v1807 = vpack.c.b16 %v1095, %v1087
    %v1808 = vpack.c.b16 %v1096, %v1088
    %v1809 = vpack.c.b16 %v1097, %v1089
    %v1810 = vpack.c.b16 %v1098, %v1090
    %v1811 = vpack.c.b16 %v1099, %v1091
    %v1812 = vpack.c.b16 %v1108, %v1100
    %v1813 = vpack.c.b16 %v1109, %v1101
    %v1814 = vpack.c.b16 %v1110, %v1102
    %v1815 = vpack.c.b16 %v1111, %v1103
    %v1816 = vpack.c.b16 %v1112, %v1104
    %v1817 = vpack.c.b16 %v1113, %v1105
    %v1818 = vpack.c.b16 %v1114, %v1106
    %v1819 = vpack.c.b16 %v1115, %v1107
    %v1820 = vpack.c.b16 %v1124, %v1116
    %v1821 = vpack.c.b16 %v1125, %v1117
    %v1822 = vpack.c.b16 %v1126, %v1118
    %v1823 = vpack.c.b16 %v1127, %v1119
    %v1824 = vpack.c.b16 %v1128, %v1120
    %v1825 = vpack.c.b16 %v1129, %v1121
    %v1826 = vpack.c.b16 %v1130, %v1122
    %v1827 = vpack.c.b16 %v1131, %v1123
    %v1828 = vpack.c.b16 %v1140, %v1132
    %v1829 = vpack.c.b16 %v1141, %v1133
    %v1830 = vpack.c.b16 %v1142, %v1134
    %v1831 = vpack.c.b16 %v1143, %v1135
    %v1832 = vpack.c.b16 %v1144, %v1136
    %v1833 = vpack.c.b16 %v1145, %v1137
    %v1834 = vpack.c.b16 %v1146, %v1138
    %v1835 = vpack.c.b16 %v1147, %v1139
    %v1836 = vpack.c.b16 %v1156, %v1148
    %v1837 = vpack.c.b16 %v1157, %v1149
    %v1838 = vpack.c.b16 %v1158, %v1150
    %v1839 = vpack.c.b16 %v1159, %v1151
    %v1840 = vpack.c.b16 %v1160, %v1152
    %v1841 = vpack.c.b16 %v1161, %v1153
    %v1842 = vpack.c.b16 %v1162, %v1154
    %v1843 = vpack.c.b16 %v1163, %v1155
    %v1844 = vpack.c.b16 %v1172, %v1164
    %v1845 = vpack.c.b16 %v1173, %v1165
    %v1846 = vpack.c.b16 %v1174, %v1166
    %v1847 = vpack.c.b16 %v1175, %v1167
    %v1848 = vpack.c.b16 %v1176, %v1168
    %v1849 = vpack.c.b16 %v1177, %v1169
    %v1850 = vpack.c.b16 %v1178, %v1170
    %v1851 = vpack.c.b16 %v1179, %v1171
    %v1852 = vpack.c.b16 %v1188, %v1180
    %v1853 = vpack.c.b16 %v1189, %v1181
    %v1854 = vpack.c.b16 %v1190, %v1182
    %v1855 = vpack.c.b16 %v1191, %v1183
    %v1856 = vpack.c.b16 %v1192, %v1184
    %v1857 = vpack.c.b16 %v1193, %v1185
    %v1858 = vpack.c.b16 %v1194, %v1186
    %v1859 = vpack.c.b16 %v1195, %v1187
    %v1860 = vpack.c.b16 %v1204, %v1196
    %v1861 = vpack.c.b16 %v1205, %v1197
    %v1862 = vpack.c.b16 %v1206, %v1198
    %v1863 = vpack.c.b16 %v1207, %v1199
    %v1864 = vpack.c.b16 %v1208, %v1200
    %v1865 = vpack.c.b16 %v1209, %v1201
    %v1866 = vpack.c.b16 %v1210, %v1202
    %v1867 = vpack.c.b16 %v1211, %v1203
    %v1868 = vpack.c.b16 %v1220, %v1212
    %v1869 = vpack.c.b16 %v1221, %v1213
    %v1870 = vpack.c.b16 %v1222, %v1214
    %v1871 = vpack.c.b16 %v1223, %v1215
    %v1872 = vpack.c.b16 %v1224, %v1216
    %v1873 = vpack.c.b16 %v1225, %v1217
    %v1874 = vpack.c.b16 %v1226, %v1218
    %v1875 = vpack.c.b16 %v1227, %v1219
    %v1876 = vpack.c.b16 %v1236, %v1228
    %v1877 = vpack.c.b16 %v1237, %v1229
    %v1878 = vpack.c.b16 %v1238, %v1230
    %v1879 = vpack.c.b16 %v1239, %v1231
    %v1880 = vpack.c.b16 %v1240, %v1232
    %v1881 = vpack.c.b16 %v1241, %v1233
    %v1882 = vpack.c.b16 %v1242, %v1234
    %v1883 = vpack.c.b16 %v1243, %v1235
    %v1884 = vpack.c.b16 %v1252, %v1244
    %v1885 = vpack.c.b16 %v1253, %v1245
    %v1886 = vpack.c.b16 %v1254, %v1246
    %v1887 = vpack.c.b16 %v1255, %v1247
    %v1888 = vpack.c.b16 %v1256, %v1248
    %v1889 = vpack.c.b16 %v1257, %v1249
    %v1890 = vpack.c.b16 %v1258, %v1250
    %v1891 = vpack.c.b16 %v1259, %v1251
    %v1892 = vpack.c.b16 %v1268, %v1260
    %v1893 = vpack.c.b16 %v1269, %v1261
    %v1894 = vpack.c.b16 %v1270, %v1262
    %v1895 = vpack.c.b16 %v1271, %v1263
    %v1896 = vpack.c.b16 %v1272, %v1264
    %v1897 = vpack.c.b16 %v1273, %v1265
    %v1898 = vpack.c.b16 %v1274, %v1266
    %v1899 = vpack.c.b16 %v1275, %v1267
    %v1900 = vpack.c.b16 %v1284, %v1276
    %v1901 = vpack.c.b16 %v1285, %v1277
    %v1902 = vpack.c.b16 %v1286, %v1278
    %v1903 = vpack.c.b16 %v1287, %v1279
    %v1904 = vpack.c.b16 %v1288, %v1280
    %v1905 = vpack.c.b16 %v1289, %v1281
    %v1906 = vpack.c.b16 %v1290, %v1282
    %v1907 = vpack.c.b16 %v1291, %v1283
    %v1908 = vpack.c.b16 %v1300, %v1292
    %v1909 = vpack.c.b16 %v1301, %v1293
    %v1910 = vpack.c.b16 %v1302, %v1294
    %v1911 = vpack.c.b16 %v1303, %v1295
    %v1912 = vpack.c.b16 %v1304, %v1296
    %v1913 = vpack.c.b16 %v1305, %v1297
    %v1914 = vpack.c.b16 %v1306, %v1298
    %v1915 = vpack.c.b16 %v1307, %v1299
    %v1916 = vpack.c.b16 %v1316, %v1308
    %v1917 = vpack.c.b16 %v1317, %v1309
    %v1918 = vpack.c.b16 %v1318, %v1310
    %v1919 = vpack.c.b16 %v1319, %v1311
    %v1920 = vpack.c.b16 %v1320, %v1312
    %v1921 = vpack.c.b16 %v1321, %v1313
    %v1922 = vpack.c.b16 %v1322, %v1314
    %v1923 = vpack.c.b16 %v1323, %v1315
    %v1924 = vpack.c.b16 %v1332, %v1324
    %v1925 = vpack.c.b16 %v1333, %v1325
    %v1926 = vpack.c.b16 %v1334, %v1326
    %v1927 = vpack.c.b16 %v1335, %v1327
    %v1928 = vpack.c.b16 %v1336, %v1328
    %v1929 = vpack.c.b16 %v1337, %v1329
    %v1930 = vpack.c.b16 %v1338, %v1330
    %v1931 = vpack.c.b16 %v1339, %v1331
    %v1932 = vpack.c.b16 %v1348, %v1340
    %v1933 = vpack.c.b16 %v1349, %v1341
    %v1934 = vpack.c.b16 %v1350, %v1342
    %v1935 = vpack.c.b16 %v1351, %v1343
    %v1936 = vpack.c.b16 %v1352, %v1344
    %v1937 = vpack.c.b16 %v1353, %v1345
    %v1938 = vpack.c.b16 %v1354, %v1346
    %v1939 = vpack.c.b16 %v1355, %v1347
    %v1940 = vpack.c.b16 %v1364, %v1356
    %v1941 = vpack.c.b16 %v1365, %v1357
    %v1942 = vpack.c.b16 %v1366, %v1358
    %v1943 = vpack.c.b16 %v1367, %v1359
    %v1944 = vpack.c.b16 %v1368, %v1360
    %v1945 = vpack.c.b16 %v1369, %v1361
    %v1946 = vpack.c.b16 %v1370, %v1362
    %v1947 = vpack.c.b16 %v1371, %v1363
    %v1948 = vpack.c.b16 %v1380, %v1372
    %v1949 = vpack.c.b16 %v1381, %v1373
    %v1950 = vpack.c.b16 %v1382, %v1374
    %v1951 = vpack.c.b16 %v1383, %v1375
    %v1952 = vpack.c.b16 %v1384, %v1376
    %v1953 = vpack.c.b16 %v1385, %v1377
    %v1954 = vpack.c.b16 %v1386, %v1378
    %v1955 = vpack.c.b16 %v1387, %v1379
    %v1956 = vpack.c.b16 %v1396, %v1388
    %v1957 = vpack.c.b16 %v1397, %v1389
    %v1958 = vpack.c.b16 %v1398, %v1390
    %v1959 = vpack.c.b16 %v1399, %v1391
    %v1960 = vpack.c.b16 %v1400, %v1392
    %v1961 = vpack.c.b16 %v1401, %v1393
    %v1962 = vpack.c.b16 %v1402, %v1394
    %v1963 = vpack.c.b16 %v1403, %v1395
    %v1964 = vpack.c.b16 %v1412, %v1404
    %v1965 = vpack.c.b16 %v1413, %v1405
    %v1966 = vpack.c.b16 %v1414, %v1406
    %v1967 = vpack.c.b16 %v1415, %v1407
    %v1968 = vpack.c.b16 %v1416, %v1408
    %v1969 = vpack.c.b16 %v1417, %v1409
    %v1970 = vpack.c.b16 %v1418, %v1410
    %v1971 = vpack.c.b16 %v1419, %v1411
    %v1972 = vpack.c.b16 %v1428, %v1420
    %v1973 = vpack.c.b16 %v1429, %v1421
    %v1974 = vpack.c.b16 %v1430, %v1422
    %v1975 = vpack.c.b16 %v1431, %v1423
    %v1976 = vpack.c.b16 %v1432, %v1424
    %v1977 = vpack.c.b16 %v1433, %v1425
    %v1978 = vpack.c.b16 %v1434, %v1426
    %v1979 = vpack.c.b16 %v1435, %v1427
    %v1980 = vpack.c.b16 %v1444, %v1436
    %v1981 = vpack.c.b16 %v1445, %v1437
    %v1982 = vpack.c.b16 %v1446, %v1438
    %v1983 = vpack.c.b16 %v1447, %v1439
    %v1984 = vpack.c.b16 %v1448, %v1440
    %v1985 = vpack.c.b16 %v1449, %v1441
    %v1986 = vpack.c.b16 %v1450, %v1442
    %v1987 = vpack.c.b16 %v1451, %v1443
    %v1988 = vpack.c.b16 %v1460, %v1452
    %v1989 = vpack.c.b16 %v1461, %v1453
    %v1990 = vpack.c.b16 %v1462, %v1454
    %v1991 = vpack.c.b16 %v1463, %v1455
    %v1992 = vpack.c.b16 %v1464, %v1456
    %v1993 = vpack.c.b16 %v1465, %v1457
    %v1994 = vpack.c.b16 %v1466, %v1458
    %v1995 = vpack.c.b16 %v1467, %v1459
    %v1996 = vpack.c.b16 %v1476, %v1468
    %v1997 = vpack.c.b16 %v1477, %v1469
    %v1998 = vpack.c.b16 %v1478, %v1470
    %v1999 = vpack.c.b16 %v1479, %v1471
    %v2000 = vpack.c.b16 %v1480, %v1472
    %v2001 = vpack.c.b16 %v1481, %v1473
    %v2002 = vpack.c.b16 %v1482, %v1474
    %v2003 = vpack.c.b16 %v1483, %v1475
    %v2004 = vpack.c.b16 %v1492, %v1484
    %v2005 = vpack.c.b16 %v1493, %v1485
    %v2006 = vpack.c.b16 %v1494, %v1486
    %v2007 = vpack.c.b16 %v1495, %v1487
    %v2008 = vpack.c.b16 %v1496, %v1488
    %v2009 = vpack.c.b16 %v1497, %v1489
    %v2010 = vpack.c.b16 %v1498, %v1490
    %v2011 = vpack.c.b16 %v1499, %v1491
    %v2012 = vpack.c.b16 %v1508, %v1500
    %v2013 = vpack.c.b16 %v1509, %v1501
    %v2014 = vpack.c.b16 %v1510, %v1502
    %v2015 = vpack.c.b16 %v1511, %v1503
    %v2016 = vpack.c.b16 %v1512, %v1504
    %v2017 = vpack.c.b16 %v1513, %v1505
    %v2018 = vpack.c.b16 %v1514, %v1506
    %v2019 = vpack.c.b16 %v1515, %v1507
    %v2020 = vpack.c.b16 %v1524, %v1516
    %v2021 = vpack.c.b16 %v1525, %v1517
    %v2022 = vpack.c.b16 %v1526, %v1518
    %v2023 = vpack.c.b16 %v1527, %v1519
    %v2024 = vpack.c.b16 %v1528, %v1520
    %v2025 = vpack.c.b16 %v1529, %v1521
    %v2026 = vpack.c.b16 %v1530, %v1522
    %v2027 = vpack.c.b16 %v1531, %v1523
    %v2028 = vpack.c.b16 %v1540, %v1532
    %v2029 = vpack.c.b16 %v1541, %v1533
    %v2030 = vpack.c.b16 %v1542, %v1534
    %v2031 = vpack.c.b16 %v1543, %v1535
    %v2032 = vpack.c.b16 %v1544, %v1536
    %v2033 = vpack.c.b16 %v1545, %v1537
    %v2034 = vpack.c.b16 %v1546, %v1538
    %v2035 = vpack.c.b16 %v1547, %v1539
    %v2036 = vpack.c.b16 %v1556, %v1548
    %v2037 = vpack.c.b16 %v1557, %v1549
    %v2038 = vpack.c.b16 %v1558, %v1550
    %v2039 = vpack.c.b16 %v1559, %v1551
    %v2040 = vpack.c.b16 %v1560, %v1552
    %v2041 = vpack.c.b16 %v1561, %v1553
    %v2042 = vpack.c.b16 %v1562, %v1554
    %v2043 = vpack.c.b16 %v1563, %v1555
    %v2044 = vpack.c.b16 %v1572, %v1564
    %v2045 = vpack.c.b16 %v1573, %v1565
    %v2046 = vpack.c.b16 %v1574, %v1566
    %v2047 = vpack.c.b16 %v1575, %v1567
    %v2048 = vpack.c.b16 %v1576, %v1568
    %v2049 = vpack.c.b16 %v1577, %v1569
    %v2050 = vpack.c.b16 %v1578, %v1570
    %v2051 = vpack.c.b16 %v1579, %v1571
    %v2052 = vpack.c.b16 %v1588, %v1580
    %v2053 = vpack.c.b16 %v1589, %v1581
    %v2054 = vpack.c.b16 %v1590, %v1582
    %v2055 = vpack.c.b16 %v1591, %v1583
    %v2056 = vpack.c.b16 %v1592, %v1584
    %v2057 = vpack.c.b16 %v1593, %v1585
    %v2058 = vpack.c.b16 %v1594, %v1586
    %v2059 = vpack.c.b16 %v1595, %v1587
    %v2060 = vpack.c.b16 %v1604, %v1596
    %v2061 = vpack.c.b16 %v1605, %v1597
    %v2062 = vpack.c.b16 %v1606, %v1598
    %v2063 = vpack.c.b16 %v1607, %v1599
    %v2064 = vpack.c.b16 %v1608, %v1600
    %v2065 = vpack.c.b16 %v1609, %v1601
    %v2066 = vpack.c.b16 %v1610, %v1602
    %v2067 = vpack.c.b16 %v1611, %v1603
    %v2068 = vpack.c.b16 %v1620, %v1612
    %v2069 = vpack.c.b16 %v1621, %v1613
    %v2070 = vpack.c.b16 %v1622, %v1614
    %v2071 = vpack.c.b16 %v1623, %v1615
    %v2072 = vpack.c.b16 %v1624, %v1616
    %v2073 = vpack.c.b16 %v1625, %v1617
    %v2074 = vpack.c.b16 %v1626, %v1618
    %v2075 = vpack.c.b16 %v1627, %v1619
    %v2076 = vpack.c.b16 %v1636, %v1628
    %v2077 = vpack.c.b16 %v1637, %v1629
    %v2078 = vpack.c.b16 %v1638, %v1630
    %v2079 = vpack.c.b16 %v1639, %v1631
    %v2080 = vpack.c.b16 %v1640, %v1632
    %v2081 = vpack.c.b16 %v1641, %v1633
    %v2082 = vpack.c.b16 %v1642, %v1634
    %v2083 = vpack.c.b16 %v1643, %v1635
    %v2084 = vpack.c.b16 %v1652, %v1644
    %v2085 = vpack.c.b16 %v1653, %v1645
    %v2086 = vpack.c.b16 %v1654, %v1646
    %v2087 = vpack.c.b16 %v1655, %v1647
    %v2088 = vpack.c.b16 %v1656, %v1648
    %v2089 = vpack.c.b16 %v1657, %v1649
    %v2090 = vpack.c.b16 %v1658, %v1650
    %v2091 = vpack.c.b16 %v1659, %v1651
    %v2092 = vpack.c.b16 %v1668, %v1660
    %v2093 = vpack.c.b16 %v1669, %v1661
    %v2094 = vpack.c.b16 %v1670, %v1662
    %v2095 = vpack.c.b16 %v1671, %v1663
    %v2096 = vpack.c.b16 %v1672, %v1664
    %v2097 = vpack.c.b16 %v1673, %v1665
    %v2098 = vpack.c.b16 %v1674, %v1666
    %v2099 = vpack.c.b16 %v1675, %v1667
    %v2100 = vpack.c.b16 %v1684, %v1676
    %v2101 = vpack.c.b16 %v1685, %v1677
    %v2102 = vpack.c.b16 %v1686, %v1678
    %v2103 = vpack.c.b16 %v1687, %v1679
    %v2104 = vpack.c.b16 %v1688, %v1680
    %v2105 = vpack.c.b16 %v1689, %v1681
    %v2106 = vpack.c.b16 %v1690, %v1682
    %v2107 = vpack.c.b16 %v1691, %v1683
    %v2108 = vpack.c.b16 %v1700, %v1692
    %v2109 = vpack.c.b16 %v1701, %v1693
    %v2110 = vpack.c.b16 %v1702, %v1694
    %v2111 = vpack.c.b16 %v1703, %v1695
    %v2112 = vpack.c.b16 %v1704, %v1696
    %v2113 = vpack.c.b16 %v1705, %v1697
    %v2114 = vpack.c.b16 %v1706, %v1698
    %v2115 = vpack.c.b16 %v1707, %v1699
    %v2116 = vpack.c.b16 %v1716, %v1708
    %v2117 = vpack.c.b16 %v1717, %v1709
    %v2118 = vpack.c.b16 %v1718, %v1710
    %v2119 = vpack.c.b16 %v1719, %v1711
    %v2120 = vpack.c.b16 %v1720, %v1712
    %v2121 = vpack.c.b16 %v1721, %v1713
    %v2122 = vpack.c.b16 %v1722, %v1714
    %v2123 = vpack.c.b16 %v1723, %v1715
    %v2124 = vpack.c.b16 %v1732, %v1724
    %v2125 = vpack.c.b16 %v1733, %v1725
    %v2126 = vpack.c.b16 %v1734, %v1726
    %v2127 = vpack.c.b16 %v1735, %v1727
    %v2128 = vpack.c.b16 %v1736, %v1728
    %v2129 = vpack.c.b16 %v1737, %v1729
    %v2130 = vpack.c.b16 %v1738, %v1730
    %v2131 = vpack.c.b16 %v1739, %v1731
    %v2132 = vpack.c.b16 %v1748, %v1740
    %v2133 = vpack.c.b16 %v1749, %v1741
    %v2134 = vpack.c.b16 %v1750, %v1742
    %v2135 = vpack.c.b16 %v1751, %v1743
    %v2136 = vpack.c.b16 %v1752, %v1744
    %v2137 = vpack.c.b16 %v1753, %v1745
    %v2138 = vpack.c.b16 %v1754, %v1746
    %v2139 = vpack.c.b16 %v1755, %v1747
    %2524 = vmatprep.subr.bf16.mxu0 %v1813
    %2525 = vmatpush1.bf16.msra.mxu0 %v1812
    %2526 = vmatprep.subr.bf16.mxu0 %v1805
    %2527 = vmatpush1.bf16.msra.mxu0 %v1804
    %2528 = vmatprep.subr.bf16.mxu0 %v1797
    %2529 = vmatpush1.bf16.msra.mxu0 %v1796
    %2530 = vmatprep.subr.bf16.mxu0 %v1789
    %2531 = vmatpush1.bf16.msra.mxu0 %v1788
    %2532 = vmatprep.subr.bf16.mxu0 %v1781
    %2533 = vmatpush1.bf16.msra.mxu0 %v1780
    %2534 = vmatprep.subr.bf16.mxu0 %v1773
    %2535 = vmatpush1.bf16.msra.mxu0 %v1772
    %2536 = vmatprep.subr.bf16.mxu0 %v1765
    %2537 = vmatpush1.bf16.msra.mxu0 %v1764
    %2538 = vmatprep.subr.bf16.mxu0 %v1757
    %2539 = vmatpush1.bf16.msra.mxu0 %v1756
    %2540 = vmatprep.subr.bf16.mxu0 %v1877
    %2541 = vmatpush2.bf16.msra.mxu0 %v1876
    %2542 = vmatprep.subr.bf16.mxu0 %v1869
    %2543 = vmatpush2.bf16.msra.mxu0 %v1868
    %2544 = vmatprep.subr.bf16.mxu0 %v1861
    %2545 = vmatpush2.bf16.msra.mxu0 %v1860
    %2546 = vmatprep.subr.bf16.mxu0 %v1853
    %2547 = vmatpush2.bf16.msra.mxu0 %v1852
    %2548 = vmatprep.subr.bf16.mxu0 %v1845
    %2549 = vmatpush2.bf16.msra.mxu0 %v1844
    %2550 = vmatprep.subr.bf16.mxu0 %v1837
    %2551 = vmatpush2.bf16.msra.mxu0 %v1836
    %2552 = vmatprep.subr.bf16.mxu0 %v1829
    %2553 = vmatpush2.bf16.msra.mxu0 %v1828
    %2554 = vmatprep.subr.bf16.mxu0 %v1821
    %2555 = vmatpush2.bf16.msra.mxu0 %v1820
    %2556 = vmatprep.mubr.bf16.mxu0 %v167
    %2557 = vmatmul.mubr.bf16.gmra.mxu0 %v166
    %v2558 = vpop.f32.mrf.mxu0
    %v2559 = vadd.f32 %v567, %v2558
    %v2560 = vpop.f32.mrf.mxu0
    %v2561 = vadd.f32 %v571, %v2560
    %v2562 = vpop.f32.mrf.mxu0
    %v2563 = vadd.f32 %v567, %v2562
    %v2564 = vpop.f32.mrf.mxu0
    %v2565 = vadd.f32 %v571, %v2564
    %2566 = vmatprep.mubr.bf16.mxu0 %v173
    %2567 = vmatmul.mubr.bf16.gmra.mxu0 %v172
    %v2568 = vpop.f32.mrf.mxu0
    %v2569 = vadd.f32 %v567, %v2568
    %v2570 = vpop.f32.mrf.mxu0
    %v2571 = vadd.f32 %v571, %v2570
    %v2572 = vpop.f32.mrf.mxu0
    %v2573 = vpop.f32.mrf.mxu0
    %2574 = vdwg.mxu0
    %2575 = vmatprep.subr.bf16.mxu0 %v1941
    %2576 = vmatpush1.bf16.msra.mxu0 %v1940
    %2577 = vmatprep.subr.bf16.mxu0 %v1933
    %2578 = vmatpush1.bf16.msra.mxu0 %v1932
    %2579 = vmatprep.subr.bf16.mxu0 %v1925
    %2580 = vmatpush1.bf16.msra.mxu0 %v1924
    %2581 = vmatprep.subr.bf16.mxu0 %v1917
    %2582 = vmatpush1.bf16.msra.mxu0 %v1916
    %2583 = vmatprep.subr.bf16.mxu0 %v1909
    %2584 = vmatpush1.bf16.msra.mxu0 %v1908
    %2585 = vmatprep.subr.bf16.mxu0 %v1901
    %2586 = vmatpush1.bf16.msra.mxu0 %v1900
    %2587 = vmatprep.subr.bf16.mxu0 %v1893
    %2588 = vmatpush1.bf16.msra.mxu0 %v1892
    %2589 = vmatprep.subr.bf16.mxu0 %v1885
    %2590 = vmatpush1.bf16.msra.mxu0 %v1884
    %2591 = vmatprep.subr.bf16.mxu0 %v2005
    %2592 = vmatpush2.bf16.msra.mxu0 %v2004
    %2593 = vmatprep.subr.bf16.mxu0 %v1997
    %2594 = vmatpush2.bf16.msra.mxu0 %v1996
    %2595 = vmatprep.subr.bf16.mxu0 %v1989
    %2596 = vmatpush2.bf16.msra.mxu0 %v1988
    %2597 = vmatprep.subr.bf16.mxu0 %v1981
    %2598 = vmatpush2.bf16.msra.mxu0 %v1980
    %2599 = vmatprep.subr.bf16.mxu0 %v1973
    %2600 = vmatpush2.bf16.msra.mxu0 %v1972
    %2601 = vmatprep.subr.bf16.mxu0 %v1965
    %2602 = vmatpush2.bf16.msra.mxu0 %v1964
    %2603 = vmatprep.subr.bf16.mxu0 %v1957
    %2604 = vmatpush2.bf16.msra.mxu0 %v1956
    %2605 = vmatprep.subr.bf16.mxu0 %v1949
    %2606 = vmatpush2.bf16.msra.mxu0 %v1948
    %2607 = vmatprep.mubr.bf16.mxu0 %v169
    %2608 = vmatmul.mubr.bf16.gmra.mxu0 %v168
    %v2609 = vpop.f32.mrf.mxu0
    %v2610 = vadd.f32 %v2559, %v2609
    %v2611 = vpop.f32.mrf.mxu0
    %v2612 = vadd.f32 %v2561, %v2611
    %v2613 = vpop.f32.mrf.mxu0
    %v2614 = vadd.f32 %v2563, %v2613
    %v2615 = vpop.f32.mrf.mxu0
    %v2616 = vadd.f32 %v2565, %v2615
    %2617 = vmatprep.mubr.bf16.mxu0 %v175
    %2618 = vmatmul.mubr.bf16.gmra.mxu0 %v174
    %v2619 = vpop.f32.mrf.mxu0
    %v2620 = vadd.f32 %v2569, %v2619
    %v2621 = vpop.f32.mrf.mxu0
    %v2622 = vadd.f32 %v2571, %v2621
    %v2623 = vpop.f32.mrf.mxu0
    %v2624 = vpop.f32.mrf.mxu0
    %2625 = vdwg.mxu0
    %2626 = vmatprep.subr.bf16.mxu0 %v2069
    %2627 = vmatpush1.bf16.msra.mxu0 %v2068
    %2628 = vmatprep.subr.bf16.mxu0 %v2061
    %2629 = vmatpush1.bf16.msra.mxu0 %v2060
    %2630 = vmatprep.subr.bf16.mxu0 %v2053
    %2631 = vmatpush1.bf16.msra.mxu0 %v2052
    %2632 = vmatprep.subr.bf16.mxu0 %v2045
    %2633 = vmatpush1.bf16.msra.mxu0 %v2044
    %2634 = vmatprep.subr.bf16.mxu0 %v2037
    %2635 = vmatpush1.bf16.msra.mxu0 %v2036
    %2636 = vmatprep.subr.bf16.mxu0 %v2029
    %2637 = vmatpush1.bf16.msra.mxu0 %v2028
    %2638 = vmatprep.subr.bf16.mxu0 %v2021
    %2639 = vmatpush1.bf16.msra.mxu0 %v2020
    %2640 = vmatprep.subr.bf16.mxu0 %v2013
    %2641 = vmatpush1.bf16.msra.mxu0 %v2012
    %2642 = vmatprep.subr.bf16.mxu0 %v2133
    %2643 = vmatpush2.bf16.msra.mxu0 %v2132
    %2644 = vmatprep.subr.bf16.mxu0 %v2125
    %2645 = vmatpush2.bf16.msra.mxu0 %v2124
    %2646 = vmatprep.subr.bf16.mxu0 %v2117
    %2647 = vmatpush2.bf16.msra.mxu0 %v2116
    %2648 = vmatprep.subr.bf16.mxu0 %v2109
    %2649 = vmatpush2.bf16.msra.mxu0 %v2108
    %2650 = vmatprep.subr.bf16.mxu0 %v2101
    %2651 = vmatpush2.bf16.msra.mxu0 %v2100
    %2652 = vmatprep.subr.bf16.mxu0 %v2093
    %2653 = vmatpush2.bf16.msra.mxu0 %v2092
    %2654 = vmatprep.subr.bf16.mxu0 %v2085
    %2655 = vmatpush2.bf16.msra.mxu0 %v2084
    %2656 = vmatprep.subr.bf16.mxu0 %v2077
    %2657 = vmatpush2.bf16.msra.mxu0 %v2076
    %2658 = vmatprep.mubr.bf16.mxu0 %v171
    %2659 = vmatmul.mubr.bf16.gmra.mxu0 %v170
    %v2660 = vpop.f32.mrf.mxu0
    %v2661 = vadd.f32 %v2610, %v2660
    %v2662 = vpop.f32.mrf.mxu0
    %v2663 = vadd.f32 %v2612, %v2662
    %v2664 = vpop.f32.mrf.mxu0
    %v2665 = vadd.f32 %v2614, %v2664
    %v2666 = vpop.f32.mrf.mxu0
    %v2667 = vadd.f32 %v2616, %v2666
    %2668 = vmatprep.mubr.bf16.mxu0 %v177
    %2669 = vmatmul.mubr.bf16.gmra.mxu0 %v176
    %v2670 = vpop.f32.mrf.mxu0
    %v2671 = vadd.f32 %v2620, %v2670
    %v2672 = vpop.f32.mrf.mxu0
    %v2673 = vadd.f32 %v2622, %v2672
    %v2674 = vpop.f32.mrf.mxu0
    %v2675 = vpop.f32.mrf.mxu0
    %2676 = vdwg.mxu0
    %2677 = vmatprep.subr.bf16.mxu0 %v1815
    %2678 = vmatpush1.bf16.msra.mxu0 %v1814
    %2679 = vmatprep.subr.bf16.mxu0 %v1807
    %2680 = vmatpush1.bf16.msra.mxu0 %v1806
    %2681 = vmatprep.subr.bf16.mxu0 %v1799
    %2682 = vmatpush1.bf16.msra.mxu0 %v1798
    %2683 = vmatprep.subr.bf16.mxu0 %v1791
    %2684 = vmatpush1.bf16.msra.mxu0 %v1790
    %2685 = vmatprep.subr.bf16.mxu0 %v1783
    %2686 = vmatpush1.bf16.msra.mxu0 %v1782
    %2687 = vmatprep.subr.bf16.mxu0 %v1775
    %2688 = vmatpush1.bf16.msra.mxu0 %v1774
    %2689 = vmatprep.subr.bf16.mxu0 %v1767
    %2690 = vmatpush1.bf16.msra.mxu0 %v1766
    %2691 = vmatprep.subr.bf16.mxu0 %v1759
    %2692 = vmatpush1.bf16.msra.mxu0 %v1758
    %2693 = vmatprep.subr.bf16.mxu0 %v1879
    %2694 = vmatpush2.bf16.msra.mxu0 %v1878
    %2695 = vmatprep.subr.bf16.mxu0 %v1871
    %2696 = vmatpush2.bf16.msra.mxu0 %v1870
    %2697 = vmatprep.subr.bf16.mxu0 %v1863
    %2698 = vmatpush2.bf16.msra.mxu0 %v1862
    %2699 = vmatprep.subr.bf16.mxu0 %v1855
    %2700 = vmatpush2.bf16.msra.mxu0 %v1854
    %2701 = vmatprep.subr.bf16.mxu0 %v1847
    %2702 = vmatpush2.bf16.msra.mxu0 %v1846
    %2703 = vmatprep.subr.bf16.mxu0 %v1839
    %2704 = vmatpush2.bf16.msra.mxu0 %v1838
    %2705 = vmatprep.subr.bf16.mxu0 %v1831
    %2706 = vmatpush2.bf16.msra.mxu0 %v1830
    %2707 = vmatprep.subr.bf16.mxu0 %v1823
    %2708 = vmatpush2.bf16.msra.mxu0 %v1822
    %2709 = vmatprep.mubr.bf16.mxu0 %v167
    %2710 = vmatmul.mubr.bf16.gmra.mxu0 %v166
    %v2711 = vpop.f32.mrf.mxu0
    %v2712 = vadd.f32 %v575, %v2711
    %v2713 = vpop.f32.mrf.mxu0
    %v2714 = vadd.f32 %v579, %v2713
    %v2715 = vpop.f32.mrf.mxu0
    %v2716 = vadd.f32 %v575, %v2715
    %v2717 = vpop.f32.mrf.mxu0
    %v2718 = vadd.f32 %v579, %v2717
    %2719 = vmatprep.mubr.bf16.mxu0 %v173
    %2720 = vmatmul.mubr.bf16.gmra.mxu0 %v172
    %v2721 = vpop.f32.mrf.mxu0
    %v2722 = vadd.f32 %v575, %v2721
    %v2723 = vpop.f32.mrf.mxu0
    %v2724 = vadd.f32 %v579, %v2723
    %v2725 = vpop.f32.mrf.mxu0
    %v2726 = vpop.f32.mrf.mxu0
    %2727 = vdwg.mxu0
    %2728 = vmatprep.subr.bf16.mxu0 %v1943
    %2729 = vmatpush1.bf16.msra.mxu0 %v1942
    %2730 = vmatprep.subr.bf16.mxu0 %v1935
    %2731 = vmatpush1.bf16.msra.mxu0 %v1934
    %2732 = vmatprep.subr.bf16.mxu0 %v1927
    %2733 = vmatpush1.bf16.msra.mxu0 %v1926
    %2734 = vmatprep.subr.bf16.mxu0 %v1919
    %2735 = vmatpush1.bf16.msra.mxu0 %v1918
    %2736 = vmatprep.subr.bf16.mxu0 %v1911
    %2737 = vmatpush1.bf16.msra.mxu0 %v1910
    %2738 = vmatprep.subr.bf16.mxu0 %v1903
    %2739 = vmatpush1.bf16.msra.mxu0 %v1902
    %2740 = vmatprep.subr.bf16.mxu0 %v1895
    %2741 = vmatpush1.bf16.msra.mxu0 %v1894
    %2742 = vmatprep.subr.bf16.mxu0 %v1887
    %2743 = vmatpush1.bf16.msra.mxu0 %v1886
    %2744 = vmatprep.subr.bf16.mxu0 %v2007
    %2745 = vmatpush2.bf16.msra.mxu0 %v2006
    %2746 = vmatprep.subr.bf16.mxu0 %v1999
    %2747 = vmatpush2.bf16.msra.mxu0 %v1998
    %2748 = vmatprep.subr.bf16.mxu0 %v1991
    %2749 = vmatpush2.bf16.msra.mxu0 %v1990
    %2750 = vmatprep.subr.bf16.mxu0 %v1983
    %2751 = vmatpush2.bf16.msra.mxu0 %v1982
    %2752 = vmatprep.subr.bf16.mxu0 %v1975
    %2753 = vmatpush2.bf16.msra.mxu0 %v1974
    %2754 = vmatprep.subr.bf16.mxu0 %v1967
    %2755 = vmatpush2.bf16.msra.mxu0 %v1966
    %2756 = vmatprep.subr.bf16.mxu0 %v1959
    %2757 = vmatpush2.bf16.msra.mxu0 %v1958
    %2758 = vmatprep.subr.bf16.mxu0 %v1951
    %2759 = vmatpush2.bf16.msra.mxu0 %v1950
    %2760 = vmatprep.mubr.bf16.mxu0 %v169
    %2761 = vmatmul.mubr.bf16.gmra.mxu0 %v168
    %v2762 = vpop.f32.mrf.mxu0
    %v2763 = vadd.f32 %v2712, %v2762
    %v2764 = vpop.f32.mrf.mxu0
    %v2765 = vadd.f32 %v2714, %v2764
    %v2766 = vpop.f32.mrf.mxu0
    %v2767 = vadd.f32 %v2716, %v2766
    %v2768 = vpop.f32.mrf.mxu0
    %v2769 = vadd.f32 %v2718, %v2768
    %2770 = vmatprep.mubr.bf16.mxu0 %v175
    %2771 = vmatmul.mubr.bf16.gmra.mxu0 %v174
    %v2772 = vpop.f32.mrf.mxu0
    %v2773 = vadd.f32 %v2722, %v2772
    %v2774 = vpop.f32.mrf.mxu0
    %v2775 = vadd.f32 %v2724, %v2774
    %v2776 = vpop.f32.mrf.mxu0
    %v2777 = vpop.f32.mrf.mxu0
    %2778 = vdwg.mxu0
    %2779 = vmatprep.subr.bf16.mxu0 %v2071
    %2780 = vmatpush1.bf16.msra.mxu0 %v2070
    %2781 = vmatprep.subr.bf16.mxu0 %v2063
    %2782 = vmatpush1.bf16.msra.mxu0 %v2062
    %2783 = vmatprep.subr.bf16.mxu0 %v2055
    %2784 = vmatpush1.bf16.msra.mxu0 %v2054
    %2785 = vmatprep.subr.bf16.mxu0 %v2047
    %2786 = vmatpush1.bf16.msra.mxu0 %v2046
    %2787 = vmatprep.subr.bf16.mxu0 %v2039
    %2788 = vmatpush1.bf16.msra.mxu0 %v2038
    %2789 = vmatprep.subr.bf16.mxu0 %v2031
    %2790 = vmatpush1.bf16.msra.mxu0 %v2030
    %2791 = vmatprep.subr.bf16.mxu0 %v2023
    %2792 = vmatpush1.bf16.msra.mxu0 %v2022
    %2793 = vmatprep.subr.bf16.mxu0 %v2015
    %2794 = vmatpush1.bf16.msra.mxu0 %v2014
    %2795 = vmatprep.subr.bf16.mxu0 %v2135
    %2796 = vmatpush2.bf16.msra.mxu0 %v2134
    %2797 = vmatprep.subr.bf16.mxu0 %v2127
    %2798 = vmatpush2.bf16.msra.mxu0 %v2126
    %2799 = vmatprep.subr.bf16.mxu0 %v2119
    %2800 = vmatpush2.bf16.msra.mxu0 %v2118
    %2801 = vmatprep.subr.bf16.mxu0 %v2111
    %2802 = vmatpush2.bf16.msra.mxu0 %v2110
    %2803 = vmatprep.subr.bf16.mxu0 %v2103
    %2804 = vmatpush2.bf16.msra.mxu0 %v2102
    %2805 = vmatprep.subr.bf16.mxu0 %v2095
    %2806 = vmatpush2.bf16.msra.mxu0 %v2094
    %2807 = vmatprep.subr.bf16.mxu0 %v2087
    %2808 = vmatpush2.bf16.msra.mxu0 %v2086
    %2809 = vmatprep.subr.bf16.mxu0 %v2079
    %2810 = vmatpush2.bf16.msra.mxu0 %v2078
    %2811 = vmatprep.mubr.bf16.mxu0 %v171
    %2812 = vmatmul.mubr.bf16.gmra.mxu0 %v170
    %v2813 = vpop.f32.mrf.mxu0
    %v2814 = vadd.f32 %v2763, %v2813
    %v2815 = vpop.f32.mrf.mxu0
    %v2816 = vadd.f32 %v2765, %v2815
    %v2817 = vpop.f32.mrf.mxu0
    %v2818 = vadd.f32 %v2767, %v2817
    %v2819 = vpop.f32.mrf.mxu0
    %v2820 = vadd.f32 %v2769, %v2819
    %2821 = vmatprep.mubr.bf16.mxu0 %v177
    %2822 = vmatmul.mubr.bf16.gmra.mxu0 %v176
    %v2823 = vpop.f32.mrf.mxu0
    %v2824 = vadd.f32 %v2773, %v2823
    %v2825 = vpop.f32.mrf.mxu0
    %v2826 = vadd.f32 %v2775, %v2825
    %v2827 = vpop.f32.mrf.mxu0
    %v2828 = vpop.f32.mrf.mxu0
    %2829 = vdwg.mxu0
    %2830 = vmatprep.subr.bf16.mxu0 %v1817
    %2831 = vmatpush1.bf16.msra.mxu0 %v1816
    %2832 = vmatprep.subr.bf16.mxu0 %v1809
    %2833 = vmatpush1.bf16.msra.mxu0 %v1808
    %2834 = vmatprep.subr.bf16.mxu0 %v1801
    %2835 = vmatpush1.bf16.msra.mxu0 %v1800
    %2836 = vmatprep.subr.bf16.mxu0 %v1793
    %2837 = vmatpush1.bf16.msra.mxu0 %v1792
    %2838 = vmatprep.subr.bf16.mxu0 %v1785
    %2839 = vmatpush1.bf16.msra.mxu0 %v1784
    %2840 = vmatprep.subr.bf16.mxu0 %v1777
    %2841 = vmatpush1.bf16.msra.mxu0 %v1776
    %2842 = vmatprep.subr.bf16.mxu0 %v1769
    %2843 = vmatpush1.bf16.msra.mxu0 %v1768
    %2844 = vmatprep.subr.bf16.mxu0 %v1761
    %2845 = vmatpush1.bf16.msra.mxu0 %v1760
    %2846 = vmatprep.subr.bf16.mxu0 %v1881
    %2847 = vmatpush2.bf16.msra.mxu0 %v1880
    %2848 = vmatprep.subr.bf16.mxu0 %v1873
    %2849 = vmatpush2.bf16.msra.mxu0 %v1872
    %2850 = vmatprep.subr.bf16.mxu0 %v1865
    %2851 = vmatpush2.bf16.msra.mxu0 %v1864
    %2852 = vmatprep.subr.bf16.mxu0 %v1857
    %2853 = vmatpush2.bf16.msra.mxu0 %v1856
    %2854 = vmatprep.subr.bf16.mxu0 %v1849
    %2855 = vmatpush2.bf16.msra.mxu0 %v1848
    %2856 = vmatprep.subr.bf16.mxu0 %v1841
    %2857 = vmatpush2.bf16.msra.mxu0 %v1840
    %2858 = vmatprep.subr.bf16.mxu0 %v1833
    %2859 = vmatpush2.bf16.msra.mxu0 %v1832
    %2860 = vmatprep.subr.bf16.mxu0 %v1825
    %2861 = vmatpush2.bf16.msra.mxu0 %v1824
    %2862 = vmatprep.mubr.bf16.mxu0 %v167
    %2863 = vmatmul.mubr.bf16.gmra.mxu0 %v166
    %v2864 = vpop.f32.mrf.mxu0
    %v2865 = vadd.f32 %v583, %v2864
    %v2866 = vpop.f32.mrf.mxu0
    %v2867 = vadd.f32 %v587, %v2866
    %v2868 = vpop.f32.mrf.mxu0
    %v2869 = vadd.f32 %v583, %v2868
    %v2870 = vpop.f32.mrf.mxu0
    %v2871 = vadd.f32 %v587, %v2870
    %2872 = vmatprep.mubr.bf16.mxu0 %v173
    %2873 = vmatmul.mubr.bf16.gmra.mxu0 %v172
    %v2874 = vpop.f32.mrf.mxu0
    %v2875 = vadd.f32 %v583, %v2874
    %v2876 = vpop.f32.mrf.mxu0
    %v2877 = vadd.f32 %v587, %v2876
    %v2878 = vpop.f32.mrf.mxu0
    %v2879 = vpop.f32.mrf.mxu0
    %2880 = vdwg.mxu0
    %2881 = vmatprep.subr.bf16.mxu0 %v1945
    %2882 = vmatpush1.bf16.msra.mxu0 %v1944
    %2883 = vmatprep.subr.bf16.mxu0 %v1937
    %2884 = vmatpush1.bf16.msra.mxu0 %v1936
    %2885 = vmatprep.subr.bf16.mxu0 %v1929
    %2886 = vmatpush1.bf16.msra.mxu0 %v1928
    %2887 = vmatprep.subr.bf16.mxu0 %v1921
    %2888 = vmatpush1.bf16.msra.mxu0 %v1920
    %2889 = vmatprep.subr.bf16.mxu0 %v1913
    %2890 = vmatpush1.bf16.msra.mxu0 %v1912
    %2891 = vmatprep.subr.bf16.mxu0 %v1905
    %2892 = vmatpush1.bf16.msra.mxu0 %v1904
    %2893 = vmatprep.subr.bf16.mxu0 %v1897
    %2894 = vmatpush1.bf16.msra.mxu0 %v1896
    %2895 = vmatprep.subr.bf16.mxu0 %v1889
    %2896 = vmatpush1.bf16.msra.mxu0 %v1888
    %2897 = vmatprep.subr.bf16.mxu0 %v2009
    %2898 = vmatpush2.bf16.msra.mxu0 %v2008
    %2899 = vmatprep.subr.bf16.mxu0 %v2001
    %2900 = vmatpush2.bf16.msra.mxu0 %v2000
    %2901 = vmatprep.subr.bf16.mxu0 %v1993
    %2902 = vmatpush2.bf16.msra.mxu0 %v1992
    %2903 = vmatprep.subr.bf16.mxu0 %v1985
    %2904 = vmatpush2.bf16.msra.mxu0 %v1984
    %2905 = vmatprep.subr.bf16.mxu0 %v1977
    %2906 = vmatpush2.bf16.msra.mxu0 %v1976
    %2907 = vmatprep.subr.bf16.mxu0 %v1969
    %2908 = vmatpush2.bf16.msra.mxu0 %v1968
    %2909 = vmatprep.subr.bf16.mxu0 %v1961
    %2910 = vmatpush2.bf16.msra.mxu0 %v1960
    %2911 = vmatprep.subr.bf16.mxu0 %v1953
    %2912 = vmatpush2.bf16.msra.mxu0 %v1952
    %2913 = vmatprep.mubr.bf16.mxu0 %v169
    %2914 = vmatmul.mubr.bf16.gmra.mxu0 %v168
    %v2915 = vpop.f32.mrf.mxu0
    %v2916 = vadd.f32 %v2865, %v2915
    %v2917 = vpop.f32.mrf.mxu0
    %v2918 = vadd.f32 %v2867, %v2917
    %v2919 = vpop.f32.mrf.mxu0
    %v2920 = vadd.f32 %v2869, %v2919
    %v2921 = vpop.f32.mrf.mxu0
    %v2922 = vadd.f32 %v2871, %v2921
    %2923 = vmatprep.mubr.bf16.mxu0 %v175
    %2924 = vmatmul.mubr.bf16.gmra.mxu0 %v174
    %v2925 = vpop.f32.mrf.mxu0
    %v2926 = vadd.f32 %v2875, %v2925
    %v2927 = vpop.f32.mrf.mxu0
    %v2928 = vadd.f32 %v2877, %v2927
    %v2929 = vpop.f32.mrf.mxu0
    %v2930 = vpop.f32.mrf.mxu0
    %2931 = vdwg.mxu0
    %2932 = vmatprep.subr.bf16.mxu0 %v2073
    %2933 = vmatpush1.bf16.msra.mxu0 %v2072
    %2934 = vmatprep.subr.bf16.mxu0 %v2065
    %2935 = vmatpush1.bf16.msra.mxu0 %v2064
    %2936 = vmatprep.subr.bf16.mxu0 %v2057
    %2937 = vmatpush1.bf16.msra.mxu0 %v2056
    %2938 = vmatprep.subr.bf16.mxu0 %v2049
    %2939 = vmatpush1.bf16.msra.mxu0 %v2048
    %2940 = vmatprep.subr.bf16.mxu0 %v2041
    %2941 = vmatpush1.bf16.msra.mxu0 %v2040
    %2942 = vmatprep.subr.bf16.mxu0 %v2033
    %2943 = vmatpush1.bf16.msra.mxu0 %v2032
    %2944 = vmatprep.subr.bf16.mxu0 %v2025
    %2945 = vmatpush1.bf16.msra.mxu0 %v2024
    %2946 = vmatprep.subr.bf16.mxu0 %v2017
    %2947 = vmatpush1.bf16.msra.mxu0 %v2016
    %2948 = vmatprep.subr.bf16.mxu0 %v2137
    %2949 = vmatpush2.bf16.msra.mxu0 %v2136
    %2950 = vmatprep.subr.bf16.mxu0 %v2129
    %2951 = vmatpush2.bf16.msra.mxu0 %v2128
    %2952 = vmatprep.subr.bf16.mxu0 %v2121
    %2953 = vmatpush2.bf16.msra.mxu0 %v2120
    %2954 = vmatprep.subr.bf16.mxu0 %v2113
    %2955 = vmatpush2.bf16.msra.mxu0 %v2112
    %2956 = vmatprep.subr.bf16.mxu0 %v2105
    %2957 = vmatpush2.bf16.msra.mxu0 %v2104
    %2958 = vmatprep.subr.bf16.mxu0 %v2097
    %2959 = vmatpush2.bf16.msra.mxu0 %v2096
    %2960 = vmatprep.subr.bf16.mxu0 %v2089
    %2961 = vmatpush2.bf16.msra.mxu0 %v2088
    %2962 = vmatprep.subr.bf16.mxu0 %v2081
    %2963 = vmatpush2.bf16.msra.mxu0 %v2080
    %2964 = vmatprep.mubr.bf16.mxu0 %v171
    %2965 = vmatmul.mubr.bf16.gmra.mxu0 %v170
    %v2966 = vpop.f32.mrf.mxu0
    %v2967 = vadd.f32 %v2916, %v2966
    %v2968 = vpop.f32.mrf.mxu0
    %v2969 = vadd.f32 %v2918, %v2968
    %v2970 = vpop.f32.mrf.mxu0
    %v2971 = vadd.f32 %v2920, %v2970
    %v2972 = vpop.f32.mrf.mxu0
    %v2973 = vadd.f32 %v2922, %v2972
    %2974 = vmatprep.mubr.bf16.mxu0 %v177
    %2975 = vmatmul.mubr.bf16.gmra.mxu0 %v176
    %v2976 = vpop.f32.mrf.mxu0
    %v2977 = vadd.f32 %v2926, %v2976
    %v2978 = vpop.f32.mrf.mxu0
    %v2979 = vadd.f32 %v2928, %v2978
    %v2980 = vpop.f32.mrf.mxu0
    %v2981 = vpop.f32.mrf.mxu0
    %2982 = vdwg.mxu0
    %2983 = vmatprep.subr.bf16.mxu0 %v1819
    %2984 = vmatpush1.bf16.msra.mxu0 %v1818
    %2985 = vmatprep.subr.bf16.mxu0 %v1811
    %2986 = vmatpush1.bf16.msra.mxu0 %v1810
    %2987 = vmatprep.subr.bf16.mxu0 %v1803
    %2988 = vmatpush1.bf16.msra.mxu0 %v1802
    %2989 = vmatprep.subr.bf16.mxu0 %v1795
    %2990 = vmatpush1.bf16.msra.mxu0 %v1794
    %2991 = vmatprep.subr.bf16.mxu0 %v1787
    %2992 = vmatpush1.bf16.msra.mxu0 %v1786
    %2993 = vmatprep.subr.bf16.mxu0 %v1779
    %2994 = vmatpush1.bf16.msra.mxu0 %v1778
    %2995 = vmatprep.subr.bf16.mxu0 %v1771
    %2996 = vmatpush1.bf16.msra.mxu0 %v1770
    %2997 = vmatprep.subr.bf16.mxu0 %v1763
    %2998 = vmatpush1.bf16.msra.mxu0 %v1762
    %2999 = vmatprep.subr.bf16.mxu0 %v1883
    %3000 = vmatpush2.bf16.msra.mxu0 %v1882
    %3001 = vmatprep.subr.bf16.mxu0 %v1875
    %3002 = vmatpush2.bf16.msra.mxu0 %v1874
    %3003 = vmatprep.subr.bf16.mxu0 %v1867
    %3004 = vmatpush2.bf16.msra.mxu0 %v1866
    %3005 = vmatprep.subr.bf16.mxu0 %v1859
    %3006 = vmatpush2.bf16.msra.mxu0 %v1858
    %3007 = vmatprep.subr.bf16.mxu0 %v1851
    %3008 = vmatpush2.bf16.msra.mxu0 %v1850
    %3009 = vmatprep.subr.bf16.mxu0 %v1843
    %3010 = vmatpush2.bf16.msra.mxu0 %v1842
    %3011 = vmatprep.subr.bf16.mxu0 %v1835
    %3012 = vmatpush2.bf16.msra.mxu0 %v1834
    %3013 = vmatprep.subr.bf16.mxu0 %v1827
    %3014 = vmatpush2.bf16.msra.mxu0 %v1826
    %3015 = vmatprep.mubr.bf16.mxu0 %v167
    %3016 = vmatmul.mubr.bf16.gmra.mxu0 %v166
    %v3017 = vpop.f32.mrf.mxu0
    %v3018 = vadd.f32 %v591, %v3017
    %v3019 = vpop.f32.mrf.mxu0
    %v3020 = vadd.f32 %v595, %v3019
    %v3021 = vpop.f32.mrf.mxu0
    %v3022 = vadd.f32 %v591, %v3021
    %v3023 = vpop.f32.mrf.mxu0
    %v3024 = vadd.f32 %v595, %v3023
    %3025 = vmatprep.mubr.bf16.mxu0 %v173
    %3026 = vmatmul.mubr.bf16.gmra.mxu0 %v172
    %v3027 = vpop.f32.mrf.mxu0
    %v3028 = vadd.f32 %v591, %v3027
    %v3029 = vpop.f32.mrf.mxu0
    %v3030 = vadd.f32 %v595, %v3029
    %v3031 = vpop.f32.mrf.mxu0
    %v3032 = vpop.f32.mrf.mxu0
    %3033 = vdwg.mxu0
    %3034 = vmatprep.subr.bf16.mxu0 %v1947
    %3035 = vmatpush1.bf16.msra.mxu0 %v1946
    %3036 = vmatprep.subr.bf16.mxu0 %v1939
    %3037 = vmatpush1.bf16.msra.mxu0 %v1938
    %3038 = vmatprep.subr.bf16.mxu0 %v1931
    %3039 = vmatpush1.bf16.msra.mxu0 %v1930
    %3040 = vmatprep.subr.bf16.mxu0 %v1923
    %3041 = vmatpush1.bf16.msra.mxu0 %v1922
    %3042 = vmatprep.subr.bf16.mxu0 %v1915
    %3043 = vmatpush1.bf16.msra.mxu0 %v1914
    %3044 = vmatprep.subr.bf16.mxu0 %v1907
    %3045 = vmatpush1.bf16.msra.mxu0 %v1906
    %3046 = vmatprep.subr.bf16.mxu0 %v1899
    %3047 = vmatpush1.bf16.msra.mxu0 %v1898
    %3048 = vmatprep.subr.bf16.mxu0 %v1891
    %3049 = vmatpush1.bf16.msra.mxu0 %v1890
    %3050 = vmatprep.subr.bf16.mxu0 %v2011
    %3051 = vmatpush2.bf16.msra.mxu0 %v2010
    %3052 = vmatprep.subr.bf16.mxu0 %v2003
    %3053 = vmatpush2.bf16.msra.mxu0 %v2002
    %3054 = vmatprep.subr.bf16.mxu0 %v1995
    %3055 = vmatpush2.bf16.msra.mxu0 %v1994
    %3056 = vmatprep.subr.bf16.mxu0 %v1987
    %3057 = vmatpush2.bf16.msra.mxu0 %v1986
    %3058 = vmatprep.subr.bf16.mxu0 %v1979
    %3059 = vmatpush2.bf16.msra.mxu0 %v1978
    %3060 = vmatprep.subr.bf16.mxu0 %v1971
    %3061 = vmatpush2.bf16.msra.mxu0 %v1970
    %3062 = vmatprep.subr.bf16.mxu0 %v1963
    %3063 = vmatpush2.bf16.msra.mxu0 %v1962
    %3064 = vmatprep.subr.bf16.mxu0 %v1955
    %3065 = vmatpush2.bf16.msra.mxu0 %v1954
    %3066 = vmatprep.mubr.bf16.mxu0 %v169
    %3067 = vmatmul.mubr.bf16.gmra.mxu0 %v168
    %v3068 = vpop.f32.mrf.mxu0
    %v3069 = vadd.f32 %v3018, %v3068
    %v3070 = vpop.f32.mrf.mxu0
    %v3071 = vadd.f32 %v3020, %v3070
    %v3072 = vpop.f32.mrf.mxu0
    %v3073 = vadd.f32 %v3022, %v3072
    %v3074 = vpop.f32.mrf.mxu0
    %v3075 = vadd.f32 %v3024, %v3074
    %3076 = vmatprep.mubr.bf16.mxu0 %v175
    %3077 = vmatmul.mubr.bf16.gmra.mxu0 %v174
    %v3078 = vpop.f32.mrf.mxu0
    %v3079 = vadd.f32 %v3028, %v3078
    %v3080 = vpop.f32.mrf.mxu0
    %v3081 = vadd.f32 %v3030, %v3080
    %v3082 = vpop.f32.mrf.mxu0
    %v3083 = vpop.f32.mrf.mxu0
    %3084 = vdwg.mxu0
    %3085 = vmatprep.subr.bf16.mxu0 %v2075
    %3086 = vmatpush1.bf16.msra.mxu0 %v2074
    %3087 = vmatprep.subr.bf16.mxu0 %v2067
    %3088 = vmatpush1.bf16.msra.mxu0 %v2066
    %3089 = vmatprep.subr.bf16.mxu0 %v2059
    %3090 = vmatpush1.bf16.msra.mxu0 %v2058
    %3091 = vmatprep.subr.bf16.mxu0 %v2051
    %3092 = vmatpush1.bf16.msra.mxu0 %v2050
    %3093 = vmatprep.subr.bf16.mxu0 %v2043
    %3094 = vmatpush1.bf16.msra.mxu0 %v2042
    %3095 = vmatprep.subr.bf16.mxu0 %v2035
    %3096 = vmatpush1.bf16.msra.mxu0 %v2034
    %3097 = vmatprep.subr.bf16.mxu0 %v2027
    %3098 = vmatpush1.bf16.msra.mxu0 %v2026
    %3099 = vmatprep.subr.bf16.mxu0 %v2019
    %3100 = vmatpush1.bf16.msra.mxu0 %v2018
    %3101 = vmatprep.subr.bf16.mxu0 %v2139
    %3102 = vmatpush2.bf16.msra.mxu0 %v2138
    %3103 = vmatprep.subr.bf16.mxu0 %v2131
    %3104 = vmatpush2.bf16.msra.mxu0 %v2130
    %3105 = vmatprep.subr.bf16.mxu0 %v2123
    %3106 = vmatpush2.bf16.msra.mxu0 %v2122
    %3107 = vmatprep.subr.bf16.mxu0 %v2115
    %3108 = vmatpush2.bf16.msra.mxu0 %v2114
    %3109 = vmatprep.subr.bf16.mxu0 %v2107
    %3110 = vmatpush2.bf16.msra.mxu0 %v2106
    %3111 = vmatprep.subr.bf16.mxu0 %v2099
    %3112 = vmatpush2.bf16.msra.mxu0 %v2098
    %3113 = vmatprep.subr.bf16.mxu0 %v2091
    %3114 = vmatpush2.bf16.msra.mxu0 %v2090
    %3115 = vmatprep.subr.bf16.mxu0 %v2083
    %3116 = vmatpush2.bf16.msra.mxu0 %v2082
    %3117 = vmatprep.mubr.bf16.mxu0 %v171
    %3118 = vmatmul.mubr.bf16.gmra.mxu0 %v170
    %v3119 = vpop.f32.mrf.mxu0
    %v3120 = vadd.f32 %v3069, %v3119
    %v3121 = vpop.f32.mrf.mxu0
    %v3122 = vadd.f32 %v3071, %v3121
    %v3123 = vpop.f32.mrf.mxu0
    %v3124 = vadd.f32 %v3073, %v3123
    %v3125 = vpop.f32.mrf.mxu0
    %v3126 = vadd.f32 %v3075, %v3125
    %3127 = vmatprep.mubr.bf16.mxu0 %v177
    %3128 = vmatmul.mubr.bf16.gmra.mxu0 %v176
    %v3129 = vpop.f32.mrf.mxu0
    %v3130 = vadd.f32 %v3079, %v3129
    %v3131 = vpop.f32.mrf.mxu0
    %v3132 = vadd.f32 %v3081, %v3131
    %v3133 = vpop.f32.mrf.mxu0
    %v3134 = vpop.f32.mrf.mxu0
    %3135 = vdwg.mxu0
    %v3136 = vmax.f32 %v2661, 0.0
    %v3137 = vmax.f32 %v2663, 0.0
    %v3138 = vmax.f32 %v2814, 0.0
    %v3139 = vmax.f32 %v2816, 0.0
    %v3140 = vmax.f32 %v2967, 0.0
    %v3141 = vmax.f32 %v2969, 0.0
    %v3142 = vmax.f32 %v3120, 0.0
    %v3143 = vmax.f32 %v3122, 0.0
    %v3144 = vmax.f32 %v2665, 0.0
    %v3145 = vmax.f32 %v2667, 0.0
    %v3146 = vmax.f32 %v2818, 0.0
    %v3147 = vmax.f32 %v2820, 0.0
    %v3148 = vmax.f32 %v2971, 0.0
    %v3149 = vmax.f32 %v2973, 0.0
    %v3150 = vmax.f32 %v3124, 0.0
    %v3151 = vmax.f32 %v3126, 0.0
    %v3152 = vmax.f32 %v2671, 0.0
    %v3153 = vmax.f32 %v2673, 0.0
    %v3154 = vmax.f32 %v2824, 0.0
    %v3155 = vmax.f32 %v2826, 0.0
    %v3156 = vmax.f32 %v2977, 0.0
    %v3157 = vmax.f32 %v2979, 0.0
    %v3158 = vmax.f32 %v3130, 0.0
    %v3159 = vmax.f32 %v3132, 0.0
    %v3160 = vpack.c.bf16 %v3144, %v3136
    %v3161 = vpack.c.bf16 %v3145, %v3137
    %v3162 = vpack.c.bf16 %v3146, %v3138
    %v3163 = vpack.c.bf16 %v3147, %v3139
    %v3164 = vpack.c.bf16 %v3148, %v3140
    %v3165 = vpack.c.bf16 %v3149, %v3141
    %v3166 = vpack.c.bf16 %v3150, %v3142
    %v3167 = vpack.c.bf16 %v3151, %v3143
    %v3168 = vpack.c.bf16 %v3152, %v3152
    %v3169 = vpack.c.bf16 %v3153, %v3153
    %v3170 = vpack.c.bf16 %v3154, %v3154
    %v3171 = vpack.c.bf16 %v3155, %v3155
    %v3172 = vpack.c.bf16 %v3156, %v3156
    %v3173 = vpack.c.bf16 %v3157, %v3157
    %v3174 = vpack.c.bf16 %v3158, %v3158
    %v3175 = vpack.c.bf16 %v3159, %v3159
    %v3176 = vld [vmem:[#allocation8] sm:$0xff]
    %v3177 = vld [vmem:[#allocation8 + $0x8] sm:$0xff]
    %v3178 = vld [vmem:[#allocation8 + $0x10] sm:$0xff]
    %v3179 = vld [vmem:[#allocation8 + $0x18] sm:$0xff]
    %v3180 = vld [vmem:[#allocation8 + $0x20] sm:$0xff]
    %v3181 = vld [vmem:[#allocation8 + $0x28] sm:$0xff]
    %v3182 = vld [vmem:[#allocation8 + $0x30] sm:$0xff]
    %v3183 = vld [vmem:[#allocation8 + $0x38] sm:$0xff]
    %v3184 = vld [vmem:[#allocation8 + $0x40] sm:$0xff]
    %v3185 = vld [vmem:[#allocation8 + $0x48] sm:$0xff]
    %v3186 = vld [vmem:[#allocation8 + $0x50] sm:$0xff]
    %v3187 = vld [vmem:[#allocation8 + $0x58] sm:$0xff]
    %v3188 = vld [vmem:[#allocation8 + $0x60] sm:$0xff]
    %v3189 = vld [vmem:[#allocation8 + $0x68] sm:$0xff]
    %v3190 = vld [vmem:[#allocation8 + $0x70] sm:$0xff]
    %v3191 = vld [vmem:[#allocation8 + $0x78] sm:$0xff]
    %v3192 = vld [vmem:[#allocation8 + $0x80] sm:$0xff]
    %v3193 = vld [vmem:[#allocation8 + $0x88] sm:$0xff]
    %v3194 = vld [vmem:[#allocation8 + $0x90] sm:$0xff]
    %v3195 = vld [vmem:[#allocation8 + $0x98] sm:$0xff]
    %v3196 = vld [vmem:[#allocation8 + $0xa0] sm:$0xff]
    %v3197 = vld [vmem:[#allocation8 + $0xa8] sm:$0xff]
    %v3198 = vld [vmem:[#allocation8 + $0xb0] sm:$0xff]
    %v3199 = vld [vmem:[#allocation8 + $0xb8] sm:$0xff]
    %v3200 = vld [vmem:[#allocation8 + $0xc0] sm:$0xff]
    %v3201 = vld [vmem:[#allocation8 + $0xc8] sm:$0xff]
    %v3202 = vld [vmem:[#allocation8 + $0xd0] sm:$0xff]
    %v3203 = vld [vmem:[#allocation8 + $0xd8] sm:$0xff]
    %v3204 = vld [vmem:[#allocation8 + $0xe0] sm:$0xff]
    %v3205 = vld [vmem:[#allocation8 + $0xe8] sm:$0xff]
    %v3206 = vld [vmem:[#allocation8 + $0xf0] sm:$0xff]
    %v3207 = vld [vmem:[#allocation8 + $0xf8] sm:$0xff]
    %v3208 = vld [vmem:[#allocation8 + $0x100] sm:$0xff]
    %v3209 = vld [vmem:[#allocation8 + $0x108] sm:$0xff]
    %v3210 = vld [vmem:[#allocation8 + $0x110] sm:$0xff]
    %v3211 = vld [vmem:[#allocation8 + $0x118] sm:$0xff]
    %v3212 = vld [vmem:[#allocation8 + $0x120] sm:$0xff]
    %v3213 = vld [vmem:[#allocation8 + $0x128] sm:$0xff]
    %v3214 = vld [vmem:[#allocation8 + $0x130] sm:$0xff]
    %v3215 = vld [vmem:[#allocation8 + $0x138] sm:$0xff]
    %v3216 = vld [vmem:[#allocation8 + $0x140] sm:$0xff]
    %v3217 = vld [vmem:[#allocation8 + $0x148] sm:$0xff]
    %v3218 = vld [vmem:[#allocation8 + $0x150] sm:$0xff]
    %v3219 = vld [vmem:[#allocation8 + $0x158] sm:$0xff]
    %v3220 = vld [vmem:[#allocation8 + $0x160] sm:$0xff]
    %v3221 = vld [vmem:[#allocation8 + $0x168] sm:$0xff]
    %v3222 = vld [vmem:[#allocation8 + $0x170] sm:$0xff]
    %v3223 = vld [vmem:[#allocation8 + $0x178] sm:$0xff]
    %v3224 = vld [vmem:[#allocation8 + $0x180] sm:$0xff]
    %v3225 = vld [vmem:[#allocation8 + $0x188] sm:$0xff]
    %v3226 = vld [vmem:[#allocation8 + $0x190] sm:$0xff]
    %v3227 = vld [vmem:[#allocation8 + $0x198] sm:$0xff]
    %v3228 = vld [vmem:[#allocation8 + $0x1a0] sm:$0xff]
    %v3229 = vld [vmem:[#allocation8 + $0x1a8] sm:$0xff]
    %v3230 = vld [vmem:[#allocation8 + $0x1b0] sm:$0xff]
    %v3231 = vld [vmem:[#allocation8 + $0x1b8] sm:$0xff]
    %v3232 = vld [vmem:[#allocation8 + $0x1c0] sm:$0xff]
    %v3233 = vld [vmem:[#allocation8 + $0x1c8] sm:$0xff]
    %v3234 = vld [vmem:[#allocation8 + $0x1d0] sm:$0xff]
    %v3235 = vld [vmem:[#allocation8 + $0x1d8] sm:$0xff]
    %v3236 = vld [vmem:[#allocation8 + $0x1e0] sm:$0xff]
    %v3237 = vld [vmem:[#allocation8 + $0x1e8] sm:$0xff]
    %v3238 = vld [vmem:[#allocation8 + $0x1f0] sm:$0xff]
    %v3239 = vld [vmem:[#allocation8 + $0x1f8] sm:$0xff]
    %v3240 = vld [vmem:[#allocation8 + $0x200] sm:$0xff]
    %v3241 = vld [vmem:[#allocation8 + $0x208] sm:$0xff]
    %v3242 = vld [vmem:[#allocation8 + $0x210] sm:$0xff]
    %v3243 = vld [vmem:[#allocation8 + $0x218] sm:$0xff]
    %v3244 = vld [vmem:[#allocation8 + $0x220] sm:$0xff]
    %v3245 = vld [vmem:[#allocation8 + $0x228] sm:$0xff]
    %v3246 = vld [vmem:[#allocation8 + $0x230] sm:$0xff]
    %v3247 = vld [vmem:[#allocation8 + $0x238] sm:$0xff]
    %v3248 = vld [vmem:[#allocation8 + $0x240] sm:$0xff]
    %v3249 = vld [vmem:[#allocation8 + $0x248] sm:$0xff]
    %v3250 = vld [vmem:[#allocation8 + $0x250] sm:$0xff]
    %v3251 = vld [vmem:[#allocation8 + $0x258] sm:$0xff]
    %v3252 = vld [vmem:[#allocation8 + $0x260] sm:$0xff]
    %v3253 = vld [vmem:[#allocation8 + $0x268] sm:$0xff]
    %v3254 = vld [vmem:[#allocation8 + $0x270] sm:$0xff]
    %v3255 = vld [vmem:[#allocation8 + $0x278] sm:$0xff]
    %v3256 = vld [vmem:[#allocation8 + $0x280] sm:$0xff]
    %v3257 = vld [vmem:[#allocation8 + $0x288] sm:$0xff]
    %v3258 = vld [vmem:[#allocation8 + $0x290] sm:$0xff]
    %v3259 = vld [vmem:[#allocation8 + $0x298] sm:$0xff]
    %v3260 = vld [vmem:[#allocation8 + $0x2a0] sm:$0xff]
    %v3261 = vld [vmem:[#allocation8 + $0x2a8] sm:$0xff]
    %v3262 = vld [vmem:[#allocation8 + $0x2b0] sm:$0xff]
    %v3263 = vld [vmem:[#allocation8 + $0x2b8] sm:$0xff]
    %v3264 = vld [vmem:[#allocation8 + $0x2c0] sm:$0xff]
    %v3265 = vld [vmem:[#allocation8 + $0x2c8] sm:$0xff]
    %v3266 = vld [vmem:[#allocation8 + $0x2d0] sm:$0xff]
    %v3267 = vld [vmem:[#allocation8 + $0x2d8] sm:$0xff]
    %v3268 = vld [vmem:[#allocation8 + $0x2e0] sm:$0xff]
    %v3269 = vld [vmem:[#allocation8 + $0x2e8] sm:$0xff]
    %v3270 = vld [vmem:[#allocation8 + $0x2f0] sm:$0xff]
    %v3271 = vld [vmem:[#allocation8 + $0x2f8] sm:$0xff]
    %v3272 = vld [vmem:[#allocation8 + $0x300] sm:$0xff]
    %v3273 = vld [vmem:[#allocation8 + $0x308] sm:$0xff]
    %v3274 = vld [vmem:[#allocation8 + $0x310] sm:$0xff]
    %v3275 = vld [vmem:[#allocation8 + $0x318] sm:$0xff]
    %v3276 = vld [vmem:[#allocation8 + $0x320] sm:$0xff]
    %v3277 = vld [vmem:[#allocation8 + $0x328] sm:$0xff]
    %v3278 = vld [vmem:[#allocation8 + $0x330] sm:$0xff]
    %v3279 = vld [vmem:[#allocation8 + $0x338] sm:$0xff]
    %v3280 = vld [vmem:[#allocation8 + $0x340] sm:$0xff]
    %v3281 = vld [vmem:[#allocation8 + $0x348] sm:$0xff]
    %v3282 = vld [vmem:[#allocation8 + $0x350] sm:$0xff]
    %v3283 = vld [vmem:[#allocation8 + $0x358] sm:$0xff]
    %v3284 = vld [vmem:[#allocation8 + $0x360] sm:$0xff]
    %v3285 = vld [vmem:[#allocation8 + $0x368] sm:$0xff]
    %v3286 = vld [vmem:[#allocation8 + $0x370] sm:$0xff]
    %v3287 = vld [vmem:[#allocation8 + $0x378] sm:$0xff]
    %v3288 = vld [vmem:[#allocation8 + $0x380] sm:$0xff]
    %v3289 = vld [vmem:[#allocation8 + $0x388] sm:$0xff]
    %v3290 = vld [vmem:[#allocation8 + $0x390] sm:$0xff]
    %v3291 = vld [vmem:[#allocation8 + $0x398] sm:$0xff]
    %v3292 = vld [vmem:[#allocation8 + $0x3a0] sm:$0xff]
    %v3293 = vld [vmem:[#allocation8 + $0x3a8] sm:$0xff]
    %v3294 = vld [vmem:[#allocation8 + $0x3b0] sm:$0xff]
    %v3295 = vld [vmem:[#allocation8 + $0x3b8] sm:$0xff]
    %v3296 = vld [vmem:[#allocation8 + $0x3c0] sm:$0xff]
    %v3297 = vld [vmem:[#allocation8 + $0x3c8] sm:$0xff]
    %v3298 = vld [vmem:[#allocation8 + $0x3d0] sm:$0xff]
    %v3299 = vld [vmem:[#allocation8 + $0x3d8] sm:$0xff]
    %v3300 = vld [vmem:[#allocation8 + $0x3e0] sm:$0xff]
    %v3301 = vld [vmem:[#allocation8 + $0x3e8] sm:$0xff]
    %v3302 = vld [vmem:[#allocation8 + $0x3f0] sm:$0xff]
    %v3303 = vld [vmem:[#allocation8 + $0x3f8] sm:$0xff]
    %v3304 = vld [vmem:[#allocation8 + $0x400] sm:$0xff]
    %v3305 = vld [vmem:[#allocation8 + $0x408] sm:$0xff]
    %v3306 = vld [vmem:[#allocation8 + $0x410] sm:$0xff]
    %v3307 = vld [vmem:[#allocation8 + $0x418] sm:$0xff]
    %v3308 = vld [vmem:[#allocation8 + $0x420] sm:$0xff]
    %v3309 = vld [vmem:[#allocation8 + $0x428] sm:$0xff]
    %v3310 = vld [vmem:[#allocation8 + $0x430] sm:$0xff]
    %v3311 = vld [vmem:[#allocation8 + $0x438] sm:$0xff]
    %v3312 = vld [vmem:[#allocation8 + $0x440] sm:$0xff]
    %v3313 = vld [vmem:[#allocation8 + $0x448] sm:$0xff]
    %v3314 = vld [vmem:[#allocation8 + $0x450] sm:$0xff]
    %v3315 = vld [vmem:[#allocation8 + $0x458] sm:$0xff]
    %v3316 = vld [vmem:[#allocation8 + $0x460] sm:$0xff]
    %v3317 = vld [vmem:[#allocation8 + $0x468] sm:$0xff]
    %v3318 = vld [vmem:[#allocation8 + $0x470] sm:$0xff]
    %v3319 = vld [vmem:[#allocation8 + $0x478] sm:$0xff]
    %v3320 = vld [vmem:[#allocation8 + $0x480] sm:$0xff]
    %v3321 = vld [vmem:[#allocation8 + $0x488] sm:$0xff]
    %v3322 = vld [vmem:[#allocation8 + $0x490] sm:$0xff]
    %v3323 = vld [vmem:[#allocation8 + $0x498] sm:$0xff]
    %v3324 = vld [vmem:[#allocation8 + $0x4a0] sm:$0xff]
    %v3325 = vld [vmem:[#allocation8 + $0x4a8] sm:$0xff]
    %v3326 = vld [vmem:[#allocation8 + $0x4b0] sm:$0xff]
    %v3327 = vld [vmem:[#allocation8 + $0x4b8] sm:$0xff]
    %v3328 = vld [vmem:[#allocation8 + $0x4c0] sm:$0xff]
    %v3329 = vld [vmem:[#allocation8 + $0x4c8] sm:$0xff]
    %v3330 = vld [vmem:[#allocation8 + $0x4d0] sm:$0xff]
    %v3331 = vld [vmem:[#allocation8 + $0x4d8] sm:$0xff]
    %v3332 = vld [vmem:[#allocation8 + $0x4e0] sm:$0xff]
    %v3333 = vld [vmem:[#allocation8 + $0x4e8] sm:$0xff]
    %v3334 = vld [vmem:[#allocation8 + $0x4f0] sm:$0xff]
    %v3335 = vld [vmem:[#allocation8 + $0x4f8] sm:$0xff]
    %v3336 = vld [vmem:[#allocation8 + $0x500] sm:$0xff]
    %v3337 = vld [vmem:[#allocation8 + $0x508] sm:$0xff]
    %v3338 = vld [vmem:[#allocation8 + $0x510] sm:$0xff]
    %v3339 = vld [vmem:[#allocation8 + $0x518] sm:$0xff]
    %v3340 = vld [vmem:[#allocation8 + $0x520] sm:$0xff]
    %v3341 = vld [vmem:[#allocation8 + $0x528] sm:$0xff]
    %v3342 = vld [vmem:[#allocation8 + $0x530] sm:$0xff]
    %v3343 = vld [vmem:[#allocation8 + $0x538] sm:$0xff]
    %v3344 = vld [vmem:[#allocation8 + $0x540] sm:$0xff]
    %v3345 = vld [vmem:[#allocation8 + $0x548] sm:$0xff]
    %v3346 = vld [vmem:[#allocation8 + $0x550] sm:$0xff]
    %v3347 = vld [vmem:[#allocation8 + $0x558] sm:$0xff]
    %v3348 = vld [vmem:[#allocation8 + $0x560] sm:$0xff]
    %v3349 = vld [vmem:[#allocation8 + $0x568] sm:$0xff]
    %v3350 = vld [vmem:[#allocation8 + $0x570] sm:$0xff]
    %v3351 = vld [vmem:[#allocation8 + $0x578] sm:$0xff]
    %v3352 = vld [vmem:[#allocation8 + $0x580] sm:$0xff]
    %v3353 = vld [vmem:[#allocation8 + $0x588] sm:$0xff]
    %v3354 = vld [vmem:[#allocation8 + $0x590] sm:$0xff]
    %v3355 = vld [vmem:[#allocation8 + $0x598] sm:$0xff]
    %v3356 = vld [vmem:[#allocation8 + $0x5a0] sm:$0xff]
    %v3357 = vld [vmem:[#allocation8 + $0x5a8] sm:$0xff]
    %v3358 = vld [vmem:[#allocation8 + $0x5b0] sm:$0xff]
    %v3359 = vld [vmem:[#allocation8 + $0x5b8] sm:$0xff]
    %v3360 = vld [vmem:[#allocation8 + $0x5c0] sm:$0xff]
    %v3361 = vld [vmem:[#allocation8 + $0x5c8] sm:$0xff]
    %v3362 = vld [vmem:[#allocation8 + $0x5d0] sm:$0xff]
    %v3363 = vld [vmem:[#allocation8 + $0x5d8] sm:$0xff]
    %v3364 = vld [vmem:[#allocation8 + $0x5e0] sm:$0xff]
    %v3365 = vld [vmem:[#allocation8 + $0x5e8] sm:$0xff]
    %v3366 = vld [vmem:[#allocation8 + $0x5f0] sm:$0xff]
    %v3367 = vld [vmem:[#allocation8 + $0x5f8] sm:$0xff]
    %v3368 = vld [vmem:[#allocation8 + $0x600] sm:$0xff]
    %v3369 = vld [vmem:[#allocation8 + $0x608] sm:$0xff]
    %v3370 = vld [vmem:[#allocation8 + $0x610] sm:$0xff]
    %v3371 = vld [vmem:[#allocation8 + $0x618] sm:$0xff]
    %v3372 = vld [vmem:[#allocation8 + $0x620] sm:$0xff]
    %v3373 = vld [vmem:[#allocation8 + $0x628] sm:$0xff]
    %v3374 = vld [vmem:[#allocation8 + $0x630] sm:$0xff]
    %v3375 = vld [vmem:[#allocation8 + $0x638] sm:$0xff]
    %v3376 = vld [vmem:[#allocation8 + $0x640] sm:$0xff]
    %v3377 = vld [vmem:[#allocation8 + $0x648] sm:$0xff]
    %v3378 = vld [vmem:[#allocation8 + $0x650] sm:$0xff]
    %v3379 = vld [vmem:[#allocation8 + $0x658] sm:$0xff]
    %v3380 = vld [vmem:[#allocation8 + $0x660] sm:$0xff]
    %v3381 = vld [vmem:[#allocation8 + $0x668] sm:$0xff]
    %v3382 = vld [vmem:[#allocation8 + $0x670] sm:$0xff]
    %v3383 = vld [vmem:[#allocation8 + $0x678] sm:$0xff]
    %v3384 = vld [vmem:[#allocation8 + $0x680] sm:$0xff]
    %v3385 = vld [vmem:[#allocation8 + $0x688] sm:$0xff]
    %v3386 = vld [vmem:[#allocation8 + $0x690] sm:$0xff]
    %v3387 = vld [vmem:[#allocation8 + $0x698] sm:$0xff]
    %v3388 = vld [vmem:[#allocation8 + $0x6a0] sm:$0xff]
    %v3389 = vld [vmem:[#allocation8 + $0x6a8] sm:$0xff]
    %v3390 = vld [vmem:[#allocation8 + $0x6b0] sm:$0xff]
    %v3391 = vld [vmem:[#allocation8 + $0x6b8] sm:$0xff]
    %v3392 = vld [vmem:[#allocation8 + $0x6c0] sm:$0xff]
    %v3393 = vld [vmem:[#allocation8 + $0x6c8] sm:$0xff]
    %v3394 = vld [vmem:[#allocation8 + $0x6d0] sm:$0xff]
    %v3395 = vld [vmem:[#allocation8 + $0x6d8] sm:$0xff]
    %v3396 = vld [vmem:[#allocation8 + $0x6e0] sm:$0xff]
    %v3397 = vld [vmem:[#allocation8 + $0x6e8] sm:$0xff]
    %v3398 = vld [vmem:[#allocation8 + $0x6f0] sm:$0xff]
    %v3399 = vld [vmem:[#allocation8 + $0x6f8] sm:$0xff]
    %v3400 = vld [vmem:[#allocation8 + $0x700] sm:$0xff]
    %v3401 = vld [vmem:[#allocation8 + $0x708] sm:$0xff]
    %v3402 = vld [vmem:[#allocation8 + $0x710] sm:$0xff]
    %v3403 = vld [vmem:[#allocation8 + $0x718] sm:$0xff]
    %v3404 = vld [vmem:[#allocation8 + $0x720] sm:$0xff]
    %v3405 = vld [vmem:[#allocation8 + $0x728] sm:$0xff]
    %v3406 = vld [vmem:[#allocation8 + $0x730] sm:$0xff]
    %v3407 = vld [vmem:[#allocation8 + $0x738] sm:$0xff]
    %v3408 = vld [vmem:[#allocation8 + $0x740] sm:$0xff]
    %v3409 = vld [vmem:[#allocation8 + $0x748] sm:$0xff]
    %v3410 = vld [vmem:[#allocation8 + $0x750] sm:$0xff]
    %v3411 = vld [vmem:[#allocation8 + $0x758] sm:$0xff]
    %v3412 = vld [vmem:[#allocation8 + $0x760] sm:$0xff]
    %v3413 = vld [vmem:[#allocation8 + $0x768] sm:$0xff]
    %v3414 = vld [vmem:[#allocation8 + $0x770] sm:$0xff]
    %v3415 = vld [vmem:[#allocation8 + $0x778] sm:$0xff]
    %v3416 = vld [vmem:[#allocation8 + $0x780] sm:$0xff]
    %v3417 = vld [vmem:[#allocation8 + $0x788] sm:$0xff]
    %v3418 = vld [vmem:[#allocation8 + $0x790] sm:$0xff]
    %v3419 = vld [vmem:[#allocation8 + $0x798] sm:$0xff]
    %v3420 = vld [vmem:[#allocation8 + $0x7a0] sm:$0xff]
    %v3421 = vld [vmem:[#allocation8 + $0x7a8] sm:$0xff]
    %v3422 = vld [vmem:[#allocation8 + $0x7b0] sm:$0xff]
    %v3423 = vld [vmem:[#allocation8 + $0x7b8] sm:$0xff]
    %v3424 = vld [vmem:[#allocation8 + $0x7c0] sm:$0xff]
    %v3425 = vld [vmem:[#allocation8 + $0x7c8] sm:$0xff]
    %v3426 = vld [vmem:[#allocation8 + $0x7d0] sm:$0xff]
    %v3427 = vld [vmem:[#allocation8 + $0x7d8] sm:$0xff]
    %v3428 = vld [vmem:[#allocation8 + $0x7e0] sm:$0xff]
    %v3429 = vld [vmem:[#allocation8 + $0x7e8] sm:$0xff]
    %v3430 = vld [vmem:[#allocation8 + $0x7f0] sm:$0xff]
    %v3431 = vld [vmem:[#allocation8 + $0x7f8] sm:$0xff]
    %v3432 = vld [vmem:[#allocation10] sm:$0xf]
    %v3434 = vlaneseq
    %v3435 = vshrl.u32 %v3434, 7
    %v3436 = vsub.s32 0, %v3435
    %v3437 = vrot.slane %v3432, %v3436
    %v3438 = vlaneseq
    %v3439 = vshrl.u32 %v3438, 7
    %v3440 = vsub.s32 1, %v3439
    %v3441 = vrot.slane %v3432, %v3440
    %v3442 = vlaneseq
    %v3443 = vshrl.u32 %v3442, 7
    %v3444 = vsub.s32 2, %v3443
    %v3445 = vrot.slane %v3432, %v3444
    %v3446 = vlaneseq
    %v3447 = vshrl.u32 %v3446, 7
    %v3448 = vsub.s32 3, %v3447
    %v3449 = vrot.slane %v3432, %v3448
    %v3710 = vunpack.c.l.b16 %v3176
    %v3711 = vunpack.c.h.b16 %v3176
    %v3712 = vunpack.c.l.b16 %v3177
    %v3713 = vunpack.c.h.b16 %v3177
    %v3714 = vunpack.c.l.b16 %v3178
    %v3715 = vunpack.c.h.b16 %v3178
    %v3716 = vunpack.c.l.b16 %v3179
    %v3717 = vunpack.c.h.b16 %v3179
    %v3718 = vunpack.c.l.b16 %v3180
    %v3719 = vunpack.c.h.b16 %v3180
    %v3720 = vunpack.c.l.b16 %v3181
    %v3721 = vunpack.c.h.b16 %v3181
    %v3722 = vunpack.c.l.b16 %v3182
    %v3723 = vunpack.c.h.b16 %v3182
    %v3724 = vunpack.c.l.b16 %v3183
    %v3725 = vunpack.c.h.b16 %v3183
    %v3726 = vunpack.c.l.b16 %v3184
    %v3727 = vunpack.c.h.b16 %v3184
    %v3728 = vunpack.c.l.b16 %v3185
    %v3729 = vunpack.c.h.b16 %v3185
    %v3730 = vunpack.c.l.b16 %v3186
    %v3731 = vunpack.c.h.b16 %v3186
    %v3732 = vunpack.c.l.b16 %v3187
    %v3733 = vunpack.c.h.b16 %v3187
    %v3734 = vunpack.c.l.b16 %v3188
    %v3735 = vunpack.c.h.b16 %v3188
    %v3736 = vunpack.c.l.b16 %v3189
    %v3737 = vunpack.c.h.b16 %v3189
    %v3738 = vunpack.c.l.b16 %v3190
    %v3739 = vunpack.c.h.b16 %v3190
    %v3740 = vunpack.c.l.b16 %v3191
    %v3741 = vunpack.c.h.b16 %v3191
    %v3742 = vunpack.c.l.b16 %v3192
    %v3743 = vunpack.c.h.b16 %v3192
    %v3744 = vunpack.c.l.b16 %v3193
    %v3745 = vunpack.c.h.b16 %v3193
    %v3746 = vunpack.c.l.b16 %v3194
    %v3747 = vunpack.c.h.b16 %v3194
    %v3748 = vunpack.c.l.b16 %v3195
    %v3749 = vunpack.c.h.b16 %v3195
    %v3750 = vunpack.c.l.b16 %v3196
    %v3751 = vunpack.c.h.b16 %v3196
    %v3752 = vunpack.c.l.b16 %v3197
    %v3753 = vunpack.c.h.b16 %v3197
    %v3754 = vunpack.c.l.b16 %v3198
    %v3755 = vunpack.c.h.b16 %v3198
    %v3756 = vunpack.c.l.b16 %v3199
    %v3757 = vunpack.c.h.b16 %v3199
    %v3758 = vunpack.c.l.b16 %v3200
    %v3759 = vunpack.c.h.b16 %v3200
    %v3760 = vunpack.c.l.b16 %v3201
    %v3761 = vunpack.c.h.b16 %v3201
    %v3762 = vunpack.c.l.b16 %v3202
    %v3763 = vunpack.c.h.b16 %v3202
    %v3764 = vunpack.c.l.b16 %v3203
    %v3765 = vunpack.c.h.b16 %v3203
    %v3766 = vunpack.c.l.b16 %v3204
    %v3767 = vunpack.c.h.b16 %v3204
    %v3768 = vunpack.c.l.b16 %v3205
    %v3769 = vunpack.c.h.b16 %v3205
    %v3770 = vunpack.c.l.b16 %v3206
    %v3771 = vunpack.c.h.b16 %v3206
    %v3772 = vunpack.c.l.b16 %v3207
    %v3773 = vunpack.c.h.b16 %v3207
    %v3774 = vunpack.c.l.b16 %v3208
    %v3775 = vunpack.c.h.b16 %v3208
    %v3776 = vunpack.c.l.b16 %v3209
    %v3777 = vunpack.c.h.b16 %v3209
    %v3778 = vunpack.c.l.b16 %v3210
    %v3779 = vunpack.c.h.b16 %v3210
    %v3780 = vunpack.c.l.b16 %v3211
    %v3781 = vunpack.c.h.b16 %v3211
    %v3782 = vunpack.c.l.b16 %v3212
    %v3783 = vunpack.c.h.b16 %v3212
    %v3784 = vunpack.c.l.b16 %v3213
    %v3785 = vunpack.c.h.b16 %v3213
    %v3786 = vunpack.c.l.b16 %v3214
    %v3787 = vunpack.c.h.b16 %v3214
    %v3788 = vunpack.c.l.b16 %v3215
    %v3789 = vunpack.c.h.b16 %v3215
    %v3790 = vunpack.c.l.b16 %v3216
    %v3791 = vunpack.c.h.b16 %v3216
    %v3792 = vunpack.c.l.b16 %v3217
    %v3793 = vunpack.c.h.b16 %v3217
    %v3794 = vunpack.c.l.b16 %v3218
    %v3795 = vunpack.c.h.b16 %v3218
    %v3796 = vunpack.c.l.b16 %v3219
    %v3797 = vunpack.c.h.b16 %v3219
    %v3798 = vunpack.c.l.b16 %v3220
    %v3799 = vunpack.c.h.b16 %v3220
    %v3800 = vunpack.c.l.b16 %v3221
    %v3801 = vunpack.c.h.b16 %v3221
    %v3802 = vunpack.c.l.b16 %v3222
    %v3803 = vunpack.c.h.b16 %v3222
    %v3804 = vunpack.c.l.b16 %v3223
    %v3805 = vunpack.c.h.b16 %v3223
    %v3806 = vunpack.c.l.b16 %v3224
    %v3807 = vunpack.c.h.b16 %v3224
    %v3808 = vunpack.c.l.b16 %v3225
    %v3809 = vunpack.c.h.b16 %v3225
    %v3810 = vunpack.c.l.b16 %v3226
    %v3811 = vunpack.c.h.b16 %v3226
    %v3812 = vunpack.c.l.b16 %v3227
    %v3813 = vunpack.c.h.b16 %v3227
    %v3814 = vunpack.c.l.b16 %v3228
    %v3815 = vunpack.c.h.b16 %v3228
    %v3816 = vunpack.c.l.b16 %v3229
    %v3817 = vunpack.c.h.b16 %v3229
    %v3818 = vunpack.c.l.b16 %v3230
    %v3819 = vunpack.c.h.b16 %v3230
    %v3820 = vunpack.c.l.b16 %v3231
    %v3821 = vunpack.c.h.b16 %v3231
    %v3822 = vunpack.c.l.b16 %v3232
    %v3823 = vunpack.c.h.b16 %v3232
    %v3824 = vunpack.c.l.b16 %v3233
    %v3825 = vunpack.c.h.b16 %v3233
    %v3826 = vunpack.c.l.b16 %v3234
    %v3827 = vunpack.c.h.b16 %v3234
    %v3828 = vunpack.c.l.b16 %v3235
    %v3829 = vunpack.c.h.b16 %v3235
    %v3830 = vunpack.c.l.b16 %v3236
    %v3831 = vunpack.c.h.b16 %v3236
    %v3832 = vunpack.c.l.b16 %v3237
    %v3833 = vunpack.c.h.b16 %v3237
    %v3834 = vunpack.c.l.b16 %v3238
    %v3835 = vunpack.c.h.b16 %v3238
    %v3836 = vunpack.c.l.b16 %v3239
    %v3837 = vunpack.c.h.b16 %v3239
    %v3838 = vunpack.c.l.b16 %v3240
    %v3839 = vunpack.c.h.b16 %v3240
    %v3840 = vunpack.c.l.b16 %v3241
    %v3841 = vunpack.c.h.b16 %v3241
    %v3842 = vunpack.c.l.b16 %v3242
    %v3843 = vunpack.c.h.b16 %v3242
    %v3844 = vunpack.c.l.b16 %v3243
    %v3845 = vunpack.c.h.b16 %v3243
    %v3846 = vunpack.c.l.b16 %v3244
    %v3847 = vunpack.c.h.b16 %v3244
    %v3848 = vunpack.c.l.b16 %v3245
    %v3849 = vunpack.c.h.b16 %v3245
    %v3850 = vunpack.c.l.b16 %v3246
    %v3851 = vunpack.c.h.b16 %v3246
    %v3852 = vunpack.c.l.b16 %v3247
    %v3853 = vunpack.c.h.b16 %v3247
    %v3854 = vunpack.c.l.b16 %v3248
    %v3855 = vunpack.c.h.b16 %v3248
    %v3856 = vunpack.c.l.b16 %v3249
    %v3857 = vunpack.c.h.b16 %v3249
    %v3858 = vunpack.c.l.b16 %v3250
    %v3859 = vunpack.c.h.b16 %v3250
    %v3860 = vunpack.c.l.b16 %v3251
    %v3861 = vunpack.c.h.b16 %v3251
    %v3862 = vunpack.c.l.b16 %v3252
    %v3863 = vunpack.c.h.b16 %v3252
    %v3864 = vunpack.c.l.b16 %v3253
    %v3865 = vunpack.c.h.b16 %v3253
    %v3866 = vunpack.c.l.b16 %v3254
    %v3867 = vunpack.c.h.b16 %v3254
    %v3868 = vunpack.c.l.b16 %v3255
    %v3869 = vunpack.c.h.b16 %v3255
    %v3870 = vunpack.c.l.b16 %v3256
    %v3871 = vunpack.c.h.b16 %v3256
    %v3872 = vunpack.c.l.b16 %v3257
    %v3873 = vunpack.c.h.b16 %v3257
    %v3874 = vunpack.c.l.b16 %v3258
    %v3875 = vunpack.c.h.b16 %v3258
    %v3876 = vunpack.c.l.b16 %v3259
    %v3877 = vunpack.c.h.b16 %v3259
    %v3878 = vunpack.c.l.b16 %v3260
    %v3879 = vunpack.c.h.b16 %v3260
    %v3880 = vunpack.c.l.b16 %v3261
    %v3881 = vunpack.c.h.b16 %v3261
    %v3882 = vunpack.c.l.b16 %v3262
    %v3883 = vunpack.c.h.b16 %v3262
    %v3884 = vunpack.c.l.b16 %v3263
    %v3885 = vunpack.c.h.b16 %v3263
    %v3886 = vunpack.c.l.b16 %v3264
    %v3887 = vunpack.c.h.b16 %v3264
    %v3888 = vunpack.c.l.b16 %v3265
    %v3889 = vunpack.c.h.b16 %v3265
    %v3890 = vunpack.c.l.b16 %v3266
    %v3891 = vunpack.c.h.b16 %v3266
    %v3892 = vunpack.c.l.b16 %v3267
    %v3893 = vunpack.c.h.b16 %v3267
    %v3894 = vunpack.c.l.b16 %v3268
    %v3895 = vunpack.c.h.b16 %v3268
    %v3896 = vunpack.c.l.b16 %v3269
    %v3897 = vunpack.c.h.b16 %v3269
    %v3898 = vunpack.c.l.b16 %v3270
    %v3899 = vunpack.c.h.b16 %v3270
    %v3900 = vunpack.c.l.b16 %v3271
    %v3901 = vunpack.c.h.b16 %v3271
    %v3902 = vunpack.c.l.b16 %v3272
    %v3903 = vunpack.c.h.b16 %v3272
    %v3904 = vunpack.c.l.b16 %v3273
    %v3905 = vunpack.c.h.b16 %v3273
    %v3906 = vunpack.c.l.b16 %v3274
    %v3907 = vunpack.c.h.b16 %v3274
    %v3908 = vunpack.c.l.b16 %v3275
    %v3909 = vunpack.c.h.b16 %v3275
    %v3910 = vunpack.c.l.b16 %v3276
    %v3911 = vunpack.c.h.b16 %v3276
    %v3912 = vunpack.c.l.b16 %v3277
    %v3913 = vunpack.c.h.b16 %v3277
    %v3914 = vunpack.c.l.b16 %v3278
    %v3915 = vunpack.c.h.b16 %v3278
    %v3916 = vunpack.c.l.b16 %v3279
    %v3917 = vunpack.c.h.b16 %v3279
    %v3918 = vunpack.c.l.b16 %v3280
    %v3919 = vunpack.c.h.b16 %v3280
    %v3920 = vunpack.c.l.b16 %v3281
    %v3921 = vunpack.c.h.b16 %v3281
    %v3922 = vunpack.c.l.b16 %v3282
    %v3923 = vunpack.c.h.b16 %v3282
    %v3924 = vunpack.c.l.b16 %v3283
    %v3925 = vunpack.c.h.b16 %v3283
    %v3926 = vunpack.c.l.b16 %v3284
    %v3927 = vunpack.c.h.b16 %v3284
    %v3928 = vunpack.c.l.b16 %v3285
    %v3929 = vunpack.c.h.b16 %v3285
    %v3930 = vunpack.c.l.b16 %v3286
    %v3931 = vunpack.c.h.b16 %v3286
    %v3932 = vunpack.c.l.b16 %v3287
    %v3933 = vunpack.c.h.b16 %v3287
    %v3934 = vunpack.c.l.b16 %v3288
    %v3935 = vunpack.c.h.b16 %v3288
    %v3936 = vunpack.c.l.b16 %v3289
    %v3937 = vunpack.c.h.b16 %v3289
    %v3938 = vunpack.c.l.b16 %v3290
    %v3939 = vunpack.c.h.b16 %v3290
    %v3940 = vunpack.c.l.b16 %v3291
    %v3941 = vunpack.c.h.b16 %v3291
    %v3942 = vunpack.c.l.b16 %v3292
    %v3943 = vunpack.c.h.b16 %v3292
    %v3944 = vunpack.c.l.b16 %v3293
    %v3945 = vunpack.c.h.b16 %v3293
    %v3946 = vunpack.c.l.b16 %v3294
    %v3947 = vunpack.c.h.b16 %v3294
    %v3948 = vunpack.c.l.b16 %v3295
    %v3949 = vunpack.c.h.b16 %v3295
    %v3950 = vunpack.c.l.b16 %v3296
    %v3951 = vunpack.c.h.b16 %v3296
    %v3952 = vunpack.c.l.b16 %v3297
    %v3953 = vunpack.c.h.b16 %v3297
    %v3954 = vunpack.c.l.b16 %v3298
    %v3955 = vunpack.c.h.b16 %v3298
    %v3956 = vunpack.c.l.b16 %v3299
    %v3957 = vunpack.c.h.b16 %v3299
    %v3958 = vunpack.c.l.b16 %v3300
    %v3959 = vunpack.c.h.b16 %v3300
    %v3960 = vunpack.c.l.b16 %v3301
    %v3961 = vunpack.c.h.b16 %v3301
    %v3962 = vunpack.c.l.b16 %v3302
    %v3963 = vunpack.c.h.b16 %v3302
    %v3964 = vunpack.c.l.b16 %v3303
    %v3965 = vunpack.c.h.b16 %v3303
    %v3966 = vunpack.c.l.b16 %v3304
    %v3967 = vunpack.c.h.b16 %v3304
    %v3968 = vunpack.c.l.b16 %v3305
    %v3969 = vunpack.c.h.b16 %v3305
    %v3970 = vunpack.c.l.b16 %v3306
    %v3971 = vunpack.c.h.b16 %v3306
    %v3972 = vunpack.c.l.b16 %v3307
    %v3973 = vunpack.c.h.b16 %v3307
    %v3974 = vunpack.c.l.b16 %v3308
    %v3975 = vunpack.c.h.b16 %v3308
    %v3976 = vunpack.c.l.b16 %v3309
    %v3977 = vunpack.c.h.b16 %v3309
    %v3978 = vunpack.c.l.b16 %v3310
    %v3979 = vunpack.c.h.b16 %v3310
    %v3980 = vunpack.c.l.b16 %v3311
    %v3981 = vunpack.c.h.b16 %v3311
    %v3982 = vunpack.c.l.b16 %v3312
    %v3983 = vunpack.c.h.b16 %v3312
    %v3984 = vunpack.c.l.b16 %v3313
    %v3985 = vunpack.c.h.b16 %v3313
    %v3986 = vunpack.c.l.b16 %v3314
    %v3987 = vunpack.c.h.b16 %v3314
    %v3988 = vunpack.c.l.b16 %v3315
    %v3989 = vunpack.c.h.b16 %v3315
    %v3990 = vunpack.c.l.b16 %v3316
    %v3991 = vunpack.c.h.b16 %v3316
    %v3992 = vunpack.c.l.b16 %v3317
    %v3993 = vunpack.c.h.b16 %v3317
    %v3994 = vunpack.c.l.b16 %v3318
    %v3995 = vunpack.c.h.b16 %v3318
    %v3996 = vunpack.c.l.b16 %v3319
    %v3997 = vunpack.c.h.b16 %v3319
    %v3998 = vunpack.c.l.b16 %v3320
    %v3999 = vunpack.c.h.b16 %v3320
    %v4000 = vunpack.c.l.b16 %v3321
    %v4001 = vunpack.c.h.b16 %v3321
    %v4002 = vunpack.c.l.b16 %v3322
    %v4003 = vunpack.c.h.b16 %v3322
    %v4004 = vunpack.c.l.b16 %v3323
    %v4005 = vunpack.c.h.b16 %v3323
    %v4006 = vunpack.c.l.b16 %v3324
    %v4007 = vunpack.c.h.b16 %v3324
    %v4008 = vunpack.c.l.b16 %v3325
    %v4009 = vunpack.c.h.b16 %v3325
    %v4010 = vunpack.c.l.b16 %v3326
    %v4011 = vunpack.c.h.b16 %v3326
    %v4012 = vunpack.c.l.b16 %v3327
    %v4013 = vunpack.c.h.b16 %v3327
    %v4014 = vunpack.c.l.b16 %v3328
    %v4015 = vunpack.c.h.b16 %v3328
    %v4016 = vunpack.c.l.b16 %v3329
    %v4017 = vunpack.c.h.b16 %v3329
    %v4018 = vunpack.c.l.b16 %v3330
    %v4019 = vunpack.c.h.b16 %v3330
    %v4020 = vunpack.c.l.b16 %v3331
    %v4021 = vunpack.c.h.b16 %v3331
    %v4022 = vunpack.c.l.b16 %v3332
    %v4023 = vunpack.c.h.b16 %v3332
    %v4024 = vunpack.c.l.b16 %v3333
    %v4025 = vunpack.c.h.b16 %v3333
    %v4026 = vunpack.c.l.b16 %v3334
    %v4027 = vunpack.c.h.b16 %v3334
    %v4028 = vunpack.c.l.b16 %v3335
    %v4029 = vunpack.c.h.b16 %v3335
    %v4030 = vunpack.c.l.b16 %v3336
    %v4031 = vunpack.c.h.b16 %v3336
    %v4032 = vunpack.c.l.b16 %v3337
    %v4033 = vunpack.c.h.b16 %v3337
    %v4034 = vunpack.c.l.b16 %v3338
    %v4035 = vunpack.c.h.b16 %v3338
    %v4036 = vunpack.c.l.b16 %v3339
    %v4037 = vunpack.c.h.b16 %v3339
    %v4038 = vunpack.c.l.b16 %v3340
    %v4039 = vunpack.c.h.b16 %v3340
    %v4040 = vunpack.c.l.b16 %v3341
    %v4041 = vunpack.c.h.b16 %v3341
    %v4042 = vunpack.c.l.b16 %v3342
    %v4043 = vunpack.c.h.b16 %v3342
    %v4044 = vunpack.c.l.b16 %v3343
    %v4045 = vunpack.c.h.b16 %v3343
    %v4046 = vunpack.c.l.b16 %v3344
    %v4047 = vunpack.c.h.b16 %v3344
    %v4048 = vunpack.c.l.b16 %v3345
    %v4049 = vunpack.c.h.b16 %v3345
    %v4050 = vunpack.c.l.b16 %v3346
    %v4051 = vunpack.c.h.b16 %v3346
    %v4052 = vunpack.c.l.b16 %v3347
    %v4053 = vunpack.c.h.b16 %v3347
    %v4054 = vunpack.c.l.b16 %v3348
    %v4055 = vunpack.c.h.b16 %v3348
    %v4056 = vunpack.c.l.b16 %v3349
    %v4057 = vunpack.c.h.b16 %v3349
    %v4058 = vunpack.c.l.b16 %v3350
    %v4059 = vunpack.c.h.b16 %v3350
    %v4060 = vunpack.c.l.b16 %v3351
    %v4061 = vunpack.c.h.b16 %v3351
    %v4062 = vunpack.c.l.b16 %v3352
    %v4063 = vunpack.c.h.b16 %v3352
    %v4064 = vunpack.c.l.b16 %v3353
    %v4065 = vunpack.c.h.b16 %v3353
    %v4066 = vunpack.c.l.b16 %v3354
    %v4067 = vunpack.c.h.b16 %v3354
    %v4068 = vunpack.c.l.b16 %v3355
    %v4069 = vunpack.c.h.b16 %v3355
    %v4070 = vunpack.c.l.b16 %v3356
    %v4071 = vunpack.c.h.b16 %v3356
    %v4072 = vunpack.c.l.b16 %v3357
    %v4073 = vunpack.c.h.b16 %v3357
    %v4074 = vunpack.c.l.b16 %v3358
    %v4075 = vunpack.c.h.b16 %v3358
    %v4076 = vunpack.c.l.b16 %v3359
    %v4077 = vunpack.c.h.b16 %v3359
    %v4078 = vunpack.c.l.b16 %v3360
    %v4079 = vunpack.c.h.b16 %v3360
    %v4080 = vunpack.c.l.b16 %v3361
    %v4081 = vunpack.c.h.b16 %v3361
    %v4082 = vunpack.c.l.b16 %v3362
    %v4083 = vunpack.c.h.b16 %v3362
    %v4084 = vunpack.c.l.b16 %v3363
    %v4085 = vunpack.c.h.b16 %v3363
    %v4086 = vunpack.c.l.b16 %v3364
    %v4087 = vunpack.c.h.b16 %v3364
    %v4088 = vunpack.c.l.b16 %v3365
    %v4089 = vunpack.c.h.b16 %v3365
    %v4090 = vunpack.c.l.b16 %v3366
    %v4091 = vunpack.c.h.b16 %v3366
    %v4092 = vunpack.c.l.b16 %v3367
    %v4093 = vunpack.c.h.b16 %v3367
    %v4094 = vunpack.c.l.b16 %v3368
    %v4095 = vunpack.c.h.b16 %v3368
    %v4096 = vunpack.c.l.b16 %v3369
    %v4097 = vunpack.c.h.b16 %v3369
    %v4098 = vunpack.c.l.b16 %v3370
    %v4099 = vunpack.c.h.b16 %v3370
    %v4100 = vunpack.c.l.b16 %v3371
    %v4101 = vunpack.c.h.b16 %v3371
    %v4102 = vunpack.c.l.b16 %v3372
    %v4103 = vunpack.c.h.b16 %v3372
    %v4104 = vunpack.c.l.b16 %v3373
    %v4105 = vunpack.c.h.b16 %v3373
    %v4106 = vunpack.c.l.b16 %v3374
    %v4107 = vunpack.c.h.b16 %v3374
    %v4108 = vunpack.c.l.b16 %v3375
    %v4109 = vunpack.c.h.b16 %v3375
    %v4110 = vunpack.c.l.b16 %v3376
    %v4111 = vunpack.c.h.b16 %v3376
    %v4112 = vunpack.c.l.b16 %v3377
    %v4113 = vunpack.c.h.b16 %v3377
    %v4114 = vunpack.c.l.b16 %v3378
    %v4115 = vunpack.c.h.b16 %v3378
    %v4116 = vunpack.c.l.b16 %v3379
    %v4117 = vunpack.c.h.b16 %v3379
    %v4118 = vunpack.c.l.b16 %v3380
    %v4119 = vunpack.c.h.b16 %v3380
    %v4120 = vunpack.c.l.b16 %v3381
    %v4121 = vunpack.c.h.b16 %v3381
    %v4122 = vunpack.c.l.b16 %v3382
    %v4123 = vunpack.c.h.b16 %v3382
    %v4124 = vunpack.c.l.b16 %v3383
    %v4125 = vunpack.c.h.b16 %v3383
    %v4126 = vunpack.c.l.b16 %v3384
    %v4127 = vunpack.c.h.b16 %v3384
    %v4128 = vunpack.c.l.b16 %v3385
    %v4129 = vunpack.c.h.b16 %v3385
    %v4130 = vunpack.c.l.b16 %v3386
    %v4131 = vunpack.c.h.b16 %v3386
    %v4132 = vunpack.c.l.b16 %v3387
    %v4133 = vunpack.c.h.b16 %v3387
    %v4134 = vunpack.c.l.b16 %v3388
    %v4135 = vunpack.c.h.b16 %v3388
    %v4136 = vunpack.c.l.b16 %v3389
    %v4137 = vunpack.c.h.b16 %v3389
    %v4138 = vunpack.c.l.b16 %v3390
    %v4139 = vunpack.c.h.b16 %v3390
    %v4140 = vunpack.c.l.b16 %v3391
    %v4141 = vunpack.c.h.b16 %v3391
    %v4142 = vunpack.c.l.b16 %v3392
    %v4143 = vunpack.c.h.b16 %v3392
    %v4144 = vunpack.c.l.b16 %v3393
    %v4145 = vunpack.c.h.b16 %v3393
    %v4146 = vunpack.c.l.b16 %v3394
    %v4147 = vunpack.c.h.b16 %v3394
    %v4148 = vunpack.c.l.b16 %v3395
    %v4149 = vunpack.c.h.b16 %v3395
    %v4150 = vunpack.c.l.b16 %v3396
    %v4151 = vunpack.c.h.b16 %v3396
    %v4152 = vunpack.c.l.b16 %v3397
    %v4153 = vunpack.c.h.b16 %v3397
    %v4154 = vunpack.c.l.b16 %v3398
    %v4155 = vunpack.c.h.b16 %v3398
    %v4156 = vunpack.c.l.b16 %v3399
    %v4157 = vunpack.c.h.b16 %v3399
    %v4158 = vunpack.c.l.b16 %v3400
    %v4159 = vunpack.c.h.b16 %v3400
    %v4160 = vunpack.c.l.b16 %v3401
    %v4161 = vunpack.c.h.b16 %v3401
    %v4162 = vunpack.c.l.b16 %v3402
    %v4163 = vunpack.c.h.b16 %v3402
    %v4164 = vunpack.c.l.b16 %v3403
    %v4165 = vunpack.c.h.b16 %v3403
    %v4166 = vunpack.c.l.b16 %v3404
    %v4167 = vunpack.c.h.b16 %v3404
    %v4168 = vunpack.c.l.b16 %v3405
    %v4169 = vunpack.c.h.b16 %v3405
    %v4170 = vunpack.c.l.b16 %v3406
    %v4171 = vunpack.c.h.b16 %v3406
    %v4172 = vunpack.c.l.b16 %v3407
    %v4173 = vunpack.c.h.b16 %v3407
    %v4174 = vunpack.c.l.b16 %v3408
    %v4175 = vunpack.c.h.b16 %v3408
    %v4176 = vunpack.c.l.b16 %v3409
    %v4177 = vunpack.c.h.b16 %v3409
    %v4178 = vunpack.c.l.b16 %v3410
    %v4179 = vunpack.c.h.b16 %v3410
    %v4180 = vunpack.c.l.b16 %v3411
    %v4181 = vunpack.c.h.b16 %v3411
    %v4182 = vunpack.c.l.b16 %v3412
    %v4183 = vunpack.c.h.b16 %v3412
    %v4184 = vunpack.c.l.b16 %v3413
    %v4185 = vunpack.c.h.b16 %v3413
    %v4186 = vunpack.c.l.b16 %v3414
    %v4187 = vunpack.c.h.b16 %v3414
    %v4188 = vunpack.c.l.b16 %v3415
    %v4189 = vunpack.c.h.b16 %v3415
    %v4190 = vunpack.c.l.b16 %v3416
    %v4191 = vunpack.c.h.b16 %v3416
    %v4192 = vunpack.c.l.b16 %v3417
    %v4193 = vunpack.c.h.b16 %v3417
    %v4194 = vunpack.c.l.b16 %v3418
    %v4195 = vunpack.c.h.b16 %v3418
    %v4196 = vunpack.c.l.b16 %v3419
    %v4197 = vunpack.c.h.b16 %v3419
    %v4198 = vunpack.c.l.b16 %v3420
    %v4199 = vunpack.c.h.b16 %v3420
    %v4200 = vunpack.c.l.b16 %v3421
    %v4201 = vunpack.c.h.b16 %v3421
    %v4202 = vunpack.c.l.b16 %v3422
    %v4203 = vunpack.c.h.b16 %v3422
    %v4204 = vunpack.c.l.b16 %v3423
    %v4205 = vunpack.c.h.b16 %v3423
    %v4206 = vunpack.c.l.b16 %v3424
    %v4207 = vunpack.c.h.b16 %v3424
    %v4208 = vunpack.c.l.b16 %v3425
    %v4209 = vunpack.c.h.b16 %v3425
    %v4210 = vunpack.c.l.b16 %v3426
    %v4211 = vunpack.c.h.b16 %v3426
    %v4212 = vunpack.c.l.b16 %v3427
    %v4213 = vunpack.c.h.b16 %v3427
    %v4214 = vunpack.c.l.b16 %v3428
    %v4215 = vunpack.c.h.b16 %v3428
    %v4216 = vunpack.c.l.b16 %v3429
    %v4217 = vunpack.c.h.b16 %v3429
    %v4218 = vunpack.c.l.b16 %v3430
    %v4219 = vunpack.c.h.b16 %v3430
    %v4220 = vunpack.c.l.b16 %v3431
    %v4221 = vunpack.c.h.b16 %v3431
    %v4222 = vpack.c.b16 %v3714, %v3710
    %v4223 = vpack.c.b16 %v3715, %v3711
    %v4224 = vpack.c.b16 %v3716, %v3712
    %v4225 = vpack.c.b16 %v3717, %v3713
    %v4226 = vpack.c.b16 %v3722, %v3718
    %v4227 = vpack.c.b16 %v3723, %v3719
    %v4228 = vpack.c.b16 %v3724, %v3720
    %v4229 = vpack.c.b16 %v3725, %v3721
    %v4230 = vpack.c.b16 %v3730, %v3726
    %v4231 = vpack.c.b16 %v3731, %v3727
    %v4232 = vpack.c.b16 %v3732, %v3728
    %v4233 = vpack.c.b16 %v3733, %v3729
    %v4234 = vpack.c.b16 %v3738, %v3734
    %v4235 = vpack.c.b16 %v3739, %v3735
    %v4236 = vpack.c.b16 %v3740, %v3736
    %v4237 = vpack.c.b16 %v3741, %v3737
    %v4238 = vpack.c.b16 %v3746, %v3742
    %v4239 = vpack.c.b16 %v3747, %v3743
    %v4240 = vpack.c.b16 %v3748, %v3744
    %v4241 = vpack.c.b16 %v3749, %v3745
    %v4242 = vpack.c.b16 %v3754, %v3750
    %v4243 = vpack.c.b16 %v3755, %v3751
    %v4244 = vpack.c.b16 %v3756, %v3752
    %v4245 = vpack.c.b16 %v3757, %v3753
    %v4246 = vpack.c.b16 %v3762, %v3758
    %v4247 = vpack.c.b16 %v3763, %v3759
    %v4248 = vpack.c.b16 %v3764, %v3760
    %v4249 = vpack.c.b16 %v3765, %v3761
    %v4250 = vpack.c.b16 %v3770, %v3766
    %v4251 = vpack.c.b16 %v3771, %v3767
    %v4252 = vpack.c.b16 %v3772, %v3768
    %v4253 = vpack.c.b16 %v3773, %v3769
    %v4254 = vpack.c.b16 %v3778, %v3774
    %v4255 = vpack.c.b16 %v3779, %v3775
    %v4256 = vpack.c.b16 %v3780, %v3776
    %v4257 = vpack.c.b16 %v3781, %v3777
    %v4258 = vpack.c.b16 %v3786, %v3782
    %v4259 = vpack.c.b16 %v3787, %v3783
    %v4260 = vpack.c.b16 %v3788, %v3784
    %v4261 = vpack.c.b16 %v3789, %v3785
    %v4262 = vpack.c.b16 %v3794, %v3790
    %v4263 = vpack.c.b16 %v3795, %v3791
    %v4264 = vpack.c.b16 %v3796, %v3792
    %v4265 = vpack.c.b16 %v3797, %v3793
    %v4266 = vpack.c.b16 %v3802, %v3798
    %v4267 = vpack.c.b16 %v3803, %v3799
    %v4268 = vpack.c.b16 %v3804, %v3800
    %v4269 = vpack.c.b16 %v3805, %v3801
    %v4270 = vpack.c.b16 %v3810, %v3806
    %v4271 = vpack.c.b16 %v3811, %v3807
    %v4272 = vpack.c.b16 %v3812, %v3808
    %v4273 = vpack.c.b16 %v3813, %v3809
    %v4274 = vpack.c.b16 %v3818, %v3814
    %v4275 = vpack.c.b16 %v3819, %v3815
    %v4276 = vpack.c.b16 %v3820, %v3816
    %v4277 = vpack.c.b16 %v3821, %v3817
    %v4278 = vpack.c.b16 %v3826, %v3822
    %v4279 = vpack.c.b16 %v3827, %v3823
    %v4280 = vpack.c.b16 %v3828, %v3824
    %v4281 = vpack.c.b16 %v3829, %v3825
    %v4282 = vpack.c.b16 %v3834, %v3830
    %v4283 = vpack.c.b16 %v3835, %v3831
    %v4284 = vpack.c.b16 %v3836, %v3832
    %v4285 = vpack.c.b16 %v3837, %v3833
    %v4286 = vpack.c.b16 %v3842, %v3838
    %v4287 = vpack.c.b16 %v3843, %v3839
    %v4288 = vpack.c.b16 %v3844, %v3840
    %v4289 = vpack.c.b16 %v3845, %v3841
    %v4290 = vpack.c.b16 %v3850, %v3846
    %v4291 = vpack.c.b16 %v3851, %v3847
    %v4292 = vpack.c.b16 %v3852, %v3848
    %v4293 = vpack.c.b16 %v3853, %v3849
    %v4294 = vpack.c.b16 %v3858, %v3854
    %v4295 = vpack.c.b16 %v3859, %v3855
    %v4296 = vpack.c.b16 %v3860, %v3856
    %v4297 = vpack.c.b16 %v3861, %v3857
    %v4298 = vpack.c.b16 %v3866, %v3862
    %v4299 = vpack.c.b16 %v3867, %v3863
    %v4300 = vpack.c.b16 %v3868, %v3864
    %v4301 = vpack.c.b16 %v3869, %v3865
    %v4302 = vpack.c.b16 %v3874, %v3870
    %v4303 = vpack.c.b16 %v3875, %v3871
    %v4304 = vpack.c.b16 %v3876, %v3872
    %v4305 = vpack.c.b16 %v3877, %v3873
    %v4306 = vpack.c.b16 %v3882, %v3878
    %v4307 = vpack.c.b16 %v3883, %v3879
    %v4308 = vpack.c.b16 %v3884, %v3880
    %v4309 = vpack.c.b16 %v3885, %v3881
    %v4310 = vpack.c.b16 %v3890, %v3886
    %v4311 = vpack.c.b16 %v3891, %v3887
    %v4312 = vpack.c.b16 %v3892, %v3888
    %v4313 = vpack.c.b16 %v3893, %v3889
    %v4314 = vpack.c.b16 %v3898, %v3894
    %v4315 = vpack.c.b16 %v3899, %v3895
    %v4316 = vpack.c.b16 %v3900, %v3896
    %v4317 = vpack.c.b16 %v3901, %v3897
    %v4318 = vpack.c.b16 %v3906, %v3902
    %v4319 = vpack.c.b16 %v3907, %v3903
    %v4320 = vpack.c.b16 %v3908, %v3904
    %v4321 = vpack.c.b16 %v3909, %v3905
    %v4322 = vpack.c.b16 %v3914, %v3910
    %v4323 = vpack.c.b16 %v3915, %v3911
    %v4324 = vpack.c.b16 %v3916, %v3912
    %v4325 = vpack.c.b16 %v3917, %v3913
    %v4326 = vpack.c.b16 %v3922, %v3918
    %v4327 = vpack.c.b16 %v3923, %v3919
    %v4328 = vpack.c.b16 %v3924, %v3920
    %v4329 = vpack.c.b16 %v3925, %v3921
    %v4330 = vpack.c.b16 %v3930, %v3926
    %v4331 = vpack.c.b16 %v3931, %v3927
    %v4332 = vpack.c.b16 %v3932, %v3928
    %v4333 = vpack.c.b16 %v3933, %v3929
    %v4334 = vpack.c.b16 %v3938, %v3934
    %v4335 = vpack.c.b16 %v3939, %v3935
    %v4336 = vpack.c.b16 %v3940, %v3936
    %v4337 = vpack.c.b16 %v3941, %v3937
    %v4338 = vpack.c.b16 %v3946, %v3942
    %v4339 = vpack.c.b16 %v3947, %v3943
    %v4340 = vpack.c.b16 %v3948, %v3944
    %v4341 = vpack.c.b16 %v3949, %v3945
    %v4342 = vpack.c.b16 %v3954, %v3950
    %v4343 = vpack.c.b16 %v3955, %v3951
    %v4344 = vpack.c.b16 %v3956, %v3952
    %v4345 = vpack.c.b16 %v3957, %v3953
    %v4346 = vpack.c.b16 %v3962, %v3958
    %v4347 = vpack.c.b16 %v3963, %v3959
    %v4348 = vpack.c.b16 %v3964, %v3960
    %v4349 = vpack.c.b16 %v3965, %v3961
    %v4350 = vpack.c.b16 %v3970, %v3966
    %v4351 = vpack.c.b16 %v3971, %v3967
    %v4352 = vpack.c.b16 %v3972, %v3968
    %v4353 = vpack.c.b16 %v3973, %v3969
    %v4354 = vpack.c.b16 %v3978, %v3974
    %v4355 = vpack.c.b16 %v3979, %v3975
    %v4356 = vpack.c.b16 %v3980, %v3976
    %v4357 = vpack.c.b16 %v3981, %v3977
    %v4358 = vpack.c.b16 %v3986, %v3982
    %v4359 = vpack.c.b16 %v3987, %v3983
    %v4360 = vpack.c.b16 %v3988, %v3984
    %v4361 = vpack.c.b16 %v3989, %v3985
    %v4362 = vpack.c.b16 %v3994, %v3990
    %v4363 = vpack.c.b16 %v3995, %v3991
    %v4364 = vpack.c.b16 %v3996, %v3992
    %v4365 = vpack.c.b16 %v3997, %v3993
    %v4366 = vpack.c.b16 %v4002, %v3998
    %v4367 = vpack.c.b16 %v4003, %v3999
    %v4368 = vpack.c.b16 %v4004, %v4000
    %v4369 = vpack.c.b16 %v4005, %v4001
    %v4370 = vpack.c.b16 %v4010, %v4006
    %v4371 = vpack.c.b16 %v4011, %v4007
    %v4372 = vpack.c.b16 %v4012, %v4008
    %v4373 = vpack.c.b16 %v4013, %v4009
    %v4374 = vpack.c.b16 %v4018, %v4014
    %v4375 = vpack.c.b16 %v4019, %v4015
    %v4376 = vpack.c.b16 %v4020, %v4016
    %v4377 = vpack.c.b16 %v4021, %v4017
    %v4378 = vpack.c.b16 %v4026, %v4022
    %v4379 = vpack.c.b16 %v4027, %v4023
    %v4380 = vpack.c.b16 %v4028, %v4024
    %v4381 = vpack.c.b16 %v4029, %v4025
    %v4382 = vpack.c.b16 %v4034, %v4030
    %v4383 = vpack.c.b16 %v4035, %v4031
    %v4384 = vpack.c.b16 %v4036, %v4032
    %v4385 = vpack.c.b16 %v4037, %v4033
    %v4386 = vpack.c.b16 %v4042, %v4038
    %v4387 = vpack.c.b16 %v4043, %v4039
    %v4388 = vpack.c.b16 %v4044, %v4040
    %v4389 = vpack.c.b16 %v4045, %v4041
    %v4390 = vpack.c.b16 %v4050, %v4046
    %v4391 = vpack.c.b16 %v4051, %v4047
    %v4392 = vpack.c.b16 %v4052, %v4048
    %v4393 = vpack.c.b16 %v4053, %v4049
    %v4394 = vpack.c.b16 %v4058, %v4054
    %v4395 = vpack.c.b16 %v4059, %v4055
    %v4396 = vpack.c.b16 %v4060, %v4056
    %v4397 = vpack.c.b16 %v4061, %v4057
    %v4398 = vpack.c.b16 %v4066, %v4062
    %v4399 = vpack.c.b16 %v4067, %v4063
    %v4400 = vpack.c.b16 %v4068, %v4064
    %v4401 = vpack.c.b16 %v4069, %v4065
    %v4402 = vpack.c.b16 %v4074, %v4070
    %v4403 = vpack.c.b16 %v4075, %v4071
    %v4404 = vpack.c.b16 %v4076, %v4072
    %v4405 = vpack.c.b16 %v4077, %v4073
    %v4406 = vpack.c.b16 %v4082, %v4078
    %v4407 = vpack.c.b16 %v4083, %v4079
    %v4408 = vpack.c.b16 %v4084, %v4080
    %v4409 = vpack.c.b16 %v4085, %v4081
    %v4410 = vpack.c.b16 %v4090, %v4086
    %v4411 = vpack.c.b16 %v4091, %v4087
    %v4412 = vpack.c.b16 %v4092, %v4088
    %v4413 = vpack.c.b16 %v4093, %v4089
    %v4414 = vpack.c.b16 %v4098, %v4094
    %v4415 = vpack.c.b16 %v4099, %v4095
    %v4416 = vpack.c.b16 %v4100, %v4096
    %v4417 = vpack.c.b16 %v4101, %v4097
    %v4418 = vpack.c.b16 %v4106, %v4102
    %v4419 = vpack.c.b16 %v4107, %v4103
    %v4420 = vpack.c.b16 %v4108, %v4104
    %v4421 = vpack.c.b16 %v4109, %v4105
    %v4422 = vpack.c.b16 %v4114, %v4110
    %v4423 = vpack.c.b16 %v4115, %v4111
    %v4424 = vpack.c.b16 %v4116, %v4112
    %v4425 = vpack.c.b16 %v4117, %v4113
    %v4426 = vpack.c.b16 %v4122, %v4118
    %v4427 = vpack.c.b16 %v4123, %v4119
    %v4428 = vpack.c.b16 %v4124, %v4120
    %v4429 = vpack.c.b16 %v4125, %v4121
    %v4430 = vpack.c.b16 %v4130, %v4126
    %v4431 = vpack.c.b16 %v4131, %v4127
    %v4432 = vpack.c.b16 %v4132, %v4128
    %v4433 = vpack.c.b16 %v4133, %v4129
    %v4434 = vpack.c.b16 %v4138, %v4134
    %v4435 = vpack.c.b16 %v4139, %v4135
    %v4436 = vpack.c.b16 %v4140, %v4136
    %v4437 = vpack.c.b16 %v4141, %v4137
    %v4438 = vpack.c.b16 %v4146, %v4142
    %v4439 = vpack.c.b16 %v4147, %v4143
    %v4440 = vpack.c.b16 %v4148, %v4144
    %v4441 = vpack.c.b16 %v4149, %v4145
    %v4442 = vpack.c.b16 %v4154, %v4150
    %v4443 = vpack.c.b16 %v4155, %v4151
    %v4444 = vpack.c.b16 %v4156, %v4152
    %v4445 = vpack.c.b16 %v4157, %v4153
    %v4446 = vpack.c.b16 %v4162, %v4158
    %v4447 = vpack.c.b16 %v4163, %v4159
    %v4448 = vpack.c.b16 %v4164, %v4160
    %v4449 = vpack.c.b16 %v4165, %v4161
    %v4450 = vpack.c.b16 %v4170, %v4166
    %v4451 = vpack.c.b16 %v4171, %v4167
    %v4452 = vpack.c.b16 %v4172, %v4168
    %v4453 = vpack.c.b16 %v4173, %v4169
    %v4454 = vpack.c.b16 %v4178, %v4174
    %v4455 = vpack.c.b16 %v4179, %v4175
    %v4456 = vpack.c.b16 %v4180, %v4176
    %v4457 = vpack.c.b16 %v4181, %v4177
    %v4458 = vpack.c.b16 %v4186, %v4182
    %v4459 = vpack.c.b16 %v4187, %v4183
    %v4460 = vpack.c.b16 %v4188, %v4184
    %v4461 = vpack.c.b16 %v4189, %v4185
    %v4462 = vpack.c.b16 %v4194, %v4190
    %v4463 = vpack.c.b16 %v4195, %v4191
    %v4464 = vpack.c.b16 %v4196, %v4192
    %v4465 = vpack.c.b16 %v4197, %v4193
    %v4466 = vpack.c.b16 %v4202, %v4198
    %v4467 = vpack.c.b16 %v4203, %v4199
    %v4468 = vpack.c.b16 %v4204, %v4200
    %v4469 = vpack.c.b16 %v4205, %v4201
    %v4470 = vpack.c.b16 %v4210, %v4206
    %v4471 = vpack.c.b16 %v4211, %v4207
    %v4472 = vpack.c.b16 %v4212, %v4208
    %v4473 = vpack.c.b16 %v4213, %v4209
    %v4474 = vpack.c.b16 %v4218, %v4214
    %v4475 = vpack.c.b16 %v4219, %v4215
    %v4476 = vpack.c.b16 %v4220, %v4216
    %v4477 = vpack.c.b16 %v4221, %v4217
    %4734 = vmatprep.subr.bf16.mxu0 %v4251
    %4735 = vmatpush1.bf16.msra.mxu0 %v4250
    %4736 = vmatprep.subr.bf16.mxu0 %v4247
    %4737 = vmatpush1.bf16.msra.mxu0 %v4246
    %4738 = vmatprep.subr.bf16.mxu0 %v4243
    %4739 = vmatpush1.bf16.msra.mxu0 %v4242
    %4740 = vmatprep.subr.bf16.mxu0 %v4239
    %4741 = vmatpush1.bf16.msra.mxu0 %v4238
    %4742 = vmatprep.subr.bf16.mxu0 %v4235
    %4743 = vmatpush1.bf16.msra.mxu0 %v4234
    %4744 = vmatprep.subr.bf16.mxu0 %v4231
    %4745 = vmatpush1.bf16.msra.mxu0 %v4230
    %4746 = vmatprep.subr.bf16.mxu0 %v4227
    %4747 = vmatpush1.bf16.msra.mxu0 %v4226
    %4748 = vmatprep.subr.bf16.mxu0 %v4223
    %4749 = vmatpush1.bf16.msra.mxu0 %v4222
    %4750 = vmatprep.subr.bf16.mxu0 %v4283
    %4751 = vmatpush2.bf16.msra.mxu0 %v4282
    %4752 = vmatprep.subr.bf16.mxu0 %v4279
    %4753 = vmatpush2.bf16.msra.mxu0 %v4278
    %4754 = vmatprep.subr.bf16.mxu0 %v4275
    %4755 = vmatpush2.bf16.msra.mxu0 %v4274
    %4756 = vmatprep.subr.bf16.mxu0 %v4271
    %4757 = vmatpush2.bf16.msra.mxu0 %v4270
    %4758 = vmatprep.subr.bf16.mxu0 %v4267
    %4759 = vmatpush2.bf16.msra.mxu0 %v4266
    %4760 = vmatprep.subr.bf16.mxu0 %v4263
    %4761 = vmatpush2.bf16.msra.mxu0 %v4262
    %4762 = vmatprep.subr.bf16.mxu0 %v4259
    %4763 = vmatpush2.bf16.msra.mxu0 %v4258
    %4764 = vmatprep.subr.bf16.mxu0 %v4255
    %4765 = vmatpush2.bf16.msra.mxu0 %v4254
    %4766 = vmatprep.mubr.bf16.mxu0 %v3161
    %4767 = vmatmul.mubr.bf16.gmra.mxu0 %v3160
    %v4768 = vpop.f32.mrf.mxu0
    %v4769 = vadd.f32 %v3437, %v4768
    %v4770 = vpop.f32.mrf.mxu0
    %v4771 = vadd.f32 %v3441, %v4770
    %v4772 = vpop.f32.mrf.mxu0
    %v4773 = vadd.f32 %v3437, %v4772
    %v4774 = vpop.f32.mrf.mxu0
    %v4775 = vadd.f32 %v3441, %v4774
    %4776 = vmatprep.mubr.bf16.mxu0 %v3169
    %4777 = vmatmul.mubr.bf16.gmra.mxu0 %v3168
    %v4778 = vpop.f32.mrf.mxu0
    %v4779 = vadd.f32 %v3437, %v4778
    %v4780 = vpop.f32.mrf.mxu0
    %v4781 = vadd.f32 %v3441, %v4780
    %v4782 = vpop.f32.mrf.mxu0
    %v4783 = vpop.f32.mrf.mxu0
    %4784 = vdwg.mxu0
    %4785 = vmatprep.subr.bf16.mxu0 %v4315
    %4786 = vmatpush1.bf16.msra.mxu0 %v4314
    %4787 = vmatprep.subr.bf16.mxu0 %v4311
    %4788 = vmatpush1.bf16.msra.mxu0 %v4310
    %4789 = vmatprep.subr.bf16.mxu0 %v4307
    %4790 = vmatpush1.bf16.msra.mxu0 %v4306
    %4791 = vmatprep.subr.bf16.mxu0 %v4303
    %4792 = vmatpush1.bf16.msra.mxu0 %v4302
    %4793 = vmatprep.subr.bf16.mxu0 %v4299
    %4794 = vmatpush1.bf16.msra.mxu0 %v4298
    %4795 = vmatprep.subr.bf16.mxu0 %v4295
    %4796 = vmatpush1.bf16.msra.mxu0 %v4294
    %4797 = vmatprep.subr.bf16.mxu0 %v4291
    %4798 = vmatpush1.bf16.msra.mxu0 %v4290
    %4799 = vmatprep.subr.bf16.mxu0 %v4287
    %4800 = vmatpush1.bf16.msra.mxu0 %v4286
    %4801 = vmatprep.subr.bf16.mxu0 %v4347
    %4802 = vmatpush2.bf16.msra.mxu0 %v4346
    %4803 = vmatprep.subr.bf16.mxu0 %v4343
    %4804 = vmatpush2.bf16.msra.mxu0 %v4342
    %4805 = vmatprep.subr.bf16.mxu0 %v4339
    %4806 = vmatpush2.bf16.msra.mxu0 %v4338
    %4807 = vmatprep.subr.bf16.mxu0 %v4335
    %4808 = vmatpush2.bf16.msra.mxu0 %v4334
    %4809 = vmatprep.subr.bf16.mxu0 %v4331
    %4810 = vmatpush2.bf16.msra.mxu0 %v4330
    %4811 = vmatprep.subr.bf16.mxu0 %v4327
    %4812 = vmatpush2.bf16.msra.mxu0 %v4326
    %4813 = vmatprep.subr.bf16.mxu0 %v4323
    %4814 = vmatpush2.bf16.msra.mxu0 %v4322
    %4815 = vmatprep.subr.bf16.mxu0 %v4319
    %4816 = vmatpush2.bf16.msra.mxu0 %v4318
    %4817 = vmatprep.mubr.bf16.mxu0 %v3163
    %4818 = vmatmul.mubr.bf16.gmra.mxu0 %v3162
    %v4819 = vpop.f32.mrf.mxu0
    %v4820 = vadd.f32 %v4769, %v4819
    %v4821 = vpop.f32.mrf.mxu0
    %v4822 = vadd.f32 %v4771, %v4821
    %v4823 = vpop.f32.mrf.mxu0
    %v4824 = vadd.f32 %v4773, %v4823
    %v4825 = vpop.f32.mrf.mxu0
    %v4826 = vadd.f32 %v4775, %v4825
    %4827 = vmatprep.mubr.bf16.mxu0 %v3171
    %4828 = vmatmul.mubr.bf16.gmra.mxu0 %v3170
    %v4829 = vpop.f32.mrf.mxu0
    %v4830 = vadd.f32 %v4779, %v4829
    %v4831 = vpop.f32.mrf.mxu0
    %v4832 = vadd.f32 %v4781, %v4831
    %v4833 = vpop.f32.mrf.mxu0
    %v4834 = vpop.f32.mrf.mxu0
    %4835 = vdwg.mxu0
    %4836 = vmatprep.subr.bf16.mxu0 %v4379
    %4837 = vmatpush1.bf16.msra.mxu0 %v4378
    %4838 = vmatprep.subr.bf16.mxu0 %v4375
    %4839 = vmatpush1.bf16.msra.mxu0 %v4374
    %4840 = vmatprep.subr.bf16.mxu0 %v4371
    %4841 = vmatpush1.bf16.msra.mxu0 %v4370
    %4842 = vmatprep.subr.bf16.mxu0 %v4367
    %4843 = vmatpush1.bf16.msra.mxu0 %v4366
    %4844 = vmatprep.subr.bf16.mxu0 %v4363
    %4845 = vmatpush1.bf16.msra.mxu0 %v4362
    %4846 = vmatprep.subr.bf16.mxu0 %v4359
    %4847 = vmatpush1.bf16.msra.mxu0 %v4358
    %4848 = vmatprep.subr.bf16.mxu0 %v4355
    %4849 = vmatpush1.bf16.msra.mxu0 %v4354
    %4850 = vmatprep.subr.bf16.mxu0 %v4351
    %4851 = vmatpush1.bf16.msra.mxu0 %v4350
    %4852 = vmatprep.subr.bf16.mxu0 %v4411
    %4853 = vmatpush2.bf16.msra.mxu0 %v4410
    %4854 = vmatprep.subr.bf16.mxu0 %v4407
    %4855 = vmatpush2.bf16.msra.mxu0 %v4406
    %4856 = vmatprep.subr.bf16.mxu0 %v4403
    %4857 = vmatpush2.bf16.msra.mxu0 %v4402
    %4858 = vmatprep.subr.bf16.mxu0 %v4399
    %4859 = vmatpush2.bf16.msra.mxu0 %v4398
    %4860 = vmatprep.subr.bf16.mxu0 %v4395
    %4861 = vmatpush2.bf16.msra.mxu0 %v4394
    %4862 = vmatprep.subr.bf16.mxu0 %v4391
    %4863 = vmatpush2.bf16.msra.mxu0 %v4390
    %4864 = vmatprep.subr.bf16.mxu0 %v4387
    %4865 = vmatpush2.bf16.msra.mxu0 %v4386
    %4866 = vmatprep.subr.bf16.mxu0 %v4383
    %4867 = vmatpush2.bf16.msra.mxu0 %v4382
    %4868 = vmatprep.mubr.bf16.mxu0 %v3165
    %4869 = vmatmul.mubr.bf16.gmra.mxu0 %v3164
    %v4870 = vpop.f32.mrf.mxu0
    %v4871 = vadd.f32 %v4820, %v4870
    %v4872 = vpop.f32.mrf.mxu0
    %v4873 = vadd.f32 %v4822, %v4872
    %v4874 = vpop.f32.mrf.mxu0
    %v4875 = vadd.f32 %v4824, %v4874
    %v4876 = vpop.f32.mrf.mxu0
    %v4877 = vadd.f32 %v4826, %v4876
    %4878 = vmatprep.mubr.bf16.mxu0 %v3173
    %4879 = vmatmul.mubr.bf16.gmra.mxu0 %v3172
    %v4880 = vpop.f32.mrf.mxu0
    %v4881 = vadd.f32 %v4830, %v4880
    %v4882 = vpop.f32.mrf.mxu0
    %v4883 = vadd.f32 %v4832, %v4882
    %v4884 = vpop.f32.mrf.mxu0
    %v4885 = vpop.f32.mrf.mxu0
    %4886 = vdwg.mxu0
    %4887 = vmatprep.subr.bf16.mxu0 %v4443
    %4888 = vmatpush1.bf16.msra.mxu0 %v4442
    %4889 = vmatprep.subr.bf16.mxu0 %v4439
    %4890 = vmatpush1.bf16.msra.mxu0 %v4438
    %4891 = vmatprep.subr.bf16.mxu0 %v4435
    %4892 = vmatpush1.bf16.msra.mxu0 %v4434
    %4893 = vmatprep.subr.bf16.mxu0 %v4431
    %4894 = vmatpush1.bf16.msra.mxu0 %v4430
    %4895 = vmatprep.subr.bf16.mxu0 %v4427
    %4896 = vmatpush1.bf16.msra.mxu0 %v4426
    %4897 = vmatprep.subr.bf16.mxu0 %v4423
    %4898 = vmatpush1.bf16.msra.mxu0 %v4422
    %4899 = vmatprep.subr.bf16.mxu0 %v4419
    %4900 = vmatpush1.bf16.msra.mxu0 %v4418
    %4901 = vmatprep.subr.bf16.mxu0 %v4415
    %4902 = vmatpush1.bf16.msra.mxu0 %v4414
    %4903 = vmatprep.subr.bf16.mxu0 %v4475
    %4904 = vmatpush2.bf16.msra.mxu0 %v4474
    %4905 = vmatprep.subr.bf16.mxu0 %v4471
    %4906 = vmatpush2.bf16.msra.mxu0 %v4470
    %4907 = vmatprep.subr.bf16.mxu0 %v4467
    %4908 = vmatpush2.bf16.msra.mxu0 %v4466
    %4909 = vmatprep.subr.bf16.mxu0 %v4463
    %4910 = vmatpush2.bf16.msra.mxu0 %v4462
    %4911 = vmatprep.subr.bf16.mxu0 %v4459
    %4912 = vmatpush2.bf16.msra.mxu0 %v4458
    %4913 = vmatprep.subr.bf16.mxu0 %v4455
    %4914 = vmatpush2.bf16.msra.mxu0 %v4454
    %4915 = vmatprep.subr.bf16.mxu0 %v4451
    %4916 = vmatpush2.bf16.msra.mxu0 %v4450
    %4917 = vmatprep.subr.bf16.mxu0 %v4447
    %4918 = vmatpush2.bf16.msra.mxu0 %v4446
    %4919 = vmatprep.mubr.bf16.mxu0 %v3167
    %4920 = vmatmul.mubr.bf16.gmra.mxu0 %v3166
    %v4921 = vpop.f32.mrf.mxu0
    %v4922 = vadd.f32 %v4871, %v4921
    %v4923 = vpop.f32.mrf.mxu0
    %v4924 = vadd.f32 %v4873, %v4923
    %v4925 = vpop.f32.mrf.mxu0
    %v4926 = vadd.f32 %v4875, %v4925
    %v4927 = vpop.f32.mrf.mxu0
    %v4928 = vadd.f32 %v4877, %v4927
    %4929 = vmatprep.mubr.bf16.mxu0 %v3175
    %4930 = vmatmul.mubr.bf16.gmra.mxu0 %v3174
    %v4931 = vpop.f32.mrf.mxu0
    %v4932 = vadd.f32 %v4881, %v4931
    %v4933 = vpop.f32.mrf.mxu0
    %v4934 = vadd.f32 %v4883, %v4933
    %v4935 = vpop.f32.mrf.mxu0
    %v4936 = vpop.f32.mrf.mxu0
    %4937 = vdwg.mxu0
    %4938 = vmatprep.subr.bf16.mxu0 %v4253
    %4939 = vmatpush1.bf16.msra.mxu0 %v4252
    %4940 = vmatprep.subr.bf16.mxu0 %v4249
    %4941 = vmatpush1.bf16.msra.mxu0 %v4248
    %4942 = vmatprep.subr.bf16.mxu0 %v4245
    %4943 = vmatpush1.bf16.msra.mxu0 %v4244
    %4944 = vmatprep.subr.bf16.mxu0 %v4241
    %4945 = vmatpush1.bf16.msra.mxu0 %v4240
    %4946 = vmatprep.subr.bf16.mxu0 %v4237
    %4947 = vmatpush1.bf16.msra.mxu0 %v4236
    %4948 = vmatprep.subr.bf16.mxu0 %v4233
    %4949 = vmatpush1.bf16.msra.mxu0 %v4232
    %4950 = vmatprep.subr.bf16.mxu0 %v4229
    %4951 = vmatpush1.bf16.msra.mxu0 %v4228
    %4952 = vmatprep.subr.bf16.mxu0 %v4225
    %4953 = vmatpush1.bf16.msra.mxu0 %v4224
    %4954 = vmatprep.subr.bf16.mxu0 %v4285
    %4955 = vmatpush2.bf16.msra.mxu0 %v4284
    %4956 = vmatprep.subr.bf16.mxu0 %v4281
    %4957 = vmatpush2.bf16.msra.mxu0 %v4280
    %4958 = vmatprep.subr.bf16.mxu0 %v4277
    %4959 = vmatpush2.bf16.msra.mxu0 %v4276
    %4960 = vmatprep.subr.bf16.mxu0 %v4273
    %4961 = vmatpush2.bf16.msra.mxu0 %v4272
    %4962 = vmatprep.subr.bf16.mxu0 %v4269
    %4963 = vmatpush2.bf16.msra.mxu0 %v4268
    %4964 = vmatprep.subr.bf16.mxu0 %v4265
    %4965 = vmatpush2.bf16.msra.mxu0 %v4264
    %4966 = vmatprep.subr.bf16.mxu0 %v4261
    %4967 = vmatpush2.bf16.msra.mxu0 %v4260
    %4968 = vmatprep.subr.bf16.mxu0 %v4257
    %4969 = vmatpush2.bf16.msra.mxu0 %v4256
    %4970 = vmatprep.mubr.bf16.mxu0 %v3161
    %4971 = vmatmul.mubr.bf16.gmra.mxu0 %v3160
    %v4972 = vpop.f32.mrf.mxu0
    %v4973 = vadd.f32 %v3445, %v4972
    %v4974 = vpop.f32.mrf.mxu0
    %v4975 = vadd.f32 %v3449, %v4974
    %v4976 = vpop.f32.mrf.mxu0
    %v4977 = vadd.f32 %v3445, %v4976
    %v4978 = vpop.f32.mrf.mxu0
    %v4979 = vadd.f32 %v3449, %v4978
    %4980 = vmatprep.mubr.bf16.mxu0 %v3169
    %4981 = vmatmul.mubr.bf16.gmra.mxu0 %v3168
    %v4982 = vpop.f32.mrf.mxu0
    %v4983 = vadd.f32 %v3445, %v4982
    %v4984 = vpop.f32.mrf.mxu0
    %v4985 = vadd.f32 %v3449, %v4984
    %v4986 = vpop.f32.mrf.mxu0
    %v4987 = vpop.f32.mrf.mxu0
    %4988 = vdwg.mxu0
    %4989 = vmatprep.subr.bf16.mxu0 %v4317
    %4990 = vmatpush1.bf16.msra.mxu0 %v4316
    %4991 = vmatprep.subr.bf16.mxu0 %v4313
    %4992 = vmatpush1.bf16.msra.mxu0 %v4312
    %4993 = vmatprep.subr.bf16.mxu0 %v4309
    %4994 = vmatpush1.bf16.msra.mxu0 %v4308
    %4995 = vmatprep.subr.bf16.mxu0 %v4305
    %4996 = vmatpush1.bf16.msra.mxu0 %v4304
    %4997 = vmatprep.subr.bf16.mxu0 %v4301
    %4998 = vmatpush1.bf16.msra.mxu0 %v4300
    %4999 = vmatprep.subr.bf16.mxu0 %v4297
    %5000 = vmatpush1.bf16.msra.mxu0 %v4296
    %5001 = vmatprep.subr.bf16.mxu0 %v4293
    %5002 = vmatpush1.bf16.msra.mxu0 %v4292
    %5003 = vmatprep.subr.bf16.mxu0 %v4289
    %5004 = vmatpush1.bf16.msra.mxu0 %v4288
    %5005 = vmatprep.subr.bf16.mxu0 %v4349
    %5006 = vmatpush2.bf16.msra.mxu0 %v4348
    %5007 = vmatprep.subr.bf16.mxu0 %v4345
    %5008 = vmatpush2.bf16.msra.mxu0 %v4344
    %5009 = vmatprep.subr.bf16.mxu0 %v4341
    %5010 = vmatpush2.bf16.msra.mxu0 %v4340
    %5011 = vmatprep.subr.bf16.mxu0 %v4337
    %5012 = vmatpush2.bf16.msra.mxu0 %v4336
    %5013 = vmatprep.subr.bf16.mxu0 %v4333
    %5014 = vmatpush2.bf16.msra.mxu0 %v4332
    %5015 = vmatprep.subr.bf16.mxu0 %v4329
    %5016 = vmatpush2.bf16.msra.mxu0 %v4328
    %5017 = vmatprep.subr.bf16.mxu0 %v4325
    %5018 = vmatpush2.bf16.msra.mxu0 %v4324
    %5019 = vmatprep.subr.bf16.mxu0 %v4321
    %5020 = vmatpush2.bf16.msra.mxu0 %v4320
    %5021 = vmatprep.mubr.bf16.mxu0 %v3163
    %5022 = vmatmul.mubr.bf16.gmra.mxu0 %v3162
    %v5023 = vpop.f32.mrf.mxu0
    %v5024 = vadd.f32 %v4973, %v5023
    %v5025 = vpop.f32.mrf.mxu0
    %v5026 = vadd.f32 %v4975, %v5025
    %v5027 = vpop.f32.mrf.mxu0
    %v5028 = vadd.f32 %v4977, %v5027
    %v5029 = vpop.f32.mrf.mxu0
    %v5030 = vadd.f32 %v4979, %v5029
    %5031 = vmatprep.mubr.bf16.mxu0 %v3171
    %5032 = vmatmul.mubr.bf16.gmra.mxu0 %v3170
    %v5033 = vpop.f32.mrf.mxu0
    %v5034 = vadd.f32 %v4983, %v5033
    %v5035 = vpop.f32.mrf.mxu0
    %v5036 = vadd.f32 %v4985, %v5035
    %v5037 = vpop.f32.mrf.mxu0
    %v5038 = vpop.f32.mrf.mxu0
    %5039 = vdwg.mxu0
    %5040 = vmatprep.subr.bf16.mxu0 %v4381
    %5041 = vmatpush1.bf16.msra.mxu0 %v4380
    %5042 = vmatprep.subr.bf16.mxu0 %v4377
    %5043 = vmatpush1.bf16.msra.mxu0 %v4376
    %5044 = vmatprep.subr.bf16.mxu0 %v4373
    %5045 = vmatpush1.bf16.msra.mxu0 %v4372
    %5046 = vmatprep.subr.bf16.mxu0 %v4369
    %5047 = vmatpush1.bf16.msra.mxu0 %v4368
    %5048 = vmatprep.subr.bf16.mxu0 %v4365
    %5049 = vmatpush1.bf16.msra.mxu0 %v4364
    %5050 = vmatprep.subr.bf16.mxu0 %v4361
    %5051 = vmatpush1.bf16.msra.mxu0 %v4360
    %5052 = vmatprep.subr.bf16.mxu0 %v4357
    %5053 = vmatpush1.bf16.msra.mxu0 %v4356
    %5054 = vmatprep.subr.bf16.mxu0 %v4353
    %5055 = vmatpush1.bf16.msra.mxu0 %v4352
    %5056 = vmatprep.subr.bf16.mxu0 %v4413
    %5057 = vmatpush2.bf16.msra.mxu0 %v4412
    %5058 = vmatprep.subr.bf16.mxu0 %v4409
    %5059 = vmatpush2.bf16.msra.mxu0 %v4408
    %5060 = vmatprep.subr.bf16.mxu0 %v4405
    %5061 = vmatpush2.bf16.msra.mxu0 %v4404
    %5062 = vmatprep.subr.bf16.mxu0 %v4401
    %5063 = vmatpush2.bf16.msra.mxu0 %v4400
    %5064 = vmatprep.subr.bf16.mxu0 %v4397
    %5065 = vmatpush2.bf16.msra.mxu0 %v4396
    %5066 = vmatprep.subr.bf16.mxu0 %v4393
    %5067 = vmatpush2.bf16.msra.mxu0 %v4392
    %5068 = vmatprep.subr.bf16.mxu0 %v4389
    %5069 = vmatpush2.bf16.msra.mxu0 %v4388
    %5070 = vmatprep.subr.bf16.mxu0 %v4385
    %5071 = vmatpush2.bf16.msra.mxu0 %v4384
    %5072 = vmatprep.mubr.bf16.mxu0 %v3165
    %5073 = vmatmul.mubr.bf16.gmra.mxu0 %v3164
    %v5074 = vpop.f32.mrf.mxu0
    %v5075 = vadd.f32 %v5024, %v5074
    %v5076 = vpop.f32.mrf.mxu0
    %v5077 = vadd.f32 %v5026, %v5076
    %v5078 = vpop.f32.mrf.mxu0
    %v5079 = vadd.f32 %v5028, %v5078
    %v5080 = vpop.f32.mrf.mxu0
    %v5081 = vadd.f32 %v5030, %v5080
    %5082 = vmatprep.mubr.bf16.mxu0 %v3173
    %5083 = vmatmul.mubr.bf16.gmra.mxu0 %v3172
    %v5084 = vpop.f32.mrf.mxu0
    %v5085 = vadd.f32 %v5034, %v5084
    %v5086 = vpop.f32.mrf.mxu0
    %v5087 = vadd.f32 %v5036, %v5086
    %v5088 = vpop.f32.mrf.mxu0
    %v5089 = vpop.f32.mrf.mxu0
    %5090 = vdwg.mxu0
    %5091 = vmatprep.subr.bf16.mxu0 %v4445
    %5092 = vmatpush1.bf16.msra.mxu0 %v4444
    %5093 = vmatprep.subr.bf16.mxu0 %v4441
    %5094 = vmatpush1.bf16.msra.mxu0 %v4440
    %5095 = vmatprep.subr.bf16.mxu0 %v4437
    %5096 = vmatpush1.bf16.msra.mxu0 %v4436
    %5097 = vmatprep.subr.bf16.mxu0 %v4433
    %5098 = vmatpush1.bf16.msra.mxu0 %v4432
    %5099 = vmatprep.subr.bf16.mxu0 %v4429
    %5100 = vmatpush1.bf16.msra.mxu0 %v4428
    %5101 = vmatprep.subr.bf16.mxu0 %v4425
    %5102 = vmatpush1.bf16.msra.mxu0 %v4424
    %5103 = vmatprep.subr.bf16.mxu0 %v4421
    %5104 = vmatpush1.bf16.msra.mxu0 %v4420
    %5105 = vmatprep.subr.bf16.mxu0 %v4417
    %5106 = vmatpush1.bf16.msra.mxu0 %v4416
    %5107 = vmatprep.subr.bf16.mxu0 %v4477
    %5108 = vmatpush2.bf16.msra.mxu0 %v4476
    %5109 = vmatprep.subr.bf16.mxu0 %v4473
    %5110 = vmatpush2.bf16.msra.mxu0 %v4472
    %5111 = vmatprep.subr.bf16.mxu0 %v4469
    %5112 = vmatpush2.bf16.msra.mxu0 %v4468
    %5113 = vmatprep.subr.bf16.mxu0 %v4465
    %5114 = vmatpush2.bf16.msra.mxu0 %v4464
    %5115 = vmatprep.subr.bf16.mxu0 %v4461
    %5116 = vmatpush2.bf16.msra.mxu0 %v4460
    %5117 = vmatprep.subr.bf16.mxu0 %v4457
    %5118 = vmatpush2.bf16.msra.mxu0 %v4456
    %5119 = vmatprep.subr.bf16.mxu0 %v4453
    %5120 = vmatpush2.bf16.msra.mxu0 %v4452
    %5121 = vmatprep.subr.bf16.mxu0 %v4449
    %5122 = vmatpush2.bf16.msra.mxu0 %v4448
    %5123 = vmatprep.mubr.bf16.mxu0 %v3167
    %5124 = vmatmul.mubr.bf16.gmra.mxu0 %v3166
    %v5125 = vpop.f32.mrf.mxu0
    %v5126 = vadd.f32 %v5075, %v5125
    %v5127 = vpop.f32.mrf.mxu0
    %v5128 = vadd.f32 %v5077, %v5127
    %v5129 = vpop.f32.mrf.mxu0
    %v5130 = vadd.f32 %v5079, %v5129
    %v5131 = vpop.f32.mrf.mxu0
    %v5132 = vadd.f32 %v5081, %v5131
    %5133 = vmatprep.mubr.bf16.mxu0 %v3175
    %5134 = vmatmul.mubr.bf16.gmra.mxu0 %v3174
    %v5135 = vpop.f32.mrf.mxu0
    %v5136 = vadd.f32 %v5085, %v5135
    %v5137 = vpop.f32.mrf.mxu0
    %v5138 = vadd.f32 %v5087, %v5137
    %v5139 = vpop.f32.mrf.mxu0
    %v5140 = vpop.f32.mrf.mxu0
    %5141 = vdwg.mxu0
    %v5142 = vmax.f32 %v4922, 0.0
    %v5143 = vmax.f32 %v4924, 0.0
    %v5144 = vmax.f32 %v5126, 0.0
    %v5145 = vmax.f32 %v5128, 0.0
    %v5146 = vmax.f32 %v4926, 0.0
    %v5147 = vmax.f32 %v4928, 0.0
    %v5148 = vmax.f32 %v5130, 0.0
    %v5149 = vmax.f32 %v5132, 0.0
    %v5150 = vmax.f32 %v4932, 0.0
    %v5151 = vmax.f32 %v4934, 0.0
    %v5152 = vmax.f32 %v5136, 0.0
    %v5153 = vmax.f32 %v5138, 0.0
    %v5154 = vpack.c.bf16 %v5146, %v5142
    %v5155 = vpack.c.bf16 %v5147, %v5143
    %v5156 = vpack.c.bf16 %v5148, %v5144
    %v5157 = vpack.c.bf16 %v5149, %v5145
    %v5158 = vpack.c.bf16 %v5150, %v5150
    %v5159 = vpack.c.bf16 %v5151, %v5151
    %v5160 = vpack.c.bf16 %v5152, %v5152
    %v5161 = vpack.c.bf16 %v5153, %v5153
    %v5162 = vld [vmem:[#allocation11] sm:$0xff]
    %v5163 = vld [vmem:[#allocation11 + $0x8] sm:$0xff]
    %v5164 = vld [vmem:[#allocation11 + $0x10] sm:$0xff]
    %v5165 = vld [vmem:[#allocation11 + $0x18] sm:$0xff]
    %v5166 = vld [vmem:[#allocation11 + $0x20] sm:$0xff]
    %v5167 = vld [vmem:[#allocation11 + $0x28] sm:$0xff]
    %v5168 = vld [vmem:[#allocation11 + $0x30] sm:$0xff]
    %v5169 = vld [vmem:[#allocation11 + $0x38] sm:$0xff]
    %v5170 = vld [vmem:[#allocation11 + $0x40] sm:$0xff]
    %v5171 = vld [vmem:[#allocation11 + $0x48] sm:$0xff]
    %v5172 = vld [vmem:[#allocation11 + $0x50] sm:$0xff]
    %v5173 = vld [vmem:[#allocation11 + $0x58] sm:$0xff]
    %v5174 = vld [vmem:[#allocation11 + $0x60] sm:$0xff]
    %v5175 = vld [vmem:[#allocation11 + $0x68] sm:$0xff]
    %v5176 = vld [vmem:[#allocation11 + $0x70] sm:$0xff]
    %v5177 = vld [vmem:[#allocation11 + $0x78] sm:$0xff]
    %v5178 = vld [vmem:[#allocation11 + $0x80] sm:$0xff]
    %v5179 = vld [vmem:[#allocation11 + $0x88] sm:$0xff]
    %v5180 = vld [vmem:[#allocation11 + $0x90] sm:$0xff]
    %v5181 = vld [vmem:[#allocation11 + $0x98] sm:$0xff]
    %v5182 = vld [vmem:[#allocation11 + $0xa0] sm:$0xff]
    %v5183 = vld [vmem:[#allocation11 + $0xa8] sm:$0xff]
    %v5184 = vld [vmem:[#allocation11 + $0xb0] sm:$0xff]
    %v5185 = vld [vmem:[#allocation11 + $0xb8] sm:$0xff]
    %v5186 = vld [vmem:[#allocation11 + $0xc0] sm:$0xff]
    %v5187 = vld [vmem:[#allocation11 + $0xc8] sm:$0xff]
    %v5188 = vld [vmem:[#allocation11 + $0xd0] sm:$0xff]
    %v5189 = vld [vmem:[#allocation11 + $0xd8] sm:$0xff]
    %v5190 = vld [vmem:[#allocation11 + $0xe0] sm:$0xff]
    %v5191 = vld [vmem:[#allocation11 + $0xe8] sm:$0xff]
    %v5192 = vld [vmem:[#allocation11 + $0xf0] sm:$0xff]
    %v5193 = vld [vmem:[#allocation11 + $0xf8] sm:$0xff]
    %v5194 = vld [vmem:[#allocation11 + $0x100] sm:$0xff]
    %v5195 = vld [vmem:[#allocation11 + $0x108] sm:$0xff]
    %v5196 = vld [vmem:[#allocation11 + $0x110] sm:$0xff]
    %v5197 = vld [vmem:[#allocation11 + $0x118] sm:$0xff]
    %v5198 = vld [vmem:[#allocation11 + $0x120] sm:$0xff]
    %v5199 = vld [vmem:[#allocation11 + $0x128] sm:$0xff]
    %v5200 = vld [vmem:[#allocation11 + $0x130] sm:$0xff]
    %v5201 = vld [vmem:[#allocation11 + $0x138] sm:$0xff]
    %v5202 = vld [vmem:[#allocation11 + $0x140] sm:$0xff]
    %v5203 = vld [vmem:[#allocation11 + $0x148] sm:$0xff]
    %v5204 = vld [vmem:[#allocation11 + $0x150] sm:$0xff]
    %v5205 = vld [vmem:[#allocation11 + $0x158] sm:$0xff]
    %v5206 = vld [vmem:[#allocation11 + $0x160] sm:$0xff]
    %v5207 = vld [vmem:[#allocation11 + $0x168] sm:$0xff]
    %v5208 = vld [vmem:[#allocation11 + $0x170] sm:$0xff]
    %v5209 = vld [vmem:[#allocation11 + $0x178] sm:$0xff]
    %v5210 = vld [vmem:[#allocation11 + $0x180] sm:$0xff]
    %v5211 = vld [vmem:[#allocation11 + $0x188] sm:$0xff]
    %v5212 = vld [vmem:[#allocation11 + $0x190] sm:$0xff]
    %v5213 = vld [vmem:[#allocation11 + $0x198] sm:$0xff]
    %v5214 = vld [vmem:[#allocation11 + $0x1a0] sm:$0xff]
    %v5215 = vld [vmem:[#allocation11 + $0x1a8] sm:$0xff]
    %v5216 = vld [vmem:[#allocation11 + $0x1b0] sm:$0xff]
    %v5217 = vld [vmem:[#allocation11 + $0x1b8] sm:$0xff]
    %v5218 = vld [vmem:[#allocation11 + $0x1c0] sm:$0xff]
    %v5219 = vld [vmem:[#allocation11 + $0x1c8] sm:$0xff]
    %v5220 = vld [vmem:[#allocation11 + $0x1d0] sm:$0xff]
    %v5221 = vld [vmem:[#allocation11 + $0x1d8] sm:$0xff]
    %v5222 = vld [vmem:[#allocation11 + $0x1e0] sm:$0xff]
    %v5223 = vld [vmem:[#allocation11 + $0x1e8] sm:$0xff]
    %v5224 = vld [vmem:[#allocation11 + $0x1f0] sm:$0xff]
    %v5225 = vld [vmem:[#allocation11 + $0x1f8] sm:$0xff]
    %v5226 = vld [vmem:[#allocation13] sm:$0x3]
    %v5228 = vlaneseq
    %v5229 = vshrl.u32 %v5228, 7
    %v5230 = vsub.s32 0, %v5229
    %v5231 = vrot.slane %v5226, %v5230
    %v5232 = vlaneseq
    %v5233 = vshrl.u32 %v5232, 7
    %v5234 = vsub.s32 1, %v5233
    %v5235 = vrot.slane %v5226, %v5234
    %v5302 = vunpack.c.l.b16 %v5162
    %v5303 = vunpack.c.h.b16 %v5162
    %v5304 = vunpack.c.l.b16 %v5163
    %v5305 = vunpack.c.h.b16 %v5163
    %v5306 = vunpack.c.l.b16 %v5164
    %v5307 = vunpack.c.h.b16 %v5164
    %v5308 = vunpack.c.l.b16 %v5165
    %v5309 = vunpack.c.h.b16 %v5165
    %v5310 = vunpack.c.l.b16 %v5166
    %v5311 = vunpack.c.h.b16 %v5166
    %v5312 = vunpack.c.l.b16 %v5167
    %v5313 = vunpack.c.h.b16 %v5167
    %v5314 = vunpack.c.l.b16 %v5168
    %v5315 = vunpack.c.h.b16 %v5168
    %v5316 = vunpack.c.l.b16 %v5169
    %v5317 = vunpack.c.h.b16 %v5169
    %v5318 = vunpack.c.l.b16 %v5170
    %v5319 = vunpack.c.h.b16 %v5170
    %v5320 = vunpack.c.l.b16 %v5171
    %v5321 = vunpack.c.h.b16 %v5171
    %v5322 = vunpack.c.l.b16 %v5172
    %v5323 = vunpack.c.h.b16 %v5172
    %v5324 = vunpack.c.l.b16 %v5173
    %v5325 = vunpack.c.h.b16 %v5173
    %v5326 = vunpack.c.l.b16 %v5174
    %v5327 = vunpack.c.h.b16 %v5174
    %v5328 = vunpack.c.l.b16 %v5175
    %v5329 = vunpack.c.h.b16 %v5175
    %v5330 = vunpack.c.l.b16 %v5176
    %v5331 = vunpack.c.h.b16 %v5176
    %v5332 = vunpack.c.l.b16 %v5177
    %v5333 = vunpack.c.h.b16 %v5177
    %v5334 = vunpack.c.l.b16 %v5178
    %v5335 = vunpack.c.h.b16 %v5178
    %v5336 = vunpack.c.l.b16 %v5179
    %v5337 = vunpack.c.h.b16 %v5179
    %v5338 = vunpack.c.l.b16 %v5180
    %v5339 = vunpack.c.h.b16 %v5180
    %v5340 = vunpack.c.l.b16 %v5181
    %v5341 = vunpack.c.h.b16 %v5181
    %v5342 = vunpack.c.l.b16 %v5182
    %v5343 = vunpack.c.h.b16 %v5182
    %v5344 = vunpack.c.l.b16 %v5183
    %v5345 = vunpack.c.h.b16 %v5183
    %v5346 = vunpack.c.l.b16 %v5184
    %v5347 = vunpack.c.h.b16 %v5184
    %v5348 = vunpack.c.l.b16 %v5185
    %v5349 = vunpack.c.h.b16 %v5185
    %v5350 = vunpack.c.l.b16 %v5186
    %v5351 = vunpack.c.h.b16 %v5186
    %v5352 = vunpack.c.l.b16 %v5187
    %v5353 = vunpack.c.h.b16 %v5187
    %v5354 = vunpack.c.l.b16 %v5188
    %v5355 = vunpack.c.h.b16 %v5188
    %v5356 = vunpack.c.l.b16 %v5189
    %v5357 = vunpack.c.h.b16 %v5189
    %v5358 = vunpack.c.l.b16 %v5190
    %v5359 = vunpack.c.h.b16 %v5190
    %v5360 = vunpack.c.l.b16 %v5191
    %v5361 = vunpack.c.h.b16 %v5191
    %v5362 = vunpack.c.l.b16 %v5192
    %v5363 = vunpack.c.h.b16 %v5192
    %v5364 = vunpack.c.l.b16 %v5193
    %v5365 = vunpack.c.h.b16 %v5193
    %v5366 = vunpack.c.l.b16 %v5194
    %v5367 = vunpack.c.h.b16 %v5194
    %v5368 = vunpack.c.l.b16 %v5195
    %v5369 = vunpack.c.h.b16 %v5195
    %v5370 = vunpack.c.l.b16 %v5196
    %v5371 = vunpack.c.h.b16 %v5196
    %v5372 = vunpack.c.l.b16 %v5197
    %v5373 = vunpack.c.h.b16 %v5197
    %v5374 = vunpack.c.l.b16 %v5198
    %v5375 = vunpack.c.h.b16 %v5198
    %v5376 = vunpack.c.l.b16 %v5199
    %v5377 = vunpack.c.h.b16 %v5199
    %v5378 = vunpack.c.l.b16 %v5200
    %v5379 = vunpack.c.h.b16 %v5200
    %v5380 = vunpack.c.l.b16 %v5201
    %v5381 = vunpack.c.h.b16 %v5201
    %v5382 = vunpack.c.l.b16 %v5202
    %v5383 = vunpack.c.h.b16 %v5202
    %v5384 = vunpack.c.l.b16 %v5203
    %v5385 = vunpack.c.h.b16 %v5203
    %v5386 = vunpack.c.l.b16 %v5204
    %v5387 = vunpack.c.h.b16 %v5204
    %v5388 = vunpack.c.l.b16 %v5205
    %v5389 = vunpack.c.h.b16 %v5205
    %v5390 = vunpack.c.l.b16 %v5206
    %v5391 = vunpack.c.h.b16 %v5206
    %v5392 = vunpack.c.l.b16 %v5207
    %v5393 = vunpack.c.h.b16 %v5207
    %v5394 = vunpack.c.l.b16 %v5208
    %v5395 = vunpack.c.h.b16 %v5208
    %v5396 = vunpack.c.l.b16 %v5209
    %v5397 = vunpack.c.h.b16 %v5209
    %v5398 = vunpack.c.l.b16 %v5210
    %v5399 = vunpack.c.h.b16 %v5210
    %v5400 = vunpack.c.l.b16 %v5211
    %v5401 = vunpack.c.h.b16 %v5211
    %v5402 = vunpack.c.l.b16 %v5212
    %v5403 = vunpack.c.h.b16 %v5212
    %v5404 = vunpack.c.l.b16 %v5213
    %v5405 = vunpack.c.h.b16 %v5213
    %v5406 = vunpack.c.l.b16 %v5214
    %v5407 = vunpack.c.h.b16 %v5214
    %v5408 = vunpack.c.l.b16 %v5215
    %v5409 = vunpack.c.h.b16 %v5215
    %v5410 = vunpack.c.l.b16 %v5216
    %v5411 = vunpack.c.h.b16 %v5216
    %v5412 = vunpack.c.l.b16 %v5217
    %v5413 = vunpack.c.h.b16 %v5217
    %v5414 = vunpack.c.l.b16 %v5218
    %v5415 = vunpack.c.h.b16 %v5218
    %v5416 = vunpack.c.l.b16 %v5219
    %v5417 = vunpack.c.h.b16 %v5219
    %v5418 = vunpack.c.l.b16 %v5220
    %v5419 = vunpack.c.h.b16 %v5220
    %v5420 = vunpack.c.l.b16 %v5221
    %v5421 = vunpack.c.h.b16 %v5221
    %v5422 = vunpack.c.l.b16 %v5222
    %v5423 = vunpack.c.h.b16 %v5222
    %v5424 = vunpack.c.l.b16 %v5223
    %v5425 = vunpack.c.h.b16 %v5223
    %v5426 = vunpack.c.l.b16 %v5224
    %v5427 = vunpack.c.h.b16 %v5224
    %v5428 = vunpack.c.l.b16 %v5225
    %v5429 = vunpack.c.h.b16 %v5225
    %v5430 = vpack.c.b16 %v5304, %v5302
    %v5431 = vpack.c.b16 %v5305, %v5303
    %v5432 = vpack.c.b16 %v5308, %v5306
    %v5433 = vpack.c.b16 %v5309, %v5307
    %v5434 = vpack.c.b16 %v5312, %v5310
    %v5435 = vpack.c.b16 %v5313, %v5311
    %v5436 = vpack.c.b16 %v5316, %v5314
    %v5437 = vpack.c.b16 %v5317, %v5315
    %v5438 = vpack.c.b16 %v5320, %v5318
    %v5439 = vpack.c.b16 %v5321, %v5319
    %v5440 = vpack.c.b16 %v5324, %v5322
    %v5441 = vpack.c.b16 %v5325, %v5323
    %v5442 = vpack.c.b16 %v5328, %v5326
    %v5443 = vpack.c.b16 %v5329, %v5327
    %v5444 = vpack.c.b16 %v5332, %v5330
    %v5445 = vpack.c.b16 %v5333, %v5331
    %v5446 = vpack.c.b16 %v5336, %v5334
    %v5447 = vpack.c.b16 %v5337, %v5335
    %v5448 = vpack.c.b16 %v5340, %v5338
    %v5449 = vpack.c.b16 %v5341, %v5339
    %v5450 = vpack.c.b16 %v5344, %v5342
    %v5451 = vpack.c.b16 %v5345, %v5343
    %v5452 = vpack.c.b16 %v5348, %v5346
    %v5453 = vpack.c.b16 %v5349, %v5347
    %v5454 = vpack.c.b16 %v5352, %v5350
    %v5455 = vpack.c.b16 %v5353, %v5351
    %v5456 = vpack.c.b16 %v5356, %v5354
    %v5457 = vpack.c.b16 %v5357, %v5355
    %v5458 = vpack.c.b16 %v5360, %v5358
    %v5459 = vpack.c.b16 %v5361, %v5359
    %v5460 = vpack.c.b16 %v5364, %v5362
    %v5461 = vpack.c.b16 %v5365, %v5363
    %v5462 = vpack.c.b16 %v5368, %v5366
    %v5463 = vpack.c.b16 %v5369, %v5367
    %v5464 = vpack.c.b16 %v5372, %v5370
    %v5465 = vpack.c.b16 %v5373, %v5371
    %v5466 = vpack.c.b16 %v5376, %v5374
    %v5467 = vpack.c.b16 %v5377, %v5375
    %v5468 = vpack.c.b16 %v5380, %v5378
    %v5469 = vpack.c.b16 %v5381, %v5379
    %v5470 = vpack.c.b16 %v5384, %v5382
    %v5471 = vpack.c.b16 %v5385, %v5383
    %v5472 = vpack.c.b16 %v5388, %v5386
    %v5473 = vpack.c.b16 %v5389, %v5387
    %v5474 = vpack.c.b16 %v5392, %v5390
    %v5475 = vpack.c.b16 %v5393, %v5391
    %v5476 = vpack.c.b16 %v5396, %v5394
    %v5477 = vpack.c.b16 %v5397, %v5395
    %v5478 = vpack.c.b16 %v5400, %v5398
    %v5479 = vpack.c.b16 %v5401, %v5399
    %v5480 = vpack.c.b16 %v5404, %v5402
    %v5481 = vpack.c.b16 %v5405, %v5403
    %v5482 = vpack.c.b16 %v5408, %v5406
    %v5483 = vpack.c.b16 %v5409, %v5407
    %v5484 = vpack.c.b16 %v5412, %v5410
    %v5485 = vpack.c.b16 %v5413, %v5411
    %v5486 = vpack.c.b16 %v5416, %v5414
    %v5487 = vpack.c.b16 %v5417, %v5415
    %v5488 = vpack.c.b16 %v5420, %v5418
    %v5489 = vpack.c.b16 %v5421, %v5419
    %v5490 = vpack.c.b16 %v5424, %v5422
    %v5491 = vpack.c.b16 %v5425, %v5423
    %v5492 = vpack.c.b16 %v5428, %v5426
    %v5493 = vpack.c.b16 %v5429, %v5427
    %5558 = vmatprep.subr.bf16.mxu0 %v5445
    %5559 = vmatpush1.bf16.msra.mxu0 %v5444
    %5560 = vmatprep.subr.bf16.mxu0 %v5443
    %5561 = vmatpush1.bf16.msra.mxu0 %v5442
    %5562 = vmatprep.subr.bf16.mxu0 %v5441
    %5563 = vmatpush1.bf16.msra.mxu0 %v5440
    %5564 = vmatprep.subr.bf16.mxu0 %v5439
    %5565 = vmatpush1.bf16.msra.mxu0 %v5438
    %5566 = vmatprep.subr.bf16.mxu0 %v5437
    %5567 = vmatpush1.bf16.msra.mxu0 %v5436
    %5568 = vmatprep.subr.bf16.mxu0 %v5435
    %5569 = vmatpush1.bf16.msra.mxu0 %v5434
    %5570 = vmatprep.subr.bf16.mxu0 %v5433
    %5571 = vmatpush1.bf16.msra.mxu0 %v5432
    %5572 = vmatprep.subr.bf16.mxu0 %v5431
    %5573 = vmatpush1.bf16.msra.mxu0 %v5430
    %5574 = vmatprep.subr.bf16.mxu0 %v5461
    %5575 = vmatpush2.bf16.msra.mxu0 %v5460
    %5576 = vmatprep.subr.bf16.mxu0 %v5459
    %5577 = vmatpush2.bf16.msra.mxu0 %v5458
    %5578 = vmatprep.subr.bf16.mxu0 %v5457
    %5579 = vmatpush2.bf16.msra.mxu0 %v5456
    %5580 = vmatprep.subr.bf16.mxu0 %v5455
    %5581 = vmatpush2.bf16.msra.mxu0 %v5454
    %5582 = vmatprep.subr.bf16.mxu0 %v5453
    %5583 = vmatpush2.bf16.msra.mxu0 %v5452
    %5584 = vmatprep.subr.bf16.mxu0 %v5451
    %5585 = vmatpush2.bf16.msra.mxu0 %v5450
    %5586 = vmatprep.subr.bf16.mxu0 %v5449
    %5587 = vmatpush2.bf16.msra.mxu0 %v5448
    %5588 = vmatprep.subr.bf16.mxu0 %v5447
    %5589 = vmatpush2.bf16.msra.mxu0 %v5446
    %5590 = vmatprep.mubr.bf16.mxu0 %v5155
    %5591 = vmatmul.mubr.bf16.gmra.mxu0 %v5154
    %v5592 = vpop.f32.mrf.mxu0
    %v5593 = vadd.f32 %v5231, %v5592
    %v5594 = vpop.f32.mrf.mxu0
    %v5595 = vadd.f32 %v5235, %v5594
    %v5596 = vpop.f32.mrf.mxu0
    %v5597 = vadd.f32 %v5231, %v5596
    %v5598 = vpop.f32.mrf.mxu0
    %v5599 = vadd.f32 %v5235, %v5598
    %5600 = vmatprep.mubr.bf16.mxu0 %v5159
    %5601 = vmatmul.mubr.bf16.gmra.mxu0 %v5158
    %v5602 = vpop.f32.mrf.mxu0
    %v5603 = vadd.f32 %v5231, %v5602
    %v5604 = vpop.f32.mrf.mxu0
    %v5605 = vadd.f32 %v5235, %v5604
    %v5606 = vpop.f32.mrf.mxu0
    %v5607 = vpop.f32.mrf.mxu0
    %5608 = vdwg.mxu0
    %5609 = vmatprep.subr.bf16.mxu0 %v5477
    %5610 = vmatpush1.bf16.msra.mxu0 %v5476
    %5611 = vmatprep.subr.bf16.mxu0 %v5475
    %5612 = vmatpush1.bf16.msra.mxu0 %v5474
    %5613 = vmatprep.subr.bf16.mxu0 %v5473
    %5614 = vmatpush1.bf16.msra.mxu0 %v5472
    %5615 = vmatprep.subr.bf16.mxu0 %v5471
    %5616 = vmatpush1.bf16.msra.mxu0 %v5470
    %5617 = vmatprep.subr.bf16.mxu0 %v5469
    %5618 = vmatpush1.bf16.msra.mxu0 %v5468
    %5619 = vmatprep.subr.bf16.mxu0 %v5467
    %5620 = vmatpush1.bf16.msra.mxu0 %v5466
    %5621 = vmatprep.subr.bf16.mxu0 %v5465
    %5622 = vmatpush1.bf16.msra.mxu0 %v5464
    %5623 = vmatprep.subr.bf16.mxu0 %v5463
    %5624 = vmatpush1.bf16.msra.mxu0 %v5462
    %5625 = vmatprep.subr.bf16.mxu0 %v5493
    %5626 = vmatpush2.bf16.msra.mxu0 %v5492
    %5627 = vmatprep.subr.bf16.mxu0 %v5491
    %5628 = vmatpush2.bf16.msra.mxu0 %v5490
    %5629 = vmatprep.subr.bf16.mxu0 %v5489
    %5630 = vmatpush2.bf16.msra.mxu0 %v5488
    %5631 = vmatprep.subr.bf16.mxu0 %v5487
    %5632 = vmatpush2.bf16.msra.mxu0 %v5486
    %5633 = vmatprep.subr.bf16.mxu0 %v5485
    %5634 = vmatpush2.bf16.msra.mxu0 %v5484
    %5635 = vmatprep.subr.bf16.mxu0 %v5483
    %5636 = vmatpush2.bf16.msra.mxu0 %v5482
    %5637 = vmatprep.subr.bf16.mxu0 %v5481
    %5638 = vmatpush2.bf16.msra.mxu0 %v5480
    %5639 = vmatprep.subr.bf16.mxu0 %v5479
    %5640 = vmatpush2.bf16.msra.mxu0 %v5478
    %5641 = vmatprep.mubr.bf16.mxu0 %v5157
    %5642 = vmatmul.mubr.bf16.gmra.mxu0 %v5156
    %v5643 = vpop.f32.mrf.mxu0
    %v5644 = vadd.f32 %v5593, %v5643
    %v5645 = vpop.f32.mrf.mxu0
    %v5646 = vadd.f32 %v5595, %v5645
    %v5647 = vpop.f32.mrf.mxu0
    %v5648 = vadd.f32 %v5597, %v5647
    %v5649 = vpop.f32.mrf.mxu0
    %v5650 = vadd.f32 %v5599, %v5649
    %5651 = vmatprep.mubr.bf16.mxu0 %v5161
    %5652 = vmatmul.mubr.bf16.gmra.mxu0 %v5160
    %v5653 = vpop.f32.mrf.mxu0
    %v5654 = vadd.f32 %v5603, %v5653
    %v5655 = vpop.f32.mrf.mxu0
    %v5656 = vadd.f32 %v5605, %v5655
    %v5657 = vpop.f32.mrf.mxu0
    %v5658 = vpop.f32.mrf.mxu0
    %5659 = vdwg.mxu0
    %v5660 = vmax.f32 %v5644, 0.0
    %v5661 = vmax.f32 %v5646, 0.0
    %v5662 = vmax.f32 %v5648, 0.0
    %v5663 = vmax.f32 %v5650, 0.0
    %v5664 = vmax.f32 %v5654, 0.0
    %v5665 = vmax.f32 %v5656, 0.0
    %v5666 = vpack.c.bf16 %v5662, %v5660
    %v5667 = vpack.c.bf16 %v5663, %v5661
    %v5668 = vpack.c.bf16 %v5664, %v5664
    %v5669 = vpack.c.bf16 %v5665, %v5665
    %v5670 = vld [vmem:[#allocation14] sm:$0xf]
    %v5671 = vld [vmem:[#allocation14 + $0x4] sm:$0xf]
    %v5672 = vld [vmem:[#allocation14 + $0x8] sm:$0xf]
    %v5673 = vld [vmem:[#allocation14 + $0xc] sm:$0xf]
    %v5674 = vld [vmem:[#allocation14 + $0x10] sm:$0xf]
    %v5675 = vld [vmem:[#allocation14 + $0x14] sm:$0xf]
    %v5676 = vld [vmem:[#allocation14 + $0x18] sm:$0xf]
    %v5677 = vld [vmem:[#allocation14 + $0x1c] sm:$0xf]
    %v5678 = vld [vmem:[#allocation14 + $0x20] sm:$0xf]
    %v5679 = vld [vmem:[#allocation14 + $0x24] sm:$0xf]
    %v5680 = vld [vmem:[#allocation14 + $0x28] sm:$0xf]
    %v5681 = vld [vmem:[#allocation14 + $0x2c] sm:$0xf]
    %v5682 = vld [vmem:[#allocation14 + $0x30] sm:$0xf]
    %v5683 = vld [vmem:[#allocation14 + $0x34] sm:$0xf]
    %v5684 = vld [vmem:[#allocation14 + $0x38] sm:$0xf]
    %v5685 = vld [vmem:[#allocation14 + $0x3c] sm:$0xf]
    %v5686 = vld [vmem:[#allocation14 + $0x40] sm:$0xf]
    %v5687 = vld [vmem:[#allocation14 + $0x44] sm:$0xf]
    %v5688 = vld [vmem:[#allocation14 + $0x48] sm:$0xf]
    %v5689 = vld [vmem:[#allocation14 + $0x4c] sm:$0xf]
    %v5690 = vld [vmem:[#allocation14 + $0x50] sm:$0xf]
    %v5691 = vld [vmem:[#allocation14 + $0x54] sm:$0xf]
    %v5692 = vld [vmem:[#allocation14 + $0x58] sm:$0xf]
    %v5693 = vld [vmem:[#allocation14 + $0x5c] sm:$0xf]
    %v5694 = vld [vmem:[#allocation14 + $0x60] sm:$0xf]
    %v5695 = vld [vmem:[#allocation14 + $0x64] sm:$0xf]
    %v5696 = vld [vmem:[#allocation14 + $0x68] sm:$0xf]
    %v5697 = vld [vmem:[#allocation14 + $0x6c] sm:$0xf]
    %v5698 = vld [vmem:[#allocation14 + $0x70] sm:$0xf]
    %v5699 = vld [vmem:[#allocation14 + $0x74] sm:$0xf]
    %v5700 = vld [vmem:[#allocation14 + $0x78] sm:$0xf]
    %v5701 = vld [vmem:[#allocation14 + $0x7c] sm:$0xf]
    %v5702 = vld [vmem:[#allocation16] sm:$0x1]
    %v5704 = vlaneseq
    %v5705 = vshrl.u32 %v5704, 7
    %v5706 = vsub.s32 0, %v5705
    %v5707 = vrot.slane %v5702, %v5706
    %v5741 = vunpack.c.l.b16 %v5670
    %v5742 = vunpack.c.l.b16 %v5671
    %v5743 = vunpack.c.l.b16 %v5672
    %v5744 = vunpack.c.l.b16 %v5673
    %v5745 = vunpack.c.l.b16 %v5674
    %v5746 = vunpack.c.l.b16 %v5675
    %v5747 = vunpack.c.l.b16 %v5676
    %v5748 = vunpack.c.l.b16 %v5677
    %v5749 = vunpack.c.l.b16 %v5678
    %v5750 = vunpack.c.l.b16 %v5679
    %v5751 = vunpack.c.l.b16 %v5680
    %v5752 = vunpack.c.l.b16 %v5681
    %v5753 = vunpack.c.l.b16 %v5682
    %v5754 = vunpack.c.l.b16 %v5683
    %v5755 = vunpack.c.l.b16 %v5684
    %v5756 = vunpack.c.l.b16 %v5685
    %v5757 = vunpack.c.l.b16 %v5686
    %v5758 = vunpack.c.l.b16 %v5687
    %v5759 = vunpack.c.l.b16 %v5688
    %v5760 = vunpack.c.l.b16 %v5689
    %v5761 = vunpack.c.l.b16 %v5690
    %v5762 = vunpack.c.l.b16 %v5691
    %v5763 = vunpack.c.l.b16 %v5692
    %v5764 = vunpack.c.l.b16 %v5693
    %v5765 = vunpack.c.l.b16 %v5694
    %v5766 = vunpack.c.l.b16 %v5695
    %v5767 = vunpack.c.l.b16 %v5696
    %v5768 = vunpack.c.l.b16 %v5697
    %v5769 = vunpack.c.l.b16 %v5698
    %v5770 = vunpack.c.l.b16 %v5699
    %v5771 = vunpack.c.l.b16 %v5700
    %v5772 = vunpack.c.l.b16 %v5701
    %v5773 = vpack.c.b16 %v5742, %v5741
    %v5774 = vpack.c.b16 %v5744, %v5743
    %v5775 = vpack.c.b16 %v5746, %v5745
    %v5776 = vpack.c.b16 %v5748, %v5747
    %v5777 = vpack.c.b16 %v5750, %v5749
    %v5778 = vpack.c.b16 %v5752, %v5751
    %v5779 = vpack.c.b16 %v5754, %v5753
    %v5780 = vpack.c.b16 %v5756, %v5755
    %v5781 = vpack.c.b16 %v5758, %v5757
    %v5782 = vpack.c.b16 %v5760, %v5759
    %v5783 = vpack.c.b16 %v5762, %v5761
    %v5784 = vpack.c.b16 %v5764, %v5763
    %v5785 = vpack.c.b16 %v5766, %v5765
    %v5786 = vpack.c.b16 %v5768, %v5767
    %v5787 = vpack.c.b16 %v5770, %v5769
    %v5788 = vpack.c.b16 %v5772, %v5771
    %5805 = vmatprep.subr.bf16.mxu0 0
    %5806 = vmatpush1.bf16.msra.mxu0 %v5780
    %5807 = vmatprep.subr.bf16.mxu0 0
    %5808 = vmatpush1.bf16.msra.mxu0 %v5779
    %5809 = vmatprep.subr.bf16.mxu0 0
    %5810 = vmatpush1.bf16.msra.mxu0 %v5778
    %5811 = vmatprep.subr.bf16.mxu0 0
    %5812 = vmatpush1.bf16.msra.mxu0 %v5777
    %5813 = vmatprep.subr.bf16.mxu0 0
    %5814 = vmatpush1.bf16.msra.mxu0 %v5776
    %5815 = vmatprep.subr.bf16.mxu0 0
    %5816 = vmatpush1.bf16.msra.mxu0 %v5775
    %5817 = vmatprep.subr.bf16.mxu0 0
    %5818 = vmatpush1.bf16.msra.mxu0 %v5774
    %5819 = vmatprep.subr.bf16.mxu0 0
    %5820 = vmatpush1.bf16.msra.mxu0 %v5773
    %5821 = vmatprep.subr.bf16.mxu0 0
    %5822 = vmatpush2.bf16.msra.mxu0 %v5788
    %5823 = vmatprep.subr.bf16.mxu0 0
    %5824 = vmatpush2.bf16.msra.mxu0 %v5787
    %5825 = vmatprep.subr.bf16.mxu0 0
    %5826 = vmatpush2.bf16.msra.mxu0 %v5786
    %5827 = vmatprep.subr.bf16.mxu0 0
    %5828 = vmatpush2.bf16.msra.mxu0 %v5785
    %5829 = vmatprep.subr.bf16.mxu0 0
    %5830 = vmatpush2.bf16.msra.mxu0 %v5784
    %5831 = vmatprep.subr.bf16.mxu0 0
    %5832 = vmatpush2.bf16.msra.mxu0 %v5783
    %5833 = vmatprep.subr.bf16.mxu0 0
    %5834 = vmatpush2.bf16.msra.mxu0 %v5782
    %5835 = vmatprep.subr.bf16.mxu0 0
    %5836 = vmatpush2.bf16.msra.mxu0 %v5781
    %5837 = vmatprep.mubr.bf16.mxu0 %v5667
    %5838 = vmatmul.mubr.bf16.gmra.mxu0 %v5666
    %v5839 = vpop.f32.mrf.mxu0
    %v5840 = vadd.f32 %v5707, %v5839
    %v5841 = vpop.f32.mrf.mxu0
    %v5842 = vpop.f32.mrf.mxu0
    %v5843 = vadd.f32 %v5707, %v5842
    %v5844 = vpop.f32.mrf.mxu0
    %5845 = vmatprep.mubr.bf16.mxu0 %v5669
    %5846 = vmatmul.mubr.bf16.gmra.mxu0 %v5668
    %v5847 = vpop.f32.mrf.mxu0
    %v5848 = vadd.f32 %v5707, %v5847
    %v5849 = vpop.f32.mrf.mxu0
    %v5850 = vpop.f32.mrf.mxu0
    %v5851 = vpop.f32.mrf.mxu0
    %5852 = vdwg.mxu0
    %5853 = vst [vmem:[#allocation17] sm:$0xff] %v5840
    %5854 = vst [vmem:[#allocation17 + $0x8] sm:$0xff] %v5843
    %5855 = vst [vmem:[#allocation17 + $0x10] sm:$0xff] %v5848
    // Predicated region
    $region74: #{tpu_custom_call.1} parent=1 // pred_check
      _
    $region75: #{tpu_custom_call.1} parent=1 // pred_check_branch
      %5857 = sbr.rel (0) target = $region77
    $region76: #{tpu_custom_call.1} parent=1 // pred_region
      %s5859 = ssub.s32 384, 384
      %5860 = vsyncadd [#allocation4], %s5859
      %s5861 = sshll.u32 [#allocation17], 4
      %s5862 = int_to_ptr.vmem [resolvable:$true] %s5861
      %5867 = dma.vmem_to_hbm [thread:$0]  %s5862, 384, %s9, [#allocation4], 128, 128, 8
    $region77: #{tpu_custom_call.1} parent=1 // pred_fallthru
      _
    // Predicated region
    $region78: #{tpu_custom_call.1} parent=1 // pred_check
      _
    $region79: #{tpu_custom_call.1} parent=1 // pred_check_branch
      %5869 = sbr.rel (0) target = $region81
    $region80: #{tpu_custom_call.1} parent=1 // pred_region
      %5870 = dma.done [#allocation4], 384
    $region81: #{tpu_custom_call.1} parent=1 // pred_fallthru
      _
    %5871 = vsyncpa [#allocation3], 1
    %5872 = vsyncpa [#allocation6], 1
    %5873 = vsyncpa [#allocation9], 1
    %5874 = vsyncpa [#allocation12], 1
    %5875 = vsyncpa [#allocation15], 1
    %5876 = vsyncpa [#allocation4], 1

// kernel: tpu_custom_call.1
$region0: #{tpu_custom_call.1}
  #allocation0 [shape = 'u32[]', space=smem, size = 0x4, offset = 0x4, fixed_abs, tag = 'smem constant byte address 0x4 - core index']
  #allocation1 [shape = 'u32[144,128]{1,0:T(1,128)}', space=vmem, size = 0x12000, scoped, tag = 'internal scratch']
  %s0 = inlined_call_operand.hbm [shape: f32[24,768], index: 0, kind: input, shape index: {}]
  %s1 = inlined_call_operand.hbm [shape: bf16[768,1024], index: 1, kind: input, shape index: {}]
  %s2 = inlined_call_operand.hbm [shape: f32[1,1024], index: 2, kind: input, shape index: {}]
  %s3 = inlined_call_operand.hbm [shape: bf16[1024,512], index: 3, kind: input, shape index: {}]
  %s4 = inlined_call_operand.hbm [shape: f32[1,512], index: 4, kind: input, shape index: {}]
  %s5 = inlined_call_operand.hbm [shape: bf16[512,256], index: 5, kind: input, shape index: {}]
  %s6 = inlined_call_operand.hbm [shape: f32[1,256], index: 6, kind: input, shape index: {}]
  %s7 = inlined_call_operand.hbm [shape: bf16[256,128], index: 7, kind: input, shape index: {}]
  %s8 = inlined_call_operand.hbm [shape: f32[1,128], index: 8, kind: input, shape index: {}]
  %s9 = inlined_call_operand.hbm [shape: f32[24,128], index: 9, kind: output, shape index: {}]
  %s10 = sld [smem:[#allocation0]]
  $region82: #{tpu_custom_call.1} parent=0
    _
  %s12 = ssub.s32 1, %s10
  %s13 = scalar_select 0, %s12, %s10
  $region1: #{tpu_custom_call.1} parent=0
    #allocation2 [shape = 'u8[73728]{0}', space=vmem, size = 0x12000, scoped, tag = 'input window, operand 0, single buffered']
    #allocation3 [shape = 's32[1]{0}', space=sflag, size = 0x4, scoped, tag = 'scoped memory for tpu_custom_call.1']
    #allocation4 [shape = 's32[1]{0}', space=sflag, size = 0x4, scoped, tag = 'scoped memory for tpu_custom_call.1']
    #allocation5 [shape = 'u8[1572864]{0}', space=vmem, size = 0x180000, scoped, tag = 'input window, operand 1, single buffered']
    #allocation6 [shape = 's32[1]{0}', space=sflag, size = 0x4, scoped, tag = 'scoped memory for tpu_custom_call.1']
    #allocation7 [shape = 'u8[4096]{0}', space=vmem, size = 0x1000, scoped, tag = 'input window, operand 2, single buffered']
    #allocation8 [shape = 'u8[1048576]{0}', space=vmem, size = 0x100000, scoped, tag = 'input window, operand 3, single buffered']
    #allocation9 [shape = 's32[1]{0}', space=sflag, size = 0x4, scoped, tag = 'scoped memory for tpu_custom_call.1']
    #allocation10 [shape = 'u8[2048]{0}', space=vmem, size = 0x800, scoped, tag = 'input window, operand 4, single buffered']
    #allocation11 [shape = 'u8[262144]{0}', space=vmem, size = 0x40000, scoped, tag = 'input window, operand 5, single buffered']
    #allocation12 [shape = 's32[1]{0}', space=sflag, size = 0x4, scoped, tag = 'scoped memory for tpu_custom_call.1']
    #allocation13 [shape = 'u8[1024]{0}', space=vmem, size = 0x400, scoped, tag = 'input window, operand 6, single buffered']
    #allocation14 [shape = 'u8[65536]{0}', space=vmem, size = 0x10000, scoped, tag = 'input window, operand 7, single buffered']
    #allocation15 [shape = 's32[1]{0}', space=sflag, size = 0x4, scoped, tag = 'scoped memory for tpu_custom_call.1']
    #allocation16 [shape = 'u8[512]{0}', space=vmem, size = 0x400, scoped, tag = 'input window, operand 8, single buffered']
    #allocation17 [shape = 'u8[12288]{0}', space=vmem, size = 0x3000, scoped, tag = 'output window, operand 0, single buffered']
    %14 = vsyncpa [#allocation3], 0
    %15 = vsyncpa [#allocation6], 0
    %16 = vsyncpa [#allocation9], 0
    %17 = vsyncpa [#allocation12], 0
    %18 = vsyncpa [#allocation15], 0
    %19 = vsyncpa [#allocation4], 0
    // Predicated region
    $region2: #{tpu_custom_call.1} parent=1 // pred_check
      _
    $region3: #{tpu_custom_call.1} parent=1 // pred_check_branch
      %21 = sbr.rel (0) target = $region5
    $region4: #{tpu_custom_call.1} parent=1 // pred_region
      %s23 = ssub.s32 2304, 2304
      %24 = vsyncadd [#allocation3], %s23
      %s25 = sshll.u32 [#allocation2], 4
      %s26 = int_to_ptr.vmem [resolvable:$true] %s25
      %31 = dma.hbm_to_vmem [thread:$0]  %s0, 2304, %s26, [#allocation3], 768, 768, 48
    $region5: #{tpu_custom_call.1} parent=1 // pred_fallthru
      _
    // Predicated region
    $region6: #{tpu_custom_call.1} parent=1 // pred_check
      _
    $region7: #{tpu_custom_call.1} parent=1 // pred_check_branch
      %33 = sbr.rel (0) target = $region9
    $region8: #{tpu_custom_call.1} parent=1 // pred_region
      %s35 = ssub.s32 49152, 49152
      %36 = vsyncadd [#allocation6], %s35
      %s37 = sshll.u32 [#allocation5], 4
      %s38 = int_to_ptr.vmem [resolvable:$true] %s37
      %43 = dma.hbm_to_vmem [thread:$0]  %s1, 49152, %s38, [#allocation6], 512, 512, 32
    $region9: #{tpu_custom_call.1} parent=1 // pred_fallthru
      _
    // Predicated region
    $region10: #{tpu_custom_call.1} parent=1 // pred_check
      _
    $region11: #{tpu_custom_call.1} parent=1 // pred_check_branch
      %45 = sbr.rel (0) target = $region13
    $region12: #{tpu_custom_call.1} parent=1 // pred_region
      %s47 = ssub.s32 128, 128
      %48 = vsyncadd [#allocation6], %s47
      %s50 = sshll.u32 [#allocation7], 4
      %s51 = int_to_ptr.vmem [resolvable:$true] %s50
      %53 = dma.hbm_to_vmem [thread:$0]  %s2, 128, %s51, [#allocation6]
    $region13: #{tpu_custom_call.1} parent=1 // pred_fallthru
      _
    // Predicated region
    $region14: #{tpu_custom_call.1} parent=1 // pred_check
      _
    $region15: #{tpu_custom_call.1} parent=1 // pred_check_branch
      %55 = sbr.rel (0) target = $region17
    $region16: #{tpu_custom_call.1} parent=1 // pred_region
      %s57 = ssub.s32 32768, 32768
      %58 = vsyncadd [#allocation9], %s57
      %s59 = sshll.u32 [#allocation8], 4
      %s60 = int_to_ptr.vmem [resolvable:$true] %s59
      %65 = dma.hbm_to_vmem [thread:$0]  %s3, 32768, %s60, [#allocation9], 256, 256, 16
    $region17: #{tpu_custom_call.1} parent=1 // pred_fallthru
      _
    // Predicated region
    $region18: #{tpu_custom_call.1} parent=1 // pred_check
      _
    $region19: #{tpu_custom_call.1} parent=1 // pred_check_branch
      %67 = sbr.rel (0) target = $region21
    $region20: #{tpu_custom_call.1} parent=1 // pred_region
      %s69 = ssub.s32 64, 64
      %70 = vsyncadd [#allocation9], %s69
      %s72 = sshll.u32 [#allocation10], 4
      %s73 = int_to_ptr.vmem [resolvable:$true] %s72
      %75 = dma.hbm_to_vmem [thread:$0]  %s4, 64, %s73, [#allocation9]
    $region21: #{tpu_custom_call.1} parent=1 // pred_fallthru
      _
    // Predicated region
    $region22: #{tpu_custom_call.1} parent=1 // pred_check
      _
    $region23: #{tpu_custom_call.1} parent=1 // pred_check_branch
      %77 = sbr.rel (0) target = $region25
    $region24: #{tpu_custom_call.1} parent=1 // pred_region
      %s79 = ssub.s32 8192, 8192
      %80 = vsyncadd [#allocation12], %s79
      %s81 = sshll.u32 [#allocation11], 4
      %s82 = int_to_ptr.vmem [resolvable:$true] %s81
      %87 = dma.hbm_to_vmem [thread:$0]  %s5, 8192, %s82, [#allocation12], 128, 128, 8
    $region25: #{tpu_custom_call.1} parent=1 // pred_fallthru
      _
    // Predicated region
    $region26: #{tpu_custom_call.1} parent=1 // pred_check
      _
    $region27: #{tpu_custom_call.1} parent=1 // pred_check_branch
      %89 = sbr.rel (0) target = $region29
    $region28: #{tpu_custom_call.1} parent=1 // pred_region
      %s91 = ssub.s32 32, 32
      %92 = vsyncadd [#allocation12], %s91
      %s94 = sshll.u32 [#allocation13], 4
      %s95 = int_to_ptr.vmem [resolvable:$true] %s94
      %97 = dma.hbm_to_vmem [thread:$0]  %s6, 32, %s95, [#allocation12]
    $region29: #{tpu_custom_call.1} parent=1 // pred_fallthru
      _
    // Predicated region
    $region30: #{tpu_custom_call.1} parent=1 // pred_check
      _
    $region31: #{tpu_custom_call.1} parent=1 // pred_check_branch
      %99 = sbr.rel (0) target = $region33
    $region32: #{tpu_custom_call.1} parent=1 // pred_region
      %s101 = ssub.s32 2048, 2048
      %102 = vsyncadd [#allocation15], %s101
      %s103 = sshll.u32 [#allocation14], 4
      %s104 = int_to_ptr.vmem [resolvable:$true] %s103
      %109 = dma.hbm_to_vmem [thread:$0]  %s7, 2048, %s104, [#allocation15], 64, 64, 4
    $region33: #{tpu_custom_call.1} parent=1 // pred_fallthru
      _
    // Predicated region
    $region34: #{tpu_custom_call.1} parent=1 // pred_check
      _
    $region35: #{tpu_custom_call.1} parent=1 // pred_check_branch
      %111 = sbr.rel (0) target = $region37
    $region36: #{tpu_custom_call.1} parent=1 // pred_region
      %s113 = ssub.s32 16, 16
      %114 = vsyncadd [#allocation15], %s113
      %s116 = sshll.u32 [#allocation16], 4
      %s117 = int_to_ptr.vmem [resolvable:$true] %s116
      %119 = dma.hbm_to_vmem [thread:$0]  %s8, 16, %s117, [#allocation15]
    $region37: #{tpu_custom_call.1} parent=1 // pred_fallthru
      _
    // Predicated region
    $region38: #{tpu_custom_call.1} parent=1 // pred_check
      _
    $region39: #{tpu_custom_call.1} parent=1 // pred_check_branch
      %121 = sbr.rel (0) target = $region41
    $region40: #{tpu_custom_call.1} parent=1 // pred_region
      %122 = dma.done [#allocation3], 2304
    $region41: #{tpu_custom_call.1} parent=1 // pred_fallthru
      _
    // Predicated region
    $region42: #{tpu_custom_call.1} parent=1 // pred_check
      _
    $region43: #{tpu_custom_call.1} parent=1 // pred_check_branch
      %124 = sbr.rel (0) target = $region45
    $region44: #{tpu_custom_call.1} parent=1 // pred_region
      %125 = dma.done [#allocation6], 49152
    $region45: #{tpu_custom_call.1} parent=1 // pred_fallthru
      _
    // Predicated region
    $region46: #{tpu_custom_call.1} parent=1 // pred_check
      _
    $region47: #{tpu_custom_call.1} parent=1 // pred_check_branch
      %127 = sbr.rel (0) target = $region49
    $region48: #{tpu_custom_call.1} parent=1 // pred_region
      %128 = dma.done [#allocation6], 128
    $region49: #{tpu_custom_call.1} parent=1 // pred_fallthru
      _
    // Predicated region
    $region50: #{tpu_custom_call.1} parent=1 // pred_check
      _
    $region51: #{tpu_custom_call.1} parent=1 // pred_check_branch
      %130 = sbr.rel (0) target = $region53
    $region52: #{tpu_custom_call.1} parent=1 // pred_region
      %131 = dma.done [#allocation9], 32768
    $region53: #{tpu_custom_call.1} parent=1 // pred_fallthru
      _
    // Predicated region
    $region54: #{tpu_custom_call.1} parent=1 // pred_check
      _
    $region55: #{tpu_custom_call.1} parent=1 // pred_check_branch
      %133 = sbr.rel (0) target = $region57
    $region56: #{tpu_custom_call.1} parent=1 // pred_region
      %134 = dma.done [#allocation9], 64
    $region57: #{tpu_custom_call.1} parent=1 // pred_fallthru
      _
    // Predicated region
    $region58: #{tpu_custom_call.1} parent=1 // pred_check
      _
    $region59: #{tpu_custom_call.1} parent=1 // pred_check_branch
      %136 = sbr.rel (0) target = $region61
    $region60: #{tpu_custom_call.1} parent=1 // pred_region
      %137 = dma.done [#allocation12], 8192
    $region61: #{tpu_custom_call.1} parent=1 // pred_fallthru
      _
    // Predicated region
    $region62: #{tpu_custom_call.1} parent=1 // pred_check
      _
    $region63: #{tpu_custom_call.1} parent=1 // pred_check_branch
      %139 = sbr.rel (0) target = $region65
    $region64: #{tpu_custom_call.1} parent=1 // pred_region
      %140 = dma.done [#allocation12], 32
    $region65: #{tpu_custom_call.1} parent=1 // pred_fallthru
      _
    // Predicated region
    $region66: #{tpu_custom_call.1} parent=1 // pred_check
      _
    $region67: #{tpu_custom_call.1} parent=1 // pred_check_branch
      %142 = sbr.rel (0) target = $region69
    $region68: #{tpu_custom_call.1} parent=1 // pred_region
      %143 = dma.done [#allocation15], 2048
    $region69: #{tpu_custom_call.1} parent=1 // pred_fallthru
      _
    // Predicated region
    $region70: #{tpu_custom_call.1} parent=1 // pred_check
      _
    $region71: #{tpu_custom_call.1} parent=1 // pred_check_branch
      %145 = sbr.rel (0) target = $region73
    $region72: #{tpu_custom_call.1} parent=1 // pred_region
      %146 = dma.done [#allocation15], 16
    $region73: #{tpu_custom_call.1} parent=1 // pred_fallthru
      _
    %v148 = vld [vmem:[#allocation2] sm:$0xff]
    %v149 = vld [vmem:[#allocation2 + $0x8] sm:$0xff]
    %v150 = vld [vmem:[#allocation2 + $0x10] sm:$0xff]
    %v151 = vld [vmem:[#allocation2 + $0x18] sm:$0xff]
    %v152 = vld [vmem:[#allocation2 + $0x20] sm:$0xff]
    %v153 = vld [vmem:[#allocation2 + $0x28] sm:$0xff]
    %v154 = vld [vmem:[#allocation2 + $0x30] sm:$0xff]
    %v155 = vld [vmem:[#allocation2 + $0x38] sm:$0xff]
    %v156 = vld [vmem:[#allocation2 + $0x40] sm:$0xff]
    %v157 = vld [vmem:[#allocation2 + $0x48] sm:$0xff]
    %v158 = vld [vmem:[#allocation2 + $0x50] sm:$0xff]
    %v159 = vld [vmem:[#allocation2 + $0x58] sm:$0xff]
    %v160 = vld [vmem:[#allocation2 + $0x60] sm:$0xff]
    %v161 = vld [vmem:[#allocation2 + $0x68] sm:$0xff]
    %v162 = vld [vmem:[#allocation2 + $0x70] sm:$0xff]
    %v163 = vld [vmem:[#allocation2 + $0x78] sm:$0xff]
    %v164 = vld [vmem:[#allocation2 + $0x80] sm:$0xff]
    %v165 = vld [vmem:[#allocation2 + $0x88] sm:$0xff]
    %v166 = vpack.c.bf16 %v154, %v148
    %v167 = vpack.c.bf16 %v155, %v149
    %v168 = vpack.c.bf16 %v156, %v150
    %v169 = vpack.c.bf16 %v157, %v151
    %v170 = vpack.c.bf16 %v158, %v152
    %v171 = vpack.c.bf16 %v159, %v153
    %v172 = vpack.c.bf16 %v160, %v160
    %v173 = vpack.c.bf16 %v161, %v161
    %v174 = vpack.c.bf16 %v162, %v162
    %v175 = vpack.c.bf16 %v163, %v163
    %v176 = vpack.c.bf16 %v164, %v164
    %v177 = vpack.c.bf16 %v165, %v165
    %v178 = vld [vmem:[#allocation5] sm:$0xff]
    %v179 = vld [vmem:[#allocation5 + $0x8] sm:$0xff]
    %v180 = vld [vmem:[#allocation5 + $0x10] sm:$0xff]
    %v181 = vld [vmem:[#allocation5 + $0x18] sm:$0xff]
    %v182 = vld [vmem:[#allocation5 + $0x20] sm:$0xff]
    %v183 = vld [vmem:[#allocation5 + $0x28] sm:$0xff]
    %v184 = vld [vmem:[#allocation5 + $0x30] sm:$0xff]
    %v185 = vld [vmem:[#allocation5 + $0x38] sm:$0xff]
    %v186 = vld [vmem:[#allocation5 + $0x40] sm:$0xff]
    %v187 = vld [vmem:[#allocation5 + $0x48] sm:$0xff]
    %v188 = vld [vmem:[#allocation5 + $0x50] sm:$0xff]
    %v189 = vld [vmem:[#allocation5 + $0x58] sm:$0xff]
    %v190 = vld [vmem:[#allocation5 + $0x60] sm:$0xff]
    %v191 = vld [vmem:[#allocation5 + $0x68] sm:$0xff]
    %v192 = vld [vmem:[#allocation5 + $0x70] sm:$0xff]
    %v193 = vld [vmem:[#allocation5 + $0x78] sm:$0xff]
    %v194 = vld [vmem:[#allocation5 + $0x80] sm:$0xff]
    %v195 = vld [vmem:[#allocation5 + $0x88] sm:$0xff]
    %v196 = vld [vmem:[#allocation5 + $0x90] sm:$0xff]
    %v197 = vld [vmem:[#allocation5 + $0x98] sm:$0xff]
    %v198 = vld [vmem:[#allocation5 + $0xa0] sm:$0xff]
    %v199 = vld [vmem:[#allocation5 + $0xa8] sm:$0xff]
    %v200 = vld [vmem:[#allocation5 + $0xb0] sm:$0xff]
    %v201 = vld [vmem:[#allocation5 + $0xb8] sm:$0xff]
    %v202 = vld [vmem:[#allocation5 + $0xc0] sm:$0xff]
    %v203 = vld [vmem:[#allocation5 + $0xc8] sm:$0xff]
    %v204 = vld [vmem:[#allocation5 + $0xd0] sm:$0xff]
    %v205 = vld [vmem:[#allocation5 + $0xd8] sm:$0xff]
    %v206 = vld [vmem:[#allocation5 + $0xe0] sm:$0xff]
    %v207 = vld [vmem:[#allocation5 + $0xe8] sm:$0xff]
    %v208 = vld [vmem:[#allocation5 + $0xf0] sm:$0xff]
    %v209 = vld [vmem:[#allocation5 + $0xf8] sm:$0xff]
    %v210 = vld [vmem:[#allocation5 + $0x100] sm:$0xff]
    %v211 = vld [vmem:[#allocation5 + $0x108] sm:$0xff]
    %v212 = vld [vmem:[#allocation5 + $0x110] sm:$0xff]
    %v213 = vld [vmem:[#allocation5 + $0x118] sm:$0xff]
    %v214 = vld [vmem:[#allocation5 + $0x120] sm:$0xff]
    %v215 = vld [vmem:[#allocation5 + $0x128] sm:$0xff]
    %v216 = vld [vmem:[#allocation5 + $0x130] sm:$0xff]
    %v217 = vld [vmem:[#allocation5 + $0x138] sm:$0xff]
    %v218 = vld [vmem:[#allocation5 + $0x140] sm:$0xff]
    %v219 = vld [vmem:[#allocation5 + $0x148] sm:$0xff]
    %v220 = vld [vmem:[#allocation5 + $0x150] sm:$0xff]
    %v221 = vld [vmem:[#allocation5 + $0x158] sm:$0xff]
    %v222 = vld [vmem:[#allocation5 + $0x160] sm:$0xff]
    %v223 = vld [vmem:[#allocation5 + $0x168] sm:$0xff]
    %v224 = vld [vmem:[#allocation5 + $0x170] sm:$0xff]
    %v225 = vld [vmem:[#allocation5 + $0x178] sm:$0xff]
    %v226 = vld [vmem:[#allocation5 + $0x180] sm:$0xff]
    %v227 = vld [vmem:[#allocation5 + $0x188] sm:$0xff]
    %v228 = vld [vmem:[#allocation5 + $0x190] sm:$0xff]
    %v229 = vld [vmem:[#allocation5 + $0x198] sm:$0xff]
    %v230 = vld [vmem:[#allocation5 + $0x1a0] sm:$0xff]
    %v231 = vld [vmem:[#allocation5 + $0x1a8] sm:$0xff]
    %v232 = vld [vmem:[#allocation5 + $0x1b0] sm:$0xff]
    %v233 = vld [vmem:[#allocation5 + $0x1b8] sm:$0xff]
    %v234 = vld [vmem:[#allocation5 + $0x1c0] sm:$0xff]
    %v235 = vld [vmem:[#allocation5 + $0x1c8] sm:$0xff]
    %v236 = vld [vmem:[#allocation5 + $0x1d0] sm:$0xff]
    %v237 = vld [vmem:[#allocation5 + $0x1d8] sm:$0xff]
    %v238 = vld [vmem:[#allocation5 + $0x1e0] sm:$0xff]
    %v239 = vld [vmem:[#allocation5 + $0x1e8] sm:$0xff]
    %v240 = vld [vmem:[#allocation5 + $0x1f0] sm:$0xff]
    %v241 = vld [vmem:[#allocation5 + $0x1f8] sm:$0xff]
    %v242 = vld [vmem:[#allocation5 + $0x200] sm:$0xff]
    %v243 = vld [vmem:[#allocation5 + $0x208] sm:$0xff]
    %v244 = vld [vmem:[#allocation5 + $0x210] sm:$0xff]
    %v245 = vld [vmem:[#allocation5 + $0x218] sm:$0xff]
    %v246 = vld [vmem:[#allocation5 + $0x220] sm:$0xff]
    %v247 = vld [vmem:[#allocation5 + $0x228] sm:$0xff]
    %v248 = vld [vmem:[#allocation5 + $0x230] sm:$0xff]
    %v249 = vld [vmem:[#allocation5 + $0x238] sm:$0xff]
    %v250 = vld [vmem:[#allocation5 + $0x240] sm:$0xff]
    %v251 = vld [vmem:[#allocation5 + $0x248] sm:$0xff]
    %v252 = vld [vmem:[#allocation5 + $0x250] sm:$0xff]
    %v253 = vld [vmem:[#allocation5 + $0x258] sm:$0xff]
    %v254 = vld [vmem:[#allocation5 + $0x260] sm:$0xff]
    %v255 = vld [vmem:[#allocation5 + $0x268] sm:$0xff]
    %v256 = vld [vmem:[#allocation5 + $0x270] sm:$0xff]
    %v257 = vld [vmem:[#allocation5 + $0x278] sm:$0xff]
    %v258 = vld [vmem:[#allocation5 + $0x280] sm:$0xff]
    %v259 = vld [vmem:[#allocation5 + $0x288] sm:$0xff]
    %v260 = vld [vmem:[#allocation5 + $0x290] sm:$0xff]
    %v261 = vld [vmem:[#allocation5 + $0x298] sm:$0xff]
    %v262 = vld [vmem:[#allocation5 + $0x2a0] sm:$0xff]
    %v263 = vld [vmem:[#allocation5 + $0x2a8] sm:$0xff]
    %v264 = vld [vmem:[#allocation5 + $0x2b0] sm:$0xff]
    %v265 = vld [vmem:[#allocation5 + $0x2b8] sm:$0xff]
    %v266 = vld [vmem:[#allocation5 + $0x2c0] sm:$0xff]
    %v267 = vld [vmem:[#allocation5 + $0x2c8] sm:$0xff]
    %v268 = vld [vmem:[#allocation5 + $0x2d0] sm:$0xff]
    %v269 = vld [vmem:[#allocation5 + $0x2d8] sm:$0xff]
    %v270 = vld [vmem:[#allocation5 + $0x2e0] sm:$0xff]
    %v271 = vld [vmem:[#allocation5 + $0x2e8] sm:$0xff]
    %v272 = vld [vmem:[#allocation5 + $0x2f0] sm:$0xff]
    %v273 = vld [vmem:[#allocation5 + $0x2f8] sm:$0xff]
    %v274 = vld [vmem:[#allocation5 + $0x300] sm:$0xff]
    %v275 = vld [vmem:[#allocation5 + $0x308] sm:$0xff]
    %v276 = vld [vmem:[#allocation5 + $0x310] sm:$0xff]
    %v277 = vld [vmem:[#allocation5 + $0x318] sm:$0xff]
    %v278 = vld [vmem:[#allocation5 + $0x320] sm:$0xff]
    %v279 = vld [vmem:[#allocation5 + $0x328] sm:$0xff]
    %v280 = vld [vmem:[#allocation5 + $0x330] sm:$0xff]
    %v281 = vld [vmem:[#allocation5 + $0x338] sm:$0xff]
    %v282 = vld [vmem:[#allocation5 + $0x340] sm:$0xff]
    %v283 = vld [vmem:[#allocation5 + $0x348] sm:$0xff]
    %v284 = vld [vmem:[#allocation5 + $0x350] sm:$0xff]
    %v285 = vld [vmem:[#allocation5 + $0x358] sm:$0xff]
    %v286 = vld [vmem:[#allocation5 + $0x360] sm:$0xff]
    %v287 = vld [vmem:[#allocation5 + $0x368] sm:$0xff]
    %v288 = vld [vmem:[#allocation5 + $0x370] sm:$0xff]
    %v289 = vld [vmem:[#allocation5 + $0x378] sm:$0xff]
    %v290 = vld [vmem:[#allocation5 + $0x380] sm:$0xff]
    %v291 = vld [vmem:[#allocation5 + $0x388] sm:$0xff]
    %v292 = vld [vmem:[#allocation5 + $0x390] sm:$0xff]
    %v293 = vld [vmem:[#allocation5 + $0x398] sm:$0xff]
    %v294 = vld [vmem:[#allocation5 + $0x3a0] sm:$0xff]
    %v295 = vld [vmem:[#allocation5 + $0x3a8] sm:$0xff]
    %v296 = vld [vmem:[#allocation5 + $0x3b0] sm:$0xff]
    %v297 = vld [vmem:[#allocation5 + $0x3b8] sm:$0xff]
    %v298 = vld [vmem:[#allocation5 + $0x3c0] sm:$0xff]
    %v299 = vld [vmem:[#allocation5 + $0x3c8] sm:$0xff]
    %v300 = vld [vmem:[#allocation5 + $0x3d0] sm:$0xff]
    %v301 = vld [vmem:[#allocation5 + $0x3d8] sm:$0xff]
    %v302 = vld [vmem:[#allocation5 + $0x3e0] sm:$0xff]
    %v303 = vld [vmem:[#allocation5 + $0x3e8] sm:$0xff]
    %v304 = vld [vmem:[#allocation5 + $0x3f0] sm:$0xff]
    %v305 = vld [vmem:[#allocation5 + $0x3f8] sm:$0xff]
    %v306 = vld [vmem:[#allocation5 + $0x400] sm:$0xff]
    %v307 = vld [vmem:[#allocation5 + $0x408] sm:$0xff]
    %v308 = vld [vmem:[#allocation5 + $0x410] sm:$0xff]
    %v309 = vld [vmem:[#allocation5 + $0x418] sm:$0xff]
    %v310 = vld [vmem:[#allocation5 + $0x420] sm:$0xff]
    %v311 = vld [vmem:[#allocation5 + $0x428] sm:$0xff]
    %v312 = vld [vmem:[#allocation5 + $0x430] sm:$0xff]
    %v313 = vld [vmem:[#allocation5 + $0x438] sm:$0xff]
    %v314 = vld [vmem:[#allocation5 + $0x440] sm:$0xff]
    %v315 = vld [vmem:[#allocation5 + $0x448] sm:$0xff]
    %v316 = vld [vmem:[#allocation5 + $0x450] sm:$0xff]
    %v317 = vld [vmem:[#allocation5 + $0x458] sm:$0xff]
    %v318 = vld [vmem:[#allocation5 + $0x460] sm:$0xff]
    %v319 = vld [vmem:[#allocation5 + $0x468] sm:$0xff]
    %v320 = vld [vmem:[#allocation5 + $0x470] sm:$0xff]
    %v321 = vld [vmem:[#allocation5 + $0x478] sm:$0xff]
    %v322 = vld [vmem:[#allocation5 + $0x480] sm:$0xff]
    %v323 = vld [vmem:[#allocation5 + $0x488] sm:$0xff]
    %v324 = vld [vmem:[#allocation5 + $0x490] sm:$0xff]
    %v325 = vld [vmem:[#allocation5 + $0x498] sm:$0xff]
    %v326 = vld [vmem:[#allocation5 + $0x4a0] sm:$0xff]
    %v327 = vld [vmem:[#allocation5 + $0x4a8] sm:$0xff]
    %v328 = vld [vmem:[#allocation5 + $0x4b0] sm:$0xff]
    %v329 = vld [vmem:[#allocation5 + $0x4b8] sm:$0xff]
    %v330 = vld [vmem:[#allocation5 + $0x4c0] sm:$0xff]
    %v331 = vld [vmem:[#allocation5 + $0x4c8] sm:$0xff]
    %v332 = vld [vmem:[#allocation5 + $0x4d0] sm:$0xff]
    %v333 = vld [vmem:[#allocation5 + $0x4d8] sm:$0xff]
    %v334 = vld [vmem:[#allocation5 + $0x4e0] sm:$0xff]
    %v335 = vld [vmem:[#allocation5 + $0x4e8] sm:$0xff]
    %v336 = vld [vmem:[#allocation5 + $0x4f0] sm:$0xff]
    %v337 = vld [vmem:[#allocation5 + $0x4f8] sm:$0xff]
    %v338 = vld [vmem:[#allocation5 + $0x500] sm:$0xff]
    %v339 = vld [vmem:[#allocation5 + $0x508] sm:$0xff]
    %v340 = vld [vmem:[#allocation5 + $0x510] sm:$0xff]
    %v341 = vld [vmem:[#allocation5 + $0x518] sm:$0xff]
    %v342 = vld [vmem:[#allocation5 + $0x520] sm:$0xff]
    %v343 = vld [vmem:[#allocation5 + $0x528] sm:$0xff]
    %v344 = vld [vmem:[#allocation5 + $0x530] sm:$0xff]
    %v345 = vld [vmem:[#allocation5 + $0x538] sm:$0xff]
    %v346 = vld [vmem:[#allocation5 + $0x540] sm:$0xff]
    %v347 = vld [vmem:[#allocation5 + $0x548] sm:$0xff]
    %v348 = vld [vmem:[#allocation5 + $0x550] sm:$0xff]
    %v349 = vld [vmem:[#allocation5 + $0x558] sm:$0xff]
    %v350 = vld [vmem:[#allocation5 + $0x560] sm:$0xff]
    %v351 = vld [vmem:[#allocation5 + $0x568] sm:$0xff]
    %v352 = vld [vmem:[#allocation5 + $0x570] sm:$0xff]
    %v353 = vld [vmem:[#allocation5 + $0x578] sm:$0xff]
    %v354 = vld [vmem:[#allocation5 + $0x580] sm:$0xff]
    %v355 = vld [vmem:[#allocation5 + $0x588] sm:$0xff]
    %v356 = vld [vmem:[#allocation5 + $0x590] sm:$0xff]
    %v357 = vld [vmem:[#allocation5 + $0x598] sm:$0xff]
    %v358 = vld [vmem:[#allocation5 + $0x5a0] sm:$0xff]
    %v359 = vld [vmem:[#allocation5 + $0x5a8] sm:$0xff]
    %v360 = vld [vmem:[#allocation5 + $0x5b0] sm:$0xff]
    %v361 = vld [vmem:[#allocation5 + $0x5b8] sm:$0xff]
    %v362 = vld [vmem:[#allocation5 + $0x5c0] sm:$0xff]
    %v363 = vld [vmem:[#allocation5 + $0x5c8] sm:$0xff]
    %v364 = vld [vmem:[#allocation5 + $0x5d0] sm:$0xff]
    %v365 = vld [vmem:[#allocation5 + $0x5d8] sm:$0xff]
    %v366 = vld [vmem:[#allocation5 + $0x5e0] sm:$0xff]
    %v367 = vld [vmem:[#allocation5 + $0x5e8] sm:$0xff]
    %v368 = vld [vmem:[#allocation5 + $0x5f0] sm:$0xff]
    %v369 = vld [vmem:[#allocation5 + $0x5f8] sm:$0xff]
    %v370 = vld [vmem:[#allocation5 + $0x600] sm:$0xff]
    %v371 = vld [vmem:[#allocation5 + $0x608] sm:$0xff]
    %v372 = vld [vmem:[#allocation5 + $0x610] sm:$0xff]
    %v373 = vld [vmem:[#allocation5 + $0x618] sm:$0xff]
    %v374 = vld [vmem:[#allocation5 + $0x620] sm:$0xff]
    %v375 = vld [vmem:[#allocation5 + $0x628] sm:$0xff]
    %v376 = vld [vmem:[#allocation5 + $0x630] sm:$0xff]
    %v377 = vld [vmem:[#allocation5 + $0x638] sm:$0xff]
    %v378 = vld [vmem:[#allocation5 + $0x640] sm:$0xff]
    %v379 = vld [vmem:[#allocation5 + $0x648] sm:$0xff]
    %v380 = vld [vmem:[#allocation5 + $0x650] sm:$0xff]
    %v381 = vld [vmem:[#allocation5 + $0x658] sm:$0xff]
    %v382 = vld [vmem:[#allocation5 + $0x660] sm:$0xff]
    %v383 = vld [vmem:[#allocation5 + $0x668] sm:$0xff]
    %v384 = vld [vmem:[#allocation5 + $0x670] sm:$0xff]
    %v385 = vld [vmem:[#allocation5 + $0x678] sm:$0xff]
    %v386 = vld [vmem:[#allocation5 + $0x680] sm:$0xff]
    %v387 = vld [vmem:[#allocation5 + $0x688] sm:$0xff]
    %v388 = vld [vmem:[#allocation5 + $0x690] sm:$0xff]
    %v389 = vld [vmem:[#allocation5 + $0x698] sm:$0xff]
    %v390 = vld [vmem:[#allocation5 + $0x6a0] sm:$0xff]
    %v391 = vld [vmem:[#allocation5 + $0x6a8] sm:$0xff]
    %v392 = vld [vmem:[#allocation5 + $0x6b0] sm:$0xff]
    %v393 = vld [vmem:[#allocation5 + $0x6b8] sm:$0xff]
    %v394 = vld [vmem:[#allocation5 + $0x6c0] sm:$0xff]
    %v395 = vld [vmem:[#allocation5 + $0x6c8] sm:$0xff]
    %v396 = vld [vmem:[#allocation5 + $0x6d0] sm:$0xff]
    %v397 = vld [vmem:[#allocation5 + $0x6d8] sm:$0xff]
    %v398 = vld [vmem:[#allocation5 + $0x6e0] sm:$0xff]
    %v399 = vld [vmem:[#allocation5 + $0x6e8] sm:$0xff]
    %v400 = vld [vmem:[#allocation5 + $0x6f0] sm:$0xff]
    %v401 = vld [vmem:[#allocation5 + $0x6f8] sm:$0xff]
    %v402 = vld [vmem:[#allocation5 + $0x700] sm:$0xff]
    %v403 = vld [vmem:[#allocation5 + $0x708] sm:$0xff]
    %v404 = vld [vmem:[#allocation5 + $0x710] sm:$0xff]
    %v405 = vld [vmem:[#allocation5 + $0x718] sm:$0xff]
    %v406 = vld [vmem:[#allocation5 + $0x720] sm:$0xff]
    %v407 = vld [vmem:[#allocation5 + $0x728] sm:$0xff]
    %v408 = vld [vmem:[#allocation5 + $0x730] sm:$0xff]
    %v409 = vld [vmem:[#allocation5 + $0x738] sm:$0xff]
    %v410 = vld [vmem:[#allocation5 + $0x740] sm:$0xff]
    %v411 = vld [vmem:[#allocation5 + $0x748] sm:$0xff]
    %v412 = vld [vmem:[#allocation5 + $0x750] sm:$0xff]
    %v413 = vld [vmem:[#allocation5 + $0x758] sm:$0xff]
    %v414 = vld [vmem:[#allocation5 + $0x760] sm:$0xff]
    %v415 = vld [vmem:[#allocation5 + $0x768] sm:$0xff]
    %v416 = vld [vmem:[#allocation5 + $0x770] sm:$0xff]
    %v417 = vld [vmem:[#allocation5 + $0x778] sm:$0xff]
    %v418 = vld [vmem:[#allocation5 + $0x780] sm:$0xff]
    %v419 = vld [vmem:[#allocation5 + $0x788] sm:$0xff]
    %v420 = vld [vmem:[#allocation5 + $0x790] sm:$0xff]
    %v421 = vld [vmem:[#allocation5 + $0x798] sm:$0xff]
    %v422 = vld [vmem:[#allocation5 + $0x7a0] sm:$0xff]
    %v423 = vld [vmem:[#allocation5 + $0x7a8] sm:$0xff]
    %v424 = vld [vmem:[#allocation5 + $0x7b0] sm:$0xff]
    %v425 = vld [vmem:[#allocation5 + $0x7b8] sm:$0xff]
    %v426 = vld [vmem:[#allocation5 + $0x7c0] sm:$0xff]
    %v427 = vld [vmem:[#allocation5 + $0x7c8] sm:$0xff]
    %v428 = vld [vmem:[#allocation5 + $0x7d0] sm:$0xff]
    %v429 = vld [vmem:[#allocation5 + $0x7d8] sm:$0xff]
    %v430 = vld [vmem:[#allocation5 + $0x7e0] sm:$0xff]
    %v431 = vld [vmem:[#allocation5 + $0x7e8] sm:$0xff]
    %v432 = vld [vmem:[#allocation5 + $0x7f0] sm:$0xff]
    %v433 = vld [vmem:[#allocation5 + $0x7f8] sm:$0xff]
    %v434 = vld [vmem:[#allocation5 + $0x800] sm:$0xff]
    %v435 = vld [vmem:[#allocation5 + $0x808] sm:$0xff]
    %v436 = vld [vmem:[#allocation5 + $0x810] sm:$0xff]
    %v437 = vld [vmem:[#allocation5 + $0x818] sm:$0xff]
    %v438 = vld [vmem:[#allocation5 + $0x820] sm:$0xff]
    %v439 = vld [vmem:[#allocation5 + $0x828] sm:$0xff]
    %v440 = vld [vmem:[#allocation5 + $0x830] sm:$0xff]
    %v441 = vld [vmem:[#allocation5 + $0x838] sm:$0xff]
    %v442 = vld [vmem:[#allocation5 + $0x840] sm:$0xff]
    %v443 = vld [vmem:[#allocation5 + $0x848] sm:$0xff]
    %v444 = vld [vmem:[#allocation5 + $0x850] sm:$0xff]
    %v445 = vld [vmem:[#allocation5 + $0x858] sm:$0xff]
    %v446 = vld [vmem:[#allocation5 + $0x860] sm:$0xff]
    %v447 = vld [vmem:[#allocation5 + $0x868] sm:$0xff]
    %v448 = vld [vmem:[#allocation5 + $0x870] sm:$0xff]
    %v449 = vld [vmem:[#allocation5 + $0x878] sm:$0xff]
    %v450 = vld [vmem:[#allocation5 + $0x880] sm:$0xff]
    %v451 = vld [vmem:[#allocation5 + $0x888] sm:$0xff]
    %v452 = vld [vmem:[#allocation5 + $0x890] sm:$0xff]
    %v453 = vld [vmem:[#allocation5 + $0x898] sm:$0xff]
    %v454 = vld [vmem:[#allocation5 + $0x8a0] sm:$0xff]
    %v455 = vld [vmem:[#allocation5 + $0x8a8] sm:$0xff]
    %v456 = vld [vmem:[#allocation5 + $0x8b0] sm:$0xff]
    %v457 = vld [vmem:[#allocation5 + $0x8b8] sm:$0xff]
    %v458 = vld [vmem:[#allocation5 + $0x8c0] sm:$0xff]
    %v459 = vld [vmem:[#allocation5 + $0x8c8] sm:$0xff]
    %v460 = vld [vmem:[#allocation5 + $0x8d0] sm:$0xff]
    %v461 = vld [vmem:[#allocation5 + $0x8d8] sm:$0xff]
    %v462 = vld [vmem:[#allocation5 + $0x8e0] sm:$0xff]
    %v463 = vld [vmem:[#allocation5 + $0x8e8] sm:$0xff]
    %v464 = vld [vmem:[#allocation5 + $0x8f0] sm:$0xff]
    %v465 = vld [vmem:[#allocation5 + $0x8f8] sm:$0xff]
    %v466 = vld [vmem:[#allocation5 + $0x900] sm:$0xff]
    %v467 = vld [vmem:[#allocation5 + $0x908] sm:$0xff]
    %v468 = vld [vmem:[#allocation5 + $0x910] sm:$0xff]
    %v469 = vld [vmem:[#allocation5 + $0x918] sm:$0xff]
    %v470 = vld [vmem:[#allocation5 + $0x920] sm:$0xff]
    %v471 = vld [vmem:[#allocation5 + $0x928] sm:$0xff]
    %v472 = vld [vmem:[#allocation5 + $0x930] sm:$0xff]
    %v473 = vld [vmem:[#allocation5 + $0x938] sm:$0xff]
    %v474 = vld [vmem:[#allocation5 + $0x940] sm:$0xff]
    %v475 = vld [vmem:[#allocation5 + $0x948] sm:$0xff]
    %v476 = vld [vmem:[#allocation5 + $0x950] sm:$0xff]
    %v477 = vld [vmem:[#allocation5 + $0x958] sm:$0xff]
    %v478 = vld [vmem:[#allocation5 + $0x960] sm:$0xff]
    %v479 = vld [vmem:[#allocation5 + $0x968] sm:$0xff]
    %v480 = vld [vmem:[#allocation5 + $0x970] sm:$0xff]
    %v481 = vld [vmem:[#allocation5 + $0x978] sm:$0xff]
    %v482 = vld [vmem:[#allocation5 + $0x980] sm:$0xff]
    %v483 = vld [vmem:[#allocation5 + $0x988] sm:$0xff]
    %v484 = vld [vmem:[#allocation5 + $0x990] sm:$0xff]
    %v485 = vld [vmem:[#allocation5 + $0x998] sm:$0xff]
    %v486 = vld [vmem:[#allocation5 + $0x9a0] sm:$0xff]
    %v487 = vld [vmem:[#allocation5 + $0x9a8] sm:$0xff]
    %v488 = vld [vmem:[#allocation5 + $0x9b0] sm:$0xff]
    %v489 = vld [vmem:[#allocation5 + $0x9b8] sm:$0xff]
    %v490 = vld [vmem:[#allocation5 + $0x9c0] sm:$0xff]
    %v491 = vld [vmem:[#allocation5 + $0x9c8] sm:$0xff]
    %v492 = vld [vmem:[#allocation5 + $0x9d0] sm:$0xff]
    %v493 = vld [vmem:[#allocation5 + $0x9d8] sm:$0xff]
    %v494 = vld [vmem:[#allocation5 + $0x9e0] sm:$0xff]
    %v495 = vld [vmem:[#allocation5 + $0x9e8] sm:$0xff]
    %v496 = vld [vmem:[#allocation5 + $0x9f0] sm:$0xff]
    %v497 = vld [vmem:[#allocation5 + $0x9f8] sm:$0xff]
    %v498 = vld [vmem:[#allocation5 + $0xa00] sm:$0xff]
    %v499 = vld [vmem:[#allocation5 + $0xa08] sm:$0xff]
    %v500 = vld [vmem:[#allocation5 + $0xa10] sm:$0xff]
    %v501 = vld [vmem:[#allocation5 + $0xa18] sm:$0xff]
    %v502 = vld [vmem:[#allocation5 + $0xa20] sm:$0xff]
    %v503 = vld [vmem:[#allocation5 + $0xa28] sm:$0xff]
    %v504 = vld [vmem:[#allocation5 + $0xa30] sm:$0xff]
    %v505 = vld [vmem:[#allocation5 + $0xa38] sm:$0xff]
    %v506 = vld [vmem:[#allocation5 + $0xa40] sm:$0xff]
    %v507 = vld [vmem:[#allocation5 + $0xa48] sm:$0xff]
    %v508 = vld [vmem:[#allocation5 + $0xa50] sm:$0xff]
    %v509 = vld [vmem:[#allocation5 + $0xa58] sm:$0xff]
    %v510 = vld [vmem:[#allocation5 + $0xa60] sm:$0xff]
    %v511 = vld [vmem:[#allocation5 + $0xa68] sm:$0xff]
    %v512 = vld [vmem:[#allocation5 + $0xa70] sm:$0xff]
    %v513 = vld [vmem:[#allocation5 + $0xa78] sm:$0xff]
    %v514 = vld [vmem:[#allocation5 + $0xa80] sm:$0xff]
    %v515 = vld [vmem:[#allocation5 + $0xa88] sm:$0xff]
    %v516 = vld [vmem:[#allocation5 + $0xa90] sm:$0xff]
    %v517 = vld [vmem:[#allocation5 + $0xa98] sm:$0xff]
    %v518 = vld [vmem:[#allocation5 + $0xaa0] sm:$0xff]
    %v519 = vld [vmem:[#allocation5 + $0xaa8] sm:$0xff]
    %v520 = vld [vmem:[#allocation5 + $0xab0] sm:$0xff]
    %v521 = vld [vmem:[#allocation5 + $0xab8] sm:$0xff]
    %v522 = vld [vmem:[#allocation5 + $0xac0] sm:$0xff]
    %v523 = vld [vmem:[#allocation5 + $0xac8] sm:$0xff]
    %v524 = vld [vmem:[#allocation5 + $0xad0] sm:$0xff]
    %v525 = vld [vmem:[#allocation5 + $0xad8] sm:$0xff]
    %v526 = vld [vmem:[#allocation5 + $0xae0] sm:$0xff]
    %v527 = vld [vmem:[#allocation5 + $0xae8] sm:$0xff]
    %v528 = vld [vmem:[#allocation5 + $0xaf0] sm:$0xff]
    %v529 = vld [vmem:[#allocation5 + $0xaf8] sm:$0xff]
    %v530 = vld [vmem:[#allocation5 + $0xb00] sm:$0xff]
    %v531 = vld [vmem:[#allocation5 + $0xb08] sm:$0xff]
    %v532 = vld [vmem:[#allocation5 + $0xb10] sm:$0xff]
    %v533 = vld [vmem:[#allocation5 + $0xb18] sm:$0xff]
    %v534 = vld [vmem:[#allocation5 + $0xb20] sm:$0xff]
    %v535 = vld [vmem:[#allocation5 + $0xb28] sm:$0xff]
    %v536 = vld [vmem:[#allocation5 + $0xb30] sm:$0xff]
    %v537 = vld [vmem:[#allocation5 + $0xb38] sm:$0xff]
    %v538 = vld [vmem:[#allocation5 + $0xb40] sm:$0xff]
    %v539 = vld [vmem:[#allocation5 + $0xb48] sm:$0xff]
    %v540 = vld [vmem:[#allocation5 + $0xb50] sm:$0xff]
    %v541 = vld [vmem:[#allocation5 + $0xb58] sm:$0xff]
    %v542 = vld [vmem:[#allocation5 + $0xb60] sm:$0xff]
    %v543 = vld [vmem:[#allocation5 + $0xb68] sm:$0xff]
    %v544 = vld [vmem:[#allocation5 + $0xb70] sm:$0xff]
    %v545 = vld [vmem:[#allocation5 + $0xb78] sm:$0xff]
    %v546 = vld [vmem:[#allocation5 + $0xb80] sm:$0xff]
    %v547 = vld [vmem:[#allocation5 + $0xb88] sm:$0xff]
    %v548 = vld [vmem:[#allocation5 + $0xb90] sm:$0xff]
    %v549 = vld [vmem:[#allocation5 + $0xb98] sm:$0xff]
    %v550 = vld [vmem:[#allocation5 + $0xba0] sm:$0xff]
    %v551 = vld [vmem:[#allocation5 + $0xba8] sm:$0xff]
    %v552 = vld [vmem:[#allocation5 + $0xbb0] sm:$0xff]
    %v553 = vld [vmem:[#allocation5 + $0xbb8] sm:$0xff]
    %v554 = vld [vmem:[#allocation5 + $0xbc0] sm:$0xff]
    %v555 = vld [vmem:[#allocation5 + $0xbc8] sm:$0xff]
    %v556 = vld [vmem:[#allocation5 + $0xbd0] sm:$0xff]
    %v557 = vld [vmem:[#allocation5 + $0xbd8] sm:$0xff]
    %v558 = vld [vmem:[#allocation5 + $0xbe0] sm:$0xff]
    %v559 = vld [vmem:[#allocation5 + $0xbe8] sm:$0xff]
    %v560 = vld [vmem:[#allocation5 + $0xbf0] sm:$0xff]
    %v561 = vld [vmem:[#allocation5 + $0xbf8] sm:$0xff]
    %v562 = vld [vmem:[#allocation7] sm:$0xff]
    %v564 = vlaneseq
    %v565 = vshrl.u32 %v564, 7
    %v566 = vsub.s32 0, %v565
    %v567 = vrot.slane %v562, %v566
    %v568 = vlaneseq
    %v569 = vshrl.u32 %v568, 7
    %v570 = vsub.s32 1, %v569
    %v571 = vrot.slane %v562, %v570
    %v572 = vlaneseq
    %v573 = vshrl.u32 %v572, 7
    %v574 = vsub.s32 2, %v573
    %v575 = vrot.slane %v562, %v574
    %v576 = vlaneseq
    %v577 = vshrl.u32 %v576, 7
    %v578 = vsub.s32 3, %v577
    %v579 = vrot.slane %v562, %v578
    %v580 = vlaneseq
    %v581 = vshrl.u32 %v580, 7
    %v582 = vsub.s32 4, %v581
    %v583 = vrot.slane %v562, %v582
    %v584 = vlaneseq
    %v585 = vshrl.u32 %v584, 7
    %v586 = vsub.s32 5, %v585
    %v587 = vrot.slane %v562, %v586
    %v588 = vlaneseq
    %v589 = vshrl.u32 %v588, 7
    %v590 = vsub.s32 6, %v589
    %v591 = vrot.slane %v562, %v590
    %v592 = vlaneseq
    %v593 = vshrl.u32 %v592, 7
    %v594 = vsub.s32 7, %v593
    %v595 = vrot.slane %v562, %v594
    %v988 = vunpack.c.l.b16 %v178
    %v989 = vunpack.c.h.b16 %v178
    %v990 = vunpack.c.l.b16 %v179
    %v991 = vunpack.c.h.b16 %v179
    %v992 = vunpack.c.l.b16 %v180
    %v993 = vunpack.c.h.b16 %v180
    %v994 = vunpack.c.l.b16 %v181
    %v995 = vunpack.c.h.b16 %v181
    %v996 = vunpack.c.l.b16 %v182
    %v997 = vunpack.c.h.b16 %v182
    %v998 = vunpack.c.l.b16 %v183
    %v999 = vunpack.c.h.b16 %v183
    %v1000 = vunpack.c.l.b16 %v184
    %v1001 = vunpack.c.h.b16 %v184
    %v1002 = vunpack.c.l.b16 %v185
    %v1003 = vunpack.c.h.b16 %v185
    %v1004 = vunpack.c.l.b16 %v186
    %v1005 = vunpack.c.h.b16 %v186
    %v1006 = vunpack.c.l.b16 %v187
    %v1007 = vunpack.c.h.b16 %v187
    %v1008 = vunpack.c.l.b16 %v188
    %v1009 = vunpack.c.h.b16 %v188
    %v1010 = vunpack.c.l.b16 %v189
    %v1011 = vunpack.c.h.b16 %v189
    %v1012 = vunpack.c.l.b16 %v190
    %v1013 = vunpack.c.h.b16 %v190
    %v1014 = vunpack.c.l.b16 %v191
    %v1015 = vunpack.c.h.b16 %v191
    %v1016 = vunpack.c.l.b16 %v192
    %v1017 = vunpack.c.h.b16 %v192
    %v1018 = vunpack.c.l.b16 %v193
    %v1019 = vunpack.c.h.b16 %v193
    %v1020 = vunpack.c.l.b16 %v194
    %v1021 = vunpack.c.h.b16 %v194
    %v1022 = vunpack.c.l.b16 %v195
    %v1023 = vunpack.c.h.b16 %v195
    %v1024 = vunpack.c.l.b16 %v196
    %v1025 = vunpack.c.h.b16 %v196
    %v1026 = vunpack.c.l.b16 %v197
    %v1027 = vunpack.c.h.b16 %v197
    %v1028 = vunpack.c.l.b16 %v198
    %v1029 = vunpack.c.h.b16 %v198
    %v1030 = vunpack.c.l.b16 %v199
    %v1031 = vunpack.c.h.b16 %v199
    %v1032 = vunpack.c.l.b16 %v200
    %v1033 = vunpack.c.h.b16 %v200
    %v1034 = vunpack.c.l.b16 %v201
    %v1035 = vunpack.c.h.b16 %v201
    %v1036 = vunpack.c.l.b16 %v202
    %v1037 = vunpack.c.h.b16 %v202
    %v1038 = vunpack.c.l.b16 %v203
    %v1039 = vunpack.c.h.b16 %v203
    %v1040 = vunpack.c.l.b16 %v204
    %v1041 = vunpack.c.h.b16 %v204
    %v1042 = vunpack.c.l.b16 %v205
    %v1043 = vunpack.c.h.b16 %v205
    %v1044 = vunpack.c.l.b16 %v206
    %v1045 = vunpack.c.h.b16 %v206
    %v1046 = vunpack.c.l.b16 %v207
    %v1047 = vunpack.c.h.b16 %v207
    %v1048 = vunpack.c.l.b16 %v208
    %v1049 = vunpack.c.h.b16 %v208
    %v1050 = vunpack.c.l.b16 %v209
    %v1051 = vunpack.c.h.b16 %v209
    %v1052 = vunpack.c.l.b16 %v210
    %v1053 = vunpack.c.h.b16 %v210
    %v1054 = vunpack.c.l.b16 %v211
    %v1055 = vunpack.c.h.b16 %v211
    %v1056 = vunpack.c.l.b16 %v212
    %v1057 = vunpack.c.h.b16 %v212
    %v1058 = vunpack.c.l.b16 %v213
    %v1059 = vunpack.c.h.b16 %v213
    %v1060 = vunpack.c.l.b16 %v214
    %v1061 = vunpack.c.h.b16 %v214
    %v1062 = vunpack.c.l.b16 %v215
    %v1063 = vunpack.c.h.b16 %v215
    %v1064 = vunpack.c.l.b16 %v216
    %v1065 = vunpack.c.h.b16 %v216
    %v1066 = vunpack.c.l.b16 %v217
    %v1067 = vunpack.c.h.b16 %v217
    %v1068 = vunpack.c.l.b16 %v218
    %v1069 = vunpack.c.h.b16 %v218
    %v1070 = vunpack.c.l.b16 %v219
    %v1071 = vunpack.c.h.b16 %v219
    %v1072 = vunpack.c.l.b16 %v220
    %v1073 = vunpack.c.h.b16 %v220
    %v1074 = vunpack.c.l.b16 %v221
    %v1075 = vunpack.c.h.b16 %v221
    %v1076 = vunpack.c.l.b16 %v222
    %v1077 = vunpack.c.h.b16 %v222
    %v1078 = vunpack.c.l.b16 %v223
    %v1079 = vunpack.c.h.b16 %v223
    %v1080 = vunpack.c.l.b16 %v224
    %v1081 = vunpack.c.h.b16 %v224
    %v1082 = vunpack.c.l.b16 %v225
    %v1083 = vunpack.c.h.b16 %v225
    %v1084 = vunpack.c.l.b16 %v226
    %v1085 = vunpack.c.h.b16 %v226
    %v1086 = vunpack.c.l.b16 %v227
    %v1087 = vunpack.c.h.b16 %v227
    %v1088 = vunpack.c.l.b16 %v228
    %v1089 = vunpack.c.h.b16 %v228
    %v1090 = vunpack.c.l.b16 %v229
    %v1091 = vunpack.c.h.b16 %v229
    %v1092 = vunpack.c.l.b16 %v230
    %v1093 = vunpack.c.h.b16 %v230
    %v1094 = vunpack.c.l.b16 %v231
    %v1095 = vunpack.c.h.b16 %v231
    %v1096 = vunpack.c.l.b16 %v232
    %v1097 = vunpack.c.h.b16 %v232
    %v1098 = vunpack.c.l.b16 %v233
    %v1099 = vunpack.c.h.b16 %v233
    %v1100 = vunpack.c.l.b16 %v234
    %v1101 = vunpack.c.h.b16 %v234
    %v1102 = vunpack.c.l.b16 %v235
    %v1103 = vunpack.c.h.b16 %v235
    %v1104 = vunpack.c.l.b16 %v236
    %v1105 = vunpack.c.h.b16 %v236
    %v1106 = vunpack.c.l.b16 %v237
    %v1107 = vunpack.c.h.b16 %v237
    %v1108 = vunpack.c.l.b16 %v238
    %v1109 = vunpack.c.h.b16 %v238
    %v1110 = vunpack.c.l.b16 %v239
    %v1111 = vunpack.c.h.b16 %v239
    %v1112 = vunpack.c.l.b16 %v240
    %v1113 = vunpack.c.h.b16 %v240
    %v1114 = vunpack.c.l.b16 %v241
    %v1115 = vunpack.c.h.b16 %v241
    %v1116 = vunpack.c.l.b16 %v242
    %v1117 = vunpack.c.h.b16 %v242
    %v1118 = vunpack.c.l.b16 %v243
    %v1119 = vunpack.c.h.b16 %v243
    %v1120 = vunpack.c.l.b16 %v244
    %v1121 = vunpack.c.h.b16 %v244
    %v1122 = vunpack.c.l.b16 %v245
    %v1123 = vunpack.c.h.b16 %v245
    %v1124 = vunpack.c.l.b16 %v246
    %v1125 = vunpack.c.h.b16 %v246
    %v1126 = vunpack.c.l.b16 %v247
    %v1127 = vunpack.c.h.b16 %v247
    %v1128 = vunpack.c.l.b16 %v248
    %v1129 = vunpack.c.h.b16 %v248
    %v1130 = vunpack.c.l.b16 %v249
    %v1131 = vunpack.c.h.b16 %v249
    %v1132 = vunpack.c.l.b16 %v250
    %v1133 = vunpack.c.h.b16 %v250
    %v1134 = vunpack.c.l.b16 %v251
    %v1135 = vunpack.c.h.b16 %v251
    %v1136 = vunpack.c.l.b16 %v252
    %v1137 = vunpack.c.h.b16 %v252
    %v1138 = vunpack.c.l.b16 %v253
    %v1139 = vunpack.c.h.b16 %v253
    %v1140 = vunpack.c.l.b16 %v254
    %v1141 = vunpack.c.h.b16 %v254
    %v1142 = vunpack.c.l.b16 %v255
    %v1143 = vunpack.c.h.b16 %v255
    %v1144 = vunpack.c.l.b16 %v256
    %v1145 = vunpack.c.h.b16 %v256
    %v1146 = vunpack.c.l.b16 %v257
    %v1147 = vunpack.c.h.b16 %v257
    %v1148 = vunpack.c.l.b16 %v258
    %v1149 = vunpack.c.h.b16 %v258
    %v1150 = vunpack.c.l.b16 %v259
    %v1151 = vunpack.c.h.b16 %v259
    %v1152 = vunpack.c.l.b16 %v260
    %v1153 = vunpack.c.h.b16 %v260
    %v1154 = vunpack.c.l.b16 %v261
    %v1155 = vunpack.c.h.b16 %v261
    %v1156 = vunpack.c.l.b16 %v262
    %v1157 = vunpack.c.h.b16 %v262
    %v1158 = vunpack.c.l.b16 %v263
    %v1159 = vunpack.c.h.b16 %v263
    %v1160 = vunpack.c.l.b16 %v264
    %v1161 = vunpack.c.h.b16 %v264
    %v1162 = vunpack.c.l.b16 %v265
    %v1163 = vunpack.c.h.b16 %v265
    %v1164 = vunpack.c.l.b16 %v266
    %v1165 = vunpack.c.h.b16 %v266
    %v1166 = vunpack.c.l.b16 %v267
    %v1167 = vunpack.c.h.b16 %v267
    %v1168 = vunpack.c.l.b16 %v268
    %v1169 = vunpack.c.h.b16 %v268
    %v1170 = vunpack.c.l.b16 %v269
    %v1171 = vunpack.c.h.b16 %v269
    %v1172 = vunpack.c.l.b16 %v270
    %v1173 = vunpack.c.h.b16 %v270
    %v1174 = vunpack.c.l.b16 %v271
    %v1175 = vunpack.c.h.b16 %v271
    %v1176 = vunpack.c.l.b16 %v272
    %v1177 = vunpack.c.h.b16 %v272
    %v1178 = vunpack.c.l.b16 %v273
    %v1179 = vunpack.c.h.b16 %v273
    %v1180 = vunpack.c.l.b16 %v274
    %v1181 = vunpack.c.h.b16 %v274
    %v1182 = vunpack.c.l.b16 %v275
    %v1183 = vunpack.c.h.b16 %v275
    %v1184 = vunpack.c.l.b16 %v276
    %v1185 = vunpack.c.h.b16 %v276
    %v1186 = vunpack.c.l.b16 %v277
    %v1187 = vunpack.c.h.b16 %v277
    %v1188 = vunpack.c.l.b16 %v278
    %v1189 = vunpack.c.h.b16 %v278
    %v1190 = vunpack.c.l.b16 %v279
    %v1191 = vunpack.c.h.b16 %v279
    %v1192 = vunpack.c.l.b16 %v280
    %v1193 = vunpack.c.h.b16 %v280
    %v1194 = vunpack.c.l.b16 %v281
    %v1195 = vunpack.c.h.b16 %v281
    %v1196 = vunpack.c.l.b16 %v282
    %v1197 = vunpack.c.h.b16 %v282
    %v1198 = vunpack.c.l.b16 %v283
    %v1199 = vunpack.c.h.b16 %v283
    %v1200 = vunpack.c.l.b16 %v284
    %v1201 = vunpack.c.h.b16 %v284
    %v1202 = vunpack.c.l.b16 %v285
    %v1203 = vunpack.c.h.b16 %v285
    %v1204 = vunpack.c.l.b16 %v286
    %v1205 = vunpack.c.h.b16 %v286
    %v1206 = vunpack.c.l.b16 %v287
    %v1207 = vunpack.c.h.b16 %v287
    %v1208 = vunpack.c.l.b16 %v288
    %v1209 = vunpack.c.h.b16 %v288
    %v1210 = vunpack.c.l.b16 %v289
    %v1211 = vunpack.c.h.b16 %v289
    %v1212 = vunpack.c.l.b16 %v290
    %v1213 = vunpack.c.h.b16 %v290
    %v1214 = vunpack.c.l.b16 %v291
    %v1215 = vunpack.c.h.b16 %v291
    %v1216 = vunpack.c.l.b16 %v292
    %v1217 = vunpack.c.h.b16 %v292
    %v1218 = vunpack.c.l.b16 %v293
    %v1219 = vunpack.c.h.b16 %v293
    %v1220 = vunpack.c.l.b16 %v294
    %v1221 = vunpack.c.h.b16 %v294
    %v1222 = vunpack.c.l.b16 %v295
    %v1223 = vunpack.c.h.b16 %v295
    %v1224 = vunpack.c.l.b16 %v296
    %v1225 = vunpack.c.h.b16 %v296
    %v1226 = vunpack.c.l.b16 %v297
    %v1227 = vunpack.c.h.b16 %v297
    %v1228 = vunpack.c.l.b16 %v298
    %v1229 = vunpack.c.h.b16 %v298
    %v1230 = vunpack.c.l.b16 %v299
    %v1231 = vunpack.c.h.b16 %v299
    %v1232 = vunpack.c.l.b16 %v300
    %v1233 = vunpack.c.h.b16 %v300
    %v1234 = vunpack.c.l.b16 %v301
    %v1235 = vunpack.c.h.b16 %v301
    %v1236 = vunpack.c.l.b16 %v302
    %v1237 = vunpack.c.h.b16 %v302
    %v1238 = vunpack.c.l.b16 %v303
    %v1239 = vunpack.c.h.b16 %v303
    %v1240 = vunpack.c.l.b16 %v304
    %v1241 = vunpack.c.h.b16 %v304
    %v1242 = vunpack.c.l.b16 %v305
    %v1243 = vunpack.c.h.b16 %v305
    %v1244 = vunpack.c.l.b16 %v306
    %v1245 = vunpack.c.h.b16 %v306
    %v1246 = vunpack.c.l.b16 %v307
    %v1247 = vunpack.c.h.b16 %v307
    %v1248 = vunpack.c.l.b16 %v308
    %v1249 = vunpack.c.h.b16 %v308
    %v1250 = vunpack.c.l.b16 %v309
    %v1251 = vunpack.c.h.b16 %v309
    %v1252 = vunpack.c.l.b16 %v310
    %v1253 = vunpack.c.h.b16 %v310
    %v1254 = vunpack.c.l.b16 %v311
    %v1255 = vunpack.c.h.b16 %v311
    %v1256 = vunpack.c.l.b16 %v312
    %v1257 = vunpack.c.h.b16 %v312
    %v1258 = vunpack.c.l.b16 %v313
    %v1259 = vunpack.c.h.b16 %v313
    %v1260 = vunpack.c.l.b16 %v314
    %v1261 = vunpack.c.h.b16 %v314
    %v1262 = vunpack.c.l.b16 %v315
    %v1263 = vunpack.c.h.b16 %v315
    %v1264 = vunpack.c.l.b16 %v316
    %v1265 = vunpack.c.h.b16 %v316
    %v1266 = vunpack.c.l.b16 %v317
    %v1267 = vunpack.c.h.b16 %v317
    %v1268 = vunpack.c.l.b16 %v318
    %v1269 = vunpack.c.h.b16 %v318
    %v1270 = vunpack.c.l.b16 %v319
    %v1271 = vunpack.c.h.b16 %v319
    %v1272 = vunpack.c.l.b16 %v320
    %v1273 = vunpack.c.h.b16 %v320
    %v1274 = vunpack.c.l.b16 %v321
    %v1275 = vunpack.c.h.b16 %v321
    %v1276 = vunpack.c.l.b16 %v322
    %v1277 = vunpack.c.h.b16 %v322
    %v1278 = vunpack.c.l.b16 %v323
    %v1279 = vunpack.c.h.b16 %v323
    %v1280 = vunpack.c.l.b16 %v324
    %v1281 = vunpack.c.h.b16 %v324
    %v1282 = vunpack.c.l.b16 %v325
    %v1283 = vunpack.c.h.b16 %v325
    %v1284 = vunpack.c.l.b16 %v326
    %v1285 = vunpack.c.h.b16 %v326
    %v1286 = vunpack.c.l.b16 %v327
    %v1287 = vunpack.c.h.b16 %v327
    %v1288 = vunpack.c.l.b16 %v328
    %v1289 = vunpack.c.h.b16 %v328
    %v1290 = vunpack.c.l.b16 %v329
    %v1291 = vunpack.c.h.b16 %v329
    %v1292 = vunpack.c.l.b16 %v330
    %v1293 = vunpack.c.h.b16 %v330
    %v1294 = vunpack.c.l.b16 %v331
    %v1295 = vunpack.c.h.b16 %v331
    %v1296 = vunpack.c.l.b16 %v332
    %v1297 = vunpack.c.h.b16 %v332
    %v1298 = vunpack.c.l.b16 %v333
    %v1299 = vunpack.c.h.b16 %v333
    %v1300 = vunpack.c.l.b16 %v334
    %v1301 = vunpack.c.h.b16 %v334
    %v1302 = vunpack.c.l.b16 %v335
    %v1303 = vunpack.c.h.b16 %v335
    %v1304 = vunpack.c.l.b16 %v336
    %v1305 = vunpack.c.h.b16 %v336
    %v1306 = vunpack.c.l.b16 %v337
    %v1307 = vunpack.c.h.b16 %v337
    %v1308 = vunpack.c.l.b16 %v338
    %v1309 = vunpack.c.h.b16 %v338
    %v1310 = vunpack.c.l.b16 %v339
    %v1311 = vunpack.c.h.b16 %v339
    %v1312 = vunpack.c.l.b16 %v340
    %v1313 = vunpack.c.h.b16 %v340
    %v1314 = vunpack.c.l.b16 %v341
    %v1315 = vunpack.c.h.b16 %v341
    %v1316 = vunpack.c.l.b16 %v342
    %v1317 = vunpack.c.h.b16 %v342
    %v1318 = vunpack.c.l.b16 %v343
    %v1319 = vunpack.c.h.b16 %v343
    %v1320 = vunpack.c.l.b16 %v344
    %v1321 = vunpack.c.h.b16 %v344
    %v1322 = vunpack.c.l.b16 %v345
    %v1323 = vunpack.c.h.b16 %v345
    %v1324 = vunpack.c.l.b16 %v346
    %v1325 = vunpack.c.h.b16 %v346
    %v1326 = vunpack.c.l.b16 %v347
    %v1327 = vunpack.c.h.b16 %v347
    %v1328 = vunpack.c.l.b16 %v348
    %v1329 = vunpack.c.h.b16 %v348
    %v1330 = vunpack.c.l.b16 %v349
    %v1331 = vunpack.c.h.b16 %v349
    %v1332 = vunpack.c.l.b16 %v350
    %v1333 = vunpack.c.h.b16 %v350
    %v1334 = vunpack.c.l.b16 %v351
    %v1335 = vunpack.c.h.b16 %v351
    %v1336 = vunpack.c.l.b16 %v352
    %v1337 = vunpack.c.h.b16 %v352
    %v1338 = vunpack.c.l.b16 %v353
    %v1339 = vunpack.c.h.b16 %v353
    %v1340 = vunpack.c.l.b16 %v354
    %v1341 = vunpack.c.h.b16 %v354
    %v1342 = vunpack.c.l.b16 %v355
    %v1343 = vunpack.c.h.b16 %v355
    %v1344 = vunpack.c.l.b16 %v356
    %v1345 = vunpack.c.h.b16 %v356
    %v1346 = vunpack.c.l.b16 %v357
    %v1347 = vunpack.c.h.b16 %v357
    %v1348 = vunpack.c.l.b16 %v358
    %v1349 = vunpack.c.h.b16 %v358
    %v1350 = vunpack.c.l.b16 %v359
    %v1351 = vunpack.c.h.b16 %v359
    %v1352 = vunpack.c.l.b16 %v360
    %v1353 = vunpack.c.h.b16 %v360
    %v1354 = vunpack.c.l.b16 %v361
    %v1355 = vunpack.c.h.b16 %v361
    %v1356 = vunpack.c.l.b16 %v362
    %v1357 = vunpack.c.h.b16 %v362
    %v1358 = vunpack.c.l.b16 %v363
    %v1359 = vunpack.c.h.b16 %v363
    %v1360 = vunpack.c.l.b16 %v364
    %v1361 = vunpack.c.h.b16 %v364
    %v1362 = vunpack.c.l.b16 %v365
    %v1363 = vunpack.c.h.b16 %v365
    %v1364 = vunpack.c.l.b16 %v366
    %v1365 = vunpack.c.h.b16 %v366
    %v1366 = vunpack.c.l.b16 %v367
    %v1367 = vunpack.c.h.b16 %v367
    %v1368 = vunpack.c.l.b16 %v368
    %v1369 = vunpack.c.h.b16 %v368
    %v1370 = vunpack.c.l.b16 %v369
    %v1371 = vunpack.c.h.b16 %v369
    %v1372 = vunpack.c.l.b16 %v370
    %v1373 = vunpack.c.h.b16 %v370
    %v1374 = vunpack.c.l.b16 %v371
    %v1375 = vunpack.c.h.b16 %v371
    %v1376 = vunpack.c.l.b16 %v372
    %v1377 = vunpack.c.h.b16 %v372
    %v1378 = vunpack.c.l.b16 %v373
    %v1379 = vunpack.c.h.b16 %v373
    %v1380 = vunpack.c.l.b16 %v374
    %v1381 = vunpack.c.h.b16 %v374
    %v1382 = vunpack.c.l.b16 %v375
    %v1383 = vunpack.c.h.b16 %v375
    %v1384 = vunpack.c.l.b16 %v376
    %v1385 = vunpack.c.h.b16 %v376
    %v1386 = vunpack.c.l.b16 %v377
    %v1387 = vunpack.c.h.b16 %v377
    %v1388 = vunpack.c.l.b16 %v378
    %v1389 = vunpack.c.h.b16 %v378
    %v1390 = vunpack.c.l.b16 %v379
    %v1391 = vunpack.c.h.b16 %v379
    %v1392 = vunpack.c.l.b16 %v380
    %v1393 = vunpack.c.h.b16 %v380
    %v1394 = vunpack.c.l.b16 %v381
    %v1395 = vunpack.c.h.b16 %v381
    %v1396 = vunpack.c.l.b16 %v382
    %v1397 = vunpack.c.h.b16 %v382
    %v1398 = vunpack.c.l.b16 %v383
    %v1399 = vunpack.c.h.b16 %v383
    %v1400 = vunpack.c.l.b16 %v384
    %v1401 = vunpack.c.h.b16 %v384
    %v1402 = vunpack.c.l.b16 %v385
    %v1403 = vunpack.c.h.b16 %v385
    %v1404 = vunpack.c.l.b16 %v386
    %v1405 = vunpack.c.h.b16 %v386
    %v1406 = vunpack.c.l.b16 %v387
    %v1407 = vunpack.c.h.b16 %v387
    %v1408 = vunpack.c.l.b16 %v388
    %v1409 = vunpack.c.h.b16 %v388
    %v1410 = vunpack.c.l.b16 %v389
    %v1411 = vunpack.c.h.b16 %v389
    %v1412 = vunpack.c.l.b16 %v390
    %v1413 = vunpack.c.h.b16 %v390
    %v1414 = vunpack.c.l.b16 %v391
    %v1415 = vunpack.c.h.b16 %v391
    %v1416 = vunpack.c.l.b16 %v392
    %v1417 = vunpack.c.h.b16 %v392
    %v1418 = vunpack.c.l.b16 %v393
    %v1419 = vunpack.c.h.b16 %v393
    %v1420 = vunpack.c.l.b16 %v394
    %v1421 = vunpack.c.h.b16 %v394
    %v1422 = vunpack.c.l.b16 %v395
    %v1423 = vunpack.c.h.b16 %v395
    %v1424 = vunpack.c.l.b16 %v396
    %v1425 = vunpack.c.h.b16 %v396
    %v1426 = vunpack.c.l.b16 %v397
    %v1427 = vunpack.c.h.b16 %v397
    %v1428 = vunpack.c.l.b16 %v398
    %v1429 = vunpack.c.h.b16 %v398
    %v1430 = vunpack.c.l.b16 %v399
    %v1431 = vunpack.c.h.b16 %v399
    %v1432 = vunpack.c.l.b16 %v400
    %v1433 = vunpack.c.h.b16 %v400
    %v1434 = vunpack.c.l.b16 %v401
    %v1435 = vunpack.c.h.b16 %v401
    %v1436 = vunpack.c.l.b16 %v402
    %v1437 = vunpack.c.h.b16 %v402
    %v1438 = vunpack.c.l.b16 %v403
    %v1439 = vunpack.c.h.b16 %v403
    %v1440 = vunpack.c.l.b16 %v404
    %v1441 = vunpack.c.h.b16 %v404
    %v1442 = vunpack.c.l.b16 %v405
    %v1443 = vunpack.c.h.b16 %v405
    %v1444 = vunpack.c.l.b16 %v406
    %v1445 = vunpack.c.h.b16 %v406
    %v1446 = vunpack.c.l.b16 %v407
    %v1447 = vunpack.c.h.b16 %v407
    %v1448 = vunpack.c.l.b16 %v408
    %v1449 = vunpack.c.h.b16 %v408
    %v1450 = vunpack.c.l.b16 %v409
    %v1451 = vunpack.c.h.b16 %v409
    %v1452 = vunpack.c.l.b16 %v410
    %v1453 = vunpack.c.h.b16 %v410
    %v1454 = vunpack.c.l.b16 %v411
    %v1455 = vunpack.c.h.b16 %v411
    %v1456 = vunpack.c.l.b16 %v412
    %v1457 = vunpack.c.h.b16 %v412
    %v1458 = vunpack.c.l.b16 %v413
    %v1459 = vunpack.c.h.b16 %v413
    %v1460 = vunpack.c.l.b16 %v414
    %v1461 = vunpack.c.h.b16 %v414
    %v1462 = vunpack.c.l.b16 %v415
    %v1463 = vunpack.c.h.b16 %v415
    %v1464 = vunpack.c.l.b16 %v416
    %v1465 = vunpack.c.h.b16 %v416
    %v1466 = vunpack.c.l.b16 %v417
    %v1467 = vunpack.c.h.b16 %v417
    %v1468 = vunpack.c.l.b16 %v418
    %v1469 = vunpack.c.h.b16 %v418
    %v1470 = vunpack.c.l.b16 %v419
    %v1471 = vunpack.c.h.b16 %v419
    %v1472 = vunpack.c.l.b16 %v420
    %v1473 = vunpack.c.h.b16 %v420
    %v1474 = vunpack.c.l.b16 %v421
    %v1475 = vunpack.c.h.b16 %v421
    %v1476 = vunpack.c.l.b16 %v422
    %v1477 = vunpack.c.h.b16 %v422
    %v1478 = vunpack.c.l.b16 %v423
    %v1479 = vunpack.c.h.b16 %v423
    %v1480 = vunpack.c.l.b16 %v424
    %v1481 = vunpack.c.h.b16 %v424
    %v1482 = vunpack.c.l.b16 %v425
    %v1483 = vunpack.c.h.b16 %v425
    %v1484 = vunpack.c.l.b16 %v426
    %v1485 = vunpack.c.h.b16 %v426
    %v1486 = vunpack.c.l.b16 %v427
    %v1487 = vunpack.c.h.b16 %v427
    %v1488 = vunpack.c.l.b16 %v428
    %v1489 = vunpack.c.h.b16 %v428
    %v1490 = vunpack.c.l.b16 %v429
    %v1491 = vunpack.c.h.b16 %v429
    %v1492 = vunpack.c.l.b16 %v430
    %v1493 = vunpack.c.h.b16 %v430
    %v1494 = vunpack.c.l.b16 %v431
    %v1495 = vunpack.c.h.b16 %v431
    %v1496 = vunpack.c.l.b16 %v432
    %v1497 = vunpack.c.h.b16 %v432
    %v1498 = vunpack.c.l.b16 %v433
    %v1499 = vunpack.c.h.b16 %v433
    %v1500 = vunpack.c.l.b16 %v434
    %v1501 = vunpack.c.h.b16 %v434
    %v1502 = vunpack.c.l.b16 %v435
    %v1503 = vunpack.c.h.b16 %v435
    %v1504 = vunpack.c.l.b16 %v436
    %v1505 = vunpack.c.h.b16 %v436
    %v1506 = vunpack.c.l.b16 %v437
    %v1507 = vunpack.c.h.b16 %v437
    %v1508 = vunpack.c.l.b16 %v438
    %v1509 = vunpack.c.h.b16 %v438
    %v1510 = vunpack.c.l.b16 %v439
    %v1511 = vunpack.c.h.b16 %v439
    %v1512 = vunpack.c.l.b16 %v440
    %v1513 = vunpack.c.h.b16 %v440
    %v1514 = vunpack.c.l.b16 %v441
    %v1515 = vunpack.c.h.b16 %v441
    %v1516 = vunpack.c.l.b16 %v442
    %v1517 = vunpack.c.h.b16 %v442
    %v1518 = vunpack.c.l.b16 %v443
    %v1519 = vunpack.c.h.b16 %v443
    %v1520 = vunpack.c.l.b16 %v444
    %v1521 = vunpack.c.h.b16 %v444
    %v1522 = vunpack.c.l.b16 %v445
    %v1523 = vunpack.c.h.b16 %v445
    %v1524 = vunpack.c.l.b16 %v446
    %v1525 = vunpack.c.h.b16 %v446
    %v1526 = vunpack.c.l.b16 %v447
    %v1527 = vunpack.c.h.b16 %v447
    %v1528 = vunpack.c.l.b16 %v448
    %v1529 = vunpack.c.h.b16 %v448
    %v1530 = vunpack.c.l.b16 %v449
    %v1531 = vunpack.c.h.b16 %v449
    %v1532 = vunpack.c.l.b16 %v450
    %v1533 = vunpack.c.h.b16 %v450
    %v1534 = vunpack.c.l.b16 %v451
    %v1535 = vunpack.c.h.b16 %v451
    %v1536 = vunpack.c.l.b16 %v452
    %v1537 = vunpack.c.h.b16 %v452
    %v1538 = vunpack.c.l.b16 %v453
    %v1539 = vunpack.c.h.b16 %v453
    %v1540 = vunpack.c.l.b16 %v454
    %v1541 = vunpack.c.h.b16 %v454
    %v1542 = vunpack.c.l.b16 %v455
    %v1543 = vunpack.c.h.b16 %v455
    %v1544 = vunpack.c.l.b16 %v456
    %v1545 = vunpack.c.h.b16 %v456
    %v1546 = vunpack.c.l.b16 %v457
    %v1547 = vunpack.c.h.b16 %v457
    %v1548 = vunpack.c.l.b16 %v458
    %v1549 = vunpack.c.h.b16 %v458
    %v1550 = vunpack.c.l.b16 %v459
    %v1551 = vunpack.c.h.b16 %v459
    %v1552 = vunpack.c.l.b16 %v460
    %v1553 = vunpack.c.h.b16 %v460
    %v1554 = vunpack.c.l.b16 %v461
    %v1555 = vunpack.c.h.b16 %v461
    %v1556 = vunpack.c.l.b16 %v462
    %v1557 = vunpack.c.h.b16 %v462
    %v1558 = vunpack.c.l.b16 %v463
    %v1559 = vunpack.c.h.b16 %v463
    %v1560 = vunpack.c.l.b16 %v464
    %v1561 = vunpack.c.h.b16 %v464
    %v1562 = vunpack.c.l.b16 %v465
    %v1563 = vunpack.c.h.b16 %v465
    %v1564 = vunpack.c.l.b16 %v466
    %v1565 = vunpack.c.h.b16 %v466
    %v1566 = vunpack.c.l.b16 %v467
    %v1567 = vunpack.c.h.b16 %v467
    %v1568 = vunpack.c.l.b16 %v468
    %v1569 = vunpack.c.h.b16 %v468
    %v1570 = vunpack.c.l.b16 %v469
    %v1571 = vunpack.c.h.b16 %v469
    %v1572 = vunpack.c.l.b16 %v470
    %v1573 = vunpack.c.h.b16 %v470
    %v1574 = vunpack.c.l.b16 %v471
    %v1575 = vunpack.c.h.b16 %v471
    %v1576 = vunpack.c.l.b16 %v472
    %v1577 = vunpack.c.h.b16 %v472
    %v1578 = vunpack.c.l.b16 %v473
    %v1579 = vunpack.c.h.b16 %v473
    %v1580 = vunpack.c.l.b16 %v474
    %v1581 = vunpack.c.h.b16 %v474
    %v1582 = vunpack.c.l.b16 %v475
    %v1583 = vunpack.c.h.b16 %v475
    %v1584 = vunpack.c.l.b16 %v476
    %v1585 = vunpack.c.h.b16 %v476
    %v1586 = vunpack.c.l.b16 %v477
    %v1587 = vunpack.c.h.b16 %v477
    %v1588 = vunpack.c.l.b16 %v478
    %v1589 = vunpack.c.h.b16 %v478
    %v1590 = vunpack.c.l.b16 %v479
    %v1591 = vunpack.c.h.b16 %v479
    %v1592 = vunpack.c.l.b16 %v480
    %v1593 = vunpack.c.h.b16 %v480
    %v1594 = vunpack.c.l.b16 %v481
    %v1595 = vunpack.c.h.b16 %v481
    %v1596 = vunpack.c.l.b16 %v482
    %v1597 = vunpack.c.h.b16 %v482
    %v1598 = vunpack.c.l.b16 %v483
    %v1599 = vunpack.c.h.b16 %v483
    %v1600 = vunpack.c.l.b16 %v484
    %v1601 = vunpack.c.h.b16 %v484
    %v1602 = vunpack.c.l.b16 %v485
    %v1603 = vunpack.c.h.b16 %v485
    %v1604 = vunpack.c.l.b16 %v486
    %v1605 = vunpack.c.h.b16 %v486
    %v1606 = vunpack.c.l.b16 %v487
    %v1607 = vunpack.c.h.b16 %v487
    %v1608 = vunpack.c.l.b16 %v488
    %v1609 = vunpack.c.h.b16 %v488
    %v1610 = vunpack.c.l.b16 %v489
    %v1611 = vunpack.c.h.b16 %v489
    %v1612 = vunpack.c.l.b16 %v490
    %v1613 = vunpack.c.h.b16 %v490
    %v1614 = vunpack.c.l.b16 %v491
    %v1615 = vunpack.c.h.b16 %v491
    %v1616 = vunpack.c.l.b16 %v492
    %v1617 = vunpack.c.h.b16 %v492
    %v1618 = vunpack.c.l.b16 %v493
    %v1619 = vunpack.c.h.b16 %v493
    %v1620 = vunpack.c.l.b16 %v494
    %v1621 = vunpack.c.h.b16 %v494
    %v1622 = vunpack.c.l.b16 %v495
    %v1623 = vunpack.c.h.b16 %v495
    %v1624 = vunpack.c.l.b16 %v496
    %v1625 = vunpack.c.h.b16 %v496
    %v1626 = vunpack.c.l.b16 %v497
    %v1627 = vunpack.c.h.b16 %v497
    %v1628 = vunpack.c.l.b16 %v498
    %v1629 = vunpack.c.h.b16 %v498
    %v1630 = vunpack.c.l.b16 %v499
    %v1631 = vunpack.c.h.b16 %v499
    %v1632 = vunpack.c.l.b16 %v500
    %v1633 = vunpack.c.h.b16 %v500
    %v1634 = vunpack.c.l.b16 %v501
    %v1635 = vunpack.c.h.b16 %v501
    %v1636 = vunpack.c.l.b16 %v502
    %v1637 = vunpack.c.h.b16 %v502
    %v1638 = vunpack.c.l.b16 %v503
    %v1639 = vunpack.c.h.b16 %v503
    %v1640 = vunpack.c.l.b16 %v504
    %v1641 = vunpack.c.h.b16 %v504
    %v1642 = vunpack.c.l.b16 %v505
    %v1643 = vunpack.c.h.b16 %v505
    %v1644 = vunpack.c.l.b16 %v506
    %v1645 = vunpack.c.h.b16 %v506
    %v1646 = vunpack.c.l.b16 %v507
    %v1647 = vunpack.c.h.b16 %v507
    %v1648 = vunpack.c.l.b16 %v508
    %v1649 = vunpack.c.h.b16 %v508
    %v1650 = vunpack.c.l.b16 %v509
    %v1651 = vunpack.c.h.b16 %v509
    %v1652 = vunpack.c.l.b16 %v510
    %v1653 = vunpack.c.h.b16 %v510
    %v1654 = vunpack.c.l.b16 %v511
    %v1655 = vunpack.c.h.b16 %v511
    %v1656 = vunpack.c.l.b16 %v512
    %v1657 = vunpack.c.h.b16 %v512
    %v1658 = vunpack.c.l.b16 %v513
    %v1659 = vunpack.c.h.b16 %v513
    %v1660 = vunpack.c.l.b16 %v514
    %v1661 = vunpack.c.h.b16 %v514
    %v1662 = vunpack.c.l.b16 %v515
    %v1663 = vunpack.c.h.b16 %v515
    %v1664 = vunpack.c.l.b16 %v516
    %v1665 = vunpack.c.h.b16 %v516
    %v1666 = vunpack.c.l.b16 %v517
    %v1667 = vunpack.c.h.b16 %v517
    %v1668 = vunpack.c.l.b16 %v518
    %v1669 = vunpack.c.h.b16 %v518
    %v1670 = vunpack.c.l.b16 %v519
    %v1671 = vunpack.c.h.b16 %v519
    %v1672 = vunpack.c.l.b16 %v520
    %v1673 = vunpack.c.h.b16 %v520
    %v1674 = vunpack.c.l.b16 %v521
    %v1675 = vunpack.c.h.b16 %v521
    %v1676 = vunpack.c.l.b16 %v522
    %v1677 = vunpack.c.h.b16 %v522
    %v1678 = vunpack.c.l.b16 %v523
    %v1679 = vunpack.c.h.b16 %v523
    %v1680 = vunpack.c.l.b16 %v524
    %v1681 = vunpack.c.h.b16 %v524
    %v1682 = vunpack.c.l.b16 %v525
    %v1683 = vunpack.c.h.b16 %v525
    %v1684 = vunpack.c.l.b16 %v526
    %v1685 = vunpack.c.h.b16 %v526
    %v1686 = vunpack.c.l.b16 %v527
    %v1687 = vunpack.c.h.b16 %v527
    %v1688 = vunpack.c.l.b16 %v528
    %v1689 = vunpack.c.h.b16 %v528
    %v1690 = vunpack.c.l.b16 %v529
    %v1691 = vunpack.c.h.b16 %v529
    %v1692 = vunpack.c.l.b16 %v530
    %v1693 = vunpack.c.h.b16 %v530
    %v1694 = vunpack.c.l.b16 %v531
    %v1695 = vunpack.c.h.b16 %v531
    %v1696 = vunpack.c.l.b16 %v532
    %v1697 = vunpack.c.h.b16 %v532
    %v1698 = vunpack.c.l.b16 %v533
    %v1699 = vunpack.c.h.b16 %v533
    %v1700 = vunpack.c.l.b16 %v534
    %v1701 = vunpack.c.h.b16 %v534
    %v1702 = vunpack.c.l.b16 %v535
    %v1703 = vunpack.c.h.b16 %v535
    %v1704 = vunpack.c.l.b16 %v536
    %v1705 = vunpack.c.h.b16 %v536
    %v1706 = vunpack.c.l.b16 %v537
    %v1707 = vunpack.c.h.b16 %v537
    %v1708 = vunpack.c.l.b16 %v538
    %v1709 = vunpack.c.h.b16 %v538
    %v1710 = vunpack.c.l.b16 %v539
    %v1711 = vunpack.c.h.b16 %v539
    %v1712 = vunpack.c.l.b16 %v540
    %v1713 = vunpack.c.h.b16 %v540
    %v1714 = vunpack.c.l.b16 %v541
    %v1715 = vunpack.c.h.b16 %v541
    %v1716 = vunpack.c.l.b16 %v542
    %v1717 = vunpack.c.h.b16 %v542
    %v1718 = vunpack.c.l.b16 %v543
    %v1719 = vunpack.c.h.b16 %v543
    %v1720 = vunpack.c.l.b16 %v544
    %v1721 = vunpack.c.h.b16 %v544
    %v1722 = vunpack.c.l.b16 %v545
    %v1723 = vunpack.c.h.b16 %v545
    %v1724 = vunpack.c.l.b16 %v546
    %v1725 = vunpack.c.h.b16 %v546
    %v1726 = vunpack.c.l.b16 %v547
    %v1727 = vunpack.c.h.b16 %v547
    %v1728 = vunpack.c.l.b16 %v548
    %v1729 = vunpack.c.h.b16 %v548
    %v1730 = vunpack.c.l.b16 %v549
    %v1731 = vunpack.c.h.b16 %v549
    %v1732 = vunpack.c.l.b16 %v550
    %v1733 = vunpack.c.h.b16 %v550
    %v1734 = vunpack.c.l.b16 %v551
    %v1735 = vunpack.c.h.b16 %v551
    %v1736 = vunpack.c.l.b16 %v552
    %v1737 = vunpack.c.h.b16 %v552
    %v1738 = vunpack.c.l.b16 %v553
    %v1739 = vunpack.c.h.b16 %v553
    %v1740 = vunpack.c.l.b16 %v554
    %v1741 = vunpack.c.h.b16 %v554
    %v1742 = vunpack.c.l.b16 %v555
    %v1743 = vunpack.c.h.b16 %v555
    %v1744 = vunpack.c.l.b16 %v556
    %v1745 = vunpack.c.h.b16 %v556
    %v1746 = vunpack.c.l.b16 %v557
    %v1747 = vunpack.c.h.b16 %v557
    %v1748 = vunpack.c.l.b16 %v558
    %v1749 = vunpack.c.h.b16 %v558
    %v1750 = vunpack.c.l.b16 %v559
    %v1751 = vunpack.c.h.b16 %v559
    %v1752 = vunpack.c.l.b16 %v560
    %v1753 = vunpack.c.h.b16 %v560
    %v1754 = vunpack.c.l.b16 %v561
    %v1755 = vunpack.c.h.b16 %v561
    %v1756 = vpack.c.b16 %v996, %v988
    %v1757 = vpack.c.b16 %v997, %v989
    %v1758 = vpack.c.b16 %v998, %v990
    %v1759 = vpack.c.b16 %v999, %v991
    %v1760 = vpack.c.b16 %v1000, %v992
    %v1761 = vpack.c.b16 %v1001, %v993
    %v1762 = vpack.c.b16 %v1002, %v994
    %v1763 = vpack.c.b16 %v1003, %v995
    %v1764 = vpack.c.b16 %v1012, %v1004
    %v1765 = vpack.c.b16 %v1013, %v1005
    %v1766 = vpack.c.b16 %v1014, %v1006
    %v1767 = vpack.c.b16 %v1015, %v1007
    %v1768 = vpack.c.b16 %v1016, %v1008
    %v1769 = vpack.c.b16 %v1017, %v1009
    %v1770 = vpack.c.b16 %v1018, %v1010
    %v1771 = vpack.c.b16 %v1019, %v1011
    %v1772 = vpack.c.b16 %v1028, %v1020
    %v1773 = vpack.c.b16 %v1029, %v1021
    %v1774 = vpack.c.b16 %v1030, %v1022
    %v1775 = vpack.c.b16 %v1031, %v1023
    %v1776 = vpack.c.b16 %v1032, %v1024
    %v1777 = vpack.c.b16 %v1033, %v1025
    %v1778 = vpack.c.b16 %v1034, %v1026
    %v1779 = vpack.c.b16 %v1035, %v1027
    %v1780 = vpack.c.b16 %v1044, %v1036
    %v1781 = vpack.c.b16 %v1045, %v1037
    %v1782 = vpack.c.b16 %v1046, %v1038
    %v1783 = vpack.c.b16 %v1047, %v1039
    %v1784 = vpack.c.b16 %v1048, %v1040
    %v1785 = vpack.c.b16 %v1049, %v1041
    %v1786 = vpack.c.b16 %v1050, %v1042
    %v1787 = vpack.c.b16 %v1051, %v1043
    %v1788 = vpack.c.b16 %v1060, %v1052
    %v1789 = vpack.c.b16 %v1061, %v1053
    %v1790 = vpack.c.b16 %v1062, %v1054
    %v1791 = vpack.c.b16 %v1063, %v1055
    %v1792 = vpack.c.b16 %v1064, %v1056
    %v1793 = vpack.c.b16 %v1065, %v1057
    %v1794 = vpack.c.b16 %v1066, %v1058
    %v1795 = vpack.c.b16 %v1067, %v1059
    %v1796 = vpack.c.b16 %v1076, %v1068
    %v1797 = vpack.c.b16 %v1077, %v1069
    %v1798 = vpack.c.b16 %v1078, %v1070
    %v1799 = vpack.c.b16 %v1079, %v1071
    %v1800 = vpack.c.b16 %v1080, %v1072
    %v1801 = vpack.c.b16 %v1081, %v1073
    %v1802 = vpack.c.b16 %v1082, %v1074
    %v1803 = vpack.c.b16 %v1083, %v1075
    %v1804 = vpack.c.b16 %v1092, %v1084
    %v1805 = vpack.c.b16 %v1093, %v1085
    %v1806 = vpack.c.b16 %v1094, %v1086
    %v1807 = vpack.c.b16 %v1095, %v1087
    %v1808 = vpack.c.b16 %v1096, %v1088
    %v1809 = vpack.c.b16 %v1097, %v1089
    %v1810 = vpack.c.b16 %v1098, %v1090
    %v1811 = vpack.c.b16 %v1099, %v1091
    %v1812 = vpack.c.b16 %v1108, %v1100
    %v1813 = vpack.c.b16 %v1109, %v1101
    %v1814 = vpack.c.b16 %v1110, %v1102
    %v1815 = vpack.c.b16 %v1111, %v1103
    %v1816 = vpack.c.b16 %v1112, %v1104
    %v1817 = vpack.c.b16 %v1113, %v1105
    %v1818 = vpack.c.b16 %v1114, %v1106
    %v1819 = vpack.c.b16 %v1115, %v1107
    %v1820 = vpack.c.b16 %v1124, %v1116
    %v1821 = vpack.c.b16 %v1125, %v1117
    %v1822 = vpack.c.b16 %v1126, %v1118
    %v1823 = vpack.c.b16 %v1127, %v1119
    %v1824 = vpack.c.b16 %v1128, %v1120
    %v1825 = vpack.c.b16 %v1129, %v1121
    %v1826 = vpack.c.b16 %v1130, %v1122
    %v1827 = vpack.c.b16 %v1131, %v1123
    %v1828 = vpack.c.b16 %v1140, %v1132
    %v1829 = vpack.c.b16 %v1141, %v1133
    %v1830 = vpack.c.b16 %v1142, %v1134
    %v1831 = vpack.c.b16 %v1143, %v1135
    %v1832 = vpack.c.b16 %v1144, %v1136
    %v1833 = vpack.c.b16 %v1145, %v1137
    %v1834 = vpack.c.b16 %v1146, %v1138
    %v1835 = vpack.c.b16 %v1147, %v1139
    %v1836 = vpack.c.b16 %v1156, %v1148
    %v1837 = vpack.c.b16 %v1157, %v1149
    %v1838 = vpack.c.b16 %v1158, %v1150
    %v1839 = vpack.c.b16 %v1159, %v1151
    %v1840 = vpack.c.b16 %v1160, %v1152
    %v1841 = vpack.c.b16 %v1161, %v1153
    %v1842 = vpack.c.b16 %v1162, %v1154
    %v1843 = vpack.c.b16 %v1163, %v1155
    %v1844 = vpack.c.b16 %v1172, %v1164
    %v1845 = vpack.c.b16 %v1173, %v1165
    %v1846 = vpack.c.b16 %v1174, %v1166
    %v1847 = vpack.c.b16 %v1175, %v1167
    %v1848 = vpack.c.b16 %v1176, %v1168
    %v1849 = vpack.c.b16 %v1177, %v1169
    %v1850 = vpack.c.b16 %v1178, %v1170
    %v1851 = vpack.c.b16 %v1179, %v1171
    %v1852 = vpack.c.b16 %v1188, %v1180
    %v1853 = vpack.c.b16 %v1189, %v1181
    %v1854 = vpack.c.b16 %v1190, %v1182
    %v1855 = vpack.c.b16 %v1191, %v1183
    %v1856 = vpack.c.b16 %v1192, %v1184
    %v1857 = vpack.c.b16 %v1193, %v1185
    %v1858 = vpack.c.b16 %v1194, %v1186
    %v1859 = vpack.c.b16 %v1195, %v1187
    %v1860 = vpack.c.b16 %v1204, %v1196
    %v1861 = vpack.c.b16 %v1205, %v1197
    %v1862 = vpack.c.b16 %v1206, %v1198
    %v1863 = vpack.c.b16 %v1207, %v1199
    %v1864 = vpack.c.b16 %v1208, %v1200
    %v1865 = vpack.c.b16 %v1209, %v1201
    %v1866 = vpack.c.b16 %v1210, %v1202
    %v1867 = vpack.c.b16 %v1211, %v1203
    %v1868 = vpack.c.b16 %v1220, %v1212
    %v1869 = vpack.c.b16 %v1221, %v1213
    %v1870 = vpack.c.b16 %v1222, %v1214
    %v1871 = vpack.c.b16 %v1223, %v1215
    %v1872 = vpack.c.b16 %v1224, %v1216
    %v1873 = vpack.c.b16 %v1225, %v1217
    %v1874 = vpack.c.b16 %v1226, %v1218
    %v1875 = vpack.c.b16 %v1227, %v1219
    %v1876 = vpack.c.b16 %v1236, %v1228
    %v1877 = vpack.c.b16 %v1237, %v1229
    %v1878 = vpack.c.b16 %v1238, %v1230
    %v1879 = vpack.c.b16 %v1239, %v1231
    %v1880 = vpack.c.b16 %v1240, %v1232
    %v1881 = vpack.c.b16 %v1241, %v1233
    %v1882 = vpack.c.b16 %v1242, %v1234
    %v1883 = vpack.c.b16 %v1243, %v1235
    %v1884 = vpack.c.b16 %v1252, %v1244
    %v1885 = vpack.c.b16 %v1253, %v1245
    %v1886 = vpack.c.b16 %v1254, %v1246
    %v1887 = vpack.c.b16 %v1255, %v1247
    %v1888 = vpack.c.b16 %v1256, %v1248
    %v1889 = vpack.c.b16 %v1257, %v1249
    %v1890 = vpack.c.b16 %v1258, %v1250
    %v1891 = vpack.c.b16 %v1259, %v1251
    %v1892 = vpack.c.b16 %v1268, %v1260
    %v1893 = vpack.c.b16 %v1269, %v1261
    %v1894 = vpack.c.b16 %v1270, %v1262
    %v1895 = vpack.c.b16 %v1271, %v1263
    %v1896 = vpack.c.b16 %v1272, %v1264
    %v1897 = vpack.c.b16 %v1273, %v1265
    %v1898 = vpack.c.b16 %v1274, %v1266
    %v1899 = vpack.c.b16 %v1275, %v1267
    %v1900 = vpack.c.b16 %v1284, %v1276
    %v1901 = vpack.c.b16 %v1285, %v1277
    %v1902 = vpack.c.b16 %v1286, %v1278
    %v1903 = vpack.c.b16 %v1287, %v1279
    %v1904 = vpack.c.b16 %v1288, %v1280
    %v1905 = vpack.c.b16 %v1289, %v1281
    %v1906 = vpack.c.b16 %v1290, %v1282
    %v1907 = vpack.c.b16 %v1291, %v1283
    %v1908 = vpack.c.b16 %v1300, %v1292
    %v1909 = vpack.c.b16 %v1301, %v1293
    %v1910 = vpack.c.b16 %v1302, %v1294
    %v1911 = vpack.c.b16 %v1303, %v1295
    %v1912 = vpack.c.b16 %v1304, %v1296
    %v1913 = vpack.c.b16 %v1305, %v1297
    %v1914 = vpack.c.b16 %v1306, %v1298
    %v1915 = vpack.c.b16 %v1307, %v1299
    %v1916 = vpack.c.b16 %v1316, %v1308
    %v1917 = vpack.c.b16 %v1317, %v1309
    %v1918 = vpack.c.b16 %v1318, %v1310
    %v1919 = vpack.c.b16 %v1319, %v1311
    %v1920 = vpack.c.b16 %v1320, %v1312
    %v1921 = vpack.c.b16 %v1321, %v1313
    %v1922 = vpack.c.b16 %v1322, %v1314
    %v1923 = vpack.c.b16 %v1323, %v1315
    %v1924 = vpack.c.b16 %v1332, %v1324
    %v1925 = vpack.c.b16 %v1333, %v1325
    %v1926 = vpack.c.b16 %v1334, %v1326
    %v1927 = vpack.c.b16 %v1335, %v1327
    %v1928 = vpack.c.b16 %v1336, %v1328
    %v1929 = vpack.c.b16 %v1337, %v1329
    %v1930 = vpack.c.b16 %v1338, %v1330
    %v1931 = vpack.c.b16 %v1339, %v1331
    %v1932 = vpack.c.b16 %v1348, %v1340
    %v1933 = vpack.c.b16 %v1349, %v1341
    %v1934 = vpack.c.b16 %v1350, %v1342
    %v1935 = vpack.c.b16 %v1351, %v1343
    %v1936 = vpack.c.b16 %v1352, %v1344
    %v1937 = vpack.c.b16 %v1353, %v1345
    %v1938 = vpack.c.b16 %v1354, %v1346
    %v1939 = vpack.c.b16 %v1355, %v1347
    %v1940 = vpack.c.b16 %v1364, %v1356
    %v1941 = vpack.c.b16 %v1365, %v1357
    %v1942 = vpack.c.b16 %v1366, %v1358
    %v1943 = vpack.c.b16 %v1367, %v1359
    %v1944 = vpack.c.b16 %v1368, %v1360
    %v1945 = vpack.c.b16 %v1369, %v1361
    %v1946 = vpack.c.b16 %v1370, %v1362
    %v1947 = vpack.c.b16 %v1371, %v1363
    %v1948 = vpack.c.b16 %v1380, %v1372
    %v1949 = vpack.c.b16 %v1381, %v1373
    %v1950 = vpack.c.b16 %v1382, %v1374
    %v1951 = vpack.c.b16 %v1383, %v1375
    %v1952 = vpack.c.b16 %v1384, %v1376
    %v1953 = vpack.c.b16 %v1385, %v1377
    %v1954 = vpack.c.b16 %v1386, %v1378
    %v1955 = vpack.c.b16 %v1387, %v1379
    %v1956 = vpack.c.b16 %v1396, %v1388
    %v1957 = vpack.c.b16 %v1397, %v1389
    %v1958 = vpack.c.b16 %v1398, %v1390
    %v1959 = vpack.c.b16 %v1399, %v1391
    %v1960 = vpack.c.b16 %v1400, %v1392
    %v1961 = vpack.c.b16 %v1401, %v1393
    %v1962 = vpack.c.b16 %v1402, %v1394
    %v1963 = vpack.c.b16 %v1403, %v1395
    %v1964 = vpack.c.b16 %v1412, %v1404
    %v1965 = vpack.c.b16 %v1413, %v1405
    %v1966 = vpack.c.b16 %v1414, %v1406
    %v1967 = vpack.c.b16 %v1415, %v1407
    %v1968 = vpack.c.b16 %v1416, %v1408
    %v1969 = vpack.c.b16 %v1417, %v1409
    %v1970 = vpack.c.b16 %v1418, %v1410
    %v1971 = vpack.c.b16 %v1419, %v1411
    %v1972 = vpack.c.b16 %v1428, %v1420
    %v1973 = vpack.c.b16 %v1429, %v1421
    %v1974 = vpack.c.b16 %v1430, %v1422
    %v1975 = vpack.c.b16 %v1431, %v1423
    %v1976 = vpack.c.b16 %v1432, %v1424
    %v1977 = vpack.c.b16 %v1433, %v1425
    %v1978 = vpack.c.b16 %v1434, %v1426
    %v1979 = vpack.c.b16 %v1435, %v1427
    %v1980 = vpack.c.b16 %v1444, %v1436
    %v1981 = vpack.c.b16 %v1445, %v1437
    %v1982 = vpack.c.b16 %v1446, %v1438
    %v1983 = vpack.c.b16 %v1447, %v1439
    %v1984 = vpack.c.b16 %v1448, %v1440
    %v1985 = vpack.c.b16 %v1449, %v1441
    %v1986 = vpack.c.b16 %v1450, %v1442
    %v1987 = vpack.c.b16 %v1451, %v1443
    %v1988 = vpack.c.b16 %v1460, %v1452
    %v1989 = vpack.c.b16 %v1461, %v1453
    %v1990 = vpack.c.b16 %v1462, %v1454
    %v1991 = vpack.c.b16 %v1463, %v1455
    %v1992 = vpack.c.b16 %v1464, %v1456
    %v1993 = vpack.c.b16 %v1465, %v1457
    %v1994 = vpack.c.b16 %v1466, %v1458
    %v1995 = vpack.c.b16 %v1467, %v1459
    %v1996 = vpack.c.b16 %v1476, %v1468
    %v1997 = vpack.c.b16 %v1477, %v1469
    %v1998 = vpack.c.b16 %v1478, %v1470
    %v1999 = vpack.c.b16 %v1479, %v1471
    %v2000 = vpack.c.b16 %v1480, %v1472
    %v2001 = vpack.c.b16 %v1481, %v1473
    %v2002 = vpack.c.b16 %v1482, %v1474
    %v2003 = vpack.c.b16 %v1483, %v1475
    %v2004 = vpack.c.b16 %v1492, %v1484
    %v2005 = vpack.c.b16 %v1493, %v1485
    %v2006 = vpack.c.b16 %v1494, %v1486
    %v2007 = vpack.c.b16 %v1495, %v1487
    %v2008 = vpack.c.b16 %v1496, %v1488
    %v2009 = vpack.c.b16 %v1497, %v1489
    %v2010 = vpack.c.b16 %v1498, %v1490
    %v2011 = vpack.c.b16 %v1499, %v1491
    %v2012 = vpack.c.b16 %v1508, %v1500
    %v2013 = vpack.c.b16 %v1509, %v1501
    %v2014 = vpack.c.b16 %v1510, %v1502
    %v2015 = vpack.c.b16 %v1511, %v1503
    %v2016 = vpack.c.b16 %v1512, %v1504
    %v2017 = vpack.c.b16 %v1513, %v1505
    %v2018 = vpack.c.b16 %v1514, %v1506
    %v2019 = vpack.c.b16 %v1515, %v1507
    %v2020 = vpack.c.b16 %v1524, %v1516
    %v2021 = vpack.c.b16 %v1525, %v1517
    %v2022 = vpack.c.b16 %v1526, %v1518
    %v2023 = vpack.c.b16 %v1527, %v1519
    %v2024 = vpack.c.b16 %v1528, %v1520
    %v2025 = vpack.c.b16 %v1529, %v1521
    %v2026 = vpack.c.b16 %v1530, %v1522
    %v2027 = vpack.c.b16 %v1531, %v1523
    %v2028 = vpack.c.b16 %v1540, %v1532
    %v2029 = vpack.c.b16 %v1541, %v1533
    %v2030 = vpack.c.b16 %v1542, %v1534
    %v2031 = vpack.c.b16 %v1543, %v1535
    %v2032 = vpack.c.b16 %v1544, %v1536
    %v2033 = vpack.c.b16 %v1545, %v1537
    %v2034 = vpack.c.b16 %v1546, %v1538
    %v2035 = vpack.c.b16 %v1547, %v1539
    %v2036 = vpack.c.b16 %v1556, %v1548
    %v2037 = vpack.c.b16 %v1557, %v1549
    %v2038 = vpack.c.b16 %v1558, %v1550
    %v2039 = vpack.c.b16 %v1559, %v1551
    %v2040 = vpack.c.b16 %v1560, %v1552
    %v2041 = vpack.c.b16 %v1561, %v1553
    %v2042 = vpack.c.b16 %v1562, %v1554
    %v2043 = vpack.c.b16 %v1563, %v1555
    %v2044 = vpack.c.b16 %v1572, %v1564
    %v2045 = vpack.c.b16 %v1573, %v1565
    %v2046 = vpack.c.b16 %v1574, %v1566
    %v2047 = vpack.c.b16 %v1575, %v1567
    %v2048 = vpack.c.b16 %v1576, %v1568
    %v2049 = vpack.c.b16 %v1577, %v1569
    %v2050 = vpack.c.b16 %v1578, %v1570
    %v2051 = vpack.c.b16 %v1579, %v1571
    %v2052 = vpack.c.b16 %v1588, %v1580
    %v2053 = vpack.c.b16 %v1589, %v1581
    %v2054 = vpack.c.b16 %v1590, %v1582
    %v2055 = vpack.c.b16 %v1591, %v1583
    %v2056 = vpack.c.b16 %v1592, %v1584
    %v2057 = vpack.c.b16 %v1593, %v1585
    %v2058 = vpack.c.b16 %v1594, %v1586
    %v2059 = vpack.c.b16 %v1595, %v1587
    %v2060 = vpack.c.b16 %v1604, %v1596
    %v2061 = vpack.c.b16 %v1605, %v1597
    %v2062 = vpack.c.b16 %v1606, %v1598
    %v2063 = vpack.c.b16 %v1607, %v1599
    %v2064 = vpack.c.b16 %v1608, %v1600
    %v2065 = vpack.c.b16 %v1609, %v1601
    %v2066 = vpack.c.b16 %v1610, %v1602
    %v2067 = vpack.c.b16 %v1611, %v1603
    %v2068 = vpack.c.b16 %v1620, %v1612
    %v2069 = vpack.c.b16 %v1621, %v1613
    %v2070 = vpack.c.b16 %v1622, %v1614
    %v2071 = vpack.c.b16 %v1623, %v1615
    %v2072 = vpack.c.b16 %v1624, %v1616
    %v2073 = vpack.c.b16 %v1625, %v1617
    %v2074 = vpack.c.b16 %v1626, %v1618
    %v2075 = vpack.c.b16 %v1627, %v1619
    %v2076 = vpack.c.b16 %v1636, %v1628
    %v2077 = vpack.c.b16 %v1637, %v1629
    %v2078 = vpack.c.b16 %v1638, %v1630
    %v2079 = vpack.c.b16 %v1639, %v1631
    %v2080 = vpack.c.b16 %v1640, %v1632
    %v2081 = vpack.c.b16 %v1641, %v1633
    %v2082 = vpack.c.b16 %v1642, %v1634
    %v2083 = vpack.c.b16 %v1643, %v1635
    %v2084 = vpack.c.b16 %v1652, %v1644
    %v2085 = vpack.c.b16 %v1653, %v1645
    %v2086 = vpack.c.b16 %v1654, %v1646
    %v2087 = vpack.c.b16 %v1655, %v1647
    %v2088 = vpack.c.b16 %v1656, %v1648
    %v2089 = vpack.c.b16 %v1657, %v1649
    %v2090 = vpack.c.b16 %v1658, %v1650
    %v2091 = vpack.c.b16 %v1659, %v1651
    %v2092 = vpack.c.b16 %v1668, %v1660
    %v2093 = vpack.c.b16 %v1669, %v1661
    %v2094 = vpack.c.b16 %v1670, %v1662
    %v2095 = vpack.c.b16 %v1671, %v1663
    %v2096 = vpack.c.b16 %v1672, %v1664
    %v2097 = vpack.c.b16 %v1673, %v1665
    %v2098 = vpack.c.b16 %v1674, %v1666
    %v2099 = vpack.c.b16 %v1675, %v1667
    %v2100 = vpack.c.b16 %v1684, %v1676
    %v2101 = vpack.c.b16 %v1685, %v1677
    %v2102 = vpack.c.b16 %v1686, %v1678
    %v2103 = vpack.c.b16 %v1687, %v1679
    %v2104 = vpack.c.b16 %v1688, %v1680
    %v2105 = vpack.c.b16 %v1689, %v1681
    %v2106 = vpack.c.b16 %v1690, %v1682
    %v2107 = vpack.c.b16 %v1691, %v1683
    %v2108 = vpack.c.b16 %v1700, %v1692
    %v2109 = vpack.c.b16 %v1701, %v1693
    %v2110 = vpack.c.b16 %v1702, %v1694
    %v2111 = vpack.c.b16 %v1703, %v1695
    %v2112 = vpack.c.b16 %v1704, %v1696
    %v2113 = vpack.c.b16 %v1705, %v1697
    %v2114 = vpack.c.b16 %v1706, %v1698
    %v2115 = vpack.c.b16 %v1707, %v1699
    %v2116 = vpack.c.b16 %v1716, %v1708
    %v2117 = vpack.c.b16 %v1717, %v1709
    %v2118 = vpack.c.b16 %v1718, %v1710
    %v2119 = vpack.c.b16 %v1719, %v1711
    %v2120 = vpack.c.b16 %v1720, %v1712
    %v2121 = vpack.c.b16 %v1721, %v1713
    %v2122 = vpack.c.b16 %v1722, %v1714
    %v2123 = vpack.c.b16 %v1723, %v1715
    %v2124 = vpack.c.b16 %v1732, %v1724
    %v2125 = vpack.c.b16 %v1733, %v1725
    %v2126 = vpack.c.b16 %v1734, %v1726
    %v2127 = vpack.c.b16 %v1735, %v1727
    %v2128 = vpack.c.b16 %v1736, %v1728
    %v2129 = vpack.c.b16 %v1737, %v1729
    %v2130 = vpack.c.b16 %v1738, %v1730
    %v2131 = vpack.c.b16 %v1739, %v1731
    %v2132 = vpack.c.b16 %v1748, %v1740
    %v2133 = vpack.c.b16 %v1749, %v1741
    %v2134 = vpack.c.b16 %v1750, %v1742
    %v2135 = vpack.c.b16 %v1751, %v1743
    %v2136 = vpack.c.b16 %v1752, %v1744
    %v2137 = vpack.c.b16 %v1753, %v1745
    %v2138 = vpack.c.b16 %v1754, %v1746
    %v2139 = vpack.c.b16 %v1755, %v1747
    %2524 = vmatprep.subr.bf16.mxu0 %v1813
    %2525 = vmatpush1.bf16.msra.mxu0 %v1812
    %2526 = vmatprep.subr.bf16.mxu0 %v1805
    %2527 = vmatpush1.bf16.msra.mxu0 %v1804
    %2528 = vmatprep.subr.bf16.mxu0 %v1797
    %2529 = vmatpush1.bf16.msra.mxu0 %v1796
    %2530 = vmatprep.subr.bf16.mxu0 %v1789
    %2531 = vmatpush1.bf16.msra.mxu0 %v1788
    %2532 = vmatprep.subr.bf16.mxu0 %v1781
    %2533 = vmatpush1.bf16.msra.mxu0 %v1780
    %2534 = vmatprep.subr.bf16.mxu0 %v1773
    %2535 = vmatpush1.bf16.msra.mxu0 %v1772
    %2536 = vmatprep.subr.bf16.mxu0 %v1765
    %2537 = vmatpush1.bf16.msra.mxu0 %v1764
    %2538 = vmatprep.subr.bf16.mxu0 %v1757
    %2539 = vmatpush1.bf16.msra.mxu0 %v1756
    %2540 = vmatprep.subr.bf16.mxu0 %v1877
    %2541 = vmatpush2.bf16.msra.mxu0 %v1876
    %2542 = vmatprep.subr.bf16.mxu0 %v1869
    %2543 = vmatpush2.bf16.msra.mxu0 %v1868
    %2544 = vmatprep.subr.bf16.mxu0 %v1861
    %2545 = vmatpush2.bf16.msra.mxu0 %v1860
    %2546 = vmatprep.subr.bf16.mxu0 %v1853
    %2547 = vmatpush2.bf16.msra.mxu0 %v1852
    %2548 = vmatprep.subr.bf16.mxu0 %v1845
    %2549 = vmatpush2.bf16.msra.mxu0 %v1844
    %2550 = vmatprep.subr.bf16.mxu0 %v1837
    %2551 = vmatpush2.bf16.msra.mxu0 %v1836
    %2552 = vmatprep.subr.bf16.mxu0 %v1829
    %2553 = vmatpush2.bf16.msra.mxu0 %v1828
    %2554 = vmatprep.subr.bf16.mxu0 %v1821
    %2555 = vmatpush2.bf16.msra.mxu0 %v1820
    %2556 = vmatprep.mubr.bf16.mxu0 %v167
    %2557 = vmatmul.mubr.bf16.gmra.mxu0 %v166
    %v2558 = vpop.f32.mrf.mxu0
    %v2559 = vadd.f32 %v567, %v2558
    %v2560 = vpop.f32.mrf.mxu0
    %v2561 = vadd.f32 %v571, %v2560
    %v2562 = vpop.f32.mrf.mxu0
    %v2563 = vadd.f32 %v567, %v2562
    %v2564 = vpop.f32.mrf.mxu0
    %v2565 = vadd.f32 %v571, %v2564
    %2566 = vmatprep.mubr.bf16.mxu0 %v173
    %2567 = vmatmul.mubr.bf16.gmra.mxu0 %v172
    %v2568 = vpop.f32.mrf.mxu0
    %v2569 = vadd.f32 %v567, %v2568
    %v2570 = vpop.f32.mrf.mxu0
    %v2571 = vadd.f32 %v571, %v2570
    %v2572 = vpop.f32.mrf.mxu0
    %v2573 = vpop.f32.mrf.mxu0
    %2574 = vdwg.mxu0
    %2575 = vmatprep.subr.bf16.mxu0 %v1941
    %2576 = vmatpush1.bf16.msra.mxu0 %v1940
    %2577 = vmatprep.subr.bf16.mxu0 %v1933
    %2578 = vmatpush1.bf16.msra.mxu0 %v1932
    %2579 = vmatprep.subr.bf16.mxu0 %v1925
    %2580 = vmatpush1.bf16.msra.mxu0 %v1924
    %2581 = vmatprep.subr.bf16.mxu0 %v1917
    %2582 = vmatpush1.bf16.msra.mxu0 %v1916
    %2583 = vmatprep.subr.bf16.mxu0 %v1909
    %2584 = vmatpush1.bf16.msra.mxu0 %v1908
    %2585 = vmatprep.subr.bf16.mxu0 %v1901
    %2586 = vmatpush1.bf16.msra.mxu0 %v1900
    %2587 = vmatprep.subr.bf16.mxu0 %v1893
    %2588 = vmatpush1.bf16.msra.mxu0 %v1892
    %2589 = vmatprep.subr.bf16.mxu0 %v1885
    %2590 = vmatpush1.bf16.msra.mxu0 %v1884
    %2591 = vmatprep.subr.bf16.mxu0 %v2005
    %2592 = vmatpush2.bf16.msra.mxu0 %v2004
    %2593 = vmatprep.subr.bf16.mxu0 %v1997
    %2594 = vmatpush2.bf16.msra.mxu0 %v1996
    %2595 = vmatprep.subr.bf16.mxu0 %v1989
    %2596 = vmatpush2.bf16.msra.mxu0 %v1988
    %2597 = vmatprep.subr.bf16.mxu0 %v1981
    %2598 = vmatpush2.bf16.msra.mxu0 %v1980
    %2599 = vmatprep.subr.bf16.mxu0 %v1973
    %2600 = vmatpush2.bf16.msra.mxu0 %v1972
    %2601 = vmatprep.subr.bf16.mxu0 %v1965
    %2602 = vmatpush2.bf16.msra.mxu0 %v1964
    %2603 = vmatprep.subr.bf16.mxu0 %v1957
    %2604 = vmatpush2.bf16.msra.mxu0 %v1956
    %2605 = vmatprep.subr.bf16.mxu0 %v1949
    %2606 = vmatpush2.bf16.msra.mxu0 %v1948
    %2607 = vmatprep.mubr.bf16.mxu0 %v169
    %2608 = vmatmul.mubr.bf16.gmra.mxu0 %v168
    %v2609 = vpop.f32.mrf.mxu0
    %v2610 = vadd.f32 %v2559, %v2609
    %v2611 = vpop.f32.mrf.mxu0
    %v2612 = vadd.f32 %v2561, %v2611
    %v2613 = vpop.f32.mrf.mxu0
    %v2614 = vadd.f32 %v2563, %v2613
    %v2615 = vpop.f32.mrf.mxu0
    %v2616 = vadd.f32 %v2565, %v2615
    %2617 = vmatprep.mubr.bf16.mxu0 %v175
    %2618 = vmatmul.mubr.bf16.gmra.mxu0 %v174
    %v2619 = vpop.f32.mrf.mxu0
    %v2620 = vadd.f32 %v2569, %v2619
    %v2621 = vpop.f32.mrf.mxu0
    %v2622 = vadd.f32 %v2571, %v2621
    %v2623 = vpop.f32.mrf.mxu0
    %v2624 = vpop.f32.mrf.mxu0
    %2625 = vdwg.mxu0
    %2626 = vmatprep.subr.bf16.mxu0 %v2069
    %2627 = vmatpush1.bf16.msra.mxu0 %v2068
    %2628 = vmatprep.subr.bf16.mxu0 %v2061
    %2629 = vmatpush1.bf16.msra.mxu0 %v2060
    %2630 = vmatprep.subr.bf16.mxu0 %v2053
    %2631 = vmatpush1.bf16.msra.mxu0 %v2052
    %2632 = vmatprep.subr.bf16.mxu0 %v2045
    %2633 = vmatpush1.bf16.msra.mxu0 %v2044
    %2634 = vmatprep.subr.bf16.mxu0 %v2037
    %2635 = vmatpush1.bf16.msra.mxu0 %v2036
    %2636 = vmatprep.subr.bf16.mxu0 %v2029
    %2637 = vmatpush1.bf16.msra.mxu0 %v2028
    %2638 = vmatprep.subr.bf16.mxu0 %v2021
    %2639 = vmatpush1.bf16.msra.mxu0 %v2020
    %2640 = vmatprep.subr.bf16.mxu0 %v2013
    %2641 = vmatpush1.bf16.msra.mxu0 %v2012
    %2642 = vmatprep.subr.bf16.mxu0 %v2133
    %2643 = vmatpush2.bf16.msra.mxu0 %v2132
    %2644 = vmatprep.subr.bf16.mxu0 %v2125
    %2645 = vmatpush2.bf16.msra.mxu0 %v2124
    %2646 = vmatprep.subr.bf16.mxu0 %v2117
    %2647 = vmatpush2.bf16.msra.mxu0 %v2116
    %2648 = vmatprep.subr.bf16.mxu0 %v2109
    %2649 = vmatpush2.bf16.msra.mxu0 %v2108
    %2650 = vmatprep.subr.bf16.mxu0 %v2101
    %2651 = vmatpush2.bf16.msra.mxu0 %v2100
    %2652 = vmatprep.subr.bf16.mxu0 %v2093
    %2653 = vmatpush2.bf16.msra.mxu0 %v2092
    %2654 = vmatprep.subr.bf16.mxu0 %v2085
    %2655 = vmatpush2.bf16.msra.mxu0 %v2084
    %2656 = vmatprep.subr.bf16.mxu0 %v2077
    %2657 = vmatpush2.bf16.msra.mxu0 %v2076
    %2658 = vmatprep.mubr.bf16.mxu0 %v171
    %2659 = vmatmul.mubr.bf16.gmra.mxu0 %v170
    %v2660 = vpop.f32.mrf.mxu0
    %v2661 = vadd.f32 %v2610, %v2660
    %v2662 = vpop.f32.mrf.mxu0
    %v2663 = vadd.f32 %v2612, %v2662
    %v2664 = vpop.f32.mrf.mxu0
    %v2665 = vadd.f32 %v2614, %v2664
    %v2666 = vpop.f32.mrf.mxu0
    %v2667 = vadd.f32 %v2616, %v2666
    %2668 = vmatprep.mubr.bf16.mxu0 %v177
    %2669 = vmatmul.mubr.bf16.gmra.mxu0 %v176
    %v2670 = vpop.f32.mrf.mxu0
    %v2671 = vadd.f32 %v2620, %v2670
    %v2672 = vpop.f32.mrf.mxu0
    %v2673 = vadd.f32 %v2622, %v2672
    %v2674 = vpop.f32.mrf.mxu0
    %v2675 = vpop.f32.mrf.mxu0
    %2676 = vdwg.mxu0
    %2677 = vmatprep.subr.bf16.mxu0 %v1815
    %2678 = vmatpush1.bf16.msra.mxu0 %v1814
    %2679 = vmatprep.subr.bf16.mxu0 %v1807
    %2680 = vmatpush1.bf16.msra.mxu0 %v1806
    %2681 = vmatprep.subr.bf16.mxu0 %v1799
    %2682 = vmatpush1.bf16.msra.mxu0 %v1798
    %2683 = vmatprep.subr.bf16.mxu0 %v1791
    %2684 = vmatpush1.bf16.msra.mxu0 %v1790
    %2685 = vmatprep.subr.bf16.mxu0 %v1783
    %2686 = vmatpush1.bf16.msra.mxu0 %v1782
    %2687 = vmatprep.subr.bf16.mxu0 %v1775
    %2688 = vmatpush1.bf16.msra.mxu0 %v1774
    %2689 = vmatprep.subr.bf16.mxu0 %v1767
    %2690 = vmatpush1.bf16.msra.mxu0 %v1766
    %2691 = vmatprep.subr.bf16.mxu0 %v1759
    %2692 = vmatpush1.bf16.msra.mxu0 %v1758
    %2693 = vmatprep.subr.bf16.mxu0 %v1879
    %2694 = vmatpush2.bf16.msra.mxu0 %v1878
    %2695 = vmatprep.subr.bf16.mxu0 %v1871
    %2696 = vmatpush2.bf16.msra.mxu0 %v1870
    %2697 = vmatprep.subr.bf16.mxu0 %v1863
    %2698 = vmatpush2.bf16.msra.mxu0 %v1862
    %2699 = vmatprep.subr.bf16.mxu0 %v1855
    %2700 = vmatpush2.bf16.msra.mxu0 %v1854
    %2701 = vmatprep.subr.bf16.mxu0 %v1847
    %2702 = vmatpush2.bf16.msra.mxu0 %v1846
    %2703 = vmatprep.subr.bf16.mxu0 %v1839
    %2704 = vmatpush2.bf16.msra.mxu0 %v1838
    %2705 = vmatprep.subr.bf16.mxu0 %v1831
    %2706 = vmatpush2.bf16.msra.mxu0 %v1830
    %2707 = vmatprep.subr.bf16.mxu0 %v1823
    %2708 = vmatpush2.bf16.msra.mxu0 %v1822
    %2709 = vmatprep.mubr.bf16.mxu0 %v167
    %2710 = vmatmul.mubr.bf16.gmra.mxu0 %v166
    %v2711 = vpop.f32.mrf.mxu0
    %v2712 = vadd.f32 %v575, %v2711
    %v2713 = vpop.f32.mrf.mxu0
    %v2714 = vadd.f32 %v579, %v2713
    %v2715 = vpop.f32.mrf.mxu0
    %v2716 = vadd.f32 %v575, %v2715
    %v2717 = vpop.f32.mrf.mxu0
    %v2718 = vadd.f32 %v579, %v2717
    %2719 = vmatprep.mubr.bf16.mxu0 %v173
    %2720 = vmatmul.mubr.bf16.gmra.mxu0 %v172
    %v2721 = vpop.f32.mrf.mxu0
    %v2722 = vadd.f32 %v575, %v2721
    %v2723 = vpop.f32.mrf.mxu0
    %v2724 = vadd.f32 %v579, %v2723
    %v2725 = vpop.f32.mrf.mxu0
    %v2726 = vpop.f32.mrf.mxu0
    %2727 = vdwg.mxu0
    %2728 = vmatprep.subr.bf16.mxu0 %v1943
    %2729 = vmatpush1.bf16.msra.mxu0 %v1942
    %2730 = vmatprep.subr.bf16.mxu0 %v1935
    %2731 = vmatpush1.bf16.msra.mxu0 %v1934
    %2732 = vmatprep.subr.bf16.mxu0 %v1927
    %2733 = vmatpush1.bf16.msra.mxu0 %v1926
    %2734 = vmatprep.subr.bf16.mxu0 %v1919
    %2735 = vmatpush1.bf16.msra.mxu0 %v1918
    %2736 = vmatprep.subr.bf16.mxu0 %v1911
    %2737 = vmatpush1.bf16.msra.mxu0 %v1910
    %2738 = vmatprep.subr.bf16.mxu0 %v1903
    %2739 = vmatpush1.bf16.msra.mxu0 %v1902
    %2740 = vmatprep.subr.bf16.mxu0 %v1895
    %2741 = vmatpush1.bf16.msra.mxu0 %v1894
    %2742 = vmatprep.subr.bf16.mxu0 %v1887
    %2743 = vmatpush1.bf16.msra.mxu0 %v1886
    %2744 = vmatprep.subr.bf16.mxu0 %v2007
    %2745 = vmatpush2.bf16.msra.mxu0 %v2006
    %2746 = vmatprep.subr.bf16.mxu0 %v1999
    %2747 = vmatpush2.bf16.msra.mxu0 %v1998
    %2748 = vmatprep.subr.bf16.mxu0 %v1991
    %2749 = vmatpush2.bf16.msra.mxu0 %v1990
    %2750 = vmatprep.subr.bf16.mxu0 %v1983
    %2751 = vmatpush2.bf16.msra.mxu0 %v1982
    %2752 = vmatprep.subr.bf16.mxu0 %v1975
    %2753 = vmatpush2.bf16.msra.mxu0 %v1974
    %2754 = vmatprep.subr.bf16.mxu0 %v1967
    %2755 = vmatpush2.bf16.msra.mxu0 %v1966
    %2756 = vmatprep.subr.bf16.mxu0 %v1959
    %2757 = vmatpush2.bf16.msra.mxu0 %v1958
    %2758 = vmatprep.subr.bf16.mxu0 %v1951
    %2759 = vmatpush2.bf16.msra.mxu0 %v1950
    %2760 = vmatprep.mubr.bf16.mxu0 %v169
    %2761 = vmatmul.mubr.bf16.gmra.mxu0 %v168
    %v2762 = vpop.f32.mrf.mxu0
    %v2763 = vadd.f32 %v2712, %v2762
    %v2764 = vpop.f32.mrf.mxu0
    %v2765 = vadd.f32 %v2714, %v2764
    %v2766 = vpop.f32.mrf.mxu0
    %v2767 = vadd.f32 %v2716, %v2766
    %v2768 = vpop.f32.mrf.mxu0
    %v2769 = vadd.f32 %v2718, %v2768
    %2770 = vmatprep.mubr.bf16.mxu0 %v175
    %2771 = vmatmul.mubr.bf16.gmra.mxu0 %v174
    %v2772 = vpop.f32.mrf.mxu0
    %v2773 = vadd.f32 %v2722, %v2772
    %v2774 = vpop.f32.mrf.mxu0
    %v2775 = vadd.f32 %v2724, %v2774
    %v2776 = vpop.f32.mrf.mxu0
    %v2777 = vpop.f32.mrf.mxu0
    %2778 = vdwg.mxu0
    %2779 = vmatprep.subr.bf16.mxu0 %v2071
    %2780 = vmatpush1.bf16.msra.mxu0 %v2070
    %2781 = vmatprep.subr.bf16.mxu0 %v2063
    %2782 = vmatpush1.bf16.msra.mxu0 %v2062
    %2783 = vmatprep.subr.bf16.mxu0 %v2055
    %2784 = vmatpush1.bf16.msra.mxu0 %v2054
    %2785 = vmatprep.subr.bf16.mxu0 %v2047
    %2786 = vmatpush1.bf16.msra.mxu0 %v2046
    %2787 = vmatprep.subr.bf16.mxu0 %v2039
    %2788 = vmatpush1.bf16.msra.mxu0 %v2038
    %2789 = vmatprep.subr.bf16.mxu0 %v2031
    %2790 = vmatpush1.bf16.msra.mxu0 %v2030
    %2791 = vmatprep.subr.bf16.mxu0 %v2023
    %2792 = vmatpush1.bf16.msra.mxu0 %v2022
    %2793 = vmatprep.subr.bf16.mxu0 %v2015
    %2794 = vmatpush1.bf16.msra.mxu0 %v2014
    %2795 = vmatprep.subr.bf16.mxu0 %v2135
    %2796 = vmatpush2.bf16.msra.mxu0 %v2134
    %2797 = vmatprep.subr.bf16.mxu0 %v2127
    %2798 = vmatpush2.bf16.msra.mxu0 %v2126
    %2799 = vmatprep.subr.bf16.mxu0 %v2119
    %2800 = vmatpush2.bf16.msra.mxu0 %v2118
    %2801 = vmatprep.subr.bf16.mxu0 %v2111
    %2802 = vmatpush2.bf16.msra.mxu0 %v2110
    %2803 = vmatprep.subr.bf16.mxu0 %v2103
    %2804 = vmatpush2.bf16.msra.mxu0 %v2102
    %2805 = vmatprep.subr.bf16.mxu0 %v2095
    %2806 = vmatpush2.bf16.msra.mxu0 %v2094
    %2807 = vmatprep.subr.bf16.mxu0 %v2087
    %2808 = vmatpush2.bf16.msra.mxu0 %v2086
    %2809 = vmatprep.subr.bf16.mxu0 %v2079
    %2810 = vmatpush2.bf16.msra.mxu0 %v2078
    %2811 = vmatprep.mubr.bf16.mxu0 %v171
    %2812 = vmatmul.mubr.bf16.gmra.mxu0 %v170
    %v2813 = vpop.f32.mrf.mxu0
    %v2814 = vadd.f32 %v2763, %v2813
    %v2815 = vpop.f32.mrf.mxu0
    %v2816 = vadd.f32 %v2765, %v2815
    %v2817 = vpop.f32.mrf.mxu0
    %v2818 = vadd.f32 %v2767, %v2817
    %v2819 = vpop.f32.mrf.mxu0
    %v2820 = vadd.f32 %v2769, %v2819
    %2821 = vmatprep.mubr.bf16.mxu0 %v177
    %2822 = vmatmul.mubr.bf16.gmra.mxu0 %v176
    %v2823 = vpop.f32.mrf.mxu0
    %v2824 = vadd.f32 %v2773, %v2823
    %v2825 = vpop.f32.mrf.mxu0
    %v2826 = vadd.f32 %v2775, %v2825
    %v2827 = vpop.f32.mrf.mxu0
    %v2828 = vpop.f32.mrf.mxu0
    %2829 = vdwg.mxu0
    %2830 = vmatprep.subr.bf16.mxu0 %v1817
    %2831 = vmatpush1.bf16.msra.mxu0 %v1816
    %2832 = vmatprep.subr.bf16.mxu0 %v1809
    %2833 = vmatpush1.bf16.msra.mxu0 %v1808
    %2834 = vmatprep.subr.bf16.mxu0 %v1801
    %2835 = vmatpush1.bf16.msra.mxu0 %v1800
    %2836 = vmatprep.subr.bf16.mxu0 %v1793
    %2837 = vmatpush1.bf16.msra.mxu0 %v1792
    %2838 = vmatprep.subr.bf16.mxu0 %v1785
    %2839 = vmatpush1.bf16.msra.mxu0 %v1784
    %2840 = vmatprep.subr.bf16.mxu0 %v1777
    %2841 = vmatpush1.bf16.msra.mxu0 %v1776
    %2842 = vmatprep.subr.bf16.mxu0 %v1769
    %2843 = vmatpush1.bf16.msra.mxu0 %v1768
    %2844 = vmatprep.subr.bf16.mxu0 %v1761
    %2845 = vmatpush1.bf16.msra.mxu0 %v1760
    %2846 = vmatprep.subr.bf16.mxu0 %v1881
    %2847 = vmatpush2.bf16.msra.mxu0 %v1880
    %2848 = vmatprep.subr.bf16.mxu0 %v1873
    %2849 = vmatpush2.bf16.msra.mxu0 %v1872
    %2850 = vmatprep.subr.bf16.mxu0 %v1865
    %2851 = vmatpush2.bf16.msra.mxu0 %v1864
    %2852 = vmatprep.subr.bf16.mxu0 %v1857
    %2853 = vmatpush2.bf16.msra.mxu0 %v1856
    %2854 = vmatprep.subr.bf16.mxu0 %v1849
    %2855 = vmatpush2.bf16.msra.mxu0 %v1848
    %2856 = vmatprep.subr.bf16.mxu0 %v1841
    %2857 = vmatpush2.bf16.msra.mxu0 %v1840
    %2858 = vmatprep.subr.bf16.mxu0 %v1833
    %2859 = vmatpush2.bf16.msra.mxu0 %v1832
    %2860 = vmatprep.subr.bf16.mxu0 %v1825
    %2861 = vmatpush2.bf16.msra.mxu0 %v1824
    %2862 = vmatprep.mubr.bf16.mxu0 %v167
    %2863 = vmatmul.mubr.bf16.gmra.mxu0 %v166
    %v2864 = vpop.f32.mrf.mxu0
    %v2865 = vadd.f32 %v583, %v2864
    %v2866 = vpop.f32.mrf.mxu0
    %v2867 = vadd.f32 %v587, %v2866
    %v2868 = vpop.f32.mrf.mxu0
    %v2869 = vadd.f32 %v583, %v2868
    %v2870 = vpop.f32.mrf.mxu0
    %v2871 = vadd.f32 %v587, %v2870
    %2872 = vmatprep.mubr.bf16.mxu0 %v173
    %2873 = vmatmul.mubr.bf16.gmra.mxu0 %v172
    %v2874 = vpop.f32.mrf.mxu0
    %v2875 = vadd.f32 %v583, %v2874
    %v2876 = vpop.f32.mrf.mxu0
    %v2877 = vadd.f32 %v587, %v2876
    %v2878 = vpop.f32.mrf.mxu0
    %v2879 = vpop.f32.mrf.mxu0
    %2880 = vdwg.mxu0
    %2881 = vmatprep.subr.bf16.mxu0 %v1945
    %2882 = vmatpush1.bf16.msra.mxu0 %v1944
    %2883 = vmatprep.subr.bf16.mxu0 %v1937
    %2884 = vmatpush1.bf16.msra.mxu0 %v1936
    %2885 = vmatprep.subr.bf16.mxu0 %v1929
    %2886 = vmatpush1.bf16.msra.mxu0 %v1928
    %2887 = vmatprep.subr.bf16.mxu0 %v1921
    %2888 = vmatpush1.bf16.msra.mxu0 %v1920
    %2889 = vmatprep.subr.bf16.mxu0 %v1913
    %2890 = vmatpush1.bf16.msra.mxu0 %v1912
    %2891 = vmatprep.subr.bf16.mxu0 %v1905
    %2892 = vmatpush1.bf16.msra.mxu0 %v1904
    %2893 = vmatprep.subr.bf16.mxu0 %v1897
    %2894 = vmatpush1.bf16.msra.mxu0 %v1896
    %2895 = vmatprep.subr.bf16.mxu0 %v1889
    %2896 = vmatpush1.bf16.msra.mxu0 %v1888
    %2897 = vmatprep.subr.bf16.mxu0 %v2009
    %2898 = vmatpush2.bf16.msra.mxu0 %v2008
    %2899 = vmatprep.subr.bf16.mxu0 %v2001
    %2900 = vmatpush2.bf16.msra.mxu0 %v2000
    %2901 = vmatprep.subr.bf16.mxu0 %v1993
    %2902 = vmatpush2.bf16.msra.mxu0 %v1992
    %2903 = vmatprep.subr.bf16.mxu0 %v1985
    %2904 = vmatpush2.bf16.msra.mxu0 %v1984
    %2905 = vmatprep.subr.bf16.mxu0 %v1977
    %2906 = vmatpush2.bf16.msra.mxu0 %v1976
    %2907 = vmatprep.subr.bf16.mxu0 %v1969
    %2908 = vmatpush2.bf16.msra.mxu0 %v1968
    %2909 = vmatprep.subr.bf16.mxu0 %v1961
    %2910 = vmatpush2.bf16.msra.mxu0 %v1960
    %2911 = vmatprep.subr.bf16.mxu0 %v1953
    %2912 = vmatpush2.bf16.msra.mxu0 %v1952
    %2913 = vmatprep.mubr.bf16.mxu0 %v169
    %2914 = vmatmul.mubr.bf16.gmra.mxu0 %v168
    %v2915 = vpop.f32.mrf.mxu0
    %v2916 = vadd.f32 %v2865, %v2915
    %v2917 = vpop.f32.mrf.mxu0
    %v2918 = vadd.f32 %v2867, %v2917
    %v2919 = vpop.f32.mrf.mxu0
    %v2920 = vadd.f32 %v2869, %v2919
    %v2921 = vpop.f32.mrf.mxu0
    %v2922 = vadd.f32 %v2871, %v2921
    %2923 = vmatprep.mubr.bf16.mxu0 %v175
    %2924 = vmatmul.mubr.bf16.gmra.mxu0 %v174
    %v2925 = vpop.f32.mrf.mxu0
    %v2926 = vadd.f32 %v2875, %v2925
    %v2927 = vpop.f32.mrf.mxu0
    %v2928 = vadd.f32 %v2877, %v2927
    %v2929 = vpop.f32.mrf.mxu0
    %v2930 = vpop.f32.mrf.mxu0
    %2931 = vdwg.mxu0
    %2932 = vmatprep.subr.bf16.mxu0 %v2073
    %2933 = vmatpush1.bf16.msra.mxu0 %v2072
    %2934 = vmatprep.subr.bf16.mxu0 %v2065
    %2935 = vmatpush1.bf16.msra.mxu0 %v2064
    %2936 = vmatprep.subr.bf16.mxu0 %v2057
    %2937 = vmatpush1.bf16.msra.mxu0 %v2056
    %2938 = vmatprep.subr.bf16.mxu0 %v2049
    %2939 = vmatpush1.bf16.msra.mxu0 %v2048
    %2940 = vmatprep.subr.bf16.mxu0 %v2041
    %2941 = vmatpush1.bf16.msra.mxu0 %v2040
    %2942 = vmatprep.subr.bf16.mxu0 %v2033
    %2943 = vmatpush1.bf16.msra.mxu0 %v2032
    %2944 = vmatprep.subr.bf16.mxu0 %v2025
    %2945 = vmatpush1.bf16.msra.mxu0 %v2024
    %2946 = vmatprep.subr.bf16.mxu0 %v2017
    %2947 = vmatpush1.bf16.msra.mxu0 %v2016
    %2948 = vmatprep.subr.bf16.mxu0 %v2137
    %2949 = vmatpush2.bf16.msra.mxu0 %v2136
    %2950 = vmatprep.subr.bf16.mxu0 %v2129
    %2951 = vmatpush2.bf16.msra.mxu0 %v2128
    %2952 = vmatprep.subr.bf16.mxu0 %v2121
    %2953 = vmatpush2.bf16.msra.mxu0 %v2120
    %2954 = vmatprep.subr.bf16.mxu0 %v2113
    %2955 = vmatpush2.bf16.msra.mxu0 %v2112
    %2956 = vmatprep.subr.bf16.mxu0 %v2105
    %2957 = vmatpush2.bf16.msra.mxu0 %v2104
    %2958 = vmatprep.subr.bf16.mxu0 %v2097
    %2959 = vmatpush2.bf16.msra.mxu0 %v2096
    %2960 = vmatprep.subr.bf16.mxu0 %v2089
    %2961 = vmatpush2.bf16.msra.mxu0 %v2088
    %2962 = vmatprep.subr.bf16.mxu0 %v2081
    %2963 = vmatpush2.bf16.msra.mxu0 %v2080
    %2964 = vmatprep.mubr.bf16.mxu0 %v171
    %2965 = vmatmul.mubr.bf16.gmra.mxu0 %v170
    %v2966 = vpop.f32.mrf.mxu0
    %v2967 = vadd.f32 %v2916, %v2966
    %v2968 = vpop.f32.mrf.mxu0
    %v2969 = vadd.f32 %v2918, %v2968
    %v2970 = vpop.f32.mrf.mxu0
    %v2971 = vadd.f32 %v2920, %v2970
    %v2972 = vpop.f32.mrf.mxu0
    %v2973 = vadd.f32 %v2922, %v2972
    %2974 = vmatprep.mubr.bf16.mxu0 %v177
    %2975 = vmatmul.mubr.bf16.gmra.mxu0 %v176
    %v2976 = vpop.f32.mrf.mxu0
    %v2977 = vadd.f32 %v2926, %v2976
    %v2978 = vpop.f32.mrf.mxu0
    %v2979 = vadd.f32 %v2928, %v2978
    %v2980 = vpop.f32.mrf.mxu0
    %v2981 = vpop.f32.mrf.mxu0
    %2982 = vdwg.mxu0
    %2983 = vmatprep.subr.bf16.mxu0 %v1819
    %2984 = vmatpush1.bf16.msra.mxu0 %v1818
    %2985 = vmatprep.subr.bf16.mxu0 %v1811
    %2986 = vmatpush1.bf16.msra.mxu0 %v1810
    %2987 = vmatprep.subr.bf16.mxu0 %v1803
    %2988 = vmatpush1.bf16.msra.mxu0 %v1802
    %2989 = vmatprep.subr.bf16.mxu0 %v1795
    %2990 = vmatpush1.bf16.msra.mxu0 %v1794
    %2991 = vmatprep.subr.bf16.mxu0 %v1787
    %2992 = vmatpush1.bf16.msra.mxu0 %v1786
    %2993 = vmatprep.subr.bf16.mxu0 %v1779
    %2994 = vmatpush1.bf16.msra.mxu0 %v1778
    %2995 = vmatprep.subr.bf16.mxu0 %v1771
    %2996 = vmatpush1.bf16.msra.mxu0 %v1770
    %2997 = vmatprep.subr.bf16.mxu0 %v1763
    %2998 = vmatpush1.bf16.msra.mxu0 %v1762
    %2999 = vmatprep.subr.bf16.mxu0 %v1883
    %3000 = vmatpush2.bf16.msra.mxu0 %v1882
    %3001 = vmatprep.subr.bf16.mxu0 %v1875
    %3002 = vmatpush2.bf16.msra.mxu0 %v1874
    %3003 = vmatprep.subr.bf16.mxu0 %v1867
    %3004 = vmatpush2.bf16.msra.mxu0 %v1866
    %3005 = vmatprep.subr.bf16.mxu0 %v1859
    %3006 = vmatpush2.bf16.msra.mxu0 %v1858
    %3007 = vmatprep.subr.bf16.mxu0 %v1851
    %3008 = vmatpush2.bf16.msra.mxu0 %v1850
    %3009 = vmatprep.subr.bf16.mxu0 %v1843
    %3010 = vmatpush2.bf16.msra.mxu0 %v1842
    %3011 = vmatprep.subr.bf16.mxu0 %v1835
    %3012 = vmatpush2.bf16.msra.mxu0 %v1834
    %3013 = vmatprep.subr.bf16.mxu0 %v1827
    %3014 = vmatpush2.bf16.msra.mxu0 %v1826
    %3015 = vmatprep.mubr.bf16.mxu0 %v167
    %3016 = vmatmul.mubr.bf16.gmra.mxu0 %v166
    %v3017 = vpop.f32.mrf.mxu0
    %v3018 = vadd.f32 %v591, %v3017
    %v3019 = vpop.f32.mrf.mxu0
    %v3020 = vadd.f32 %v595, %v3019
    %v3021 = vpop.f32.mrf.mxu0
    %v3022 = vadd.f32 %v591, %v3021
    %v3023 = vpop.f32.mrf.mxu0
    %v3024 = vadd.f32 %v595, %v3023
    %3025 = vmatprep.mubr.bf16.mxu0 %v173
    %3026 = vmatmul.mubr.bf16.gmra.mxu0 %v172
    %v3027 = vpop.f32.mrf.mxu0
    %v3028 = vadd.f32 %v591, %v3027
    %v3029 = vpop.f32.mrf.mxu0
    %v3030 = vadd.f32 %v595, %v3029
    %v3031 = vpop.f32.mrf.mxu0
    %v3032 = vpop.f32.mrf.mxu0
    %3033 = vdwg.mxu0
    %3034 = vmatprep.subr.bf16.mxu0 %v1947
    %3035 = vmatpush1.bf16.msra.mxu0 %v1946
    %3036 = vmatprep.subr.bf16.mxu0 %v1939
    %3037 = vmatpush1.bf16.msra.mxu0 %v1938
    %3038 = vmatprep.subr.bf16.mxu0 %v1931
    %3039 = vmatpush1.bf16.msra.mxu0 %v1930
    %3040 = vmatprep.subr.bf16.mxu0 %v1923
    %3041 = vmatpush1.bf16.msra.mxu0 %v1922
    %3042 = vmatprep.subr.bf16.mxu0 %v1915
    %3043 = vmatpush1.bf16.msra.mxu0 %v1914
    %3044 = vmatprep.subr.bf16.mxu0 %v1907
    %3045 = vmatpush1.bf16.msra.mxu0 %v1906
    %3046 = vmatprep.subr.bf16.mxu0 %v1899
    %3047 = vmatpush1.bf16.msra.mxu0 %v1898
    %3048 = vmatprep.subr.bf16.mxu0 %v1891
    %3049 = vmatpush1.bf16.msra.mxu0 %v1890
    %3050 = vmatprep.subr.bf16.mxu0 %v2011
    %3051 = vmatpush2.bf16.msra.mxu0 %v2010
    %3052 = vmatprep.subr.bf16.mxu0 %v2003
    %3053 = vmatpush2.bf16.msra.mxu0 %v2002
    %3054 = vmatprep.subr.bf16.mxu0 %v1995
    %3055 = vmatpush2.bf16.msra.mxu0 %v1994
    %3056 = vmatprep.subr.bf16.mxu0 %v1987
    %3057 = vmatpush2.bf16.msra.mxu0 %v1986
    %3058 = vmatprep.subr.bf16.mxu0 %v1979
    %3059 = vmatpush2.bf16.msra.mxu0 %v1978
    %3060 = vmatprep.subr.bf16.mxu0 %v1971
    %3061 = vmatpush2.bf16.msra.mxu0 %v1970
    %3062 = vmatprep.subr.bf16.mxu0 %v1963
    %3063 = vmatpush2.bf16.msra.mxu0 %v1962
    %3064 = vmatprep.subr.bf16.mxu0 %v1955
    %3065 = vmatpush2.bf16.msra.mxu0 %v1954
    %3066 = vmatprep.mubr.bf16.mxu0 %v169
    %3067 = vmatmul.mubr.bf16.gmra.mxu0 %v168
    %v3068 = vpop.f32.mrf.mxu0
    %v3069 = vadd.f32 %v3018, %v3068
    %v3070 = vpop.f32.mrf.mxu0
    %v3071 = vadd.f32 %v3020, %v3070
    %v3072 = vpop.f32.mrf.mxu0
    %v3073 = vadd.f32 %v3022, %v3072
    %v3074 = vpop.f32.mrf.mxu0
    %v3075 = vadd.f32 %v3024, %v3074
    %3076 = vmatprep.mubr.bf16.mxu0 %v175
    %3077 = vmatmul.mubr.bf16.gmra.mxu0 %v174
    %v3078 = vpop.f32.mrf.mxu0
    %v3079 = vadd.f32 %v3028, %v3078
    %v3080 = vpop.f32.mrf.mxu0
    %v3081 = vadd.f32 %v3030, %v3080
    %v3082 = vpop.f32.mrf.mxu0
    %v3083 = vpop.f32.mrf.mxu0
    %3084 = vdwg.mxu0
    %3085 = vmatprep.subr.bf16.mxu0 %v2075
    %3086 = vmatpush1.bf16.msra.mxu0 %v2074
    %3087 = vmatprep.subr.bf16.mxu0 %v2067
    %3088 = vmatpush1.bf16.msra.mxu0 %v2066
    %3089 = vmatprep.subr.bf16.mxu0 %v2059
    %3090 = vmatpush1.bf16.msra.mxu0 %v2058
    %3091 = vmatprep.subr.bf16.mxu0 %v2051
    %3092 = vmatpush1.bf16.msra.mxu0 %v2050
    %3093 = vmatprep.subr.bf16.mxu0 %v2043
    %3094 = vmatpush1.bf16.msra.mxu0 %v2042
    %3095 = vmatprep.subr.bf16.mxu0 %v2035
    %3096 = vmatpush1.bf16.msra.mxu0 %v2034
    %3097 = vmatprep.subr.bf16.mxu0 %v2027
    %3098 = vmatpush1.bf16.msra.mxu0 %v2026
    %3099 = vmatprep.subr.bf16.mxu0 %v2019
    %3100 = vmatpush1.bf16.msra.mxu0 %v2018
    %3101 = vmatprep.subr.bf16.mxu0 %v2139
    %3102 = vmatpush2.bf16.msra.mxu0 %v2138
    %3103 = vmatprep.subr.bf16.mxu0 %v2131
    %3104 = vmatpush2.bf16.msra.mxu0 %v2130
    %3105 = vmatprep.subr.bf16.mxu0 %v2123
    %3106 = vmatpush2.bf16.msra.mxu0 %v2122
    %3107 = vmatprep.subr.bf16.mxu0 %v2115
    %3108 = vmatpush2.bf16.msra.mxu0 %v2114
    %3109 = vmatprep.subr.bf16.mxu0 %v2107
    %3110 = vmatpush2.bf16.msra.mxu0 %v2106
    %3111 = vmatprep.subr.bf16.mxu0 %v2099
    %3112 = vmatpush2.bf16.msra.mxu0 %v2098
    %3113 = vmatprep.subr.bf16.mxu0 %v2091
    %3114 = vmatpush2.bf16.msra.mxu0 %v2090
    %3115 = vmatprep.subr.bf16.mxu0 %v2083
    %3116 = vmatpush2.bf16.msra.mxu0 %v2082
    %3117 = vmatprep.mubr.bf16.mxu0 %v171
    %3118 = vmatmul.mubr.bf16.gmra.mxu0 %v170
    %v3119 = vpop.f32.mrf.mxu0
    %v3120 = vadd.f32 %v3069, %v3119
    %v3121 = vpop.f32.mrf.mxu0
    %v3122 = vadd.f32 %v3071, %v3121
    %v3123 = vpop.f32.mrf.mxu0
    %v3124 = vadd.f32 %v3073, %v3123
    %v3125 = vpop.f32.mrf.mxu0
    %v3126 = vadd.f32 %v3075, %v3125
    %3127 = vmatprep.mubr.bf16.mxu0 %v177
    %3128 = vmatmul.mubr.bf16.gmra.mxu0 %v176
    %v3129 = vpop.f32.mrf.mxu0
    %v3130 = vadd.f32 %v3079, %v3129
    %v3131 = vpop.f32.mrf.mxu0
    %v3132 = vadd.f32 %v3081, %v3131
    %v3133 = vpop.f32.mrf.mxu0
    %v3134 = vpop.f32.mrf.mxu0
    %3135 = vdwg.mxu0
    %v3136 = vmax.f32 %v2661, 0.0
    %v3137 = vmax.f32 %v2663, 0.0
    %v3138 = vmax.f32 %v2814, 0.0
    %v3139 = vmax.f32 %v2816, 0.0
    %v3140 = vmax.f32 %v2967, 0.0
    %v3141 = vmax.f32 %v2969, 0.0
    %v3142 = vmax.f32 %v3120, 0.0
    %v3143 = vmax.f32 %v3122, 0.0
    %v3144 = vmax.f32 %v2665, 0.0
    %v3145 = vmax.f32 %v2667, 0.0
    %v3146 = vmax.f32 %v2818, 0.0
    %v3147 = vmax.f32 %v2820, 0.0
    %v3148 = vmax.f32 %v2971, 0.0
    %v3149 = vmax.f32 %v2973, 0.0
    %v3150 = vmax.f32 %v3124, 0.0
    %v3151 = vmax.f32 %v3126, 0.0
    %v3152 = vmax.f32 %v2671, 0.0
    %v3153 = vmax.f32 %v2673, 0.0
    %v3154 = vmax.f32 %v2824, 0.0
    %v3155 = vmax.f32 %v2826, 0.0
    %v3156 = vmax.f32 %v2977, 0.0
    %v3157 = vmax.f32 %v2979, 0.0
    %v3158 = vmax.f32 %v3130, 0.0
    %v3159 = vmax.f32 %v3132, 0.0
    %v3160 = vpack.c.bf16 %v3144, %v3136
    %v3161 = vpack.c.bf16 %v3145, %v3137
    %v3162 = vpack.c.bf16 %v3146, %v3138
    %v3163 = vpack.c.bf16 %v3147, %v3139
    %v3164 = vpack.c.bf16 %v3148, %v3140
    %v3165 = vpack.c.bf16 %v3149, %v3141
    %v3166 = vpack.c.bf16 %v3150, %v3142
    %v3167 = vpack.c.bf16 %v3151, %v3143
    %v3168 = vpack.c.bf16 %v3152, %v3152
    %v3169 = vpack.c.bf16 %v3153, %v3153
    %v3170 = vpack.c.bf16 %v3154, %v3154
    %v3171 = vpack.c.bf16 %v3155, %v3155
    %v3172 = vpack.c.bf16 %v3156, %v3156
    %v3173 = vpack.c.bf16 %v3157, %v3157
    %v3174 = vpack.c.bf16 %v3158, %v3158
    %v3175 = vpack.c.bf16 %v3159, %v3159
    %v3176 = vld [vmem:[#allocation8] sm:$0xff]
    %v3177 = vld [vmem:[#allocation8 + $0x8] sm:$0xff]
    %v3178 = vld [vmem:[#allocation8 + $0x10] sm:$0xff]
    %v3179 = vld [vmem:[#allocation8 + $0x18] sm:$0xff]
    %v3180 = vld [vmem:[#allocation8 + $0x20] sm:$0xff]
    %v3181 = vld [vmem:[#allocation8 + $0x28] sm:$0xff]
    %v3182 = vld [vmem:[#allocation8 + $0x30] sm:$0xff]
    %v3183 = vld [vmem:[#allocation8 + $0x38] sm:$0xff]
    %v3184 = vld [vmem:[#allocation8 + $0x40] sm:$0xff]
    %v3185 = vld [vmem:[#allocation8 + $0x48] sm:$0xff]
    %v3186 = vld [vmem:[#allocation8 + $0x50] sm:$0xff]
    %v3187 = vld [vmem:[#allocation8 + $0x58] sm:$0xff]
    %v3188 = vld [vmem:[#allocation8 + $0x60] sm:$0xff]
    %v3189 = vld [vmem:[#allocation8 + $0x68] sm:$0xff]
    %v3190 = vld [vmem:[#allocation8 + $0x70] sm:$0xff]
    %v3191 = vld [vmem:[#allocation8 + $0x78] sm:$0xff]
    %v3192 = vld [vmem:[#allocation8 + $0x80] sm:$0xff]
    %v3193 = vld [vmem:[#allocation8 + $0x88] sm:$0xff]
    %v3194 = vld [vmem:[#allocation8 + $0x90] sm:$0xff]
    %v3195 = vld [vmem:[#allocation8 + $0x98] sm:$0xff]
    %v3196 = vld [vmem:[#allocation8 + $0xa0] sm:$0xff]
    %v3197 = vld [vmem:[#allocation8 + $0xa8] sm:$0xff]
    %v3198 = vld [vmem:[#allocation8 + $0xb0] sm:$0xff]
    %v3199 = vld [vmem:[#allocation8 + $0xb8] sm:$0xff]
    %v3200 = vld [vmem:[#allocation8 + $0xc0] sm:$0xff]
    %v3201 = vld [vmem:[#allocation8 + $0xc8] sm:$0xff]
    %v3202 = vld [vmem:[#allocation8 + $0xd0] sm:$0xff]
    %v3203 = vld [vmem:[#allocation8 + $0xd8] sm:$0xff]
    %v3204 = vld [vmem:[#allocation8 + $0xe0] sm:$0xff]
    %v3205 = vld [vmem:[#allocation8 + $0xe8] sm:$0xff]
    %v3206 = vld [vmem:[#allocation8 + $0xf0] sm:$0xff]
    %v3207 = vld [vmem:[#allocation8 + $0xf8] sm:$0xff]
    %v3208 = vld [vmem:[#allocation8 + $0x100] sm:$0xff]
    %v3209 = vld [vmem:[#allocation8 + $0x108] sm:$0xff]
    %v3210 = vld [vmem:[#allocation8 + $0x110] sm:$0xff]
    %v3211 = vld [vmem:[#allocation8 + $0x118] sm:$0xff]
    %v3212 = vld [vmem:[#allocation8 + $0x120] sm:$0xff]
    %v3213 = vld [vmem:[#allocation8 + $0x128] sm:$0xff]
    %v3214 = vld [vmem:[#allocation8 + $0x130] sm:$0xff]
    %v3215 = vld [vmem:[#allocation8 + $0x138] sm:$0xff]
    %v3216 = vld [vmem:[#allocation8 + $0x140] sm:$0xff]
    %v3217 = vld [vmem:[#allocation8 + $0x148] sm:$0xff]
    %v3218 = vld [vmem:[#allocation8 + $0x150] sm:$0xff]
    %v3219 = vld [vmem:[#allocation8 + $0x158] sm:$0xff]
    %v3220 = vld [vmem:[#allocation8 + $0x160] sm:$0xff]
    %v3221 = vld [vmem:[#allocation8 + $0x168] sm:$0xff]
    %v3222 = vld [vmem:[#allocation8 + $0x170] sm:$0xff]
    %v3223 = vld [vmem:[#allocation8 + $0x178] sm:$0xff]
    %v3224 = vld [vmem:[#allocation8 + $0x180] sm:$0xff]
    %v3225 = vld [vmem:[#allocation8 + $0x188] sm:$0xff]
    %v3226 = vld [vmem:[#allocation8 + $0x190] sm:$0xff]
    %v3227 = vld [vmem:[#allocation8 + $0x198] sm:$0xff]
    %v3228 = vld [vmem:[#allocation8 + $0x1a0] sm:$0xff]
    %v3229 = vld [vmem:[#allocation8 + $0x1a8] sm:$0xff]
    %v3230 = vld [vmem:[#allocation8 + $0x1b0] sm:$0xff]
    %v3231 = vld [vmem:[#allocation8 + $0x1b8] sm:$0xff]
    %v3232 = vld [vmem:[#allocation8 + $0x1c0] sm:$0xff]
    %v3233 = vld [vmem:[#allocation8 + $0x1c8] sm:$0xff]
    %v3234 = vld [vmem:[#allocation8 + $0x1d0] sm:$0xff]
    %v3235 = vld [vmem:[#allocation8 + $0x1d8] sm:$0xff]
    %v3236 = vld [vmem:[#allocation8 + $0x1e0] sm:$0xff]
    %v3237 = vld [vmem:[#allocation8 + $0x1e8] sm:$0xff]
    %v3238 = vld [vmem:[#allocation8 + $0x1f0] sm:$0xff]
    %v3239 = vld [vmem:[#allocation8 + $0x1f8] sm:$0xff]
    %v3240 = vld [vmem:[#allocation8 + $0x200] sm:$0xff]
    %v3241 = vld [vmem:[#allocation8 + $0x208] sm:$0xff]
    %v3242 = vld [vmem:[#allocation8 + $0x210] sm:$0xff]
    %v3243 = vld [vmem:[#allocation8 + $0x218] sm:$0xff]
    %v3244 = vld [vmem:[#allocation8 + $0x220] sm:$0xff]
    %v3245 = vld [vmem:[#allocation8 + $0x228] sm:$0xff]
    %v3246 = vld [vmem:[#allocation8 + $0x230] sm:$0xff]
    %v3247 = vld [vmem:[#allocation8 + $0x238] sm:$0xff]
    %v3248 = vld [vmem:[#allocation8 + $0x240] sm:$0xff]
    %v3249 = vld [vmem:[#allocation8 + $0x248] sm:$0xff]
    %v3250 = vld [vmem:[#allocation8 + $0x250] sm:$0xff]
    %v3251 = vld [vmem:[#allocation8 + $0x258] sm:$0xff]
    %v3252 = vld [vmem:[#allocation8 + $0x260] sm:$0xff]
    %v3253 = vld [vmem:[#allocation8 + $0x268] sm:$0xff]
    %v3254 = vld [vmem:[#allocation8 + $0x270] sm:$0xff]
    %v3255 = vld [vmem:[#allocation8 + $0x278] sm:$0xff]
    %v3256 = vld [vmem:[#allocation8 + $0x280] sm:$0xff]
    %v3257 = vld [vmem:[#allocation8 + $0x288] sm:$0xff]
    %v3258 = vld [vmem:[#allocation8 + $0x290] sm:$0xff]
    %v3259 = vld [vmem:[#allocation8 + $0x298] sm:$0xff]
    %v3260 = vld [vmem:[#allocation8 + $0x2a0] sm:$0xff]
    %v3261 = vld [vmem:[#allocation8 + $0x2a8] sm:$0xff]
    %v3262 = vld [vmem:[#allocation8 + $0x2b0] sm:$0xff]
    %v3263 = vld [vmem:[#allocation8 + $0x2b8] sm:$0xff]
    %v3264 = vld [vmem:[#allocation8 + $0x2c0] sm:$0xff]
    %v3265 = vld [vmem:[#allocation8 + $0x2c8] sm:$0xff]
    %v3266 = vld [vmem:[#allocation8 + $0x2d0] sm:$0xff]
    %v3267 = vld [vmem:[#allocation8 + $0x2d8] sm:$0xff]
    %v3268 = vld [vmem:[#allocation8 + $0x2e0] sm:$0xff]
    %v3269 = vld [vmem:[#allocation8 + $0x2e8] sm:$0xff]
    %v3270 = vld [vmem:[#allocation8 + $0x2f0] sm:$0xff]
    %v3271 = vld [vmem:[#allocation8 + $0x2f8] sm:$0xff]
    %v3272 = vld [vmem:[#allocation8 + $0x300] sm:$0xff]
    %v3273 = vld [vmem:[#allocation8 + $0x308] sm:$0xff]
    %v3274 = vld [vmem:[#allocation8 + $0x310] sm:$0xff]
    %v3275 = vld [vmem:[#allocation8 + $0x318] sm:$0xff]
    %v3276 = vld [vmem:[#allocation8 + $0x320] sm:$0xff]
    %v3277 = vld [vmem:[#allocation8 + $0x328] sm:$0xff]
    %v3278 = vld [vmem:[#allocation8 + $0x330] sm:$0xff]
    %v3279 = vld [vmem:[#allocation8 + $0x338] sm:$0xff]
    %v3280 = vld [vmem:[#allocation8 + $0x340] sm:$0xff]
    %v3281 = vld [vmem:[#allocation8 + $0x348] sm:$0xff]
    %v3282 = vld [vmem:[#allocation8 + $0x350] sm:$0xff]
    %v3283 = vld [vmem:[#allocation8 + $0x358] sm:$0xff]
    %v3284 = vld [vmem:[#allocation8 + $0x360] sm:$0xff]
    %v3285 = vld [vmem:[#allocation8 + $0x368] sm:$0xff]
    %v3286 = vld [vmem:[#allocation8 + $0x370] sm:$0xff]
    %v3287 = vld [vmem:[#allocation8 + $0x378] sm:$0xff]
    %v3288 = vld [vmem:[#allocation8 + $0x380] sm:$0xff]
    %v3289 = vld [vmem:[#allocation8 + $0x388] sm:$0xff]
    %v3290 = vld [vmem:[#allocation8 + $0x390] sm:$0xff]
    %v3291 = vld [vmem:[#allocation8 + $0x398] sm:$0xff]
    %v3292 = vld [vmem:[#allocation8 + $0x3a0] sm:$0xff]
    %v3293 = vld [vmem:[#allocation8 + $0x3a8] sm:$0xff]
    %v3294 = vld [vmem:[#allocation8 + $0x3b0] sm:$0xff]
    %v3295 = vld [vmem:[#allocation8 + $0x3b8] sm:$0xff]
    %v3296 = vld [vmem:[#allocation8 + $0x3c0] sm:$0xff]
    %v3297 = vld [vmem:[#allocation8 + $0x3c8] sm:$0xff]
    %v3298 = vld [vmem:[#allocation8 + $0x3d0] sm:$0xff]
    %v3299 = vld [vmem:[#allocation8 + $0x3d8] sm:$0xff]
    %v3300 = vld [vmem:[#allocation8 + $0x3e0] sm:$0xff]
    %v3301 = vld [vmem:[#allocation8 + $0x3e8] sm:$0xff]
    %v3302 = vld [vmem:[#allocation8 + $0x3f0] sm:$0xff]
    %v3303 = vld [vmem:[#allocation8 + $0x3f8] sm:$0xff]
    %v3304 = vld [vmem:[#allocation8 + $0x400] sm:$0xff]
    %v3305 = vld [vmem:[#allocation8 + $0x408] sm:$0xff]
    %v3306 = vld [vmem:[#allocation8 + $0x410] sm:$0xff]
    %v3307 = vld [vmem:[#allocation8 + $0x418] sm:$0xff]
    %v3308 = vld [vmem:[#allocation8 + $0x420] sm:$0xff]
    %v3309 = vld [vmem:[#allocation8 + $0x428] sm:$0xff]
    %v3310 = vld [vmem:[#allocation8 + $0x430] sm:$0xff]
    %v3311 = vld [vmem:[#allocation8 + $0x438] sm:$0xff]
    %v3312 = vld [vmem:[#allocation8 + $0x440] sm:$0xff]
    %v3313 = vld [vmem:[#allocation8 + $0x448] sm:$0xff]
    %v3314 = vld [vmem:[#allocation8 + $0x450] sm:$0xff]
    %v3315 = vld [vmem:[#allocation8 + $0x458] sm:$0xff]
    %v3316 = vld [vmem:[#allocation8 + $0x460] sm:$0xff]
    %v3317 = vld [vmem:[#allocation8 + $0x468] sm:$0xff]
    %v3318 = vld [vmem:[#allocation8 + $0x470] sm:$0xff]
    %v3319 = vld [vmem:[#allocation8 + $0x478] sm:$0xff]
    %v3320 = vld [vmem:[#allocation8 + $0x480] sm:$0xff]
    %v3321 = vld [vmem:[#allocation8 + $0x488] sm:$0xff]
    %v3322 = vld [vmem:[#allocation8 + $0x490] sm:$0xff]
    %v3323 = vld [vmem:[#allocation8 + $0x498] sm:$0xff]
    %v3324 = vld [vmem:[#allocation8 + $0x4a0] sm:$0xff]
    %v3325 = vld [vmem:[#allocation8 + $0x4a8] sm:$0xff]
    %v3326 = vld [vmem:[#allocation8 + $0x4b0] sm:$0xff]
    %v3327 = vld [vmem:[#allocation8 + $0x4b8] sm:$0xff]
    %v3328 = vld [vmem:[#allocation8 + $0x4c0] sm:$0xff]
    %v3329 = vld [vmem:[#allocation8 + $0x4c8] sm:$0xff]
    %v3330 = vld [vmem:[#allocation8 + $0x4d0] sm:$0xff]
    %v3331 = vld [vmem:[#allocation8 + $0x4d8] sm:$0xff]
    %v3332 = vld [vmem:[#allocation8 + $0x4e0] sm:$0xff]
    %v3333 = vld [vmem:[#allocation8 + $0x4e8] sm:$0xff]
    %v3334 = vld [vmem:[#allocation8 + $0x4f0] sm:$0xff]
    %v3335 = vld [vmem:[#allocation8 + $0x4f8] sm:$0xff]
    %v3336 = vld [vmem:[#allocation8 + $0x500] sm:$0xff]
    %v3337 = vld [vmem:[#allocation8 + $0x508] sm:$0xff]
    %v3338 = vld [vmem:[#allocation8 + $0x510] sm:$0xff]
    %v3339 = vld [vmem:[#allocation8 + $0x518] sm:$0xff]
    %v3340 = vld [vmem:[#allocation8 + $0x520] sm:$0xff]
    %v3341 = vld [vmem:[#allocation8 + $0x528] sm:$0xff]
    %v3342 = vld [vmem:[#allocation8 + $0x530] sm:$0xff]
    %v3343 = vld [vmem:[#allocation8 + $0x538] sm:$0xff]
    %v3344 = vld [vmem:[#allocation8 + $0x540] sm:$0xff]
    %v3345 = vld [vmem:[#allocation8 + $0x548] sm:$0xff]
    %v3346 = vld [vmem:[#allocation8 + $0x550] sm:$0xff]
    %v3347 = vld [vmem:[#allocation8 + $0x558] sm:$0xff]
    %v3348 = vld [vmem:[#allocation8 + $0x560] sm:$0xff]
    %v3349 = vld [vmem:[#allocation8 + $0x568] sm:$0xff]
    %v3350 = vld [vmem:[#allocation8 + $0x570] sm:$0xff]
    %v3351 = vld [vmem:[#allocation8 + $0x578] sm:$0xff]
    %v3352 = vld [vmem:[#allocation8 + $0x580] sm:$0xff]
    %v3353 = vld [vmem:[#allocation8 + $0x588] sm:$0xff]
    %v3354 = vld [vmem:[#allocation8 + $0x590] sm:$0xff]
    %v3355 = vld [vmem:[#allocation8 + $0x598] sm:$0xff]
    %v3356 = vld [vmem:[#allocation8 + $0x5a0] sm:$0xff]
    %v3357 = vld [vmem:[#allocation8 + $0x5a8] sm:$0xff]
    %v3358 = vld [vmem:[#allocation8 + $0x5b0] sm:$0xff]
    %v3359 = vld [vmem:[#allocation8 + $0x5b8] sm:$0xff]
    %v3360 = vld [vmem:[#allocation8 + $0x5c0] sm:$0xff]
    %v3361 = vld [vmem:[#allocation8 + $0x5c8] sm:$0xff]
    %v3362 = vld [vmem:[#allocation8 + $0x5d0] sm:$0xff]
    %v3363 = vld [vmem:[#allocation8 + $0x5d8] sm:$0xff]
    %v3364 = vld [vmem:[#allocation8 + $0x5e0] sm:$0xff]
    %v3365 = vld [vmem:[#allocation8 + $0x5e8] sm:$0xff]
    %v3366 = vld [vmem:[#allocation8 + $0x5f0] sm:$0xff]
    %v3367 = vld [vmem:[#allocation8 + $0x5f8] sm:$0xff]
    %v3368 = vld [vmem:[#allocation8 + $0x600] sm:$0xff]
    %v3369 = vld [vmem:[#allocation8 + $0x608] sm:$0xff]
    %v3370 = vld [vmem:[#allocation8 + $0x610] sm:$0xff]
    %v3371 = vld [vmem:[#allocation8 + $0x618] sm:$0xff]
    %v3372 = vld [vmem:[#allocation8 + $0x620] sm:$0xff]
    %v3373 = vld [vmem:[#allocation8 + $0x628] sm:$0xff]
    %v3374 = vld [vmem:[#allocation8 + $0x630] sm:$0xff]
    %v3375 = vld [vmem:[#allocation8 + $0x638] sm:$0xff]
    %v3376 = vld [vmem:[#allocation8 + $0x640] sm:$0xff]
    %v3377 = vld [vmem:[#allocation8 + $0x648] sm:$0xff]
    %v3378 = vld [vmem:[#allocation8 + $0x650] sm:$0xff]
    %v3379 = vld [vmem:[#allocation8 + $0x658] sm:$0xff]
    %v3380 = vld [vmem:[#allocation8 + $0x660] sm:$0xff]
    %v3381 = vld [vmem:[#allocation8 + $0x668] sm:$0xff]
    %v3382 = vld [vmem:[#allocation8 + $0x670] sm:$0xff]
    %v3383 = vld [vmem:[#allocation8 + $0x678] sm:$0xff]
    %v3384 = vld [vmem:[#allocation8 + $0x680] sm:$0xff]
    %v3385 = vld [vmem:[#allocation8 + $0x688] sm:$0xff]
    %v3386 = vld [vmem:[#allocation8 + $0x690] sm:$0xff]
    %v3387 = vld [vmem:[#allocation8 + $0x698] sm:$0xff]
    %v3388 = vld [vmem:[#allocation8 + $0x6a0] sm:$0xff]
    %v3389 = vld [vmem:[#allocation8 + $0x6a8] sm:$0xff]
    %v3390 = vld [vmem:[#allocation8 + $0x6b0] sm:$0xff]
    %v3391 = vld [vmem:[#allocation8 + $0x6b8] sm:$0xff]
    %v3392 = vld [vmem:[#allocation8 + $0x6c0] sm:$0xff]
    %v3393 = vld [vmem:[#allocation8 + $0x6c8] sm:$0xff]
    %v3394 = vld [vmem:[#allocation8 + $0x6d0] sm:$0xff]
    %v3395 = vld [vmem:[#allocation8 + $0x6d8] sm:$0xff]
    %v3396 = vld [vmem:[#allocation8 + $0x6e0] sm:$0xff]
    %v3397 = vld [vmem:[#allocation8 + $0x6e8] sm:$0xff]
    %v3398 = vld [vmem:[#allocation8 + $0x6f0] sm:$0xff]
    %v3399 = vld [vmem:[#allocation8 + $0x6f8] sm:$0xff]
    %v3400 = vld [vmem:[#allocation8 + $0x700] sm:$0xff]
    %v3401 = vld [vmem:[#allocation8 + $0x708] sm:$0xff]
    %v3402 = vld [vmem:[#allocation8 + $0x710] sm:$0xff]
    %v3403 = vld [vmem:[#allocation8 + $0x718] sm:$0xff]
    %v3404 = vld [vmem:[#allocation8 + $0x720] sm:$0xff]
    %v3405 = vld [vmem:[#allocation8 + $0x728] sm:$0xff]
    %v3406 = vld [vmem:[#allocation8 + $0x730] sm:$0xff]
    %v3407 = vld [vmem:[#allocation8 + $0x738] sm:$0xff]
    %v3408 = vld [vmem:[#allocation8 + $0x740] sm:$0xff]
    %v3409 = vld [vmem:[#allocation8 + $0x748] sm:$0xff]
    %v3410 = vld [vmem:[#allocation8 + $0x750] sm:$0xff]
    %v3411 = vld [vmem:[#allocation8 + $0x758] sm:$0xff]
    %v3412 = vld [vmem:[#allocation8 + $0x760] sm:$0xff]
    %v3413 = vld [vmem:[#allocation8 + $0x768] sm:$0xff]
    %v3414 = vld [vmem:[#allocation8 + $0x770] sm:$0xff]
    %v3415 = vld [vmem:[#allocation8 + $0x778] sm:$0xff]
    %v3416 = vld [vmem:[#allocation8 + $0x780] sm:$0xff]
    %v3417 = vld [vmem:[#allocation8 + $0x788] sm:$0xff]
    %v3418 = vld [vmem:[#allocation8 + $0x790] sm:$0xff]
    %v3419 = vld [vmem:[#allocation8 + $0x798] sm:$0xff]
    %v3420 = vld [vmem:[#allocation8 + $0x7a0] sm:$0xff]
    %v3421 = vld [vmem:[#allocation8 + $0x7a8] sm:$0xff]
    %v3422 = vld [vmem:[#allocation8 + $0x7b0] sm:$0xff]
    %v3423 = vld [vmem:[#allocation8 + $0x7b8] sm:$0xff]
    %v3424 = vld [vmem:[#allocation8 + $0x7c0] sm:$0xff]
    %v3425 = vld [vmem:[#allocation8 + $0x7c8] sm:$0xff]
    %v3426 = vld [vmem:[#allocation8 + $0x7d0] sm:$0xff]
    %v3427 = vld [vmem:[#allocation8 + $0x7d8] sm:$0xff]
    %v3428 = vld [vmem:[#allocation8 + $0x7e0] sm:$0xff]
    %v3429 = vld [vmem:[#allocation8 + $0x7e8] sm:$0xff]
    %v3430 = vld [vmem:[#allocation8 + $0x7f0] sm:$0xff]
    %v3431 = vld [vmem:[#allocation8 + $0x7f8] sm:$0xff]
    %v3432 = vld [vmem:[#allocation10] sm:$0xf]
    %v3434 = vlaneseq
    %v3435 = vshrl.u32 %v3434, 7
    %v3436 = vsub.s32 0, %v3435
    %v3437 = vrot.slane %v3432, %v3436
    %v3438 = vlaneseq
    %v3439 = vshrl.u32 %v3438, 7
    %v3440 = vsub.s32 1, %v3439
    %v3441 = vrot.slane %v3432, %v3440
    %v3442 = vlaneseq
    %v3443 = vshrl.u32 %v3442, 7
    %v3444 = vsub.s32 2, %v3443
    %v3445 = vrot.slane %v3432, %v3444
    %v3446 = vlaneseq
    %v3447 = vshrl.u32 %v3446, 7
    %v3448 = vsub.s32 3, %v3447
    %v3449 = vrot.slane %v3432, %v3448
    %v3710 = vunpack.c.l.b16 %v3176
    %v3711 = vunpack.c.h.b16 %v3176
    %v3712 = vunpack.c.l.b16 %v3177
    %v3713 = vunpack.c.h.b16 %v3177
    %v3714 = vunpack.c.l.b16 %v3178
    %v3715 = vunpack.c.h.b16 %v3178
    %v3716 = vunpack.c.l.b16 %v3179
    %v3717 = vunpack.c.h.b16 %v3179
    %v3718 = vunpack.c.l.b16 %v3180
    %v3719 = vunpack.c.h.b16 %v3180
    %v3720 = vunpack.c.l.b16 %v3181
    %v3721 = vunpack.c.h.b16 %v3181
    %v3722 = vunpack.c.l.b16 %v3182
    %v3723 = vunpack.c.h.b16 %v3182
    %v3724 = vunpack.c.l.b16 %v3183
    %v3725 = vunpack.c.h.b16 %v3183
    %v3726 = vunpack.c.l.b16 %v3184
    %v3727 = vunpack.c.h.b16 %v3184
    %v3728 = vunpack.c.l.b16 %v3185
    %v3729 = vunpack.c.h.b16 %v3185
    %v3730 = vunpack.c.l.b16 %v3186
    %v3731 = vunpack.c.h.b16 %v3186
    %v3732 = vunpack.c.l.b16 %v3187
    %v3733 = vunpack.c.h.b16 %v3187
    %v3734 = vunpack.c.l.b16 %v3188
    %v3735 = vunpack.c.h.b16 %v3188
    %v3736 = vunpack.c.l.b16 %v3189
    %v3737 = vunpack.c.h.b16 %v3189
    %v3738 = vunpack.c.l.b16 %v3190
    %v3739 = vunpack.c.h.b16 %v3190
    %v3740 = vunpack.c.l.b16 %v3191
    %v3741 = vunpack.c.h.b16 %v3191
    %v3742 = vunpack.c.l.b16 %v3192
    %v3743 = vunpack.c.h.b16 %v3192
    %v3744 = vunpack.c.l.b16 %v3193
    %v3745 = vunpack.c.h.b16 %v3193
    %v3746 = vunpack.c.l.b16 %v3194
    %v3747 = vunpack.c.h.b16 %v3194
    %v3748 = vunpack.c.l.b16 %v3195
    %v3749 = vunpack.c.h.b16 %v3195
    %v3750 = vunpack.c.l.b16 %v3196
    %v3751 = vunpack.c.h.b16 %v3196
    %v3752 = vunpack.c.l.b16 %v3197
    %v3753 = vunpack.c.h.b16 %v3197
    %v3754 = vunpack.c.l.b16 %v3198
    %v3755 = vunpack.c.h.b16 %v3198
    %v3756 = vunpack.c.l.b16 %v3199
    %v3757 = vunpack.c.h.b16 %v3199
    %v3758 = vunpack.c.l.b16 %v3200
    %v3759 = vunpack.c.h.b16 %v3200
    %v3760 = vunpack.c.l.b16 %v3201
    %v3761 = vunpack.c.h.b16 %v3201
    %v3762 = vunpack.c.l.b16 %v3202
    %v3763 = vunpack.c.h.b16 %v3202
    %v3764 = vunpack.c.l.b16 %v3203
    %v3765 = vunpack.c.h.b16 %v3203
    %v3766 = vunpack.c.l.b16 %v3204
    %v3767 = vunpack.c.h.b16 %v3204
    %v3768 = vunpack.c.l.b16 %v3205
    %v3769 = vunpack.c.h.b16 %v3205
    %v3770 = vunpack.c.l.b16 %v3206
    %v3771 = vunpack.c.h.b16 %v3206
    %v3772 = vunpack.c.l.b16 %v3207
    %v3773 = vunpack.c.h.b16 %v3207
    %v3774 = vunpack.c.l.b16 %v3208
    %v3775 = vunpack.c.h.b16 %v3208
    %v3776 = vunpack.c.l.b16 %v3209
    %v3777 = vunpack.c.h.b16 %v3209
    %v3778 = vunpack.c.l.b16 %v3210
    %v3779 = vunpack.c.h.b16 %v3210
    %v3780 = vunpack.c.l.b16 %v3211
    %v3781 = vunpack.c.h.b16 %v3211
    %v3782 = vunpack.c.l.b16 %v3212
    %v3783 = vunpack.c.h.b16 %v3212
    %v3784 = vunpack.c.l.b16 %v3213
    %v3785 = vunpack.c.h.b16 %v3213
    %v3786 = vunpack.c.l.b16 %v3214
    %v3787 = vunpack.c.h.b16 %v3214
    %v3788 = vunpack.c.l.b16 %v3215
    %v3789 = vunpack.c.h.b16 %v3215
    %v3790 = vunpack.c.l.b16 %v3216
    %v3791 = vunpack.c.h.b16 %v3216
    %v3792 = vunpack.c.l.b16 %v3217
    %v3793 = vunpack.c.h.b16 %v3217
    %v3794 = vunpack.c.l.b16 %v3218
    %v3795 = vunpack.c.h.b16 %v3218
    %v3796 = vunpack.c.l.b16 %v3219
    %v3797 = vunpack.c.h.b16 %v3219
    %v3798 = vunpack.c.l.b16 %v3220
    %v3799 = vunpack.c.h.b16 %v3220
    %v3800 = vunpack.c.l.b16 %v3221
    %v3801 = vunpack.c.h.b16 %v3221
    %v3802 = vunpack.c.l.b16 %v3222
    %v3803 = vunpack.c.h.b16 %v3222
    %v3804 = vunpack.c.l.b16 %v3223
    %v3805 = vunpack.c.h.b16 %v3223
    %v3806 = vunpack.c.l.b16 %v3224
    %v3807 = vunpack.c.h.b16 %v3224
    %v3808 = vunpack.c.l.b16 %v3225
    %v3809 = vunpack.c.h.b16 %v3225
    %v3810 = vunpack.c.l.b16 %v3226
    %v3811 = vunpack.c.h.b16 %v3226
    %v3812 = vunpack.c.l.b16 %v3227
    %v3813 = vunpack.c.h.b16 %v3227
    %v3814 = vunpack.c.l.b16 %v3228
    %v3815 = vunpack.c.h.b16 %v3228
    %v3816 = vunpack.c.l.b16 %v3229
    %v3817 = vunpack.c.h.b16 %v3229
    %v3818 = vunpack.c.l.b16 %v3230
    %v3819 = vunpack.c.h.b16 %v3230
    %v3820 = vunpack.c.l.b16 %v3231
    %v3821 = vunpack.c.h.b16 %v3231
    %v3822 = vunpack.c.l.b16 %v3232
    %v3823 = vunpack.c.h.b16 %v3232
    %v3824 = vunpack.c.l.b16 %v3233
    %v3825 = vunpack.c.h.b16 %v3233
    %v3826 = vunpack.c.l.b16 %v3234
    %v3827 = vunpack.c.h.b16 %v3234
    %v3828 = vunpack.c.l.b16 %v3235
    %v3829 = vunpack.c.h.b16 %v3235
    %v3830 = vunpack.c.l.b16 %v3236
    %v3831 = vunpack.c.h.b16 %v3236
    %v3832 = vunpack.c.l.b16 %v3237
    %v3833 = vunpack.c.h.b16 %v3237
    %v3834 = vunpack.c.l.b16 %v3238
    %v3835 = vunpack.c.h.b16 %v3238
    %v3836 = vunpack.c.l.b16 %v3239
    %v3837 = vunpack.c.h.b16 %v3239
    %v3838 = vunpack.c.l.b16 %v3240
    %v3839 = vunpack.c.h.b16 %v3240
    %v3840 = vunpack.c.l.b16 %v3241
    %v3841 = vunpack.c.h.b16 %v3241
    %v3842 = vunpack.c.l.b16 %v3242
    %v3843 = vunpack.c.h.b16 %v3242
    %v3844 = vunpack.c.l.b16 %v3243
    %v3845 = vunpack.c.h.b16 %v3243
    %v3846 = vunpack.c.l.b16 %v3244
    %v3847 = vunpack.c.h.b16 %v3244
    %v3848 = vunpack.c.l.b16 %v3245
    %v3849 = vunpack.c.h.b16 %v3245
    %v3850 = vunpack.c.l.b16 %v3246
    %v3851 = vunpack.c.h.b16 %v3246
    %v3852 = vunpack.c.l.b16 %v3247
    %v3853 = vunpack.c.h.b16 %v3247
    %v3854 = vunpack.c.l.b16 %v3248
    %v3855 = vunpack.c.h.b16 %v3248
    %v3856 = vunpack.c.l.b16 %v3249
    %v3857 = vunpack.c.h.b16 %v3249
    %v3858 = vunpack.c.l.b16 %v3250
    %v3859 = vunpack.c.h.b16 %v3250
    %v3860 = vunpack.c.l.b16 %v3251
    %v3861 = vunpack.c.h.b16 %v3251
    %v3862 = vunpack.c.l.b16 %v3252
    %v3863 = vunpack.c.h.b16 %v3252
    %v3864 = vunpack.c.l.b16 %v3253
    %v3865 = vunpack.c.h.b16 %v3253
    %v3866 = vunpack.c.l.b16 %v3254
    %v3867 = vunpack.c.h.b16 %v3254
    %v3868 = vunpack.c.l.b16 %v3255
    %v3869 = vunpack.c.h.b16 %v3255
    %v3870 = vunpack.c.l.b16 %v3256
    %v3871 = vunpack.c.h.b16 %v3256
    %v3872 = vunpack.c.l.b16 %v3257
    %v3873 = vunpack.c.h.b16 %v3257
    %v3874 = vunpack.c.l.b16 %v3258
    %v3875 = vunpack.c.h.b16 %v3258
    %v3876 = vunpack.c.l.b16 %v3259
    %v3877 = vunpack.c.h.b16 %v3259
    %v3878 = vunpack.c.l.b16 %v3260
    %v3879 = vunpack.c.h.b16 %v3260
    %v3880 = vunpack.c.l.b16 %v3261
    %v3881 = vunpack.c.h.b16 %v3261
    %v3882 = vunpack.c.l.b16 %v3262
    %v3883 = vunpack.c.h.b16 %v3262
    %v3884 = vunpack.c.l.b16 %v3263
    %v3885 = vunpack.c.h.b16 %v3263
    %v3886 = vunpack.c.l.b16 %v3264
    %v3887 = vunpack.c.h.b16 %v3264
    %v3888 = vunpack.c.l.b16 %v3265
    %v3889 = vunpack.c.h.b16 %v3265
    %v3890 = vunpack.c.l.b16 %v3266
    %v3891 = vunpack.c.h.b16 %v3266
    %v3892 = vunpack.c.l.b16 %v3267
    %v3893 = vunpack.c.h.b16 %v3267
    %v3894 = vunpack.c.l.b16 %v3268
    %v3895 = vunpack.c.h.b16 %v3268
    %v3896 = vunpack.c.l.b16 %v3269
    %v3897 = vunpack.c.h.b16 %v3269
    %v3898 = vunpack.c.l.b16 %v3270
    %v3899 = vunpack.c.h.b16 %v3270
    %v3900 = vunpack.c.l.b16 %v3271
    %v3901 = vunpack.c.h.b16 %v3271
    %v3902 = vunpack.c.l.b16 %v3272
    %v3903 = vunpack.c.h.b16 %v3272
    %v3904 = vunpack.c.l.b16 %v3273
    %v3905 = vunpack.c.h.b16 %v3273
    %v3906 = vunpack.c.l.b16 %v3274
    %v3907 = vunpack.c.h.b16 %v3274
    %v3908 = vunpack.c.l.b16 %v3275
    %v3909 = vunpack.c.h.b16 %v3275
    %v3910 = vunpack.c.l.b16 %v3276
    %v3911 = vunpack.c.h.b16 %v3276
    %v3912 = vunpack.c.l.b16 %v3277
    %v3913 = vunpack.c.h.b16 %v3277
    %v3914 = vunpack.c.l.b16 %v3278
    %v3915 = vunpack.c.h.b16 %v3278
    %v3916 = vunpack.c.l.b16 %v3279
    %v3917 = vunpack.c.h.b16 %v3279
    %v3918 = vunpack.c.l.b16 %v3280
    %v3919 = vunpack.c.h.b16 %v3280
    %v3920 = vunpack.c.l.b16 %v3281
    %v3921 = vunpack.c.h.b16 %v3281
    %v3922 = vunpack.c.l.b16 %v3282
    %v3923 = vunpack.c.h.b16 %v3282
    %v3924 = vunpack.c.l.b16 %v3283
    %v3925 = vunpack.c.h.b16 %v3283
    %v3926 = vunpack.c.l.b16 %v3284
    %v3927 = vunpack.c.h.b16 %v3284
    %v3928 = vunpack.c.l.b16 %v3285
    %v3929 = vunpack.c.h.b16 %v3285
    %v3930 = vunpack.c.l.b16 %v3286
    %v3931 = vunpack.c.h.b16 %v3286
    %v3932 = vunpack.c.l.b16 %v3287
    %v3933 = vunpack.c.h.b16 %v3287
    %v3934 = vunpack.c.l.b16 %v3288
    %v3935 = vunpack.c.h.b16 %v3288
    %v3936 = vunpack.c.l.b16 %v3289
    %v3937 = vunpack.c.h.b16 %v3289
    %v3938 = vunpack.c.l.b16 %v3290
    %v3939 = vunpack.c.h.b16 %v3290
    %v3940 = vunpack.c.l.b16 %v3291
    %v3941 = vunpack.c.h.b16 %v3291
    %v3942 = vunpack.c.l.b16 %v3292
    %v3943 = vunpack.c.h.b16 %v3292
    %v3944 = vunpack.c.l.b16 %v3293
    %v3945 = vunpack.c.h.b16 %v3293
    %v3946 = vunpack.c.l.b16 %v3294
    %v3947 = vunpack.c.h.b16 %v3294
    %v3948 = vunpack.c.l.b16 %v3295
    %v3949 = vunpack.c.h.b16 %v3295
    %v3950 = vunpack.c.l.b16 %v3296
    %v3951 = vunpack.c.h.b16 %v3296
    %v3952 = vunpack.c.l.b16 %v3297
    %v3953 = vunpack.c.h.b16 %v3297
    %v3954 = vunpack.c.l.b16 %v3298
    %v3955 = vunpack.c.h.b16 %v3298
    %v3956 = vunpack.c.l.b16 %v3299
    %v3957 = vunpack.c.h.b16 %v3299
    %v3958 = vunpack.c.l.b16 %v3300
    %v3959 = vunpack.c.h.b16 %v3300
    %v3960 = vunpack.c.l.b16 %v3301
    %v3961 = vunpack.c.h.b16 %v3301
    %v3962 = vunpack.c.l.b16 %v3302
    %v3963 = vunpack.c.h.b16 %v3302
    %v3964 = vunpack.c.l.b16 %v3303
    %v3965 = vunpack.c.h.b16 %v3303
    %v3966 = vunpack.c.l.b16 %v3304
    %v3967 = vunpack.c.h.b16 %v3304
    %v3968 = vunpack.c.l.b16 %v3305
    %v3969 = vunpack.c.h.b16 %v3305
    %v3970 = vunpack.c.l.b16 %v3306
    %v3971 = vunpack.c.h.b16 %v3306
    %v3972 = vunpack.c.l.b16 %v3307
    %v3973 = vunpack.c.h.b16 %v3307
    %v3974 = vunpack.c.l.b16 %v3308
    %v3975 = vunpack.c.h.b16 %v3308
    %v3976 = vunpack.c.l.b16 %v3309
    %v3977 = vunpack.c.h.b16 %v3309
    %v3978 = vunpack.c.l.b16 %v3310
    %v3979 = vunpack.c.h.b16 %v3310
    %v3980 = vunpack.c.l.b16 %v3311
    %v3981 = vunpack.c.h.b16 %v3311
    %v3982 = vunpack.c.l.b16 %v3312
    %v3983 = vunpack.c.h.b16 %v3312
    %v3984 = vunpack.c.l.b16 %v3313
    %v3985 = vunpack.c.h.b16 %v3313
    %v3986 = vunpack.c.l.b16 %v3314
    %v3987 = vunpack.c.h.b16 %v3314
    %v3988 = vunpack.c.l.b16 %v3315
    %v3989 = vunpack.c.h.b16 %v3315
    %v3990 = vunpack.c.l.b16 %v3316
    %v3991 = vunpack.c.h.b16 %v3316
    %v3992 = vunpack.c.l.b16 %v3317
    %v3993 = vunpack.c.h.b16 %v3317
    %v3994 = vunpack.c.l.b16 %v3318
    %v3995 = vunpack.c.h.b16 %v3318
    %v3996 = vunpack.c.l.b16 %v3319
    %v3997 = vunpack.c.h.b16 %v3319
    %v3998 = vunpack.c.l.b16 %v3320
    %v3999 = vunpack.c.h.b16 %v3320
    %v4000 = vunpack.c.l.b16 %v3321
    %v4001 = vunpack.c.h.b16 %v3321
    %v4002 = vunpack.c.l.b16 %v3322
    %v4003 = vunpack.c.h.b16 %v3322
    %v4004 = vunpack.c.l.b16 %v3323
    %v4005 = vunpack.c.h.b16 %v3323
    %v4006 = vunpack.c.l.b16 %v3324
    %v4007 = vunpack.c.h.b16 %v3324
    %v4008 = vunpack.c.l.b16 %v3325
    %v4009 = vunpack.c.h.b16 %v3325
    %v4010 = vunpack.c.l.b16 %v3326
    %v4011 = vunpack.c.h.b16 %v3326
    %v4012 = vunpack.c.l.b16 %v3327
    %v4013 = vunpack.c.h.b16 %v3327
    %v4014 = vunpack.c.l.b16 %v3328
    %v4015 = vunpack.c.h.b16 %v3328
    %v4016 = vunpack.c.l.b16 %v3329
    %v4017 = vunpack.c.h.b16 %v3329
    %v4018 = vunpack.c.l.b16 %v3330
    %v4019 = vunpack.c.h.b16 %v3330
    %v4020 = vunpack.c.l.b16 %v3331
    %v4021 = vunpack.c.h.b16 %v3331
    %v4022 = vunpack.c.l.b16 %v3332
    %v4023 = vunpack.c.h.b16 %v3332
    %v4024 = vunpack.c.l.b16 %v3333
    %v4025 = vunpack.c.h.b16 %v3333
    %v4026 = vunpack.c.l.b16 %v3334
    %v4027 = vunpack.c.h.b16 %v3334
    %v4028 = vunpack.c.l.b16 %v3335
    %v4029 = vunpack.c.h.b16 %v3335
    %v4030 = vunpack.c.l.b16 %v3336
    %v4031 = vunpack.c.h.b16 %v3336
    %v4032 = vunpack.c.l.b16 %v3337
    %v4033 = vunpack.c.h.b16 %v3337
    %v4034 = vunpack.c.l.b16 %v3338
    %v4035 = vunpack.c.h.b16 %v3338
    %v4036 = vunpack.c.l.b16 %v3339
    %v4037 = vunpack.c.h.b16 %v3339
    %v4038 = vunpack.c.l.b16 %v3340
    %v4039 = vunpack.c.h.b16 %v3340
    %v4040 = vunpack.c.l.b16 %v3341
    %v4041 = vunpack.c.h.b16 %v3341
    %v4042 = vunpack.c.l.b16 %v3342
    %v4043 = vunpack.c.h.b16 %v3342
    %v4044 = vunpack.c.l.b16 %v3343
    %v4045 = vunpack.c.h.b16 %v3343
    %v4046 = vunpack.c.l.b16 %v3344
    %v4047 = vunpack.c.h.b16 %v3344
    %v4048 = vunpack.c.l.b16 %v3345
    %v4049 = vunpack.c.h.b16 %v3345
    %v4050 = vunpack.c.l.b16 %v3346
    %v4051 = vunpack.c.h.b16 %v3346
    %v4052 = vunpack.c.l.b16 %v3347
    %v4053 = vunpack.c.h.b16 %v3347
    %v4054 = vunpack.c.l.b16 %v3348
    %v4055 = vunpack.c.h.b16 %v3348
    %v4056 = vunpack.c.l.b16 %v3349
    %v4057 = vunpack.c.h.b16 %v3349
    %v4058 = vunpack.c.l.b16 %v3350
    %v4059 = vunpack.c.h.b16 %v3350
    %v4060 = vunpack.c.l.b16 %v3351
    %v4061 = vunpack.c.h.b16 %v3351
    %v4062 = vunpack.c.l.b16 %v3352
    %v4063 = vunpack.c.h.b16 %v3352
    %v4064 = vunpack.c.l.b16 %v3353
    %v4065 = vunpack.c.h.b16 %v3353
    %v4066 = vunpack.c.l.b16 %v3354
    %v4067 = vunpack.c.h.b16 %v3354
    %v4068 = vunpack.c.l.b16 %v3355
    %v4069 = vunpack.c.h.b16 %v3355
    %v4070 = vunpack.c.l.b16 %v3356
    %v4071 = vunpack.c.h.b16 %v3356
    %v4072 = vunpack.c.l.b16 %v3357
    %v4073 = vunpack.c.h.b16 %v3357
    %v4074 = vunpack.c.l.b16 %v3358
    %v4075 = vunpack.c.h.b16 %v3358
    %v4076 = vunpack.c.l.b16 %v3359
    %v4077 = vunpack.c.h.b16 %v3359
    %v4078 = vunpack.c.l.b16 %v3360
    %v4079 = vunpack.c.h.b16 %v3360
    %v4080 = vunpack.c.l.b16 %v3361
    %v4081 = vunpack.c.h.b16 %v3361
    %v4082 = vunpack.c.l.b16 %v3362
    %v4083 = vunpack.c.h.b16 %v3362
    %v4084 = vunpack.c.l.b16 %v3363
    %v4085 = vunpack.c.h.b16 %v3363
    %v4086 = vunpack.c.l.b16 %v3364
    %v4087 = vunpack.c.h.b16 %v3364
    %v4088 = vunpack.c.l.b16 %v3365
    %v4089 = vunpack.c.h.b16 %v3365
    %v4090 = vunpack.c.l.b16 %v3366
    %v4091 = vunpack.c.h.b16 %v3366
    %v4092 = vunpack.c.l.b16 %v3367
    %v4093 = vunpack.c.h.b16 %v3367
    %v4094 = vunpack.c.l.b16 %v3368
    %v4095 = vunpack.c.h.b16 %v3368
    %v4096 = vunpack.c.l.b16 %v3369
    %v4097 = vunpack.c.h.b16 %v3369
    %v4098 = vunpack.c.l.b16 %v3370
    %v4099 = vunpack.c.h.b16 %v3370
    %v4100 = vunpack.c.l.b16 %v3371
    %v4101 = vunpack.c.h.b16 %v3371
    %v4102 = vunpack.c.l.b16 %v3372
    %v4103 = vunpack.c.h.b16 %v3372
    %v4104 = vunpack.c.l.b16 %v3373
    %v4105 = vunpack.c.h.b16 %v3373
    %v4106 = vunpack.c.l.b16 %v3374
    %v4107 = vunpack.c.h.b16 %v3374
    %v4108 = vunpack.c.l.b16 %v3375
    %v4109 = vunpack.c.h.b16 %v3375
    %v4110 = vunpack.c.l.b16 %v3376
    %v4111 = vunpack.c.h.b16 %v3376
    %v4112 = vunpack.c.l.b16 %v3377
    %v4113 = vunpack.c.h.b16 %v3377
    %v4114 = vunpack.c.l.b16 %v3378
    %v4115 = vunpack.c.h.b16 %v3378
    %v4116 = vunpack.c.l.b16 %v3379
    %v4117 = vunpack.c.h.b16 %v3379
    %v4118 = vunpack.c.l.b16 %v3380
    %v4119 = vunpack.c.h.b16 %v3380
    %v4120 = vunpack.c.l.b16 %v3381
    %v4121 = vunpack.c.h.b16 %v3381
    %v4122 = vunpack.c.l.b16 %v3382
    %v4123 = vunpack.c.h.b16 %v3382
    %v4124 = vunpack.c.l.b16 %v3383
    %v4125 = vunpack.c.h.b16 %v3383
    %v4126 = vunpack.c.l.b16 %v3384
    %v4127 = vunpack.c.h.b16 %v3384
    %v4128 = vunpack.c.l.b16 %v3385
    %v4129 = vunpack.c.h.b16 %v3385
    %v4130 = vunpack.c.l.b16 %v3386
    %v4131 = vunpack.c.h.b16 %v3386
    %v4132 = vunpack.c.l.b16 %v3387
    %v4133 = vunpack.c.h.b16 %v3387
    %v4134 = vunpack.c.l.b16 %v3388
    %v4135 = vunpack.c.h.b16 %v3388
    %v4136 = vunpack.c.l.b16 %v3389
    %v4137 = vunpack.c.h.b16 %v3389
    %v4138 = vunpack.c.l.b16 %v3390
    %v4139 = vunpack.c.h.b16 %v3390
    %v4140 = vunpack.c.l.b16 %v3391
    %v4141 = vunpack.c.h.b16 %v3391
    %v4142 = vunpack.c.l.b16 %v3392
    %v4143 = vunpack.c.h.b16 %v3392
    %v4144 = vunpack.c.l.b16 %v3393
    %v4145 = vunpack.c.h.b16 %v3393
    %v4146 = vunpack.c.l.b16 %v3394
    %v4147 = vunpack.c.h.b16 %v3394
    %v4148 = vunpack.c.l.b16 %v3395
    %v4149 = vunpack.c.h.b16 %v3395
    %v4150 = vunpack.c.l.b16 %v3396
    %v4151 = vunpack.c.h.b16 %v3396
    %v4152 = vunpack.c.l.b16 %v3397
    %v4153 = vunpack.c.h.b16 %v3397
    %v4154 = vunpack.c.l.b16 %v3398
    %v4155 = vunpack.c.h.b16 %v3398
    %v4156 = vunpack.c.l.b16 %v3399
    %v4157 = vunpack.c.h.b16 %v3399
    %v4158 = vunpack.c.l.b16 %v3400
    %v4159 = vunpack.c.h.b16 %v3400
    %v4160 = vunpack.c.l.b16 %v3401
    %v4161 = vunpack.c.h.b16 %v3401
    %v4162 = vunpack.c.l.b16 %v3402
    %v4163 = vunpack.c.h.b16 %v3402
    %v4164 = vunpack.c.l.b16 %v3403
    %v4165 = vunpack.c.h.b16 %v3403
    %v4166 = vunpack.c.l.b16 %v3404
    %v4167 = vunpack.c.h.b16 %v3404
    %v4168 = vunpack.c.l.b16 %v3405
    %v4169 = vunpack.c.h.b16 %v3405
    %v4170 = vunpack.c.l.b16 %v3406
    %v4171 = vunpack.c.h.b16 %v3406
    %v4172 = vunpack.c.l.b16 %v3407
    %v4173 = vunpack.c.h.b16 %v3407
    %v4174 = vunpack.c.l.b16 %v3408
    %v4175 = vunpack.c.h.b16 %v3408
    %v4176 = vunpack.c.l.b16 %v3409
    %v4177 = vunpack.c.h.b16 %v3409
    %v4178 = vunpack.c.l.b16 %v3410
    %v4179 = vunpack.c.h.b16 %v3410
    %v4180 = vunpack.c.l.b16 %v3411
    %v4181 = vunpack.c.h.b16 %v3411
    %v4182 = vunpack.c.l.b16 %v3412
    %v4183 = vunpack.c.h.b16 %v3412
    %v4184 = vunpack.c.l.b16 %v3413
    %v4185 = vunpack.c.h.b16 %v3413
    %v4186 = vunpack.c.l.b16 %v3414
    %v4187 = vunpack.c.h.b16 %v3414
    %v4188 = vunpack.c.l.b16 %v3415
    %v4189 = vunpack.c.h.b16 %v3415
    %v4190 = vunpack.c.l.b16 %v3416
    %v4191 = vunpack.c.h.b16 %v3416
    %v4192 = vunpack.c.l.b16 %v3417
    %v4193 = vunpack.c.h.b16 %v3417
    %v4194 = vunpack.c.l.b16 %v3418
    %v4195 = vunpack.c.h.b16 %v3418
    %v4196 = vunpack.c.l.b16 %v3419
    %v4197 = vunpack.c.h.b16 %v3419
    %v4198 = vunpack.c.l.b16 %v3420
    %v4199 = vunpack.c.h.b16 %v3420
    %v4200 = vunpack.c.l.b16 %v3421
    %v4201 = vunpack.c.h.b16 %v3421
    %v4202 = vunpack.c.l.b16 %v3422
    %v4203 = vunpack.c.h.b16 %v3422
    %v4204 = vunpack.c.l.b16 %v3423
    %v4205 = vunpack.c.h.b16 %v3423
    %v4206 = vunpack.c.l.b16 %v3424
    %v4207 = vunpack.c.h.b16 %v3424
    %v4208 = vunpack.c.l.b16 %v3425
    %v4209 = vunpack.c.h.b16 %v3425
    %v4210 = vunpack.c.l.b16 %v3426
    %v4211 = vunpack.c.h.b16 %v3426
    %v4212 = vunpack.c.l.b16 %v3427
    %v4213 = vunpack.c.h.b16 %v3427
    %v4214 = vunpack.c.l.b16 %v3428
    %v4215 = vunpack.c.h.b16 %v3428
    %v4216 = vunpack.c.l.b16 %v3429
    %v4217 = vunpack.c.h.b16 %v3429
    %v4218 = vunpack.c.l.b16 %v3430
    %v4219 = vunpack.c.h.b16 %v3430
    %v4220 = vunpack.c.l.b16 %v3431
    %v4221 = vunpack.c.h.b16 %v3431
    %v4222 = vpack.c.b16 %v3714, %v3710
    %v4223 = vpack.c.b16 %v3715, %v3711
    %v4224 = vpack.c.b16 %v3716, %v3712
    %v4225 = vpack.c.b16 %v3717, %v3713
    %v4226 = vpack.c.b16 %v3722, %v3718
    %v4227 = vpack.c.b16 %v3723, %v3719
    %v4228 = vpack.c.b16 %v3724, %v3720
    %v4229 = vpack.c.b16 %v3725, %v3721
    %v4230 = vpack.c.b16 %v3730, %v3726
    %v4231 = vpack.c.b16 %v3731, %v3727
    %v4232 = vpack.c.b16 %v3732, %v3728
    %v4233 = vpack.c.b16 %v3733, %v3729
    %v4234 = vpack.c.b16 %v3738, %v3734
    %v4235 = vpack.c.b16 %v3739, %v3735
    %v4236 = vpack.c.b16 %v3740, %v3736
    %v4237 = vpack.c.b16 %v3741, %v3737
    %v4238 = vpack.c.b16 %v3746, %v3742
    %v4239 = vpack.c.b16 %v3747, %v3743
    %v4240 = vpack.c.b16 %v3748, %v3744
    %v4241 = vpack.c.b16 %v3749, %v3745
    %v4242 = vpack.c.b16 %v3754, %v3750
    %v4243 = vpack.c.b16 %v3755, %v3751
    %v4244 = vpack.c.b16 %v3756, %v3752
    %v4245 = vpack.c.b16 %v3757, %v3753
    %v4246 = vpack.c.b16 %v3762, %v3758
    %v4247 = vpack.c.b16 %v3763, %v3759
    %v4248 = vpack.c.b16 %v3764, %v3760
    %v4249 = vpack.c.b16 %v3765, %v3761
    %v4250 = vpack.c.b16 %v3770, %v3766
    %v4251 = vpack.c.b16 %v3771, %v3767
    %v4252 = vpack.c.b16 %v3772, %v3768
    %v4253 = vpack.c.b16 %v3773, %v3769
    %v4254 = vpack.c.b16 %v3778, %v3774
    %v4255 = vpack.c.b16 %v3779, %v3775
    %v4256 = vpack.c.b16 %v3780, %v3776
    %v4257 = vpack.c.b16 %v3781, %v3777
    %v4258 = vpack.c.b16 %v3786, %v3782
    %v4259 = vpack.c.b16 %v3787, %v3783
    %v4260 = vpack.c.b16 %v3788, %v3784
    %v4261 = vpack.c.b16 %v3789, %v3785
    %v4262 = vpack.c.b16 %v3794, %v3790
    %v4263 = vpack.c.b16 %v3795, %v3791
    %v4264 = vpack.c.b16 %v3796, %v3792
    %v4265 = vpack.c.b16 %v3797, %v3793
    %v4266 = vpack.c.b16 %v3802, %v3798
    %v4267 = vpack.c.b16 %v3803, %v3799
    %v4268 = vpack.c.b16 %v3804, %v3800
    %v4269 = vpack.c.b16 %v3805, %v3801
    %v4270 = vpack.c.b16 %v3810, %v3806
    %v4271 = vpack.c.b16 %v3811, %v3807
    %v4272 = vpack.c.b16 %v3812, %v3808
    %v4273 = vpack.c.b16 %v3813, %v3809
    %v4274 = vpack.c.b16 %v3818, %v3814
    %v4275 = vpack.c.b16 %v3819, %v3815
    %v4276 = vpack.c.b16 %v3820, %v3816
    %v4277 = vpack.c.b16 %v3821, %v3817
    %v4278 = vpack.c.b16 %v3826, %v3822
    %v4279 = vpack.c.b16 %v3827, %v3823
    %v4280 = vpack.c.b16 %v3828, %v3824
    %v4281 = vpack.c.b16 %v3829, %v3825
    %v4282 = vpack.c.b16 %v3834, %v3830
    %v4283 = vpack.c.b16 %v3835, %v3831
    %v4284 = vpack.c.b16 %v3836, %v3832
    %v4285 = vpack.c.b16 %v3837, %v3833
    %v4286 = vpack.c.b16 %v3842, %v3838
    %v4287 = vpack.c.b16 %v3843, %v3839
    %v4288 = vpack.c.b16 %v3844, %v3840
    %v4289 = vpack.c.b16 %v3845, %v3841
    %v4290 = vpack.c.b16 %v3850, %v3846
    %v4291 = vpack.c.b16 %v3851, %v3847
    %v4292 = vpack.c.b16 %v3852, %v3848
    %v4293 = vpack.c.b16 %v3853, %v3849
    %v4294 = vpack.c.b16 %v3858, %v3854
    %v4295 = vpack.c.b16 %v3859, %v3855
    %v4296 = vpack.c.b16 %v3860, %v3856
    %v4297 = vpack.c.b16 %v3861, %v3857
    %v4298 = vpack.c.b16 %v3866, %v3862
    %v4299 = vpack.c.b16 %v3867, %v3863
    %v4300 = vpack.c.b16 %v3868, %v3864
    %v4301 = vpack.c.b16 %v3869, %v3865
    %v4302 = vpack.c.b16 %v3874, %v3870
    %v4303 = vpack.c.b16 %v3875, %v3871
    %v4304 = vpack.c.b16 %v3876, %v3872
    %v4305 = vpack.c.b16 %v3877, %v3873
    %v4306 = vpack.c.b16 %v3882, %v3878
    %v4307 = vpack.c.b16 %v3883, %v3879
    %v4308 = vpack.c.b16 %v3884, %v3880
    %v4309 = vpack.c.b16 %v3885, %v3881
    %v4310 = vpack.c.b16 %v3890, %v3886
    %v4311 = vpack.c.b16 %v3891, %v3887
    %v4312 = vpack.c.b16 %v3892, %v3888
    %v4313 = vpack.c.b16 %v3893, %v3889
    %v4314 = vpack.c.b16 %v3898, %v3894
    %v4315 = vpack.c.b16 %v3899, %v3895
    %v4316 = vpack.c.b16 %v3900, %v3896
    %v4317 = vpack.c.b16 %v3901, %v3897
    %v4318 = vpack.c.b16 %v3906, %v3902
    %v4319 = vpack.c.b16 %v3907, %v3903
    %v4320 = vpack.c.b16 %v3908, %v3904
    %v4321 = vpack.c.b16 %v3909, %v3905
    %v4322 = vpack.c.b16 %v3914, %v3910
    %v4323 = vpack.c.b16 %v3915, %v3911
    %v4324 = vpack.c.b16 %v3916, %v3912
    %v4325 = vpack.c.b16 %v3917, %v3913
    %v4326 = vpack.c.b16 %v3922, %v3918
    %v4327 = vpack.c.b16 %v3923, %v3919
    %v4328 = vpack.c.b16 %v3924, %v3920
    %v4329 = vpack.c.b16 %v3925, %v3921
    %v4330 = vpack.c.b16 %v3930, %v3926
    %v4331 = vpack.c.b16 %v3931, %v3927
    %v4332 = vpack.c.b16 %v3932, %v3928
    %v4333 = vpack.c.b16 %v3933, %v3929
    %v4334 = vpack.c.b16 %v3938, %v3934
    %v4335 = vpack.c.b16 %v3939, %v3935
    %v4336 = vpack.c.b16 %v3940, %v3936
    %v4337 = vpack.c.b16 %v3941, %v3937
    %v4338 = vpack.c.b16 %v3946, %v3942
    %v4339 = vpack.c.b16 %v3947, %v3943
    %v4340 = vpack.c.b16 %v3948, %v3944
    %v4341 = vpack.c.b16 %v3949, %v3945
    %v4342 = vpack.c.b16 %v3954, %v3950
    %v4343 = vpack.c.b16 %v3955, %v3951
    %v4344 = vpack.c.b16 %v3956, %v3952
    %v4345 = vpack.c.b16 %v3957, %v3953
    %v4346 = vpack.c.b16 %v3962, %v3958
    %v4347 = vpack.c.b16 %v3963, %v3959
    %v4348 = vpack.c.b16 %v3964, %v3960
    %v4349 = vpack.c.b16 %v3965, %v3961
    %v4350 = vpack.c.b16 %v3970, %v3966
    %v4351 = vpack.c.b16 %v3971, %v3967
    %v4352 = vpack.c.b16 %v3972, %v3968
    %v4353 = vpack.c.b16 %v3973, %v3969
    %v4354 = vpack.c.b16 %v3978, %v3974
    %v4355 = vpack.c.b16 %v3979, %v3975
    %v4356 = vpack.c.b16 %v3980, %v3976
    %v4357 = vpack.c.b16 %v3981, %v3977
    %v4358 = vpack.c.b16 %v3986, %v3982
    %v4359 = vpack.c.b16 %v3987, %v3983
    %v4360 = vpack.c.b16 %v3988, %v3984
    %v4361 = vpack.c.b16 %v3989, %v3985
    %v4362 = vpack.c.b16 %v3994, %v3990
    %v4363 = vpack.c.b16 %v3995, %v3991
    %v4364 = vpack.c.b16 %v3996, %v3992
    %v4365 = vpack.c.b16 %v3997, %v3993
    %v4366 = vpack.c.b16 %v4002, %v3998
    %v4367 = vpack.c.b16 %v4003, %v3999
    %v4368 = vpack.c.b16 %v4004, %v4000
    %v4369 = vpack.c.b16 %v4005, %v4001
    %v4370 = vpack.c.b16 %v4010, %v4006
    %v4371 = vpack.c.b16 %v4011, %v4007
    %v4372 = vpack.c.b16 %v4012, %v4008
    %v4373 = vpack.c.b16 %v4013, %v4009
    %v4374 = vpack.c.b16 %v4018, %v4014
    %v4375 = vpack.c.b16 %v4019, %v4015
    %v4376 = vpack.c.b16 %v4020, %v4016
    %v4377 = vpack.c.b16 %v4021, %v4017
    %v4378 = vpack.c.b16 %v4026, %v4022
    %v4379 = vpack.c.b16 %v4027, %v4023
    %v4380 = vpack.c.b16 %v4028, %v4024
    %v4381 = vpack.c.b16 %v4029, %v4025
    %v4382 = vpack.c.b16 %v4034, %v4030
    %v4383 = vpack.c.b16 %v4035, %v4031
    %v4384 = vpack.c.b16 %v4036, %v4032
    %v4385 = vpack.c.b16 %v4037, %v4033
    %v4386 = vpack.c.b16 %v4042, %v4038
    %v4387 = vpack.c.b16 %v4043, %v4039
    %v4388 = vpack.c.b16 %v4044, %v4040
    %v4389 = vpack.c.b16 %v4045, %v4041
    %v4390 = vpack.c.b16 %v4050, %v4046
    %v4391 = vpack.c.b16 %v4051, %v4047
    %v4392 = vpack.c.b16 %v4052, %v4048
    %v4393 = vpack.c.b16 %v4053, %v4049
    %v4394 = vpack.c.b16 %v4058, %v4054
    %v4395 = vpack.c.b16 %v4059, %v4055
    %v4396 = vpack.c.b16 %v4060, %v4056
    %v4397 = vpack.c.b16 %v4061, %v4057
    %v4398 = vpack.c.b16 %v4066, %v4062
    %v4399 = vpack.c.b16 %v4067, %v4063
    %v4400 = vpack.c.b16 %v4068, %v4064
    %v4401 = vpack.c.b16 %v4069, %v4065
    %v4402 = vpack.c.b16 %v4074, %v4070
    %v4403 = vpack.c.b16 %v4075, %v4071
    %v4404 = vpack.c.b16 %v4076, %v4072
    %v4405 = vpack.c.b16 %v4077, %v4073
    %v4406 = vpack.c.b16 %v4082, %v4078
    %v4407 = vpack.c.b16 %v4083, %v4079
    %v4408 = vpack.c.b16 %v4084, %v4080
    %v4409 = vpack.c.b16 %v4085, %v4081
    %v4410 = vpack.c.b16 %v4090, %v4086
    %v4411 = vpack.c.b16 %v4091, %v4087
    %v4412 = vpack.c.b16 %v4092, %v4088
    %v4413 = vpack.c.b16 %v4093, %v4089
    %v4414 = vpack.c.b16 %v4098, %v4094
    %v4415 = vpack.c.b16 %v4099, %v4095
    %v4416 = vpack.c.b16 %v4100, %v4096
    %v4417 = vpack.c.b16 %v4101, %v4097
    %v4418 = vpack.c.b16 %v4106, %v4102
    %v4419 = vpack.c.b16 %v4107, %v4103
    %v4420 = vpack.c.b16 %v4108, %v4104
    %v4421 = vpack.c.b16 %v4109, %v4105
    %v4422 = vpack.c.b16 %v4114, %v4110
    %v4423 = vpack.c.b16 %v4115, %v4111
    %v4424 = vpack.c.b16 %v4116, %v4112
    %v4425 = vpack.c.b16 %v4117, %v4113
    %v4426 = vpack.c.b16 %v4122, %v4118
    %v4427 = vpack.c.b16 %v4123, %v4119
    %v4428 = vpack.c.b16 %v4124, %v4120
    %v4429 = vpack.c.b16 %v4125, %v4121
    %v4430 = vpack.c.b16 %v4130, %v4126
    %v4431 = vpack.c.b16 %v4131, %v4127
    %v4432 = vpack.c.b16 %v4132, %v4128
    %v4433 = vpack.c.b16 %v4133, %v4129
    %v4434 = vpack.c.b16 %v4138, %v4134
    %v4435 = vpack.c.b16 %v4139, %v4135
    %v4436 = vpack.c.b16 %v4140, %v4136
    %v4437 = vpack.c.b16 %v4141, %v4137
    %v4438 = vpack.c.b16 %v4146, %v4142
    %v4439 = vpack.c.b16 %v4147, %v4143
    %v4440 = vpack.c.b16 %v4148, %v4144
    %v4441 = vpack.c.b16 %v4149, %v4145
    %v4442 = vpack.c.b16 %v4154, %v4150
    %v4443 = vpack.c.b16 %v4155, %v4151
    %v4444 = vpack.c.b16 %v4156, %v4152
    %v4445 = vpack.c.b16 %v4157, %v4153
    %v4446 = vpack.c.b16 %v4162, %v4158
    %v4447 = vpack.c.b16 %v4163, %v4159
    %v4448 = vpack.c.b16 %v4164, %v4160
    %v4449 = vpack.c.b16 %v4165, %v4161
    %v4450 = vpack.c.b16 %v4170, %v4166
    %v4451 = vpack.c.b16 %v4171, %v4167
    %v4452 = vpack.c.b16 %v4172, %v4168
    %v4453 = vpack.c.b16 %v4173, %v4169
    %v4454 = vpack.c.b16 %v4178, %v4174
    %v4455 = vpack.c.b16 %v4179, %v4175
    %v4456 = vpack.c.b16 %v4180, %v4176
    %v4457 = vpack.c.b16 %v4181, %v4177
    %v4458 = vpack.c.b16 %v4186, %v4182
    %v4459 = vpack.c.b16 %v4187, %v4183
    %v4460 = vpack.c.b16 %v4188, %v4184
    %v4461 = vpack.c.b16 %v4189, %v4185
    %v4462 = vpack.c.b16 %v4194, %v4190
    %v4463 = vpack.c.b16 %v4195, %v4191
    %v4464 = vpack.c.b16 %v4196, %v4192
    %v4465 = vpack.c.b16 %v4197, %v4193
    %v4466 = vpack.c.b16 %v4202, %v4198
    %v4467 = vpack.c.b16 %v4203, %v4199
    %v4468 = vpack.c.b16 %v4204, %v4200
    %v4469 = vpack.c.b16 %v4205, %v4201
    %v4470 = vpack.c.b16 %v4210, %v4206
    %v4471 = vpack.c.b16 %v4211, %v4207
    %v4472 = vpack.c.b16 %v4212, %v4208
    %v4473 = vpack.c.b16 %v4213, %v4209
    %v4474 = vpack.c.b16 %v4218, %v4214
    %v4475 = vpack.c.b16 %v4219, %v4215
    %v4476 = vpack.c.b16 %v4220, %v4216
    %v4477 = vpack.c.b16 %v4221, %v4217
    %4734 = vmatprep.subr.bf16.mxu0 %v4251
    %4735 = vmatpush1.bf16.msra.mxu0 %v4250
    %4736 = vmatprep.subr.bf16.mxu0 %v4247
    %4737 = vmatpush1.bf16.msra.mxu0 %v4246
    %4738 = vmatprep.subr.bf16.mxu0 %v4243
    %4739 = vmatpush1.bf16.msra.mxu0 %v4242
    %4740 = vmatprep.subr.bf16.mxu0 %v4239
    %4741 = vmatpush1.bf16.msra.mxu0 %v4238
    %4742 = vmatprep.subr.bf16.mxu0 %v4235
    %4743 = vmatpush1.bf16.msra.mxu0 %v4234
    %4744 = vmatprep.subr.bf16.mxu0 %v4231
    %4745 = vmatpush1.bf16.msra.mxu0 %v4230
    %4746 = vmatprep.subr.bf16.mxu0 %v4227
    %4747 = vmatpush1.bf16.msra.mxu0 %v4226
    %4748 = vmatprep.subr.bf16.mxu0 %v4223
    %4749 = vmatpush1.bf16.msra.mxu0 %v4222
    %4750 = vmatprep.subr.bf16.mxu0 %v4283
    %4751 = vmatpush2.bf16.msra.mxu0 %v4282
    %4752 = vmatprep.subr.bf16.mxu0 %v4279
    %4753 = vmatpush2.bf16.msra.mxu0 %v4278
    %4754 = vmatprep.subr.bf16.mxu0 %v4275
    %4755 = vmatpush2.bf16.msra.mxu0 %v4274
    %4756 = vmatprep.subr.bf16.mxu0 %v4271
    %4757 = vmatpush2.bf16.msra.mxu0 %v4270
    %4758 = vmatprep.subr.bf16.mxu0 %v4267
    %4759 = vmatpush2.bf16.msra.mxu0 %v4266
    %4760 = vmatprep.subr.bf16.mxu0 %v4263
    %4761 = vmatpush2.bf16.msra.mxu0 %v4262
    %4762 = vmatprep.subr.bf16.mxu0 %v4259
    %4763 = vmatpush2.bf16.msra.mxu0 %v4258
    %4764 = vmatprep.subr.bf16.mxu0 %v4255
    %4765 = vmatpush2.bf16.msra.mxu0 %v4254
    %4766 = vmatprep.mubr.bf16.mxu0 %v3161
    %4767 = vmatmul.mubr.bf16.gmra.mxu0 %v3160
    %v4768 = vpop.f32.mrf.mxu0
    %v4769 = vadd.f32 %v3437, %v4768
    %v4770 = vpop.f32.mrf.mxu0
    %v4771 = vadd.f32 %v3441, %v4770
    %v4772 = vpop.f32.mrf.mxu0
    %v4773 = vadd.f32 %v3437, %v4772
    %v4774 = vpop.f32.mrf.mxu0
    %v4775 = vadd.f32 %v3441, %v4774
    %4776 = vmatprep.mubr.bf16.mxu0 %v3169
    %4777 = vmatmul.mubr.bf16.gmra.mxu0 %v3168
    %v4778 = vpop.f32.mrf.mxu0
    %v4779 = vadd.f32 %v3437, %v4778
    %v4780 = vpop.f32.mrf.mxu0
    %v4781 = vadd.f32 %v3441, %v4780
    %v4782 = vpop.f32.mrf.mxu0
    %v4783 = vpop.f32.mrf.mxu0
    %4784 = vdwg.mxu0
    %4785 = vmatprep.subr.bf16.mxu0 %v4315
    %4786 = vmatpush1.bf16.msra.mxu0 %v4314
    %4787 = vmatprep.subr.bf16.mxu0 %v4311
    %4788 = vmatpush1.bf16.msra.mxu0 %v4310
    %4789 = vmatprep.subr.bf16.mxu0 %v4307
    %4790 = vmatpush1.bf16.msra.mxu0 %v4306
    %4791 = vmatprep.subr.bf16.mxu0 %v4303
    %4792 = vmatpush1.bf16.msra.mxu0 %v4302
    %4793 = vmatprep.subr.bf16.mxu0 %v4299
    %4794 = vmatpush1.bf16.msra.mxu0 %v4298
    %4795 = vmatprep.subr.bf16.mxu0 %v4295
    %4796 = vmatpush1.bf16.msra.mxu0 %v4294
    %4797 = vmatprep.subr.bf16.mxu0 %v4291
    %4798 = vmatpush1.bf16.msra.mxu0 %v4290
    %4799 = vmatprep.subr.bf16.mxu0 %v4287
    %4800 = vmatpush1.bf16.msra.mxu0 %v4286
    %4801 = vmatprep.subr.bf16.mxu0 %v4347
    %4802 = vmatpush2.bf16.msra.mxu0 %v4346
    %4803 = vmatprep.subr.bf16.mxu0 %v4343
    %4804 = vmatpush2.bf16.msra.mxu0 %v4342
    %4805 = vmatprep.subr.bf16.mxu0 %v4339
    %4806 = vmatpush2.bf16.msra.mxu0 %v4338
    %4807 = vmatprep.subr.bf16.mxu0 %v4335
    %4808 = vmatpush2.bf16.msra.mxu0 %v4334
    %4809 = vmatprep.subr.bf16.mxu0 %v4331
    %4810 = vmatpush2.bf16.msra.mxu0 %v4330
    %4811 = vmatprep.subr.bf16.mxu0 %v4327
    %4812 = vmatpush2.bf16.msra.mxu0 %v4326
    %4813 = vmatprep.subr.bf16.mxu0 %v4323
    %4814 = vmatpush2.bf16.msra.mxu0 %v4322
    %4815 = vmatprep.subr.bf16.mxu0 %v4319
    %4816 = vmatpush2.bf16.msra.mxu0 %v4318
    %4817 = vmatprep.mubr.bf16.mxu0 %v3163
    %4818 = vmatmul.mubr.bf16.gmra.mxu0 %v3162
    %v4819 = vpop.f32.mrf.mxu0
    %v4820 = vadd.f32 %v4769, %v4819
    %v4821 = vpop.f32.mrf.mxu0
    %v4822 = vadd.f32 %v4771, %v4821
    %v4823 = vpop.f32.mrf.mxu0
    %v4824 = vadd.f32 %v4773, %v4823
    %v4825 = vpop.f32.mrf.mxu0
    %v4826 = vadd.f32 %v4775, %v4825
    %4827 = vmatprep.mubr.bf16.mxu0 %v3171
    %4828 = vmatmul.mubr.bf16.gmra.mxu0 %v3170
    %v4829 = vpop.f32.mrf.mxu0
    %v4830 = vadd.f32 %v4779, %v4829
    %v4831 = vpop.f32.mrf.mxu0
    %v4832 = vadd.f32 %v4781, %v4831
    %v4833 = vpop.f32.mrf.mxu0
    %v4834 = vpop.f32.mrf.mxu0
    %4835 = vdwg.mxu0
    %4836 = vmatprep.subr.bf16.mxu0 %v4379
    %4837 = vmatpush1.bf16.msra.mxu0 %v4378
    %4838 = vmatprep.subr.bf16.mxu0 %v4375
    %4839 = vmatpush1.bf16.msra.mxu0 %v4374
    %4840 = vmatprep.subr.bf16.mxu0 %v4371
    %4841 = vmatpush1.bf16.msra.mxu0 %v4370
    %4842 = vmatprep.subr.bf16.mxu0 %v4367
    %4843 = vmatpush1.bf16.msra.mxu0 %v4366
    %4844 = vmatprep.subr.bf16.mxu0 %v4363
    %4845 = vmatpush1.bf16.msra.mxu0 %v4362
    %4846 = vmatprep.subr.bf16.mxu0 %v4359
    %4847 = vmatpush1.bf16.msra.mxu0 %v4358
    %4848 = vmatprep.subr.bf16.mxu0 %v4355
    %4849 = vmatpush1.bf16.msra.mxu0 %v4354
    %4850 = vmatprep.subr.bf16.mxu0 %v4351
    %4851 = vmatpush1.bf16.msra.mxu0 %v4350
    %4852 = vmatprep.subr.bf16.mxu0 %v4411
    %4853 = vmatpush2.bf16.msra.mxu0 %v4410
    %4854 = vmatprep.subr.bf16.mxu0 %v4407
    %4855 = vmatpush2.bf16.msra.mxu0 %v4406
    %4856 = vmatprep.subr.bf16.mxu0 %v4403
    %4857 = vmatpush2.bf16.msra.mxu0 %v4402
    %4858 = vmatprep.subr.bf16.mxu0 %v4399
    %4859 = vmatpush2.bf16.msra.mxu0 %v4398
    %4860 = vmatprep.subr.bf16.mxu0 %v4395
    %4861 = vmatpush2.bf16.msra.mxu0 %v4394
    %4862 = vmatprep.subr.bf16.mxu0 %v4391
    %4863 = vmatpush2.bf16.msra.mxu0 %v4390
    %4864 = vmatprep.subr.bf16.mxu0 %v4387
    %4865 = vmatpush2.bf16.msra.mxu0 %v4386
    %4866 = vmatprep.subr.bf16.mxu0 %v4383
    %4867 = vmatpush2.bf16.msra.mxu0 %v4382
    %4868 = vmatprep.mubr.bf16.mxu0 %v3165
    %4869 = vmatmul.mubr.bf16.gmra.mxu0 %v3164
    %v4870 = vpop.f32.mrf.mxu0
    %v4871 = vadd.f32 %v4820, %v4870
    %v4872 = vpop.f32.mrf.mxu0
    %v4873 = vadd.f32 %v4822, %v4872
    %v4874 = vpop.f32.mrf.mxu0
    %v4875 = vadd.f32 %v4824, %v4874
    %v4876 = vpop.f32.mrf.mxu0
    %v4877 = vadd.f32 %v4826, %v4876
    %4878 = vmatprep.mubr.bf16.mxu0 %v3173
    %4879 = vmatmul.mubr.bf16.gmra.mxu0 %v3172
    %v4880 = vpop.f32.mrf.mxu0
    %v4881 = vadd.f32 %v4830, %v4880
    %v4882 = vpop.f32.mrf.mxu0
    %v4883 = vadd.f32 %v4832, %v4882
    %v4884 = vpop.f32.mrf.mxu0
    %v4885 = vpop.f32.mrf.mxu0
    %4886 = vdwg.mxu0
    %4887 = vmatprep.subr.bf16.mxu0 %v4443
    %4888 = vmatpush1.bf16.msra.mxu0 %v4442
    %4889 = vmatprep.subr.bf16.mxu0 %v4439
    %4890 = vmatpush1.bf16.msra.mxu0 %v4438
    %4891 = vmatprep.subr.bf16.mxu0 %v4435
    %4892 = vmatpush1.bf16.msra.mxu0 %v4434
    %4893 = vmatprep.subr.bf16.mxu0 %v4431
    %4894 = vmatpush1.bf16.msra.mxu0 %v4430
    %4895 = vmatprep.subr.bf16.mxu0 %v4427
    %4896 = vmatpush1.bf16.msra.mxu0 %v4426
    %4897 = vmatprep.subr.bf16.mxu0 %v4423
    %4898 = vmatpush1.bf16.msra.mxu0 %v4422
    %4899 = vmatprep.subr.bf16.mxu0 %v4419
    %4900 = vmatpush1.bf16.msra.mxu0 %v4418
    %4901 = vmatprep.subr.bf16.mxu0 %v4415
    %4902 = vmatpush1.bf16.msra.mxu0 %v4414
    %4903 = vmatprep.subr.bf16.mxu0 %v4475
    %4904 = vmatpush2.bf16.msra.mxu0 %v4474
    %4905 = vmatprep.subr.bf16.mxu0 %v4471
    %4906 = vmatpush2.bf16.msra.mxu0 %v4470
    %4907 = vmatprep.subr.bf16.mxu0 %v4467
    %4908 = vmatpush2.bf16.msra.mxu0 %v4466
    %4909 = vmatprep.subr.bf16.mxu0 %v4463
    %4910 = vmatpush2.bf16.msra.mxu0 %v4462
    %4911 = vmatprep.subr.bf16.mxu0 %v4459
    %4912 = vmatpush2.bf16.msra.mxu0 %v4458
    %4913 = vmatprep.subr.bf16.mxu0 %v4455
    %4914 = vmatpush2.bf16.msra.mxu0 %v4454
    %4915 = vmatprep.subr.bf16.mxu0 %v4451
    %4916 = vmatpush2.bf16.msra.mxu0 %v4450
    %4917 = vmatprep.subr.bf16.mxu0 %v4447
    %4918 = vmatpush2.bf16.msra.mxu0 %v4446
    %4919 = vmatprep.mubr.bf16.mxu0 %v3167
    %4920 = vmatmul.mubr.bf16.gmra.mxu0 %v3166
    %v4921 = vpop.f32.mrf.mxu0
    %v4922 = vadd.f32 %v4871, %v4921
    %v4923 = vpop.f32.mrf.mxu0
    %v4924 = vadd.f32 %v4873, %v4923
    %v4925 = vpop.f32.mrf.mxu0
    %v4926 = vadd.f32 %v4875, %v4925
    %v4927 = vpop.f32.mrf.mxu0
    %v4928 = vadd.f32 %v4877, %v4927
    %4929 = vmatprep.mubr.bf16.mxu0 %v3175
    %4930 = vmatmul.mubr.bf16.gmra.mxu0 %v3174
    %v4931 = vpop.f32.mrf.mxu0
    %v4932 = vadd.f32 %v4881, %v4931
    %v4933 = vpop.f32.mrf.mxu0
    %v4934 = vadd.f32 %v4883, %v4933
    %v4935 = vpop.f32.mrf.mxu0
    %v4936 = vpop.f32.mrf.mxu0
    %4937 = vdwg.mxu0
    %4938 = vmatprep.subr.bf16.mxu0 %v4253
    %4939 = vmatpush1.bf16.msra.mxu0 %v4252
    %4940 = vmatprep.subr.bf16.mxu0 %v4249
    %4941 = vmatpush1.bf16.msra.mxu0 %v4248
    %4942 = vmatprep.subr.bf16.mxu0 %v4245
    %4943 = vmatpush1.bf16.msra.mxu0 %v4244
    %4944 = vmatprep.subr.bf16.mxu0 %v4241
    %4945 = vmatpush1.bf16.msra.mxu0 %v4240
    %4946 = vmatprep.subr.bf16.mxu0 %v4237
    %4947 = vmatpush1.bf16.msra.mxu0 %v4236
    %4948 = vmatprep.subr.bf16.mxu0 %v4233
    %4949 = vmatpush1.bf16.msra.mxu0 %v4232
    %4950 = vmatprep.subr.bf16.mxu0 %v4229
    %4951 = vmatpush1.bf16.msra.mxu0 %v4228
    %4952 = vmatprep.subr.bf16.mxu0 %v4225
    %4953 = vmatpush1.bf16.msra.mxu0 %v4224
    %4954 = vmatprep.subr.bf16.mxu0 %v4285
    %4955 = vmatpush2.bf16.msra.mxu0 %v4284
    %4956 = vmatprep.subr.bf16.mxu0 %v4281
    %4957 = vmatpush2.bf16.msra.mxu0 %v4280
    %4958 = vmatprep.subr.bf16.mxu0 %v4277
    %4959 = vmatpush2.bf16.msra.mxu0 %v4276
    %4960 = vmatprep.subr.bf16.mxu0 %v4273
    %4961 = vmatpush2.bf16.msra.mxu0 %v4272
    %4962 = vmatprep.subr.bf16.mxu0 %v4269
    %4963 = vmatpush2.bf16.msra.mxu0 %v4268
    %4964 = vmatprep.subr.bf16.mxu0 %v4265
    %4965 = vmatpush2.bf16.msra.mxu0 %v4264
    %4966 = vmatprep.subr.bf16.mxu0 %v4261
    %4967 = vmatpush2.bf16.msra.mxu0 %v4260
    %4968 = vmatprep.subr.bf16.mxu0 %v4257
    %4969 = vmatpush2.bf16.msra.mxu0 %v4256
    %4970 = vmatprep.mubr.bf16.mxu0 %v3161
    %4971 = vmatmul.mubr.bf16.gmra.mxu0 %v3160
    %v4972 = vpop.f32.mrf.mxu0
    %v4973 = vadd.f32 %v3445, %v4972
    %v4974 = vpop.f32.mrf.mxu0
    %v4975 = vadd.f32 %v3449, %v4974
    %v4976 = vpop.f32.mrf.mxu0
    %v4977 = vadd.f32 %v3445, %v4976
    %v4978 = vpop.f32.mrf.mxu0
    %v4979 = vadd.f32 %v3449, %v4978
    %4980 = vmatprep.mubr.bf16.mxu0 %v3169
    %4981 = vmatmul.mubr.bf16.gmra.mxu0 %v3168
    %v4982 = vpop.f32.mrf.mxu0
    %v4983 = vadd.f32 %v3445, %v4982
    %v4984 = vpop.f32.mrf.mxu0
    %v4985 = vadd.f32 %v3449, %v4984
    %v4986 = vpop.f32.mrf.mxu0
    %v4987 = vpop.f32.mrf.mxu0
    %4988 = vdwg.mxu0
    %4989 = vmatprep.subr.bf16.mxu0 %v4317
    %4990 = vmatpush1.bf16.msra.mxu0 %v4316
    %4991 = vmatprep.subr.bf16.mxu0 %v4313
    %4992 = vmatpush1.bf16.msra.mxu0 %v4312
    %4993 = vmatprep.subr.bf16.mxu0 %v4309
    %4994 = vmatpush1.bf16.msra.mxu0 %v4308
    %4995 = vmatprep.subr.bf16.mxu0 %v4305
    %4996 = vmatpush1.bf16.msra.mxu0 %v4304
    %4997 = vmatprep.subr.bf16.mxu0 %v4301
    %4998 = vmatpush1.bf16.msra.mxu0 %v4300
    %4999 = vmatprep.subr.bf16.mxu0 %v4297
    %5000 = vmatpush1.bf16.msra.mxu0 %v4296
    %5001 = vmatprep.subr.bf16.mxu0 %v4293
    %5002 = vmatpush1.bf16.msra.mxu0 %v4292
    %5003 = vmatprep.subr.bf16.mxu0 %v4289
    %5004 = vmatpush1.bf16.msra.mxu0 %v4288
    %5005 = vmatprep.subr.bf16.mxu0 %v4349
    %5006 = vmatpush2.bf16.msra.mxu0 %v4348
    %5007 = vmatprep.subr.bf16.mxu0 %v4345
    %5008 = vmatpush2.bf16.msra.mxu0 %v4344
    %5009 = vmatprep.subr.bf16.mxu0 %v4341
    %5010 = vmatpush2.bf16.msra.mxu0 %v4340
    %5011 = vmatprep.subr.bf16.mxu0 %v4337
    %5012 = vmatpush2.bf16.msra.mxu0 %v4336
    %5013 = vmatprep.subr.bf16.mxu0 %v4333
    %5014 = vmatpush2.bf16.msra.mxu0 %v4332
    %5015 = vmatprep.subr.bf16.mxu0 %v4329
    %5016 = vmatpush2.bf16.msra.mxu0 %v4328
    %5017 = vmatprep.subr.bf16.mxu0 %v4325
    %5018 = vmatpush2.bf16.msra.mxu0 %v4324
    %5019 = vmatprep.subr.bf16.mxu0 %v4321
    %5020 = vmatpush2.bf16.msra.mxu0 %v4320
    %5021 = vmatprep.mubr.bf16.mxu0 %v3163
    %5022 = vmatmul.mubr.bf16.gmra.mxu0 %v3162
    %v5023 = vpop.f32.mrf.mxu0
    %v5024 = vadd.f32 %v4973, %v5023
    %v5025 = vpop.f32.mrf.mxu0
    %v5026 = vadd.f32 %v4975, %v5025
    %v5027 = vpop.f32.mrf.mxu0
    %v5028 = vadd.f32 %v4977, %v5027
    %v5029 = vpop.f32.mrf.mxu0
    %v5030 = vadd.f32 %v4979, %v5029
    %5031 = vmatprep.mubr.bf16.mxu0 %v3171
    %5032 = vmatmul.mubr.bf16.gmra.mxu0 %v3170
    %v5033 = vpop.f32.mrf.mxu0
    %v5034 = vadd.f32 %v4983, %v5033
    %v5035 = vpop.f32.mrf.mxu0
    %v5036 = vadd.f32 %v4985, %v5035
    %v5037 = vpop.f32.mrf.mxu0
    %v5038 = vpop.f32.mrf.mxu0
    %5039 = vdwg.mxu0
    %5040 = vmatprep.subr.bf16.mxu0 %v4381
    %5041 = vmatpush1.bf16.msra.mxu0 %v4380
    %5042 = vmatprep.subr.bf16.mxu0 %v4377
    %5043 = vmatpush1.bf16.msra.mxu0 %v4376
    %5044 = vmatprep.subr.bf16.mxu0 %v4373
    %5045 = vmatpush1.bf16.msra.mxu0 %v4372
    %5046 = vmatprep.subr.bf16.mxu0 %v4369
    %5047 = vmatpush1.bf16.msra.mxu0 %v4368
    %5048 = vmatprep.subr.bf16.mxu0 %v4365
    %5049 = vmatpush1.bf16.msra.mxu0 %v4364
    %5050 = vmatprep.subr.bf16.mxu0 %v4361
    %5051 = vmatpush1.bf16.msra.mxu0 %v4360
    %5052 = vmatprep.subr.bf16.mxu0 %v4357
    %5053 = vmatpush1.bf16.msra.mxu0 %v4356
    %5054 = vmatprep.subr.bf16.mxu0 %v4353
    %5055 = vmatpush1.bf16.msra.mxu0 %v4352
    %5056 = vmatprep.subr.bf16.mxu0 %v4413
    %5057 = vmatpush2.bf16.msra.mxu0 %v4412
    %5058 = vmatprep.subr.bf16.mxu0 %v4409
    %5059 = vmatpush2.bf16.msra.mxu0 %v4408
    %5060 = vmatprep.subr.bf16.mxu0 %v4405
    %5061 = vmatpush2.bf16.msra.mxu0 %v4404
    %5062 = vmatprep.subr.bf16.mxu0 %v4401
    %5063 = vmatpush2.bf16.msra.mxu0 %v4400
    %5064 = vmatprep.subr.bf16.mxu0 %v4397
    %5065 = vmatpush2.bf16.msra.mxu0 %v4396
    %5066 = vmatprep.subr.bf16.mxu0 %v4393
    %5067 = vmatpush2.bf16.msra.mxu0 %v4392
    %5068 = vmatprep.subr.bf16.mxu0 %v4389
    %5069 = vmatpush2.bf16.msra.mxu0 %v4388
    %5070 = vmatprep.subr.bf16.mxu0 %v4385
    %5071 = vmatpush2.bf16.msra.mxu0 %v4384
    %5072 = vmatprep.mubr.bf16.mxu0 %v3165
    %5073 = vmatmul.mubr.bf16.gmra.mxu0 %v3164
    %v5074 = vpop.f32.mrf.mxu0
    %v5075 = vadd.f32 %v5024, %v5074
    %v5076 = vpop.f32.mrf.mxu0
    %v5077 = vadd.f32 %v5026, %v5076
    %v5078 = vpop.f32.mrf.mxu0
    %v5079 = vadd.f32 %v5028, %v5078
    %v5080 = vpop.f32.mrf.mxu0
    %v5081 = vadd.f32 %v5030, %v5080
    %5082 = vmatprep.mubr.bf16.mxu0 %v3173
    %5083 = vmatmul.mubr.bf16.gmra.mxu0 %v3172
    %v5084 = vpop.f32.mrf.mxu0
    %v5085 = vadd.f32 %v5034, %v5084
    %v5086 = vpop.f32.mrf.mxu0
    %v5087 = vadd.f32 %v5036, %v5086
    %v5088 = vpop.f32.mrf.mxu0
    %v5089 = vpop.f32.mrf.mxu0
    %5090 = vdwg.mxu0
    %5091 = vmatprep.subr.bf16.mxu0 %v4445
    %5092 = vmatpush1.bf16.msra.mxu0 %v4444
    %5093 = vmatprep.subr.bf16.mxu0 %v4441
    %5094 = vmatpush1.bf16.msra.mxu0 %v4440
    %5095 = vmatprep.subr.bf16.mxu0 %v4437
    %5096 = vmatpush1.bf16.msra.mxu0 %v4436
    %5097 = vmatprep.subr.bf16.mxu0 %v4433
    %5098 = vmatpush1.bf16.msra.mxu0 %v4432
    %5099 = vmatprep.subr.bf16.mxu0 %v4429
    %5100 = vmatpush1.bf16.msra.mxu0 %v4428
    %5101 = vmatprep.subr.bf16.mxu0 %v4425
    %5102 = vmatpush1.bf16.msra.mxu0 %v4424
    %5103 = vmatprep.subr.bf16.mxu0 %v4421
    %5104 = vmatpush1.bf16.msra.mxu0 %v4420
    %5105 = vmatprep.subr.bf16.mxu0 %v4417
    %5106 = vmatpush1.bf16.msra.mxu0 %v4416
    %5107 = vmatprep.subr.bf16.mxu0 %v4477
    %5108 = vmatpush2.bf16.msra.mxu0 %v4476
    %5109 = vmatprep.subr.bf16.mxu0 %v4473
    %5110 = vmatpush2.bf16.msra.mxu0 %v4472
    %5111 = vmatprep.subr.bf16.mxu0 %v4469
    %5112 = vmatpush2.bf16.msra.mxu0 %v4468
    %5113 = vmatprep.subr.bf16.mxu0 %v4465
    %5114 = vmatpush2.bf16.msra.mxu0 %v4464
    %5115 = vmatprep.subr.bf16.mxu0 %v4461
    %5116 = vmatpush2.bf16.msra.mxu0 %v4460
    %5117 = vmatprep.subr.bf16.mxu0 %v4457
    %5118 = vmatpush2.bf16.msra.mxu0 %v4456
    %5119 = vmatprep.subr.bf16.mxu0 %v4453
    %5120 = vmatpush2.bf16.msra.mxu0 %v4452
    %5121 = vmatprep.subr.bf16.mxu0 %v4449
    %5122 = vmatpush2.bf16.msra.mxu0 %v4448
    %5123 = vmatprep.mubr.bf16.mxu0 %v3167
    %5124 = vmatmul.mubr.bf16.gmra.mxu0 %v3166
    %v5125 = vpop.f32.mrf.mxu0
    %v5126 = vadd.f32 %v5075, %v5125
    %v5127 = vpop.f32.mrf.mxu0
    %v5128 = vadd.f32 %v5077, %v5127
    %v5129 = vpop.f32.mrf.mxu0
    %v5130 = vadd.f32 %v5079, %v5129
    %v5131 = vpop.f32.mrf.mxu0
    %v5132 = vadd.f32 %v5081, %v5131
    %5133 = vmatprep.mubr.bf16.mxu0 %v3175
    %5134 = vmatmul.mubr.bf16.gmra.mxu0 %v3174
    %v5135 = vpop.f32.mrf.mxu0
    %v5136 = vadd.f32 %v5085, %v5135
    %v5137 = vpop.f32.mrf.mxu0
    %v5138 = vadd.f32 %v5087, %v5137
    %v5139 = vpop.f32.mrf.mxu0
    %v5140 = vpop.f32.mrf.mxu0
    %5141 = vdwg.mxu0
    %v5142 = vmax.f32 %v4922, 0.0
    %v5143 = vmax.f32 %v4924, 0.0
    %v5144 = vmax.f32 %v5126, 0.0
    %v5145 = vmax.f32 %v5128, 0.0
    %v5146 = vmax.f32 %v4926, 0.0
    %v5147 = vmax.f32 %v4928, 0.0
    %v5148 = vmax.f32 %v5130, 0.0
    %v5149 = vmax.f32 %v5132, 0.0
    %v5150 = vmax.f32 %v4932, 0.0
    %v5151 = vmax.f32 %v4934, 0.0
    %v5152 = vmax.f32 %v5136, 0.0
    %v5153 = vmax.f32 %v5138, 0.0
    %v5154 = vpack.c.bf16 %v5146, %v5142
    %v5155 = vpack.c.bf16 %v5147, %v5143
    %v5156 = vpack.c.bf16 %v5148, %v5144
    %v5157 = vpack.c.bf16 %v5149, %v5145
    %v5158 = vpack.c.bf16 %v5150, %v5150
    %v5159 = vpack.c.bf16 %v5151, %v5151
    %v5160 = vpack.c.bf16 %v5152, %v5152
    %v5161 = vpack.c.bf16 %v5153, %v5153
    %v5162 = vld [vmem:[#allocation11] sm:$0xff]
    %v5163 = vld [vmem:[#allocation11 + $0x8] sm:$0xff]
    %v5164 = vld [vmem:[#allocation11 + $0x10] sm:$0xff]
    %v5165 = vld [vmem:[#allocation11 + $0x18] sm:$0xff]
    %v5166 = vld [vmem:[#allocation11 + $0x20] sm:$0xff]
    %v5167 = vld [vmem:[#allocation11 + $0x28] sm:$0xff]
    %v5168 = vld [vmem:[#allocation11 + $0x30] sm:$0xff]
    %v5169 = vld [vmem:[#allocation11 + $0x38] sm:$0xff]
    %v5170 = vld [vmem:[#allocation11 + $0x40] sm:$0xff]
    %v5171 = vld [vmem:[#allocation11 + $0x48] sm:$0xff]
    %v5172 = vld [vmem:[#allocation11 + $0x50] sm:$0xff]
    %v5173 = vld [vmem:[#allocation11 + $0x58] sm:$0xff]
    %v5174 = vld [vmem:[#allocation11 + $0x60] sm:$0xff]
    %v5175 = vld [vmem:[#allocation11 + $0x68] sm:$0xff]
    %v5176 = vld [vmem:[#allocation11 + $0x70] sm:$0xff]
    %v5177 = vld [vmem:[#allocation11 + $0x78] sm:$0xff]
    %v5178 = vld [vmem:[#allocation11 + $0x80] sm:$0xff]
    %v5179 = vld [vmem:[#allocation11 + $0x88] sm:$0xff]
    %v5180 = vld [vmem:[#allocation11 + $0x90] sm:$0xff]
    %v5181 = vld [vmem:[#allocation11 + $0x98] sm:$0xff]
    %v5182 = vld [vmem:[#allocation11 + $0xa0] sm:$0xff]
    %v5183 = vld [vmem:[#allocation11 + $0xa8] sm:$0xff]
    %v5184 = vld [vmem:[#allocation11 + $0xb0] sm:$0xff]
    %v5185 = vld [vmem:[#allocation11 + $0xb8] sm:$0xff]
    %v5186 = vld [vmem:[#allocation11 + $0xc0] sm:$0xff]
    %v5187 = vld [vmem:[#allocation11 + $0xc8] sm:$0xff]
    %v5188 = vld [vmem:[#allocation11 + $0xd0] sm:$0xff]
    %v5189 = vld [vmem:[#allocation11 + $0xd8] sm:$0xff]
    %v5190 = vld [vmem:[#allocation11 + $0xe0] sm:$0xff]
    %v5191 = vld [vmem:[#allocation11 + $0xe8] sm:$0xff]
    %v5192 = vld [vmem:[#allocation11 + $0xf0] sm:$0xff]
    %v5193 = vld [vmem:[#allocation11 + $0xf8] sm:$0xff]
    %v5194 = vld [vmem:[#allocation11 + $0x100] sm:$0xff]
    %v5195 = vld [vmem:[#allocation11 + $0x108] sm:$0xff]
    %v5196 = vld [vmem:[#allocation11 + $0x110] sm:$0xff]
    %v5197 = vld [vmem:[#allocation11 + $0x118] sm:$0xff]
    %v5198 = vld [vmem:[#allocation11 + $0x120] sm:$0xff]
    %v5199 = vld [vmem:[#allocation11 + $0x128] sm:$0xff]
    %v5200 = vld [vmem:[#allocation11 + $0x130] sm:$0xff]
    %v5201 = vld [vmem:[#allocation11 + $0x138] sm:$0xff]
    %v5202 = vld [vmem:[#allocation11 + $0x140] sm:$0xff]
    %v5203 = vld [vmem:[#allocation11 + $0x148] sm:$0xff]
    %v5204 = vld [vmem:[#allocation11 + $0x150] sm:$0xff]
    %v5205 = vld [vmem:[#allocation11 + $0x158] sm:$0xff]
    %v5206 = vld [vmem:[#allocation11 + $0x160] sm:$0xff]
    %v5207 = vld [vmem:[#allocation11 + $0x168] sm:$0xff]
    %v5208 = vld [vmem:[#allocation11 + $0x170] sm:$0xff]
    %v5209 = vld [vmem:[#allocation11 + $0x178] sm:$0xff]
    %v5210 = vld [vmem:[#allocation11 + $0x180] sm:$0xff]
    %v5211 = vld [vmem:[#allocation11 + $0x188] sm:$0xff]
    %v5212 = vld [vmem:[#allocation11 + $0x190] sm:$0xff]
    %v5213 = vld [vmem:[#allocation11 + $0x198] sm:$0xff]
    %v5214 = vld [vmem:[#allocation11 + $0x1a0] sm:$0xff]
    %v5215 = vld [vmem:[#allocation11 + $0x1a8] sm:$0xff]
    %v5216 = vld [vmem:[#allocation11 + $0x1b0] sm:$0xff]
    %v5217 = vld [vmem:[#allocation11 + $0x1b8] sm:$0xff]
    %v5218 = vld [vmem:[#allocation11 + $0x1c0] sm:$0xff]
    %v5219 = vld [vmem:[#allocation11 + $0x1c8] sm:$0xff]
    %v5220 = vld [vmem:[#allocation11 + $0x1d0] sm:$0xff]
    %v5221 = vld [vmem:[#allocation11 + $0x1d8] sm:$0xff]
    %v5222 = vld [vmem:[#allocation11 + $0x1e0] sm:$0xff]
    %v5223 = vld [vmem:[#allocation11 + $0x1e8] sm:$0xff]
    %v5224 = vld [vmem:[#allocation11 + $0x1f0] sm:$0xff]
    %v5225 = vld [vmem:[#allocation11 + $0x1f8] sm:$0xff]
    %v5226 = vld [vmem:[#allocation13] sm:$0x3]
    %v5228 = vlaneseq
    %v5229 = vshrl.u32 %v5228, 7
    %v5230 = vsub.s32 0, %v5229
    %v5231 = vrot.slane %v5226, %v5230
    %v5232 = vlaneseq
    %v5233 = vshrl.u32 %v5232, 7
    %v5234 = vsub.s32 1, %v5233
    %v5235 = vrot.slane %v5226, %v5234
    %v5302 = vunpack.c.l.b16 %v5162
    %v5303 = vunpack.c.h.b16 %v5162
    %v5304 = vunpack.c.l.b16 %v5163
    %v5305 = vunpack.c.h.b16 %v5163
    %v5306 = vunpack.c.l.b16 %v5164
    %v5307 = vunpack.c.h.b16 %v5164
    %v5308 = vunpack.c.l.b16 %v5165
    %v5309 = vunpack.c.h.b16 %v5165
    %v5310 = vunpack.c.l.b16 %v5166
    %v5311 = vunpack.c.h.b16 %v5166
    %v5312 = vunpack.c.l.b16 %v5167
    %v5313 = vunpack.c.h.b16 %v5167
    %v5314 = vunpack.c.l.b16 %v5168
    %v5315 = vunpack.c.h.b16 %v5168
    %v5316 = vunpack.c.l.b16 %v5169
    %v5317 = vunpack.c.h.b16 %v5169
    %v5318 = vunpack.c.l.b16 %v5170
    %v5319 = vunpack.c.h.b16 %v5170
    %v5320 = vunpack.c.l.b16 %v5171
    %v5321 = vunpack.c.h.b16 %v5171
    %v5322 = vunpack.c.l.b16 %v5172
    %v5323 = vunpack.c.h.b16 %v5172
    %v5324 = vunpack.c.l.b16 %v5173
    %v5325 = vunpack.c.h.b16 %v5173
    %v5326 = vunpack.c.l.b16 %v5174
    %v5327 = vunpack.c.h.b16 %v5174
    %v5328 = vunpack.c.l.b16 %v5175
    %v5329 = vunpack.c.h.b16 %v5175
    %v5330 = vunpack.c.l.b16 %v5176
    %v5331 = vunpack.c.h.b16 %v5176
    %v5332 = vunpack.c.l.b16 %v5177
    %v5333 = vunpack.c.h.b16 %v5177
    %v5334 = vunpack.c.l.b16 %v5178
    %v5335 = vunpack.c.h.b16 %v5178
    %v5336 = vunpack.c.l.b16 %v5179
    %v5337 = vunpack.c.h.b16 %v5179
    %v5338 = vunpack.c.l.b16 %v5180
    %v5339 = vunpack.c.h.b16 %v5180
    %v5340 = vunpack.c.l.b16 %v5181
    %v5341 = vunpack.c.h.b16 %v5181
    %v5342 = vunpack.c.l.b16 %v5182
    %v5343 = vunpack.c.h.b16 %v5182
    %v5344 = vunpack.c.l.b16 %v5183
    %v5345 = vunpack.c.h.b16 %v5183
    %v5346 = vunpack.c.l.b16 %v5184
    %v5347 = vunpack.c.h.b16 %v5184
    %v5348 = vunpack.c.l.b16 %v5185
    %v5349 = vunpack.c.h.b16 %v5185
    %v5350 = vunpack.c.l.b16 %v5186
    %v5351 = vunpack.c.h.b16 %v5186
    %v5352 = vunpack.c.l.b16 %v5187
    %v5353 = vunpack.c.h.b16 %v5187
    %v5354 = vunpack.c.l.b16 %v5188
    %v5355 = vunpack.c.h.b16 %v5188
    %v5356 = vunpack.c.l.b16 %v5189
    %v5357 = vunpack.c.h.b16 %v5189
    %v5358 = vunpack.c.l.b16 %v5190
    %v5359 = vunpack.c.h.b16 %v5190
    %v5360 = vunpack.c.l.b16 %v5191
    %v5361 = vunpack.c.h.b16 %v5191
    %v5362 = vunpack.c.l.b16 %v5192
    %v5363 = vunpack.c.h.b16 %v5192
    %v5364 = vunpack.c.l.b16 %v5193
    %v5365 = vunpack.c.h.b16 %v5193
    %v5366 = vunpack.c.l.b16 %v5194
    %v5367 = vunpack.c.h.b16 %v5194
    %v5368 = vunpack.c.l.b16 %v5195
    %v5369 = vunpack.c.h.b16 %v5195
    %v5370 = vunpack.c.l.b16 %v5196
    %v5371 = vunpack.c.h.b16 %v5196
    %v5372 = vunpack.c.l.b16 %v5197
    %v5373 = vunpack.c.h.b16 %v5197
    %v5374 = vunpack.c.l.b16 %v5198
    %v5375 = vunpack.c.h.b16 %v5198
    %v5376 = vunpack.c.l.b16 %v5199
    %v5377 = vunpack.c.h.b16 %v5199
    %v5378 = vunpack.c.l.b16 %v5200
    %v5379 = vunpack.c.h.b16 %v5200
    %v5380 = vunpack.c.l.b16 %v5201
    %v5381 = vunpack.c.h.b16 %v5201
    %v5382 = vunpack.c.l.b16 %v5202
    %v5383 = vunpack.c.h.b16 %v5202
    %v5384 = vunpack.c.l.b16 %v5203
    %v5385 = vunpack.c.h.b16 %v5203
    %v5386 = vunpack.c.l.b16 %v5204
    %v5387 = vunpack.c.h.b16 %v5204
    %v5388 = vunpack.c.l.b16 %v5205
    %v5389 = vunpack.c.h.b16 %v5205
    %v5390 = vunpack.c.l.b16 %v5206
    %v5391 = vunpack.c.h.b16 %v5206
    %v5392 = vunpack.c.l.b16 %v5207
    %v5393 = vunpack.c.h.b16 %v5207
    %v5394 = vunpack.c.l.b16 %v5208
    %v5395 = vunpack.c.h.b16 %v5208
    %v5396 = vunpack.c.l.b16 %v5209
    %v5397 = vunpack.c.h.b16 %v5209
    %v5398 = vunpack.c.l.b16 %v5210
    %v5399 = vunpack.c.h.b16 %v5210
    %v5400 = vunpack.c.l.b16 %v5211
    %v5401 = vunpack.c.h.b16 %v5211
    %v5402 = vunpack.c.l.b16 %v5212
    %v5403 = vunpack.c.h.b16 %v5212
    %v5404 = vunpack.c.l.b16 %v5213
    %v5405 = vunpack.c.h.b16 %v5213
    %v5406 = vunpack.c.l.b16 %v5214
    %v5407 = vunpack.c.h.b16 %v5214
    %v5408 = vunpack.c.l.b16 %v5215
    %v5409 = vunpack.c.h.b16 %v5215
    %v5410 = vunpack.c.l.b16 %v5216
    %v5411 = vunpack.c.h.b16 %v5216
    %v5412 = vunpack.c.l.b16 %v5217
    %v5413 = vunpack.c.h.b16 %v5217
    %v5414 = vunpack.c.l.b16 %v5218
    %v5415 = vunpack.c.h.b16 %v5218
    %v5416 = vunpack.c.l.b16 %v5219
    %v5417 = vunpack.c.h.b16 %v5219
    %v5418 = vunpack.c.l.b16 %v5220
    %v5419 = vunpack.c.h.b16 %v5220
    %v5420 = vunpack.c.l.b16 %v5221
    %v5421 = vunpack.c.h.b16 %v5221
    %v5422 = vunpack.c.l.b16 %v5222
    %v5423 = vunpack.c.h.b16 %v5222
    %v5424 = vunpack.c.l.b16 %v5223
    %v5425 = vunpack.c.h.b16 %v5223
    %v5426 = vunpack.c.l.b16 %v5224
    %v5427 = vunpack.c.h.b16 %v5224
    %v5428 = vunpack.c.l.b16 %v5225
    %v5429 = vunpack.c.h.b16 %v5225
    %v5430 = vpack.c.b16 %v5304, %v5302
    %v5431 = vpack.c.b16 %v5305, %v5303
    %v5432 = vpack.c.b16 %v5308, %v5306
    %v5433 = vpack.c.b16 %v5309, %v5307
    %v5434 = vpack.c.b16 %v5312, %v5310
    %v5435 = vpack.c.b16 %v5313, %v5311
    %v5436 = vpack.c.b16 %v5316, %v5314
    %v5437 = vpack.c.b16 %v5317, %v5315
    %v5438 = vpack.c.b16 %v5320, %v5318
    %v5439 = vpack.c.b16 %v5321, %v5319
    %v5440 = vpack.c.b16 %v5324, %v5322
    %v5441 = vpack.c.b16 %v5325, %v5323
    %v5442 = vpack.c.b16 %v5328, %v5326
    %v5443 = vpack.c.b16 %v5329, %v5327
    %v5444 = vpack.c.b16 %v5332, %v5330
    %v5445 = vpack.c.b16 %v5333, %v5331
    %v5446 = vpack.c.b16 %v5336, %v5334
    %v5447 = vpack.c.b16 %v5337, %v5335
    %v5448 = vpack.c.b16 %v5340, %v5338
    %v5449 = vpack.c.b16 %v5341, %v5339
    %v5450 = vpack.c.b16 %v5344, %v5342
    %v5451 = vpack.c.b16 %v5345, %v5343
    %v5452 = vpack.c.b16 %v5348, %v5346
    %v5453 = vpack.c.b16 %v5349, %v5347
    %v5454 = vpack.c.b16 %v5352, %v5350
    %v5455 = vpack.c.b16 %v5353, %v5351
    %v5456 = vpack.c.b16 %v5356, %v5354
    %v5457 = vpack.c.b16 %v5357, %v5355
    %v5458 = vpack.c.b16 %v5360, %v5358
    %v5459 = vpack.c.b16 %v5361, %v5359
    %v5460 = vpack.c.b16 %v5364, %v5362
    %v5461 = vpack.c.b16 %v5365, %v5363
    %v5462 = vpack.c.b16 %v5368, %v5366
    %v5463 = vpack.c.b16 %v5369, %v5367
    %v5464 = vpack.c.b16 %v5372, %v5370
    %v5465 = vpack.c.b16 %v5373, %v5371
    %v5466 = vpack.c.b16 %v5376, %v5374
    %v5467 = vpack.c.b16 %v5377, %v5375
    %v5468 = vpack.c.b16 %v5380, %v5378
    %v5469 = vpack.c.b16 %v5381, %v5379
    %v5470 = vpack.c.b16 %v5384, %v5382
    %v5471 = vpack.c.b16 %v5385, %v5383
    %v5472 = vpack.c.b16 %v5388, %v5386
    %v5473 = vpack.c.b16 %v5389, %v5387
    %v5474 = vpack.c.b16 %v5392, %v5390
    %v5475 = vpack.c.b16 %v5393, %v5391
    %v5476 = vpack.c.b16 %v5396, %v5394
    %v5477 = vpack.c.b16 %v5397, %v5395
    %v5478 = vpack.c.b16 %v5400, %v5398
    %v5479 = vpack.c.b16 %v5401, %v5399
    %v5480 = vpack.c.b16 %v5404, %v5402
    %v5481 = vpack.c.b16 %v5405, %v5403
    %v5482 = vpack.c.b16 %v5408, %v5406
    %v5483 = vpack.c.b16 %v5409, %v5407
    %v5484 = vpack.c.b16 %v5412, %v5410
    %v5485 = vpack.c.b16 %v5413, %v5411
    %v5486 = vpack.c.b16 %v5416, %v5414
    %v5487 = vpack.c.b16 %v5417, %v5415
    %v5488 = vpack.c.b16 %v5420, %v5418
    %v5489 = vpack.c.b16 %v5421, %v5419
    %v5490 = vpack.c.b16 %v5424, %v5422
    %v5491 = vpack.c.b16 %v5425, %v5423
    %v5492 = vpack.c.b16 %v5428, %v5426
    %v5493 = vpack.c.b16 %v5429, %v5427
    %5558 = vmatprep.subr.bf16.mxu0 %v5445
    %5559 = vmatpush1.bf16.msra.mxu0 %v5444
    %5560 = vmatprep.subr.bf16.mxu0 %v5443
    %5561 = vmatpush1.bf16.msra.mxu0 %v5442
    %5562 = vmatprep.subr.bf16.mxu0 %v5441
    %5563 = vmatpush1.bf16.msra.mxu0 %v5440
    %5564 = vmatprep.subr.bf16.mxu0 %v5439
    %5565 = vmatpush1.bf16.msra.mxu0 %v5438
    %5566 = vmatprep.subr.bf16.mxu0 %v5437
    %5567 = vmatpush1.bf16.msra.mxu0 %v5436
    %5568 = vmatprep.subr.bf16.mxu0 %v5435
    %5569 = vmatpush1.bf16.msra.mxu0 %v5434
    %5570 = vmatprep.subr.bf16.mxu0 %v5433
    %5571 = vmatpush1.bf16.msra.mxu0 %v5432
    %5572 = vmatprep.subr.bf16.mxu0 %v5431
    %5573 = vmatpush1.bf16.msra.mxu0 %v5430
    %5574 = vmatprep.subr.bf16.mxu0 %v5461
    %5575 = vmatpush2.bf16.msra.mxu0 %v5460
    %5576 = vmatprep.subr.bf16.mxu0 %v5459
    %5577 = vmatpush2.bf16.msra.mxu0 %v5458
    %5578 = vmatprep.subr.bf16.mxu0 %v5457
    %5579 = vmatpush2.bf16.msra.mxu0 %v5456
    %5580 = vmatprep.subr.bf16.mxu0 %v5455
    %5581 = vmatpush2.bf16.msra.mxu0 %v5454
    %5582 = vmatprep.subr.bf16.mxu0 %v5453
    %5583 = vmatpush2.bf16.msra.mxu0 %v5452
    %5584 = vmatprep.subr.bf16.mxu0 %v5451
    %5585 = vmatpush2.bf16.msra.mxu0 %v5450
    %5586 = vmatprep.subr.bf16.mxu0 %v5449
    %5587 = vmatpush2.bf16.msra.mxu0 %v5448
    %5588 = vmatprep.subr.bf16.mxu0 %v5447
    %5589 = vmatpush2.bf16.msra.mxu0 %v5446
    %5590 = vmatprep.mubr.bf16.mxu0 %v5155
    %5591 = vmatmul.mubr.bf16.gmra.mxu0 %v5154
    %v5592 = vpop.f32.mrf.mxu0
    %v5593 = vadd.f32 %v5231, %v5592
    %v5594 = vpop.f32.mrf.mxu0
    %v5595 = vadd.f32 %v5235, %v5594
    %v5596 = vpop.f32.mrf.mxu0
    %v5597 = vadd.f32 %v5231, %v5596
    %v5598 = vpop.f32.mrf.mxu0
    %v5599 = vadd.f32 %v5235, %v5598
    %5600 = vmatprep.mubr.bf16.mxu0 %v5159
    %5601 = vmatmul.mubr.bf16.gmra.mxu0 %v5158
    %v5602 = vpop.f32.mrf.mxu0
    %v5603 = vadd.f32 %v5231, %v5602
    %v5604 = vpop.f32.mrf.mxu0
    %v5605 = vadd.f32 %v5235, %v5604
    %v5606 = vpop.f32.mrf.mxu0
    %v5607 = vpop.f32.mrf.mxu0
    %5608 = vdwg.mxu0
    %5609 = vmatprep.subr.bf16.mxu0 %v5477
    %5610 = vmatpush1.bf16.msra.mxu0 %v5476
    %5611 = vmatprep.subr.bf16.mxu0 %v5475
    %5612 = vmatpush1.bf16.msra.mxu0 %v5474
    %5613 = vmatprep.subr.bf16.mxu0 %v5473
    %5614 = vmatpush1.bf16.msra.mxu0 %v5472
    %5615 = vmatprep.subr.bf16.mxu0 %v5471
    %5616 = vmatpush1.bf16.msra.mxu0 %v5470
    %5617 = vmatprep.subr.bf16.mxu0 %v5469
    %5618 = vmatpush1.bf16.msra.mxu0 %v5468
    %5619 = vmatprep.subr.bf16.mxu0 %v5467
    %5620 = vmatpush1.bf16.msra.mxu0 %v5466
    %5621 = vmatprep.subr.bf16.mxu0 %v5465
    %5622 = vmatpush1.bf16.msra.mxu0 %v5464
    %5623 = vmatprep.subr.bf16.mxu0 %v5463
    %5624 = vmatpush1.bf16.msra.mxu0 %v5462
    %5625 = vmatprep.subr.bf16.mxu0 %v5493
    %5626 = vmatpush2.bf16.msra.mxu0 %v5492
    %5627 = vmatprep.subr.bf16.mxu0 %v5491
    %5628 = vmatpush2.bf16.msra.mxu0 %v5490
    %5629 = vmatprep.subr.bf16.mxu0 %v5489
    %5630 = vmatpush2.bf16.msra.mxu0 %v5488
    %5631 = vmatprep.subr.bf16.mxu0 %v5487
    %5632 = vmatpush2.bf16.msra.mxu0 %v5486
    %5633 = vmatprep.subr.bf16.mxu0 %v5485
    %5634 = vmatpush2.bf16.msra.mxu0 %v5484
    %5635 = vmatprep.subr.bf16.mxu0 %v5483
    %5636 = vmatpush2.bf16.msra.mxu0 %v5482
    %5637 = vmatprep.subr.bf16.mxu0 %v5481
    %5638 = vmatpush2.bf16.msra.mxu0 %v5480
    %5639 = vmatprep.subr.bf16.mxu0 %v5479
    %5640 = vmatpush2.bf16.msra.mxu0 %v5478
    %5641 = vmatprep.mubr.bf16.mxu0 %v5157
    %5642 = vmatmul.mubr.bf16.gmra.mxu0 %v5156
    %v5643 = vpop.f32.mrf.mxu0
    %v5644 = vadd.f32 %v5593, %v5643
    %v5645 = vpop.f32.mrf.mxu0
    %v5646 = vadd.f32 %v5595, %v5645
    %v5647 = vpop.f32.mrf.mxu0
    %v5648 = vadd.f32 %v5597, %v5647
    %v5649 = vpop.f32.mrf.mxu0
    %v5650 = vadd.f32 %v5599, %v5649
    %5651 = vmatprep.mubr.bf16.mxu0 %v5161
    %5652 = vmatmul.mubr.bf16.gmra.mxu0 %v5160
    %v5653 = vpop.f32.mrf.mxu0
    %v5654 = vadd.f32 %v5603, %v5653
    %v5655 = vpop.f32.mrf.mxu0
    %v5656 = vadd.f32 %v5605, %v5655
    %v5657 = vpop.f32.mrf.mxu0
    %v5658 = vpop.f32.mrf.mxu0
    %5659 = vdwg.mxu0
    %v5660 = vmax.f32 %v5644, 0.0
    %v5661 = vmax.f32 %v5646, 0.0
    %v5662 = vmax.f32 %v5648, 0.0
    %v5663 = vmax.f32 %v5650, 0.0
    %v5664 = vmax.f32 %v5654, 0.0
    %v5665 = vmax.f32 %v5656, 0.0
    %v5666 = vpack.c.bf16 %v5662, %v5660
    %v5667 = vpack.c.bf16 %v5663, %v5661
    %v5668 = vpack.c.bf16 %v5664, %v5664
    %v5669 = vpack.c.bf16 %v5665, %v5665
    %v5670 = vld [vmem:[#allocation14] sm:$0xf]
    %v5671 = vld [vmem:[#allocation14 + $0x4] sm:$0xf]
    %v5672 = vld [vmem:[#allocation14 + $0x8] sm:$0xf]
    %v5673 = vld [vmem:[#allocation14 + $0xc] sm:$0xf]
    %v5674 = vld [vmem:[#allocation14 + $0x10] sm:$0xf]
    %v5675 = vld [vmem:[#allocation14 + $0x14] sm:$0xf]
    %v5676 = vld [vmem:[#allocation14 + $0x18] sm:$0xf]
    %v5677 = vld [vmem:[#allocation14 + $0x1c] sm:$0xf]
    %v5678 = vld [vmem:[#allocation14 + $0x20] sm:$0xf]
    %v5679 = vld [vmem:[#allocation14 + $0x24] sm:$0xf]
    %v5680 = vld [vmem:[#allocation14 + $0x28] sm:$0xf]
    %v5681 = vld [vmem:[#allocation14 + $0x2c] sm:$0xf]
    %v5682 = vld [vmem:[#allocation14 + $0x30] sm:$0xf]
    %v5683 = vld [vmem:[#allocation14 + $0x34] sm:$0xf]
    %v5684 = vld [vmem:[#allocation14 + $0x38] sm:$0xf]
    %v5685 = vld [vmem:[#allocation14 + $0x3c] sm:$0xf]
    %v5686 = vld [vmem:[#allocation14 + $0x40] sm:$0xf]
    %v5687 = vld [vmem:[#allocation14 + $0x44] sm:$0xf]
    %v5688 = vld [vmem:[#allocation14 + $0x48] sm:$0xf]
    %v5689 = vld [vmem:[#allocation14 + $0x4c] sm:$0xf]
    %v5690 = vld [vmem:[#allocation14 + $0x50] sm:$0xf]
    %v5691 = vld [vmem:[#allocation14 + $0x54] sm:$0xf]
    %v5692 = vld [vmem:[#allocation14 + $0x58] sm:$0xf]
    %v5693 = vld [vmem:[#allocation14 + $0x5c] sm:$0xf]
    %v5694 = vld [vmem:[#allocation14 + $0x60] sm:$0xf]
    %v5695 = vld [vmem:[#allocation14 + $0x64] sm:$0xf]
    %v5696 = vld [vmem:[#allocation14 + $0x68] sm:$0xf]
    %v5697 = vld [vmem:[#allocation14 + $0x6c] sm:$0xf]
    %v5698 = vld [vmem:[#allocation14 + $0x70] sm:$0xf]
    %v5699 = vld [vmem:[#allocation14 + $0x74] sm:$0xf]
    %v5700 = vld [vmem:[#allocation14 + $0x78] sm:$0xf]
    %v5701 = vld [vmem:[#allocation14 + $0x7c] sm:$0xf]
    %v5702 = vld [vmem:[#allocation16] sm:$0x1]
    %v5704 = vlaneseq
    %v5705 = vshrl.u32 %v5704, 7
    %v5706 = vsub.s32 0, %v5705
    %v5707 = vrot.slane %v5702, %v5706
    %v5741 = vunpack.c.l.b16 %v5670
    %v5742 = vunpack.c.l.b16 %v5671
    %v5743 = vunpack.c.l.b16 %v5672
    %v5744 = vunpack.c.l.b16 %v5673
    %v5745 = vunpack.c.l.b16 %v5674
    %v5746 = vunpack.c.l.b16 %v5675
    %v5747 = vunpack.c.l.b16 %v5676
    %v5748 = vunpack.c.l.b16 %v5677
    %v5749 = vunpack.c.l.b16 %v5678
    %v5750 = vunpack.c.l.b16 %v5679
    %v5751 = vunpack.c.l.b16 %v5680
    %v5752 = vunpack.c.l.b16 %v5681
    %v5753 = vunpack.c.l.b16 %v5682
    %v5754 = vunpack.c.l.b16 %v5683
    %v5755 = vunpack.c.l.b16 %v5684
    %v5756 = vunpack.c.l.b16 %v5685
    %v5757 = vunpack.c.l.b16 %v5686
    %v5758 = vunpack.c.l.b16 %v5687
    %v5759 = vunpack.c.l.b16 %v5688
    %v5760 = vunpack.c.l.b16 %v5689
    %v5761 = vunpack.c.l.b16 %v5690
    %v5762 = vunpack.c.l.b16 %v5691
    %v5763 = vunpack.c.l.b16 %v5692
    %v5764 = vunpack.c.l.b16 %v5693
    %v5765 = vunpack.c.l.b16 %v5694
    %v5766 = vunpack.c.l.b16 %v5695
    %v5767 = vunpack.c.l.b16 %v5696
    %v5768 = vunpack.c.l.b16 %v5697
    %v5769 = vunpack.c.l.b16 %v5698
    %v5770 = vunpack.c.l.b16 %v5699
    %v5771 = vunpack.c.l.b16 %v5700
    %v5772 = vunpack.c.l.b16 %v5701
    %v5773 = vpack.c.b16 %v5742, %v5741
    %v5774 = vpack.c.b16 %v5744, %v5743
    %v5775 = vpack.c.b16 %v5746, %v5745
    %v5776 = vpack.c.b16 %v5748, %v5747
    %v5777 = vpack.c.b16 %v5750, %v5749
    %v5778 = vpack.c.b16 %v5752, %v5751
    %v5779 = vpack.c.b16 %v5754, %v5753
    %v5780 = vpack.c.b16 %v5756, %v5755
    %v5781 = vpack.c.b16 %v5758, %v5757
    %v5782 = vpack.c.b16 %v5760, %v5759
    %v5783 = vpack.c.b16 %v5762, %v5761
    %v5784 = vpack.c.b16 %v5764, %v5763
    %v5785 = vpack.c.b16 %v5766, %v5765
    %v5786 = vpack.c.b16 %v5768, %v5767
    %v5787 = vpack.c.b16 %v5770, %v5769
    %v5788 = vpack.c.b16 %v5772, %v5771
    %5805 = vmatprep.subr.bf16.mxu0 0
    %5806 = vmatpush1.bf16.msra.mxu0 %v5780
    %5807 = vmatprep.subr.bf16.mxu0 0
    %5808 = vmatpush1.bf16.msra.mxu0 %v5779
    %5809 = vmatprep.subr.bf16.mxu0 0
    %5810 = vmatpush1.bf16.msra.mxu0 %v5778
    %5811 = vmatprep.subr.bf16.mxu0 0
    %5812 = vmatpush1.bf16.msra.mxu0 %v5777
    %5813 = vmatprep.subr.bf16.mxu0 0
    %5814 = vmatpush1.bf16.msra.mxu0 %v5776
    %5815 = vmatprep.subr.bf16.mxu0 0
    %5816 = vmatpush1.bf16.msra.mxu0 %v5775
    %5817 = vmatprep.subr.bf16.mxu0 0
    %5818 = vmatpush1.bf16.msra.mxu0 %v5774
    %5819 = vmatprep.subr.bf16.mxu0 0
    %5820 = vmatpush1.bf16.msra.mxu0 %v5773
    %5821 = vmatprep.subr.bf16.mxu0 0
    %5822 = vmatpush2.bf16.msra.mxu0 %v5788
    %5823 = vmatprep.subr.bf16.mxu0 0
    %5824 = vmatpush2.bf16.msra.mxu0 %v5787
    %5825 = vmatprep.subr.bf16.mxu0 0
    %5826 = vmatpush2.bf16.msra.mxu0 %v5786
    %5827 = vmatprep.subr.bf16.mxu0 0
    %5828 = vmatpush2.bf16.msra.mxu0 %v5785
    %5829 = vmatprep.subr.bf16.mxu0 0
    %5830 = vmatpush2.bf16.msra.mxu0 %v5784
    %5831 = vmatprep.subr.bf16.mxu0 0
    %5832 = vmatpush2.bf16.msra.mxu0 %v5783
    %5833 = vmatprep.subr.bf16.mxu0 0
    %5834 = vmatpush2.bf16.msra.mxu0 %v5782
    %5835 = vmatprep.subr.bf16.mxu0 0
    %5836 = vmatpush2.bf16.msra.mxu0 %v5781
    %5837 = vmatprep.mubr.bf16.mxu0 %v5667
    %5838 = vmatmul.mubr.bf16.gmra.mxu0 %v5666
    %v5839 = vpop.f32.mrf.mxu0
    %v5840 = vadd.f32 %v5707, %v5839
    %v5841 = vpop.f32.mrf.mxu0
    %v5842 = vpop.f32.mrf.mxu0
    %v5843 = vadd.f32 %v5707, %v5842
    %v5844 = vpop.f32.mrf.mxu0
    %5845 = vmatprep.mubr.bf16.mxu0 %v5669
    %5846 = vmatmul.mubr.bf16.gmra.mxu0 %v5668
    %v5847 = vpop.f32.mrf.mxu0
    %v5848 = vadd.f32 %v5707, %v5847
    %v5849 = vpop.f32.mrf.mxu0
    %v5850 = vpop.f32.mrf.mxu0
    %v5851 = vpop.f32.mrf.mxu0
    %5852 = vdwg.mxu0
    %5853 = vst [vmem:[#allocation17] sm:$0xff] %v5840
    %5854 = vst [vmem:[#allocation17 + $0x8] sm:$0xff] %v5843
    %5855 = vst [vmem:[#allocation17 + $0x10] sm:$0xff] %v5848
    // Predicated region
    $region74: #{tpu_custom_call.1} parent=1 // pred_check
      _
    $region75: #{tpu_custom_call.1} parent=1 // pred_check_branch
      %5857 = sbr.rel (0) target = $region77
    $region76: #{tpu_custom_call.1} parent=1 // pred_region
      %s5859 = ssub.s32 384, 384
      %5860 = vsyncadd [#allocation4], %s5859
      %s5861 = sshll.u32 [#allocation17], 4
      %s5862 = int_to_ptr.vmem [resolvable:$true] %s5861
      %5867 = dma.vmem_to_hbm [thread:$0]  %s5862, 384, %s9, [#allocation4], 128, 128, 8
    $region77: #{tpu_custom_call.1} parent=1 // pred_fallthru
      _
    // Predicated region
    $region78: #{tpu_custom_call.1} parent=1 // pred_check
      _
    $region79: #{tpu_custom_call.1} parent=1 // pred_check_branch
      %5869 = sbr.rel (0) target = $region81
    $region80: #{tpu_custom_call.1} parent=1 // pred_region
      %5870 = dma.done [#allocation4], 384
    $region81: #{tpu_custom_call.1} parent=1 // pred_fallthru
      _
    %5871 = vsyncpa [#allocation3], 1
    %5872 = vsyncpa [#allocation6], 1
    %5873 = vsyncpa [#allocation9], 1
    %5874 = vsyncpa [#allocation12], 1
    %5875 = vsyncpa [#allocation15], 1
    %5876 = vsyncpa [#allocation4], 1

</llo_original>
